<compile_context>
chip_gen: v7x
topology: tpu7x:2x2x1
jax: 0.10.0
libtpu: 0.0.40
codegen_flags: <defaults>
</compile_context>

<pallas_src>
import jax
import jax.numpy as jnp
from jax.experimental import pallas as pl
from jax.experimental.pallas import tpu as pltpu

# ---------------- small synthetic encoder config ----------------
B = 2            # number of query/context pairs
S = 8            # sequence length
D = 32           # hidden size
H = 4            # attention heads
DH = D // H      # head dim
F = 64           # FFN intermediate size
L = 2            # transformer layers
VOCAB = 64
LN_EPS = 1e-12

_WEIGHT_NAMES = ("wqkv", "bqkv", "wo", "bo",
                 "ln1_g", "ln1_b", "w1", "b1", "w2", "b2", "ln2_g", "ln2_b")


# ---------------- shared math (used inside the Pallas kernel and the ref) ----
def _gelu(x):
    # tanh-approximate GELU (differs slightly from HF's exact erf GELU)
    c = 0.7978845608028654  # sqrt(2/pi)
    return 0.5 * x * (1.0 + jnp.tanh(c * (x + 0.044715 * x * x * x)))


def _layer_norm(x, g, b):
    # single-pass LN: one reduction pass produces mean and E[x^2]
    mu = jnp.mean(x, axis=-1, keepdims=True)
    ms = jnp.mean(x * x, axis=-1, keepdims=True)
    var = jnp.maximum(ms - mu * mu, 0.0)
    return (x - mu) * jax.lax.rsqrt(var + LN_EPS) * g + b


def _encoder_math(x, mask, wqkv, bqkv, wo, bo,
                  ln1g, ln1b, w1, b1, w2, b2, ln2g, ln2b, recip):
    """Batched encoder over the fused batch.
    x: (N, S, D) f32 embedded inputs; mask: (N, S) f32 {0,1}.
    Matmul weights are bf16 (f32 MXU accumulation); biases / LN params f32.
    The 1/sqrt(DH) attention scale is pre-folded into the Wq/bq columns of
    wqkv/bqkv.  Returns Contriever 'average'-pooled embeddings (N, D) f32."""
    N = x.shape[0]
    NS = N * S
    NH = N * H
    bf16 = jnp.bfloat16

    # additive attention bias, broadcast ONCE (hoisted out of the layer loop)
    # note: fully masked rows become a uniform softmax over padding tokens,
    # matching HF BertModel behaviour (no probability re-masking).
    att_bias = jnp.broadcast_to(((1.0 - mask) * -1e9)[:, None, None, :],
                                (N, H, S, S)).reshape(NH, S, S)

    def to_heads(t):          # (NS, D) -> (N*H, S, DH)
        return jnp.transpose(t.reshape(N, S, H, DH), (0, 2, 1, 3)).reshape(NH, S, DH)

    h = x.reshape(NS, D)                       # f32 activations, flat (NS, D)
    # NOTE: static unroll is fine at L=2; switch to lax.fori_loop for large L.
    for l in range(L):
        hb = h.astype(bf16)
        # fused QKV projection: one (NS,D)x(D,3D) matmul, one bias add
        qkv = (jnp.dot(hb, wqkv[l], preferred_element_type=jnp.float32)
               + bqkv[l]).astype(bf16)
        q4 = to_heads(qkv[:, :D])
        k4 = to_heads(qkv[:, D:2 * D])
        v4 = to_heads(qkv[:, 2 * D:])

        # head-batched attention: single score einsum + single context einsum
        sc = jnp.einsum('bqd,bkd->bqk', q4, k4,
                        preferred_element_type=jnp.float32)
        sc = sc + att_bias
        sc = sc - jnp.max(sc, axis=-1, keepdims=True)        # stable softmax
        e = jnp.exp(sc)
        p = e * recip(jnp.sum(e, axis=-1, keepdims=True))
        ctx = jnp.einsum('bqk,bkd->bqd', p.astype(bf16), v4,
                         preferred_element_type=jnp.float32)  # (N*H, S, DH)
        ctx = jnp.transpose(ctx.reshape(N, H, S, DH), (0, 2, 1, 3)).reshape(NS, D)

        attn = jnp.dot(ctx.astype(bf16), wo[l],
                       preferred_element_type=jnp.float32) + bo[l]
        h = _layer_norm(h + attn, ln1g[l], ln1b[l])

        ff = _gelu(jnp.dot(h.astype(bf16), w1[l],
                           preferred_element_type=jnp.float32) + b1[l])
        ff = jnp.dot(ff.astype(bf16), w2[l],
                     preferred_element_type=jnp.float32) + b2[l]
        h = _layer_norm(h + ff, ln2g[l], ln2b[l])

    # Contriever 'average' pooling as a (1,S) x (S,D) bf16 matmul per example
    h3 = h.reshape(N, S, D)
    pooled = jnp.einsum('nqs,nsd->nqd',
                        mask[:, None, :].astype(bf16), h3.astype(bf16),
                        preferred_element_type=jnp.float32).reshape(N, D)
    count = jnp.sum(mask, axis=-1, keepdims=True)             # (N, 1)
    # exact divide here: count is a small exact integer (no approx-recip bias)
    return pooled / jnp.maximum(count, 1.0)                   # clamp: no div-by-0


# ---------------- Pallas kernel ----------------
def encoder_kernel(x_ref, mask_ref,
                   wqkv_ref, bqkv_ref, wo_ref, bo_ref,
                   ln1g_ref, ln1b_ref, w1_ref, b1_ref, w2_ref, b2_ref,
                   ln2g_ref, ln2b_ref, out_ref):
    out_ref[...] = _encoder_math(
        x_ref[...], mask_ref[...],
        wqkv_ref[...], bqkv_ref[...], wo_ref[...], bo_ref[...],
        ln1g_ref[...], ln1b_ref[...], w1_ref[...], b1_ref[...],
        w2_ref[...], b2_ref[...], ln2g_ref[...], ln2b_ref[...],
        recip=lambda v: pl.reciprocal(v, approx=True))


# ---------------- wrappers ----------------
def prepare_encoder_weights(params):
    """Fuse Wq|Wk|Wv into one (D,3D) weight (attention scale folded into the
    Q columns) and cast matmul weights to bf16."""
    scale = 1.0 / (DH ** 0.5)
    bf = lambda a: a.astype(jnp.bfloat16)
    wqkv = jnp.concatenate([params["wq"] * scale, params["wk"], params["wv"]],
                           axis=-1)                     # (L, D, 3D)
    bqkv = jnp.concatenate([params["bq"] * scale, params["bk"], params["bv"]],
                           axis=-1)                     # (L, 1, 3D)
    prepared = {
        "wqkv": bf(wqkv), "bqkv": bqkv,
        "wo": bf(params["wo"]), "bo": params["bo"],
        "ln1_g": params["ln1_g"], "ln1_b": params["ln1_b"],
        "w1": bf(params["w1"]), "b1": params["b1"],
        "w2": bf(params["w2"]), "b2": params["b2"],
        "ln2_g": params["ln2_g"], "ln2_b": params["ln2_b"],
    }
    return tuple(prepared[n] for n in _WEIGHT_NAMES)


def encode_pallas(x_emb, attn_mask, enc_weights):
    """x_emb: (N, S, D) f32 embedded inputs for the FUSED batch (queries and
    contexts concatenated); attn_mask: (N, S) f32 {0,1}.
    Single pallas_call, single grid step: whole fused batch processed at once,
    all encoder weights resident in VMEM (DMA'd exactly once)."""
    n = x_emb.shape[0]
    vmem = pl.BlockSpec(memory_space=pltpu.MemorySpace.VMEM)
    return pl.pallas_call(
        encoder_kernel,
        out_shape=jax.ShapeDtypeStruct((n, D), jnp.float32),
        in_specs=[vmem] * (2 + len(enc_weights)),
        out_specs=vmem,
        compiler_params=pltpu.CompilerParams(
            vmem_limit_bytes=32 * 1024 * 1024),
    )(x_emb, attn_mask, *enc_weights)


# ---------------- parameters & embedding (glue, plain JAX) ----------------
def init_params(key):
    ks = iter(jax.random.split(key, 24))

    def nrm(shape, scale=0.05):
        return scale * jax.random.normal(next(ks), shape, jnp.float32)

    return dict(
        tok_emb=nrm((VOCAB, D)),
        pos_emb=nrm((S, D)),
        type_emb=nrm((2, D)),
        emb_ln_g=jnp.ones((D,), jnp.float32),
        emb_ln_b=jnp.zeros((D,), jnp.float32),
        wq=nrm((L, D, D)), bq=nrm((L, 1, D)),
        wk=nrm((L, D, D)), bk=nrm((L, 1, D)),
        wv=nrm((L, D, D)), bv=nrm((L, 1, D)),
        wo=nrm((L, D, D)), bo=nrm((L, 1, D)),
        ln1_g=jnp.ones((L, 1, D), jnp.float32),
        ln1_b=jnp.zeros((L, 1, D), jnp.float32),
        w1=nrm((L, D, F)), b1=nrm((L, 1, F)),
        w2=nrm((L, F, D)), b2=nrm((L, 1, D)),
        ln2_g=jnp.ones((L, 1, D), jnp.float32),
        ln2_b=jnp.zeros((L, 1, D), jnp.float32),
    )


def embed(input_ids, params):
    # glue: embedding gather + embedding LayerNorm in plain JAX
    x = (params["tok_emb"][input_ids]
         + params["pos_emb"][None, :input_ids.shape[1], :]
         + params["type_emb"][0][None, None, :])
    mu = jnp.mean(x, axis=-1, keepdims=True)
    var = jnp.mean((x - mu) ** 2, axis=-1, keepdims=True)
    return ((x - mu) * jax.lax.rsqrt(var + LN_EPS)
            * params["emb_ln_g"] + params["emb_ln_b"]).astype(jnp.float32)


def retriever_forward(q_tokens, c_tokens, params):
    """Mirrors Retriever.forward (contriever: q_encoder == d_encoder, shared
    weights).  Query and context passes are fused into one encoder kernel call;
    the per-pair dot on the tiny (B, D) embeddings is plain JAX (a separate
    pallas_call would cost more in launch overhead than the work itself)."""
    q_ids, q_mask = q_tokens
    c_ids, c_mask = c_tokens
    nb = q_ids.shape[0]
    x_all = jnp.concatenate([embed(q_ids, params), embed(c_ids, params)], axis=0)
    m_all = jnp.concatenate([q_mask, c_mask], axis=0).astype(jnp.float32)
    emb = encode_pallas(x_all, m_all, prepare_encoder_weights(params))
    q_emb, c_emb = emb[:nb], emb[nb:]
    return jnp.sum(q_emb * c_emb, axis=-1)        # scores[i] = q_i @ c_i


def reference_forward(q_tokens, c_tokens, params):
    w = prepare_encoder_weights(params)

    def enc(ids, mask):
        return _encoder_math(embed(ids, params), mask.astype(jnp.float32), *w,
                             recip=lambda v: 1.0 / v)

    qe = enc(*q_tokens)
    ce = enc(*c_tokens)
    return jnp.sum(qe * ce, axis=-1)


if __name__ == "__main__":
    key = jax.random.PRNGKey(0)
    kp, kq, kc = jax.random.split(key, 3)
    params = init_params(kp)

    q_ids = jax.random.randint(kq, (B, S), 0, VOCAB)
    c_ids = jax.random.randint(kc, (B, S), 0, VOCAB)
    ar = jnp.arange(S)[None, :]
    q_mask = (ar < jnp.array([S, S - 3])[:, None]).astype(jnp.float32)
    c_mask = (ar < jnp.array([S, S - 2])[:, None]).astype(jnp.float32)

    scores = retriever_forward((q_ids, q_mask), (c_ids, c_mask), params)
    scores = jax.block_until_ready(scores)

    ref = reference_forward((q_ids, q_mask), (c_ids, c_mask), params)
    assert scores.shape == (B,)
    # kernel and reference share the same (bf16-matmul) math; the only delta is
    # the EUP approximate reciprocal used for the in-kernel softmax denominator.
    assert jnp.allclose(scores, ref, rtol=1e-2, atol=1e-2), (scores, ref)
    print("KERNEL_OK")
</pallas_src>

<mosaic_0001>
module attributes {stable_mosaic.version = 11 : i64} {
  func.func @encoder_kernel(%arg0: memref<4x8x32xf32, #tpu.memory_space<vmem>>, %arg1: memref<4x8xf32, #tpu.memory_space<vmem>>, %arg2: memref<2x32x96xbf16, #tpu.memory_space<vmem>>, %arg3: memref<2x1x96xf32, #tpu.memory_space<vmem>>, %arg4: memref<2x32x32xbf16, #tpu.memory_space<vmem>>, %arg5: memref<2x1x32xf32, #tpu.memory_space<vmem>>, %arg6: memref<2x1x32xf32, #tpu.memory_space<vmem>>, %arg7: memref<2x1x32xf32, #tpu.memory_space<vmem>>, %arg8: memref<2x32x64xbf16, #tpu.memory_space<vmem>>, %arg9: memref<2x1x64xf32, #tpu.memory_space<vmem>>, %arg10: memref<2x64x32xbf16, #tpu.memory_space<vmem>>, %arg11: memref<2x1x32xf32, #tpu.memory_space<vmem>>, %arg12: memref<2x1x32xf32, #tpu.memory_space<vmem>>, %arg13: memref<2x1x32xf32, #tpu.memory_space<vmem>>, %arg14: memref<4x32xf32, #tpu.memory_space<vmem>>) attributes {dimension_semantics = [], scalar_prefetch = 0 : i64, scratch_operands = 0 : i64, tpu.core_type = #tpu.core_type<tc>} {
    %c0 = arith.constant 0 : index
    %c0_0 = arith.constant 0 : index
    %c0_1 = arith.constant 0 : index
    %0 = vector.load %arg0[%c0, %c0_0, %c0_1] : memref<4x8x32xf32, #tpu.memory_space<vmem>>, vector<4x8x32xf32>
    %c0_2 = arith.constant 0 : index
    %c0_3 = arith.constant 0 : index
    %1 = vector.load %arg1[%c0_2, %c0_3] : memref<4x8xf32, #tpu.memory_space<vmem>>, vector<4x8xf32>
    %c0_4 = arith.constant 0 : index
    %c0_5 = arith.constant 0 : index
    %c0_6 = arith.constant 0 : index
    %2 = vector.load %arg2[%c0_4, %c0_5, %c0_6] : memref<2x32x96xbf16, #tpu.memory_space<vmem>>, vector<2x32x96xbf16>
    %c0_7 = arith.constant 0 : index
    %c0_8 = arith.constant 0 : index
    %c0_9 = arith.constant 0 : index
    %3 = vector.load %arg3[%c0_7, %c0_8, %c0_9] : memref<2x1x96xf32, #tpu.memory_space<vmem>>, vector<2x1x96xf32>
    %c0_10 = arith.constant 0 : index
    %c0_11 = arith.constant 0 : index
    %c0_12 = arith.constant 0 : index
    %4 = vector.load %arg4[%c0_10, %c0_11, %c0_12] : memref<2x32x32xbf16, #tpu.memory_space<vmem>>, vector<2x32x32xbf16>
    %c0_13 = arith.constant 0 : index
    %c0_14 = arith.constant 0 : index
    %c0_15 = arith.constant 0 : index
    %5 = vector.load %arg5[%c0_13, %c0_14, %c0_15] : memref<2x1x32xf32, #tpu.memory_space<vmem>>, vector<2x1x32xf32>
    %c0_16 = arith.constant 0 : index
    %c0_17 = arith.constant 0 : index
    %c0_18 = arith.constant 0 : index
    %6 = vector.load %arg6[%c0_16, %c0_17, %c0_18] : memref<2x1x32xf32, #tpu.memory_space<vmem>>, vector<2x1x32xf32>
    %c0_19 = arith.constant 0 : index
    %c0_20 = arith.constant 0 : index
    %c0_21 = arith.constant 0 : index
    %7 = vector.load %arg7[%c0_19, %c0_20, %c0_21] : memref<2x1x32xf32, #tpu.memory_space<vmem>>, vector<2x1x32xf32>
    %c0_22 = arith.constant 0 : index
    %c0_23 = arith.constant 0 : index
    %c0_24 = arith.constant 0 : index
    %8 = vector.load %arg8[%c0_22, %c0_23, %c0_24] : memref<2x32x64xbf16, #tpu.memory_space<vmem>>, vector<2x32x64xbf16>
    %c0_25 = arith.constant 0 : index
    %c0_26 = arith.constant 0 : index
    %c0_27 = arith.constant 0 : index
    %9 = vector.load %arg9[%c0_25, %c0_26, %c0_27] : memref<2x1x64xf32, #tpu.memory_space<vmem>>, vector<2x1x64xf32>
    %c0_28 = arith.constant 0 : index
    %c0_29 = arith.constant 0 : index
    %c0_30 = arith.constant 0 : index
    %10 = vector.load %arg10[%c0_28, %c0_29, %c0_30] : memref<2x64x32xbf16, #tpu.memory_space<vmem>>, vector<2x64x32xbf16>
    %c0_31 = arith.constant 0 : index
    %c0_32 = arith.constant 0 : index
    %c0_33 = arith.constant 0 : index
    %11 = vector.load %arg11[%c0_31, %c0_32, %c0_33] : memref<2x1x32xf32, #tpu.memory_space<vmem>>, vector<2x1x32xf32>
    %c0_34 = arith.constant 0 : index
    %c0_35 = arith.constant 0 : index
    %c0_36 = arith.constant 0 : index
    %12 = vector.load %arg12[%c0_34, %c0_35, %c0_36] : memref<2x1x32xf32, #tpu.memory_space<vmem>>, vector<2x1x32xf32>
    %c0_37 = arith.constant 0 : index
    %c0_38 = arith.constant 0 : index
    %c0_39 = arith.constant 0 : index
    %13 = vector.load %arg13[%c0_37, %c0_38, %c0_39] : memref<2x1x32xf32, #tpu.memory_space<vmem>>, vector<2x1x32xf32>
    %cst = arith.constant 1.000000e+00 : f32
    %14 = vector.broadcast %cst : f32 to vector<4x8xf32>
    %15 = arith.subf %14, %1 : vector<4x8xf32>
    %cst_40 = arith.constant -1.000000e+09 : f32
    %16 = vector.broadcast %cst_40 : f32 to vector<4x8xf32>
    %17 = arith.mulf %15, %16 : vector<4x8xf32>
    %18 = vector.shape_cast %17 : vector<4x8xf32> to vector<4x1x1x8xf32>
    %19 = vector.shape_cast %18 : vector<4x1x1x8xf32> to vector<4x1x1x8xf32>
    %20 = vector.broadcast %19 : vector<4x1x1x8xf32> to vector<4x4x8x8xf32>
    %21 = vector.shape_cast %20 : vector<4x4x8x8xf32> to vector<16x8x8xf32>
    %22 = vector.shape_cast %0 : vector<4x8x32xf32> to vector<32x32xf32>
    %23 = arith.truncf %22 : vector<32x32xf32> to vector<32x32xbf16>
    %24 = vector.extract_strided_slice %2 {offsets = [0, 0, 0], sizes = [1, 32, 96], strides = [1, 1, 1]} : vector<2x32x96xbf16> to vector<1x32x96xbf16>
    %25 = vector.shape_cast %24 : vector<1x32x96xbf16> to vector<32x96xbf16>
    %cst_41 = arith.constant dense<0.000000e+00> : vector<32x96xf32>
    %26 = tpu.matmul %23, %25, %cst_41 {dimension_numbers = #tpu.dot_dimension_numbers<[1], [0], [0], [1], [0, 0, 1, 1], [], []>} : vector<32x32xbf16>, vector<32x96xbf16>, vector<32x96xf32> -> vector<32x96xf32>
    %27 = vector.extract_strided_slice %3 {offsets = [0, 0, 0], sizes = [1, 1, 96], strides = [1, 1, 1]} : vector<2x1x96xf32> to vector<1x1x96xf32>
    %28 = vector.shape_cast %27 : vector<1x1x96xf32> to vector<1x96xf32>
    %29 = vector.broadcast %28 : vector<1x96xf32> to vector<32x96xf32>
    %30 = arith.addf %26, %29 : vector<32x96xf32>
    %31 = arith.truncf %30 : vector<32x96xf32> to vector<32x96xbf16>
    %32 = vector.extract_strided_slice %31 {offsets = [0, 0], sizes = [32, 32], strides = [1, 1]} : vector<32x96xbf16> to vector<32x32xbf16>
    %33 = vector.shape_cast %32 : vector<32x32xbf16> to vector<4x8x4x8xbf16>
    %34 = tpu.transpose %33, [0, 2, 1, 3] : vector<4x8x4x8xbf16> -> vector<4x4x8x8xbf16>
    %35 = vector.shape_cast %34 : vector<4x4x8x8xbf16> to vector<16x8x8xbf16>
    %36 = vector.extract_strided_slice %31 {offsets = [0, 32], sizes = [32, 32], strides = [1, 1]} : vector<32x96xbf16> to vector<32x32xbf16>
    %37 = vector.shape_cast %36 : vector<32x32xbf16> to vector<4x8x4x8xbf16>
    %38 = tpu.transpose %37, [0, 2, 1, 3] : vector<4x8x4x8xbf16> -> vector<4x4x8x8xbf16>
    %39 = vector.shape_cast %38 : vector<4x4x8x8xbf16> to vector<16x8x8xbf16>
    %40 = vector.extract_strided_slice %31 {offsets = [0, 64], sizes = [32, 32], strides = [1, 1]} : vector<32x96xbf16> to vector<32x32xbf16>
    %41 = vector.shape_cast %40 : vector<32x32xbf16> to vector<4x8x4x8xbf16>
    %42 = tpu.transpose %41, [0, 2, 1, 3] : vector<4x8x4x8xbf16> -> vector<4x4x8x8xbf16>
    %43 = vector.shape_cast %42 : vector<4x4x8x8xbf16> to vector<16x8x8xbf16>
    "tpu.trace_start"() <{level = 10 : i32, message = "bqd,bkd->bqk"}> : () -> ()
    %cst_42 = arith.constant dense<0.000000e+00> : vector<16x8x8xf32>
    %44 = tpu.matmul %35, %39, %cst_42 {dimension_numbers = #tpu.dot_dimension_numbers<[2], [2], [1], [1], [0, 0, 0, 1, 1, 1], [0], [0]>} : vector<16x8x8xbf16>, vector<16x8x8xbf16>, vector<16x8x8xf32> -> vector<16x8x8xf32>
    "tpu.trace_stop"() : () -> ()
    %45 = arith.addf %44, %21 : vector<16x8x8xf32>
    %cst_43 = arith.constant dense<0xFF800000> : vector<16x8xf32>
    %46 = vector.multi_reduction <maximumf>, %45, %cst_43 [2] : vector<16x8x8xf32> to vector<16x8xf32>
    %47 = vector.shape_cast %46 : vector<16x8xf32> to vector<16x8x1xf32>
    %48 = vector.broadcast %47 : vector<16x8x1xf32> to vector<16x8x8xf32>
    %49 = arith.subf %45, %48 : vector<16x8x8xf32>
    %50 = math.exp %49 : vector<16x8x8xf32>
    %cst_44 = arith.constant dense<0.000000e+00> : vector<16x8xf32>
    %51 = vector.multi_reduction <add>, %50, %cst_44 [2] : vector<16x8x8xf32> to vector<16x8xf32>
    %52 = vector.shape_cast %51 : vector<16x8xf32> to vector<16x8x1xf32>
    %53 = tpu.reciprocal %52 {approx = true} : vector<16x8x1xf32> -> vector<16x8x1xf32>
    %54 = vector.broadcast %53 : vector<16x8x1xf32> to vector<16x8x8xf32>
    %55 = arith.mulf %50, %54 : vector<16x8x8xf32>
    %56 = arith.truncf %55 : vector<16x8x8xf32> to vector<16x8x8xbf16>
    "tpu.trace_start"() <{level = 10 : i32, message = "bqk,bkd->bqd"}> : () -> ()
    %cst_45 = arith.constant dense<0.000000e+00> : vector<16x8x8xf32>
    %57 = tpu.matmul %56, %43, %cst_45 {dimension_numbers = #tpu.dot_dimension_numbers<[2], [1], [1], [2], [0, 0, 0, 1, 1, 2], [0], [0]>} : vector<16x8x8xbf16>, vector<16x8x8xbf16>, vector<16x8x8xf32> -> vector<16x8x8xf32>
    "tpu.trace_stop"() : () -> ()
    %58 = vector.shape_cast %57 : vector<16x8x8xf32> to vector<4x4x8x8xf32>
    %59 = tpu.transpose %58, [0, 2, 1, 3] : vector<4x4x8x8xf32> -> vector<4x8x4x8xf32>
    %60 = vector.shape_cast %59 : vector<4x8x4x8xf32> to vector<32x32xf32>
    %61 = arith.truncf %60 : vector<32x32xf32> to vector<32x32xbf16>
    %62 = vector.extract_strided_slice %4 {offsets = [0, 0, 0], sizes = [1, 32, 32], strides = [1, 1, 1]} : vector<2x32x32xbf16> to vector<1x32x32xbf16>
    %63 = vector.shape_cast %62 : vector<1x32x32xbf16> to vector<32x32xbf16>
    %cst_46 = arith.constant dense<0.000000e+00> : vector<32x32xf32>
    %64 = tpu.matmul %61, %63, %cst_46 {dimension_numbers = #tpu.dot_dimension_numbers<[1], [0], [0], [1], [0, 0, 1, 1], [], []>} : vector<32x32xbf16>, vector<32x32xbf16>, vector<32x32xf32> -> vector<32x32xf32>
    %65 = vector.extract_strided_slice %5 {offsets = [0, 0, 0], sizes = [1, 1, 32], strides = [1, 1, 1]} : vector<2x1x32xf32> to vector<1x1x32xf32>
    %66 = vector.shape_cast %65 : vector<1x1x32xf32> to vector<1x32xf32>
    %67 = vector.broadcast %66 : vector<1x32xf32> to vector<32x32xf32>
    %68 = arith.addf %64, %67 : vector<32x32xf32>
    %69 = arith.addf %22, %68 : vector<32x32xf32>
    %70 = vector.extract_strided_slice %6 {offsets = [0, 0, 0], sizes = [1, 1, 32], strides = [1, 1, 1]} : vector<2x1x32xf32> to vector<1x1x32xf32>
    %71 = vector.shape_cast %70 : vector<1x1x32xf32> to vector<1x32xf32>
    %72 = vector.extract_strided_slice %7 {offsets = [0, 0, 0], sizes = [1, 1, 32], strides = [1, 1, 1]} : vector<2x1x32xf32> to vector<1x1x32xf32>
    %73 = vector.shape_cast %72 : vector<1x1x32xf32> to vector<1x32xf32>
    %cst_47 = arith.constant dense<0.000000e+00> : vector<32xf32>
    %74 = vector.multi_reduction <add>, %69, %cst_47 [1] : vector<32x32xf32> to vector<32xf32>
    %75 = vector.shape_cast %74 : vector<32xf32> to vector<32x1xf32>
    %cst_48 = arith.constant 3.200000e+01 : f32
    %76 = vector.broadcast %cst_48 : f32 to vector<32x1xf32>
    %77 = arith.divf %75, %76 : vector<32x1xf32>
    %78 = arith.mulf %69, %69 : vector<32x32xf32>
    %cst_49 = arith.constant dense<0.000000e+00> : vector<32xf32>
    %79 = vector.multi_reduction <add>, %78, %cst_49 [1] : vector<32x32xf32> to vector<32xf32>
    %80 = vector.shape_cast %79 : vector<32xf32> to vector<32x1xf32>
    %cst_50 = arith.constant 3.200000e+01 : f32
    %81 = vector.broadcast %cst_50 : f32 to vector<32x1xf32>
    %82 = arith.divf %80, %81 : vector<32x1xf32>
    %83 = arith.mulf %77, %77 : vector<32x1xf32>
    %84 = arith.subf %82, %83 : vector<32x1xf32>
    %cst_51 = arith.constant 0.000000e+00 : f32
    %85 = vector.broadcast %cst_51 : f32 to vector<32x1xf32>
    %86 = arith.maximumf %84, %85 : vector<32x1xf32>
    %87 = vector.broadcast %77 : vector<32x1xf32> to vector<32x32xf32>
    %88 = arith.subf %69, %87 : vector<32x32xf32>
    %cst_52 = arith.constant 9.99999996E-13 : f32
    %89 = vector.broadcast %cst_52 : f32 to vector<32x1xf32>
    %90 = arith.addf %86, %89 : vector<32x1xf32>
    %91 = math.rsqrt %90 : vector<32x1xf32>
    %92 = vector.broadcast %91 : vector<32x1xf32> to vector<32x32xf32>
    %93 = arith.mulf %88, %92 : vector<32x32xf32>
    %94 = vector.broadcast %71 : vector<1x32xf32> to vector<32x32xf32>
    %95 = arith.mulf %93, %94 : vector<32x32xf32>
    %96 = vector.broadcast %73 : vector<1x32xf32> to vector<32x32xf32>
    %97 = arith.addf %95, %96 : vector<32x32xf32>
    %98 = arith.truncf %97 : vector<32x32xf32> to vector<32x32xbf16>
    %99 = vector.extract_strided_slice %8 {offsets = [0, 0, 0], sizes = [1, 32, 64], strides = [1, 1, 1]} : vector<2x32x64xbf16> to vector<1x32x64xbf16>
    %100 = vector.shape_cast %99 : vector<1x32x64xbf16> to vector<32x64xbf16>
    %cst_53 = arith.constant dense<0.000000e+00> : vector<32x64xf32>
    %101 = tpu.matmul %98, %100, %cst_53 {dimension_numbers = #tpu.dot_dimension_numbers<[1], [0], [0], [1], [0, 0, 1, 1], [], []>} : vector<32x32xbf16>, vector<32x64xbf16>, vector<32x64xf32> -> vector<32x64xf32>
    %102 = vector.extract_strided_slice %9 {offsets = [0, 0, 0], sizes = [1, 1, 64], strides = [1, 1, 1]} : vector<2x1x64xf32> to vector<1x1x64xf32>
    %103 = vector.shape_cast %102 : vector<1x1x64xf32> to vector<1x64xf32>
    %104 = vector.broadcast %103 : vector<1x64xf32> to vector<32x64xf32>
    %105 = arith.addf %101, %104 : vector<32x64xf32>
    %cst_54 = arith.constant 5.000000e-01 : f32
    %106 = vector.broadcast %cst_54 : f32 to vector<32x64xf32>
    %107 = arith.mulf %106, %105 : vector<32x64xf32>
    %cst_55 = arith.constant 4.471500e-02 : f32
    %108 = vector.broadcast %cst_55 : f32 to vector<32x64xf32>
    %109 = arith.mulf %108, %105 : vector<32x64xf32>
    %110 = arith.mulf %109, %105 : vector<32x64xf32>
    %111 = arith.mulf %110, %105 : vector<32x64xf32>
    %112 = arith.addf %105, %111 : vector<32x64xf32>
    %cst_56 = arith.constant 0.797884583 : f32
    %113 = vector.broadcast %cst_56 : f32 to vector<32x64xf32>
    %114 = arith.mulf %113, %112 : vector<32x64xf32>
    %115 = math.tanh %114 : vector<32x64xf32>
    %cst_57 = arith.constant 1.000000e+00 : f32
    %116 = vector.broadcast %cst_57 : f32 to vector<32x64xf32>
    %117 = arith.addf %116, %115 : vector<32x64xf32>
    %118 = arith.mulf %107, %117 : vector<32x64xf32>
    %119 = arith.truncf %118 : vector<32x64xf32> to vector<32x64xbf16>
    %120 = vector.extract_strided_slice %10 {offsets = [0, 0, 0], sizes = [1, 64, 32], strides = [1, 1, 1]} : vector<2x64x32xbf16> to vector<1x64x32xbf16>
    %121 = vector.shape_cast %120 : vector<1x64x32xbf16> to vector<64x32xbf16>
    %cst_58 = arith.constant dense<0.000000e+00> : vector<32x32xf32>
    %122 = tpu.matmul %119, %121, %cst_58 {dimension_numbers = #tpu.dot_dimension_numbers<[1], [0], [0], [1], [0, 0, 1, 1], [], []>} : vector<32x64xbf16>, vector<64x32xbf16>, vector<32x32xf32> -> vector<32x32xf32>
    %123 = vector.extract_strided_slice %11 {offsets = [0, 0, 0], sizes = [1, 1, 32], strides = [1, 1, 1]} : vector<2x1x32xf32> to vector<1x1x32xf32>
    %124 = vector.shape_cast %123 : vector<1x1x32xf32> to vector<1x32xf32>
    %125 = vector.broadcast %124 : vector<1x32xf32> to vector<32x32xf32>
    %126 = arith.addf %122, %125 : vector<32x32xf32>
    %127 = arith.addf %97, %126 : vector<32x32xf32>
    %128 = vector.extract_strided_slice %12 {offsets = [0, 0, 0], sizes = [1, 1, 32], strides = [1, 1, 1]} : vector<2x1x32xf32> to vector<1x1x32xf32>
    %129 = vector.shape_cast %128 : vector<1x1x32xf32> to vector<1x32xf32>
    %130 = vector.extract_strided_slice %13 {offsets = [0, 0, 0], sizes = [1, 1, 32], strides = [1, 1, 1]} : vector<2x1x32xf32> to vector<1x1x32xf32>
    %131 = vector.shape_cast %130 : vector<1x1x32xf32> to vector<1x32xf32>
    %cst_59 = arith.constant dense<0.000000e+00> : vector<32xf32>
    %132 = vector.multi_reduction <add>, %127, %cst_59 [1] : vector<32x32xf32> to vector<32xf32>
    %133 = vector.shape_cast %132 : vector<32xf32> to vector<32x1xf32>
    %cst_60 = arith.constant 3.200000e+01 : f32
    %134 = vector.broadcast %cst_60 : f32 to vector<32x1xf32>
    %135 = arith.divf %133, %134 : vector<32x1xf32>
    %136 = arith.mulf %127, %127 : vector<32x32xf32>
    %cst_61 = arith.constant dense<0.000000e+00> : vector<32xf32>
    %137 = vector.multi_reduction <add>, %136, %cst_61 [1] : vector<32x32xf32> to vector<32xf32>
    %138 = vector.shape_cast %137 : vector<32xf32> to vector<32x1xf32>
    %cst_62 = arith.constant 3.200000e+01 : f32
    %139 = vector.broadcast %cst_62 : f32 to vector<32x1xf32>
    %140 = arith.divf %138, %139 : vector<32x1xf32>
    %141 = arith.mulf %135, %135 : vector<32x1xf32>
    %142 = arith.subf %140, %141 : vector<32x1xf32>
    %cst_63 = arith.constant 0.000000e+00 : f32
    %143 = vector.broadcast %cst_63 : f32 to vector<32x1xf32>
    %144 = arith.maximumf %142, %143 : vector<32x1xf32>
    %145 = vector.broadcast %135 : vector<32x1xf32> to vector<32x32xf32>
    %146 = arith.subf %127, %145 : vector<32x32xf32>
    %cst_64 = arith.constant 9.99999996E-13 : f32
    %147 = vector.broadcast %cst_64 : f32 to vector<32x1xf32>
    %148 = arith.addf %144, %147 : vector<32x1xf32>
    %149 = math.rsqrt %148 : vector<32x1xf32>
    %150 = vector.broadcast %149 : vector<32x1xf32> to vector<32x32xf32>
    %151 = arith.mulf %146, %150 : vector<32x32xf32>
    %152 = vector.broadcast %129 : vector<1x32xf32> to vector<32x32xf32>
    %153 = arith.mulf %151, %152 : vector<32x32xf32>
    %154 = vector.broadcast %131 : vector<1x32xf32> to vector<32x32xf32>
    %155 = arith.addf %153, %154 : vector<32x32xf32>
    %156 = arith.truncf %155 : vector<32x32xf32> to vector<32x32xbf16>
    %157 = vector.extract_strided_slice %2 {offsets = [1, 0, 0], sizes = [1, 32, 96], strides = [1, 1, 1]} : vector<2x32x96xbf16> to vector<1x32x96xbf16>
    %158 = vector.shape_cast %157 : vector<1x32x96xbf16> to vector<32x96xbf16>
    %cst_65 = arith.constant dense<0.000000e+00> : vector<32x96xf32>
    %159 = tpu.matmul %156, %158, %cst_65 {dimension_numbers = #tpu.dot_dimension_numbers<[1], [0], [0], [1], [0, 0, 1, 1], [], []>} : vector<32x32xbf16>, vector<32x96xbf16>, vector<32x96xf32> -> vector<32x96xf32>
    %160 = vector.extract_strided_slice %3 {offsets = [1, 0, 0], sizes = [1, 1, 96], strides = [1, 1, 1]} : vector<2x1x96xf32> to vector<1x1x96xf32>
    %161 = vector.shape_cast %160 : vector<1x1x96xf32> to vector<1x96xf32>
    %162 = vector.broadcast %161 : vector<1x96xf32> to vector<32x96xf32>
    %163 = arith.addf %159, %162 : vector<32x96xf32>
    %164 = arith.truncf %163 : vector<32x96xf32> to vector<32x96xbf16>
    %165 = vector.extract_strided_slice %164 {offsets = [0, 0], sizes = [32, 32], strides = [1, 1]} : vector<32x96xbf16> to vector<32x32xbf16>
    %166 = vector.shape_cast %165 : vector<32x32xbf16> to vector<4x8x4x8xbf16>
    %167 = tpu.transpose %166, [0, 2, 1, 3] : vector<4x8x4x8xbf16> -> vector<4x4x8x8xbf16>
    %168 = vector.shape_cast %167 : vector<4x4x8x8xbf16> to vector<16x8x8xbf16>
    %169 = vector.extract_strided_slice %164 {offsets = [0, 32], sizes = [32, 32], strides = [1, 1]} : vector<32x96xbf16> to vector<32x32xbf16>
    %170 = vector.shape_cast %169 : vector<32x32xbf16> to vector<4x8x4x8xbf16>
    %171 = tpu.transpose %170, [0, 2, 1, 3] : vector<4x8x4x8xbf16> -> vector<4x4x8x8xbf16>
    %172 = vector.shape_cast %171 : vector<4x4x8x8xbf16> to vector<16x8x8xbf16>
    %173 = vector.extract_strided_slice %164 {offsets = [0, 64], sizes = [32, 32], strides = [1, 1]} : vector<32x96xbf16> to vector<32x32xbf16>
    %174 = vector.shape_cast %173 : vector<32x32xbf16> to vector<4x8x4x8xbf16>
    %175 = tpu.transpose %174, [0, 2, 1, 3] : vector<4x8x4x8xbf16> -> vector<4x4x8x8xbf16>
    %176 = vector.shape_cast %175 : vector<4x4x8x8xbf16> to vector<16x8x8xbf16>
    "tpu.trace_start"() <{level = 10 : i32, message = "bqd,bkd->bqk"}> : () -> ()
    %cst_66 = arith.constant dense<0.000000e+00> : vector<16x8x8xf32>
    %177 = tpu.matmul %168, %172, %cst_66 {dimension_numbers = #tpu.dot_dimension_numbers<[2], [2], [1], [1], [0, 0, 0, 1, 1, 1], [0], [0]>} : vector<16x8x8xbf16>, vector<16x8x8xbf16>, vector<16x8x8xf32> -> vector<16x8x8xf32>
    "tpu.trace_stop"() : () -> ()
    %178 = arith.addf %177, %21 : vector<16x8x8xf32>
    %cst_67 = arith.constant dense<0xFF800000> : vector<16x8xf32>
    %179 = vector.multi_reduction <maximumf>, %178, %cst_67 [2] : vector<16x8x8xf32> to vector<16x8xf32>
    %180 = vector.shape_cast %179 : vector<16x8xf32> to vector<16x8x1xf32>
    %181 = vector.broadcast %180 : vector<16x8x1xf32> to vector<16x8x8xf32>
    %182 = arith.subf %178, %181 : vector<16x8x8xf32>
    %183 = math.exp %182 : vector<16x8x8xf32>
    %cst_68 = arith.constant dense<0.000000e+00> : vector<16x8xf32>
    %184 = vector.multi_reduction <add>, %183, %cst_68 [2] : vector<16x8x8xf32> to vector<16x8xf32>
    %185 = vector.shape_cast %184 : vector<16x8xf32> to vector<16x8x1xf32>
    %186 = tpu.reciprocal %185 {approx = true} : vector<16x8x1xf32> -> vector<16x8x1xf32>
    %187 = vector.broadcast %186 : vector<16x8x1xf32> to vector<16x8x8xf32>
    %188 = arith.mulf %183, %187 : vector<16x8x8xf32>
    %189 = arith.truncf %188 : vector<16x8x8xf32> to vector<16x8x8xbf16>
    "tpu.trace_start"() <{level = 10 : i32, message = "bqk,bkd->bqd"}> : () -> ()
    %cst_69 = arith.constant dense<0.000000e+00> : vector<16x8x8xf32>
    %190 = tpu.matmul %189, %176, %cst_69 {dimension_numbers = #tpu.dot_dimension_numbers<[2], [1], [1], [2], [0, 0, 0, 1, 1, 2], [0], [0]>} : vector<16x8x8xbf16>, vector<16x8x8xbf16>, vector<16x8x8xf32> -> vector<16x8x8xf32>
    "tpu.trace_stop"() : () -> ()
    %191 = vector.shape_cast %190 : vector<16x8x8xf32> to vector<4x4x8x8xf32>
    %192 = tpu.transpose %191, [0, 2, 1, 3] : vector<4x4x8x8xf32> -> vector<4x8x4x8xf32>
    %193 = vector.shape_cast %192 : vector<4x8x4x8xf32> to vector<32x32xf32>
    %194 = arith.truncf %193 : vector<32x32xf32> to vector<32x32xbf16>
    %195 = vector.extract_strided_slice %4 {offsets = [1, 0, 0], sizes = [1, 32, 32], strides = [1, 1, 1]} : vector<2x32x32xbf16> to vector<1x32x32xbf16>
    %196 = vector.shape_cast %195 : vector<1x32x32xbf16> to vector<32x32xbf16>
    %cst_70 = arith.constant dense<0.000000e+00> : vector<32x32xf32>
    %197 = tpu.matmul %194, %196, %cst_70 {dimension_numbers = #tpu.dot_dimension_numbers<[1], [0], [0], [1], [0, 0, 1, 1], [], []>} : vector<32x32xbf16>, vector<32x32xbf16>, vector<32x32xf32> -> vector<32x32xf32>
    %198 = vector.extract_strided_slice %5 {offsets = [1, 0, 0], sizes = [1, 1, 32], strides = [1, 1, 1]} : vector<2x1x32xf32> to vector<1x1x32xf32>
    %199 = vector.shape_cast %198 : vector<1x1x32xf32> to vector<1x32xf32>
    %200 = vector.broadcast %199 : vector<1x32xf32> to vector<32x32xf32>
    %201 = arith.addf %197, %200 : vector<32x32xf32>
    %202 = arith.addf %155, %201 : vector<32x32xf32>
    %203 = vector.extract_strided_slice %6 {offsets = [1, 0, 0], sizes = [1, 1, 32], strides = [1, 1, 1]} : vector<2x1x32xf32> to vector<1x1x32xf32>
    %204 = vector.shape_cast %203 : vector<1x1x32xf32> to vector<1x32xf32>
    %205 = vector.extract_strided_slice %7 {offsets = [1, 0, 0], sizes = [1, 1, 32], strides = [1, 1, 1]} : vector<2x1x32xf32> to vector<1x1x32xf32>
    %206 = vector.shape_cast %205 : vector<1x1x32xf32> to vector<1x32xf32>
    %cst_71 = arith.constant dense<0.000000e+00> : vector<32xf32>
    %207 = vector.multi_reduction <add>, %202, %cst_71 [1] : vector<32x32xf32> to vector<32xf32>
    %208 = vector.shape_cast %207 : vector<32xf32> to vector<32x1xf32>
    %cst_72 = arith.constant 3.200000e+01 : f32
    %209 = vector.broadcast %cst_72 : f32 to vector<32x1xf32>
    %210 = arith.divf %208, %209 : vector<32x1xf32>
    %211 = arith.mulf %202, %202 : vector<32x32xf32>
    %cst_73 = arith.constant dense<0.000000e+00> : vector<32xf32>
    %212 = vector.multi_reduction <add>, %211, %cst_73 [1] : vector<32x32xf32> to vector<32xf32>
    %213 = vector.shape_cast %212 : vector<32xf32> to vector<32x1xf32>
    %cst_74 = arith.constant 3.200000e+01 : f32
    %214 = vector.broadcast %cst_74 : f32 to vector<32x1xf32>
    %215 = arith.divf %213, %214 : vector<32x1xf32>
    %216 = arith.mulf %210, %210 : vector<32x1xf32>
    %217 = arith.subf %215, %216 : vector<32x1xf32>
    %cst_75 = arith.constant 0.000000e+00 : f32
    %218 = vector.broadcast %cst_75 : f32 to vector<32x1xf32>
    %219 = arith.maximumf %217, %218 : vector<32x1xf32>
    %220 = vector.broadcast %210 : vector<32x1xf32> to vector<32x32xf32>
    %221 = arith.subf %202, %220 : vector<32x32xf32>
    %cst_76 = arith.constant 9.99999996E-13 : f32
    %222 = vector.broadcast %cst_76 : f32 to vector<32x1xf32>
    %223 = arith.addf %219, %222 : vector<32x1xf32>
    %224 = math.rsqrt %223 : vector<32x1xf32>
    %225 = vector.broadcast %224 : vector<32x1xf32> to vector<32x32xf32>
    %226 = arith.mulf %221, %225 : vector<32x32xf32>
    %227 = vector.broadcast %204 : vector<1x32xf32> to vector<32x32xf32>
    %228 = arith.mulf %226, %227 : vector<32x32xf32>
    %229 = vector.broadcast %206 : vector<1x32xf32> to vector<32x32xf32>
    %230 = arith.addf %228, %229 : vector<32x32xf32>
    %231 = arith.truncf %230 : vector<32x32xf32> to vector<32x32xbf16>
    %232 = vector.extract_strided_slice %8 {offsets = [1, 0, 0], sizes = [1, 32, 64], strides = [1, 1, 1]} : vector<2x32x64xbf16> to vector<1x32x64xbf16>
    %233 = vector.shape_cast %232 : vector<1x32x64xbf16> to vector<32x64xbf16>
    %cst_77 = arith.constant dense<0.000000e+00> : vector<32x64xf32>
    %234 = tpu.matmul %231, %233, %cst_77 {dimension_numbers = #tpu.dot_dimension_numbers<[1], [0], [0], [1], [0, 0, 1, 1], [], []>} : vector<32x32xbf16>, vector<32x64xbf16>, vector<32x64xf32> -> vector<32x64xf32>
    %235 = vector.extract_strided_slice %9 {offsets = [1, 0, 0], sizes = [1, 1, 64], strides = [1, 1, 1]} : vector<2x1x64xf32> to vector<1x1x64xf32>
    %236 = vector.shape_cast %235 : vector<1x1x64xf32> to vector<1x64xf32>
    %237 = vector.broadcast %236 : vector<1x64xf32> to vector<32x64xf32>
    %238 = arith.addf %234, %237 : vector<32x64xf32>
    %cst_78 = arith.constant 5.000000e-01 : f32
    %239 = vector.broadcast %cst_78 : f32 to vector<32x64xf32>
    %240 = arith.mulf %239, %238 : vector<32x64xf32>
    %cst_79 = arith.constant 4.471500e-02 : f32
    %241 = vector.broadcast %cst_79 : f32 to vector<32x64xf32>
    %242 = arith.mulf %241, %238 : vector<32x64xf32>
    %243 = arith.mulf %242, %238 : vector<32x64xf32>
    %244 = arith.mulf %243, %238 : vector<32x64xf32>
    %245 = arith.addf %238, %244 : vector<32x64xf32>
    %cst_80 = arith.constant 0.797884583 : f32
    %246 = vector.broadcast %cst_80 : f32 to vector<32x64xf32>
    %247 = arith.mulf %246, %245 : vector<32x64xf32>
    %248 = math.tanh %247 : vector<32x64xf32>
    %cst_81 = arith.constant 1.000000e+00 : f32
    %249 = vector.broadcast %cst_81 : f32 to vector<32x64xf32>
    %250 = arith.addf %249, %248 : vector<32x64xf32>
    %251 = arith.mulf %240, %250 : vector<32x64xf32>
    %252 = arith.truncf %251 : vector<32x64xf32> to vector<32x64xbf16>
    %253 = vector.extract_strided_slice %10 {offsets = [1, 0, 0], sizes = [1, 64, 32], strides = [1, 1, 1]} : vector<2x64x32xbf16> to vector<1x64x32xbf16>
    %254 = vector.shape_cast %253 : vector<1x64x32xbf16> to vector<64x32xbf16>
    %cst_82 = arith.constant dense<0.000000e+00> : vector<32x32xf32>
    %255 = tpu.matmul %252, %254, %cst_82 {dimension_numbers = #tpu.dot_dimension_numbers<[1], [0], [0], [1], [0, 0, 1, 1], [], []>} : vector<32x64xbf16>, vector<64x32xbf16>, vector<32x32xf32> -> vector<32x32xf32>
    %256 = vector.extract_strided_slice %11 {offsets = [1, 0, 0], sizes = [1, 1, 32], strides = [1, 1, 1]} : vector<2x1x32xf32> to vector<1x1x32xf32>
    %257 = vector.shape_cast %256 : vector<1x1x32xf32> to vector<1x32xf32>
    %258 = vector.broadcast %257 : vector<1x32xf32> to vector<32x32xf32>
    %259 = arith.addf %255, %258 : vector<32x32xf32>
    %260 = arith.addf %230, %259 : vector<32x32xf32>
    %261 = vector.extract_strided_slice %12 {offsets = [1, 0, 0], sizes = [1, 1, 32], strides = [1, 1, 1]} : vector<2x1x32xf32> to vector<1x1x32xf32>
    %262 = vector.shape_cast %261 : vector<1x1x32xf32> to vector<1x32xf32>
    %263 = vector.extract_strided_slice %13 {offsets = [1, 0, 0], sizes = [1, 1, 32], strides = [1, 1, 1]} : vector<2x1x32xf32> to vector<1x1x32xf32>
    %264 = vector.shape_cast %263 : vector<1x1x32xf32> to vector<1x32xf32>
    %cst_83 = arith.constant dense<0.000000e+00> : vector<32xf32>
    %265 = vector.multi_reduction <add>, %260, %cst_83 [1] : vector<32x32xf32> to vector<32xf32>
    %266 = vector.shape_cast %265 : vector<32xf32> to vector<32x1xf32>
    %cst_84 = arith.constant 3.200000e+01 : f32
    %267 = vector.broadcast %cst_84 : f32 to vector<32x1xf32>
    %268 = arith.divf %266, %267 : vector<32x1xf32>
    %269 = arith.mulf %260, %260 : vector<32x32xf32>
    %cst_85 = arith.constant dense<0.000000e+00> : vector<32xf32>
    %270 = vector.multi_reduction <add>, %269, %cst_85 [1] : vector<32x32xf32> to vector<32xf32>
    %271 = vector.shape_cast %270 : vector<32xf32> to vector<32x1xf32>
    %cst_86 = arith.constant 3.200000e+01 : f32
    %272 = vector.broadcast %cst_86 : f32 to vector<32x1xf32>
    %273 = arith.divf %271, %272 : vector<32x1xf32>
    %274 = arith.mulf %268, %268 : vector<32x1xf32>
    %275 = arith.subf %273, %274 : vector<32x1xf32>
    %cst_87 = arith.constant 0.000000e+00 : f32
    %276 = vector.broadcast %cst_87 : f32 to vector<32x1xf32>
    %277 = arith.maximumf %275, %276 : vector<32x1xf32>
    %278 = vector.broadcast %268 : vector<32x1xf32> to vector<32x32xf32>
    %279 = arith.subf %260, %278 : vector<32x32xf32>
    %cst_88 = arith.constant 9.99999996E-13 : f32
    %280 = vector.broadcast %cst_88 : f32 to vector<32x1xf32>
    %281 = arith.addf %277, %280 : vector<32x1xf32>
    %282 = math.rsqrt %281 : vector<32x1xf32>
    %283 = vector.broadcast %282 : vector<32x1xf32> to vector<32x32xf32>
    %284 = arith.mulf %279, %283 : vector<32x32xf32>
    %285 = vector.broadcast %262 : vector<1x32xf32> to vector<32x32xf32>
    %286 = arith.mulf %284, %285 : vector<32x32xf32>
    %287 = vector.broadcast %264 : vector<1x32xf32> to vector<32x32xf32>
    %288 = arith.addf %286, %287 : vector<32x32xf32>
    %289 = vector.shape_cast %288 : vector<32x32xf32> to vector<4x8x32xf32>
    %290 = vector.shape_cast %1 : vector<4x8xf32> to vector<4x1x8xf32>
    %291 = arith.truncf %290 : vector<4x1x8xf32> to vector<4x1x8xbf16>
    %292 = arith.truncf %289 : vector<4x8x32xf32> to vector<4x8x32xbf16>
    "tpu.trace_start"() <{level = 10 : i32, message = "nqs,nsd->nqd"}> : () -> ()
    %cst_89 = arith.constant dense<0.000000e+00> : vector<4x1x32xf32>
    %293 = tpu.matmul %291, %292, %cst_89 {dimension_numbers = #tpu.dot_dimension_numbers<[2], [1], [1], [2], [0, 0, 0, 1, 1, 2], [0], [0]>} : vector<4x1x8xbf16>, vector<4x8x32xbf16>, vector<4x1x32xf32> -> vector<4x1x32xf32>
    "tpu.trace_stop"() : () -> ()
    %294 = vector.shape_cast %293 : vector<4x1x32xf32> to vector<4x32xf32>
    %cst_90 = arith.constant dense<0.000000e+00> : vector<4xf32>
    %295 = vector.multi_reduction <add>, %1, %cst_90 [1] : vector<4x8xf32> to vector<4xf32>
    %296 = vector.shape_cast %295 : vector<4xf32> to vector<4x1xf32>
    %cst_91 = arith.constant 1.000000e+00 : f32
    %297 = vector.broadcast %cst_91 : f32 to vector<4x1xf32>
    %298 = arith.maximumf %296, %297 : vector<4x1xf32>
    %299 = vector.broadcast %298 : vector<4x1xf32> to vector<4x32xf32>
    %300 = arith.divf %294, %299 : vector<4x32xf32>
    %c0_92 = arith.constant 0 : index
    %c0_93 = arith.constant 0 : index
    %301 = vector.load %arg14[%c0_92, %c0_93] : memref<4x32xf32, #tpu.memory_space<vmem>>, vector<4x32xf32>
    tpu.vector_store %arg14[%c0_92, %c0_93], %300 {strides = array<i32>} : memref<4x32xf32, #tpu.memory_space<vmem>>, vector<4x32xf32>,
    return
  }
}

</mosaic_0001>

<llo_original>
// kernel: tpu_custom_call.1
$region0: #{tpu_custom_call.1}
  #allocation0 [shape = 'u32[]', space=smem, size = 0x4, offset = 0x4, fixed_abs, tag = 'smem constant byte address 0x4 - core index']
  #allocation1 [shape = 'u32[144,128]{1,0:T(1,128)}', space=vmem, size = 0x12000, scoped, tag = 'internal scratch']
  %s0 = inlined_call_operand.vmem [shape: f32[4,8,32], index: 0, kind: input, shape index: {}]
  %s1 = inlined_call_operand.hbm [shape: f32[4,8], index: 1, kind: input, shape index: {}]
  %s2 = inlined_call_operand.vmem [shape: bf16[2,32,96], index: 2, kind: input, shape index: {}]
  %s3 = inlined_call_operand.vmem [shape: f32[2,1,96], index: 3, kind: input, shape index: {}]
  %s4 = inlined_call_operand.vmem [shape: bf16[2,32,32], index: 4, kind: input, shape index: {}]
  %s5 = inlined_call_operand.vmem [shape: f32[2,1,32], index: 5, kind: input, shape index: {}]
  %s6 = inlined_call_operand.hbm [shape: f32[2,1,32], index: 6, kind: input, shape index: {}]
  %s7 = inlined_call_operand.hbm [shape: f32[2,1,32], index: 7, kind: input, shape index: {}]
  %s8 = inlined_call_operand.hbm [shape: bf16[2,32,64], index: 8, kind: input, shape index: {}]
  %s9 = inlined_call_operand.hbm [shape: f32[2,1,64], index: 9, kind: input, shape index: {}]
  %s10 = inlined_call_operand.vmem [shape: bf16[2,64,32], index: 10, kind: input, shape index: {}]
  %s11 = inlined_call_operand.vmem [shape: f32[2,1,32], index: 11, kind: input, shape index: {}]
  %s12 = inlined_call_operand.vmem [shape: f32[2,1,32], index: 12, kind: input, shape index: {}]
  %s13 = inlined_call_operand.vmem [shape: f32[2,1,32], index: 13, kind: input, shape index: {}]
  %s14 = inlined_call_operand.hbm [shape: f32[4,32], index: 14, kind: output, shape index: {}]
  %s15 = sld [smem:[#allocation0]]
  $region86: #{tpu_custom_call.1} parent=0
    _
  %s17 = ssub.s32 1, %s15
  %s18 = scalar_select 0, %s17, %s15
  $region1: #{tpu_custom_call.1} parent=0
    #allocation2 [shape = 'u8[2048]{0}', space=vmem, size = 0x800, scoped, tag = 'input window, operand 1, single buffered']
    #allocation3 [shape = 's32[1]{0}', space=sflag, size = 0x4, scoped, tag = 'scoped memory for tpu_custom_call.1']
    #allocation4 [shape = 's32[1]{0}', space=sflag, size = 0x4, scoped, tag = 'scoped memory for tpu_custom_call.1']
    #allocation5 [shape = 'u8[1024]{0}', space=vmem, size = 0x400, scoped, tag = 'input window, operand 6, single buffered']
    #allocation6 [shape = 's32[1]{0}', space=sflag, size = 0x4, scoped, tag = 'scoped memory for tpu_custom_call.1']
    #allocation7 [shape = 'u8[1024]{0}', space=vmem, size = 0x400, scoped, tag = 'input window, operand 7, single buffered']
    #allocation8 [shape = 'u8[16384]{0}', space=vmem, size = 0x4000, scoped, tag = 'input window, operand 8, single buffered']
    #allocation9 [shape = 's32[1]{0}', space=sflag, size = 0x4, scoped, tag = 'scoped memory for tpu_custom_call.1']
    #allocation10 [shape = 'u8[1024]{0}', space=vmem, size = 0x400, scoped, tag = 'input window, operand 9, single buffered']
    #allocation11 [shape = 'u8[2048]{0}', space=vmem, size = 0x800, scoped, tag = 'output window, operand 0, single buffered']
    %19 = vsyncpa [#allocation3], 0
    %20 = vsyncpa [#allocation6], 0
    %21 = vsyncpa [#allocation9], 0
    %22 = vsyncpa [#allocation4], 0
    // Predicated region
    $region2: #{tpu_custom_call.1} parent=1 // pred_check
      _
    $region3: #{tpu_custom_call.1} parent=1 // pred_check_branch
      %24 = sbr.rel (0) target = $region5
    $region4: #{tpu_custom_call.1} parent=1 // pred_region
      _
    $region5: #{tpu_custom_call.1} parent=1 // pred_fallthru
      _
    // Predicated region
    $region6: #{tpu_custom_call.1} parent=1 // pred_check
      _
    $region7: #{tpu_custom_call.1} parent=1 // pred_check_branch
      %26 = sbr.rel (0) target = $region9
    $region8: #{tpu_custom_call.1} parent=1 // pred_region
      %s28 = ssub.s32 64, 64
      %29 = vsyncadd [#allocation3], %s28
      %s31 = sshll.u32 [#allocation2], 4
      %s32 = int_to_ptr.vmem [resolvable:$true] %s31
      %34 = dma.hbm_to_vmem [thread:$0]  %s1, 64, %s32, [#allocation3]
    $region9: #{tpu_custom_call.1} parent=1 // pred_fallthru
      _
    // Predicated region
    $region10: #{tpu_custom_call.1} parent=1 // pred_check
      _
    $region11: #{tpu_custom_call.1} parent=1 // pred_check_branch
      %36 = sbr.rel (0) target = $region13
    $region12: #{tpu_custom_call.1} parent=1 // pred_region
      _
    $region13: #{tpu_custom_call.1} parent=1 // pred_fallthru
      _
    // Predicated region
    $region14: #{tpu_custom_call.1} parent=1 // pred_check
      _
    $region15: #{tpu_custom_call.1} parent=1 // pred_check_branch
      %38 = sbr.rel (0) target = $region17
    $region16: #{tpu_custom_call.1} parent=1 // pred_region
      _
    $region17: #{tpu_custom_call.1} parent=1 // pred_fallthru
      _
    // Predicated region
    $region18: #{tpu_custom_call.1} parent=1 // pred_check
      _
    $region19: #{tpu_custom_call.1} parent=1 // pred_check_branch
      %40 = sbr.rel (0) target = $region21
    $region20: #{tpu_custom_call.1} parent=1 // pred_region
      _
    $region21: #{tpu_custom_call.1} parent=1 // pred_fallthru
      _
    // Predicated region
    $region22: #{tpu_custom_call.1} parent=1 // pred_check
      _
    $region23: #{tpu_custom_call.1} parent=1 // pred_check_branch
      %42 = sbr.rel (0) target = $region25
    $region24: #{tpu_custom_call.1} parent=1 // pred_region
      _
    $region25: #{tpu_custom_call.1} parent=1 // pred_fallthru
      _
    // Predicated region
    $region26: #{tpu_custom_call.1} parent=1 // pred_check
      _
    $region27: #{tpu_custom_call.1} parent=1 // pred_check_branch
      %44 = sbr.rel (0) target = $region29
    $region28: #{tpu_custom_call.1} parent=1 // pred_region
      %s46 = ssub.s32 32, 32
      %47 = vsyncadd [#allocation6], %s46
      %s48 = sshll.u32 [#allocation5], 4
      %s49 = int_to_ptr.vmem [resolvable:$true] %s48
      %54 = dma.hbm_to_vmem [thread:$0]  %s6, 32, %s49, [#allocation6], 16, 16, 1
    $region29: #{tpu_custom_call.1} parent=1 // pred_fallthru
      _
    // Predicated region
    $region30: #{tpu_custom_call.1} parent=1 // pred_check
      _
    $region31: #{tpu_custom_call.1} parent=1 // pred_check_branch
      %56 = sbr.rel (0) target = $region33
    $region32: #{tpu_custom_call.1} parent=1 // pred_region
      %s58 = ssub.s32 32, 32
      %59 = vsyncadd [#allocation6], %s58
      %s60 = sshll.u32 [#allocation7], 4
      %s61 = int_to_ptr.vmem [resolvable:$true] %s60
      %66 = dma.hbm_to_vmem [thread:$0]  %s7, 32, %s61, [#allocation6], 16, 16, 1
    $region33: #{tpu_custom_call.1} parent=1 // pred_fallthru
      _
    // Predicated region
    $region34: #{tpu_custom_call.1} parent=1 // pred_check
      _
    $region35: #{tpu_custom_call.1} parent=1 // pred_check_branch
      %68 = sbr.rel (0) target = $region37
    $region36: #{tpu_custom_call.1} parent=1 // pred_region
      %s70 = ssub.s32 512, 512
      %71 = vsyncadd [#allocation9], %s70
      %s72 = sshll.u32 [#allocation8], 4
      %s73 = int_to_ptr.vmem [resolvable:$true] %s72
      %78 = dma.hbm_to_vmem [thread:$0]  %s8, 512, %s73, [#allocation9], 64, 64, 4
    $region37: #{tpu_custom_call.1} parent=1 // pred_fallthru
      _
    // Predicated region
    $region38: #{tpu_custom_call.1} parent=1 // pred_check
      _
    $region39: #{tpu_custom_call.1} parent=1 // pred_check_branch
      %80 = sbr.rel (0) target = $region41
    $region40: #{tpu_custom_call.1} parent=1 // pred_region
      %s82 = ssub.s32 32, 32
      %83 = vsyncadd [#allocation9], %s82
      %s84 = sshll.u32 [#allocation10], 4
      %s85 = int_to_ptr.vmem [resolvable:$true] %s84
      %90 = dma.hbm_to_vmem [thread:$0]  %s9, 32, %s85, [#allocation9], 16, 16, 1
    $region41: #{tpu_custom_call.1} parent=1 // pred_fallthru
      _
    // Predicated region
    $region42: #{tpu_custom_call.1} parent=1 // pred_check
      _
    $region43: #{tpu_custom_call.1} parent=1 // pred_check_branch
      %92 = sbr.rel (0) target = $region45
    $region44: #{tpu_custom_call.1} parent=1 // pred_region
      _
    $region45: #{tpu_custom_call.1} parent=1 // pred_fallthru
      _
    // Predicated region
    $region46: #{tpu_custom_call.1} parent=1 // pred_check
      _
    $region47: #{tpu_custom_call.1} parent=1 // pred_check_branch
      %94 = sbr.rel (0) target = $region49
    $region48: #{tpu_custom_call.1} parent=1 // pred_region
      _
    $region49: #{tpu_custom_call.1} parent=1 // pred_fallthru
      _
    // Predicated region
    $region50: #{tpu_custom_call.1} parent=1 // pred_check
      _
    $region51: #{tpu_custom_call.1} parent=1 // pred_check_branch
      %96 = sbr.rel (0) target = $region53
    $region52: #{tpu_custom_call.1} parent=1 // pred_region
      _
    $region53: #{tpu_custom_call.1} parent=1 // pred_fallthru
      _
    // Predicated region
    $region54: #{tpu_custom_call.1} parent=1 // pred_check
      _
    $region55: #{tpu_custom_call.1} parent=1 // pred_check_branch
      %98 = sbr.rel (0) target = $region57
    $region56: #{tpu_custom_call.1} parent=1 // pred_region
      _
    $region57: #{tpu_custom_call.1} parent=1 // pred_fallthru
      _
    // Predicated region
    $region58: #{tpu_custom_call.1} parent=1 // pred_check
      _
    $region59: #{tpu_custom_call.1} parent=1 // pred_check_branch
      %100 = sbr.rel (0) target = $region61
    $region60: #{tpu_custom_call.1} parent=1 // pred_region
      %101 = dma.done [#allocation3], 64
    $region61: #{tpu_custom_call.1} parent=1 // pred_fallthru
      _
    // Predicated region
    $region62: #{tpu_custom_call.1} parent=1 // pred_check
      _
    $region63: #{tpu_custom_call.1} parent=1 // pred_check_branch
      %103 = sbr.rel (0) target = $region65
    $region64: #{tpu_custom_call.1} parent=1 // pred_region
      %104 = dma.done [#allocation6], 32
    $region65: #{tpu_custom_call.1} parent=1 // pred_fallthru
      _
    // Predicated region
    $region66: #{tpu_custom_call.1} parent=1 // pred_check
      _
    $region67: #{tpu_custom_call.1} parent=1 // pred_check_branch
      %106 = sbr.rel (0) target = $region69
    $region68: #{tpu_custom_call.1} parent=1 // pred_region
      %107 = dma.done [#allocation6], 32
    $region69: #{tpu_custom_call.1} parent=1 // pred_fallthru
      _
    // Predicated region
    $region70: #{tpu_custom_call.1} parent=1 // pred_check
      _
    $region71: #{tpu_custom_call.1} parent=1 // pred_check_branch
      %109 = sbr.rel (0) target = $region73
    $region72: #{tpu_custom_call.1} parent=1 // pred_region
      %110 = dma.done [#allocation9], 512
    $region73: #{tpu_custom_call.1} parent=1 // pred_fallthru
      _
    // Predicated region
    $region74: #{tpu_custom_call.1} parent=1 // pred_check
      _
    $region75: #{tpu_custom_call.1} parent=1 // pred_check_branch
      %112 = sbr.rel (0) target = $region77
    $region76: #{tpu_custom_call.1} parent=1 // pred_region
      %113 = dma.done [#allocation9], 32
    $region77: #{tpu_custom_call.1} parent=1 // pred_fallthru
      _
    %v115 = vld [vmem:[%s0] sm:$0xff]
    %v116 = vld [vmem:[%s0 + $0x8] sm:$0xff]
    %v117 = vld [vmem:[%s0 + $0x10] sm:$0xff]
    %v118 = vld [vmem:[%s0 + $0x18] sm:$0xff]
    %v119 = vld [vmem:[#allocation2] sm:$0xf]
    %v120 = vld [vmem:[%s2] sm:$0xf]
    %v121 = vld [vmem:[%s2 + $0x4] sm:$0xf]
    %v122 = vld [vmem:[%s2 + $0x8] sm:$0xf]
    %v123 = vld [vmem:[%s2 + $0xc] sm:$0xf]
    %v124 = vld [vmem:[%s2 + $0x10] sm:$0xf]
    %v125 = vld [vmem:[%s2 + $0x14] sm:$0xf]
    %v126 = vld [vmem:[%s2 + $0x18] sm:$0xf]
    %v127 = vld [vmem:[%s2 + $0x1c] sm:$0xf]
    %v128 = vld [vmem:[%s3] sm:$0x1]
    %v129 = vld [vmem:[%s3 + $0x1] sm:$0x1]
    %v130 = vld [vmem:[%s4] sm:$0xf]
    %v131 = vld [vmem:[%s4 + $0x4] sm:$0xf]
    %v132 = vld [vmem:[%s4 + $0x8] sm:$0xf]
    %v133 = vld [vmem:[%s4 + $0xc] sm:$0xf]
    %v134 = vld [vmem:[%s4 + $0x10] sm:$0xf]
    %v135 = vld [vmem:[%s4 + $0x14] sm:$0xf]
    %v136 = vld [vmem:[%s4 + $0x18] sm:$0xf]
    %v137 = vld [vmem:[%s4 + $0x1c] sm:$0xf]
    %v138 = vld [vmem:[%s5] sm:$0x1]
    %v139 = vld [vmem:[%s5 + $0x1] sm:$0x1]
    %v140 = vld [vmem:[#allocation5] sm:$0x1]
    %v141 = vld [vmem:[#allocation5 + $0x1] sm:$0x1]
    %v142 = vld [vmem:[#allocation7] sm:$0x1]
    %v143 = vld [vmem:[#allocation7 + $0x1] sm:$0x1]
    %v144 = vld [vmem:[#allocation8] sm:$0xf]
    %v145 = vld [vmem:[#allocation8 + $0x4] sm:$0xf]
    %v146 = vld [vmem:[#allocation8 + $0x8] sm:$0xf]
    %v147 = vld [vmem:[#allocation8 + $0xc] sm:$0xf]
    %v148 = vld [vmem:[#allocation8 + $0x10] sm:$0xf]
    %v149 = vld [vmem:[#allocation8 + $0x14] sm:$0xf]
    %v150 = vld [vmem:[#allocation8 + $0x18] sm:$0xf]
    %v151 = vld [vmem:[#allocation8 + $0x1c] sm:$0xf]
    %v152 = vld [vmem:[#allocation10] sm:$0x1]
    %v153 = vld [vmem:[#allocation10 + $0x1] sm:$0x1]
    %v154 = vld [vmem:[%s10] sm:$0xf]
    %v155 = vld [vmem:[%s10 + $0x4] sm:$0xf]
    %v156 = vld [vmem:[%s10 + $0x8] sm:$0xf]
    %v157 = vld [vmem:[%s10 + $0xc] sm:$0xf]
    %v158 = vld [vmem:[%s10 + $0x10] sm:$0xf]
    %v159 = vld [vmem:[%s10 + $0x14] sm:$0xf]
    %v160 = vld [vmem:[%s10 + $0x18] sm:$0xf]
    %v161 = vld [vmem:[%s10 + $0x1c] sm:$0xf]
    %v162 = vld [vmem:[%s10 + $0x20] sm:$0xf]
    %v163 = vld [vmem:[%s10 + $0x24] sm:$0xf]
    %v164 = vld [vmem:[%s10 + $0x28] sm:$0xf]
    %v165 = vld [vmem:[%s10 + $0x2c] sm:$0xf]
    %v166 = vld [vmem:[%s10 + $0x30] sm:$0xf]
    %v167 = vld [vmem:[%s10 + $0x34] sm:$0xf]
    %v168 = vld [vmem:[%s10 + $0x38] sm:$0xf]
    %v169 = vld [vmem:[%s10 + $0x3c] sm:$0xf]
    %v170 = vld [vmem:[%s11] sm:$0x1]
    %v171 = vld [vmem:[%s11 + $0x1] sm:$0x1]
    %v172 = vld [vmem:[%s12] sm:$0x1]
    %v173 = vld [vmem:[%s12 + $0x1] sm:$0x1]
    %v174 = vld [vmem:[%s13] sm:$0x1]
    %v175 = vld [vmem:[%s13 + $0x1] sm:$0x1]
    %v176 = vsub.f32 1.0, %v119
    %v177 = vmul.f32 %v176, -1e+09
    %v180 = vunpack.c.l.s4 1966171168
    %v181 = vunpack.c.0.s8 %v180
    %v182 = vlaneseq
    %v183 = vshrl.u32 %v182, 7
    %v184 = vsub.s32 %v181, %v183
    %v185 = vrot.slane %v177, %v184
    %v186 = vcombine.high %v185, %v185
    %v188 = vunpack.c.l.s4 1966171168
    %v189 = vunpack.c.0.s8 %v188
    %v190 = vlaneseq
    %v191 = vshrl.u32 %v190, 7
    %v192 = vsub.s32 %v189, %v191
    %v193 = vrot.slane %v185, %v192
    %v195 = vunpack.c.l.s4 1966171168
    %v196 = vunpack.c.0.s8 %v195
    %v197 = vlaneseq
    %v198 = vshrl.u32 %v197, 7
    %v199 = vsub.s32 %v196, %v198
    %v200 = vrot.slane %v186, %v199
    %v201 = vcombine.high %v193, %v193
    %v202 = vcombine.high %v200, %v200
    %v203 = vlaneseq
    %v204 = vshrl.u32 %v203, 7
    %v205 = vsub.s32 0, %v204
    %v206 = vrot.slane %v193, %v205
    %v207 = vlaneseq
    %v208 = vshrl.u32 %v207, 7
    %v209 = vsub.s32 0, %v208
    %v210 = vrot.slane %v200, %v209
    %v211 = vlaneseq
    %v212 = vshrl.u32 %v211, 7
    %v213 = vsub.s32 0, %v212
    %v214 = vrot.slane %v201, %v213
    %v215 = vlaneseq
    %v216 = vshrl.u32 %v215, 7
    %v217 = vsub.s32 0, %v216
    %v218 = vrot.slane %v202, %v217
    %v223 = vpack.c.bf16 %v116, %v115
    %v224 = vpack.c.bf16 %v118, %v117
    %v226 = vlaneseq
    %v227 = vshrl.u32 %v226, 7
    %v228 = vsub.s32 0, %v227
    %v229 = vrot.slane %v128, %v228
    %v235 = vunpack.c.l.b16 %v120
    %v236 = vunpack.c.l.b16 %v121
    %v237 = vunpack.c.l.b16 %v122
    %v238 = vunpack.c.l.b16 %v123
    %v239 = vpack.c.b16 %v236, %v235
    %v240 = vpack.c.b16 %v238, %v237
    %vm243 = vcmask 261120
    %v245 = vsel %vm243, %v223, 0
    %v248 = vsel %vm243, %v224, 0
    %250 = vmatprep.subr.bf16.mxu0 0
    %251 = vmatpush1.bf16.msra.mxu0 %v239
    %252 = vmatprep.subr.bf16.mxu0 0
    %253 = vmatpush1.bf16.msra.mxu0 %v240
    %254 = vmatprep.subr.bf16.mxu0 0
    %255 = vmatpush1.bf16.msra.mxu0 0
    %256 = vmatprep.subr.bf16.mxu0 0
    %257 = vmatpush1.bf16.msra.mxu0 0
    %258 = vmatprep.subr.bf16.mxu0 0
    %259 = vmatpush1.bf16.msra.mxu0 0
    %260 = vmatprep.subr.bf16.mxu0 0
    %261 = vmatpush1.bf16.msra.mxu0 0
    %262 = vmatprep.subr.bf16.mxu0 0
    %263 = vmatpush1.bf16.msra.mxu0 0
    %264 = vmatprep.subr.bf16.mxu0 0
    %265 = vmatpush1.bf16.msra.mxu0 0
    %266 = vmatprep.subr.bf16.mxu0 0
    %267 = vmatpush1.bf16.msra.mxu0 0
    %268 = vmatprep.subr.bf16.mxu0 0
    %269 = vmatpush1.bf16.msra.mxu0 0
    %270 = vmatprep.subr.bf16.mxu0 0
    %271 = vmatpush1.bf16.msra.mxu0 0
    %272 = vmatprep.subr.bf16.mxu0 0
    %273 = vmatpush1.bf16.msra.mxu0 0
    %274 = vmatprep.subr.bf16.mxu0 0
    %275 = vmatpush1.bf16.msra.mxu0 0
    %276 = vmatprep.subr.bf16.mxu0 0
    %277 = vmatpush1.bf16.msra.mxu0 0
    %278 = vmatprep.subr.bf16.mxu0 0
    %279 = vmatpush1.bf16.msra.mxu0 0
    %280 = vmatprep.subr.bf16.mxu0 0
    %281 = vmatpush1.bf16.msra.mxu0 0
    %282 = vmatprep.mubr.bf16.mxu0 0
    %283 = vmatmul.mubr.bf16.gmra.mrb[0].mxu0 %v245
    %v284 = vpop.f32.mrb[0].mxu0
    %v285 = vadd.f32 %v229, %v284
    %v286 = vpop.f32.mrb[0].mxu0
    %v287 = vpop.f32.mrb[0].mxu0
    %v288 = vadd.f32 %v229, %v287
    %v289 = vpop.f32.mrb[0].mxu0
    %290 = vmatprep.mubr.bf16.mxu0 0
    %291 = vmatmul.mubr.bf16.gmra.mrb[0].mxu0 %v248
    %v292 = vpop.f32.mrb[0].mxu0
    %v293 = vadd.f32 %v229, %v292
    %v294 = vpop.f32.mrb[0].mxu0
    %v295 = vpop.f32.mrb[0].mxu0
    %v296 = vadd.f32 %v229, %v295
    %v297 = vpop.f32.mrb[0].mxu0
    %298 = vdwg.mxu0
    %v299 = vpack.c.bf16 %v288, %v285
    %v300 = vpack.c.bf16 %v296, %v293
    %303 = vrot.lane.b32.xlu0 %v299, 120
    %v304 = vpop.permute.xlu0 %303
    %305 = vrot.lane.b32.xlu0 %v300, 120
    %v306 = vpop.permute.xlu0 %305
    %307 = vrot.lane.b32.xlu0 %v299, 112
    %v308 = vpop.permute.xlu0 %307
    %309 = vrot.lane.b32.xlu0 %v300, 112
    %v310 = vpop.permute.xlu0 %309
    %311 = vrot.lane.b32.xlu0 %v299, 104
    %v312 = vpop.permute.xlu0 %311
    %313 = vrot.lane.b32.xlu0 %v300, 104
    %v314 = vpop.permute.xlu0 %313
    %v317 = vpack.i.b16 %v304, %v299
    %v319 = vshrl.u32 %v299, 16
    %v320 = vshrl.u32 %v304, 16
    %v321 = vpack.i.b16 %v320, %v319
    %v325 = vpack.i.b16 %v312, %v308
    %v327 = vshrl.u32 %v308, 16
    %v328 = vshrl.u32 %v312, 16
    %v329 = vpack.i.b16 %v328, %v327
    %v332 = vpack.i.b16 0, 0
    %v334 = vshrl.u32 0, 16
    %v335 = vpack.i.b16 %v334, %v334
    %v339 = vpack.i.b16 %v306, %v300
    %v341 = vshrl.u32 %v300, 16
    %v342 = vshrl.u32 %v306, 16
    %v343 = vpack.i.b16 %v342, %v341
    %v347 = vpack.i.b16 %v314, %v310
    %v349 = vshrl.u32 %v310, 16
    %v350 = vshrl.u32 %v314, 16
    %v351 = vpack.i.b16 %v350, %v349
    %v353 = vcombine.high %v317, %v332
    %v355 = vunpack.c.l.s4 1983009808
    %v356 = vunpack.c.0.s8 %v355
    %v357 = vlaneseq
    %v358 = vshrl.u32 %v357, 7
    %v359 = vsub.s32 %v356, %v358
    %v360 = vrot.slane %v317, %v359
    %v362 = vunpack.c.l.s4 1983009808
    %v363 = vunpack.c.0.s8 %v362
    %v364 = vlaneseq
    %v365 = vshrl.u32 %v364, 7
    %v366 = vsub.s32 %v363, %v365
    %v367 = vrot.slane %v353, %v366
    %v368 = vcombine.high %v325, %v332
    %v370 = vunpack.c.l.s4 1983009808
    %v371 = vunpack.c.0.s8 %v370
    %v372 = vlaneseq
    %v373 = vshrl.u32 %v372, 7
    %v374 = vsub.s32 %v371, %v373
    %v375 = vrot.slane %v325, %v374
    %v377 = vunpack.c.l.s4 1983009808
    %v378 = vunpack.c.0.s8 %v377
    %v379 = vlaneseq
    %v380 = vshrl.u32 %v379, 7
    %v381 = vsub.s32 %v378, %v380
    %v382 = vrot.slane %v368, %v381
    %v383 = vcombine.low %v360, %v375
    %v384 = vcombine.high %v360, %v375
    %v386 = vunpack.c.l.s4 1934713408
    %v387 = vunpack.c.0.s8 %v386
    %v388 = vlaneseq
    %v389 = vshrl.u32 %v388, 7
    %v390 = vsub.s32 %v387, %v389
    %v391 = vrot.slane %v383, %v390
    %v393 = vunpack.c.l.s4 1934713408
    %v394 = vunpack.c.0.s8 %v393
    %v395 = vlaneseq
    %v396 = vshrl.u32 %v395, 7
    %v397 = vsub.s32 %v394, %v396
    %v398 = vrot.slane %v384, %v397
    %v399 = vcombine.low %v367, %v382
    %v400 = vcombine.high %v367, %v382
    %v402 = vunpack.c.l.s4 1934713408
    %v403 = vunpack.c.0.s8 %v402
    %v404 = vlaneseq
    %v405 = vshrl.u32 %v404, 7
    %v406 = vsub.s32 %v403, %v405
    %v407 = vrot.slane %v399, %v406
    %v409 = vunpack.c.l.s4 1934713408
    %v410 = vunpack.c.0.s8 %v409
    %v411 = vlaneseq
    %v412 = vshrl.u32 %v411, 7
    %v413 = vsub.s32 %v410, %v412
    %v414 = vrot.slane %v400, %v413
    %v415 = vcombine.high %v391, 0
    %v416 = vcombine.high %v398, 0
    %v417 = vcombine.high %v407, 0
    %v418 = vcombine.high %v414, 0
    %v419 = vcombine.high %v321, %v335
    %v421 = vunpack.c.l.s4 1983009808
    %v422 = vunpack.c.0.s8 %v421
    %v423 = vlaneseq
    %v424 = vshrl.u32 %v423, 7
    %v425 = vsub.s32 %v422, %v424
    %v426 = vrot.slane %v321, %v425
    %v428 = vunpack.c.l.s4 1983009808
    %v429 = vunpack.c.0.s8 %v428
    %v430 = vlaneseq
    %v431 = vshrl.u32 %v430, 7
    %v432 = vsub.s32 %v429, %v431
    %v433 = vrot.slane %v419, %v432
    %v434 = vcombine.high %v329, %v335
    %v436 = vunpack.c.l.s4 1983009808
    %v437 = vunpack.c.0.s8 %v436
    %v438 = vlaneseq
    %v439 = vshrl.u32 %v438, 7
    %v440 = vsub.s32 %v437, %v439
    %v441 = vrot.slane %v329, %v440
    %v443 = vunpack.c.l.s4 1983009808
    %v444 = vunpack.c.0.s8 %v443
    %v445 = vlaneseq
    %v446 = vshrl.u32 %v445, 7
    %v447 = vsub.s32 %v444, %v446
    %v448 = vrot.slane %v434, %v447
    %v449 = vcombine.low %v426, %v441
    %v450 = vcombine.high %v426, %v441
    %v452 = vunpack.c.l.s4 1934713408
    %v453 = vunpack.c.0.s8 %v452
    %v454 = vlaneseq
    %v455 = vshrl.u32 %v454, 7
    %v456 = vsub.s32 %v453, %v455
    %v457 = vrot.slane %v449, %v456
    %v459 = vunpack.c.l.s4 1934713408
    %v460 = vunpack.c.0.s8 %v459
    %v461 = vlaneseq
    %v462 = vshrl.u32 %v461, 7
    %v463 = vsub.s32 %v460, %v462
    %v464 = vrot.slane %v450, %v463
    %v465 = vcombine.low %v433, %v448
    %v466 = vcombine.high %v433, %v448
    %v468 = vunpack.c.l.s4 1934713408
    %v469 = vunpack.c.0.s8 %v468
    %v470 = vlaneseq
    %v471 = vshrl.u32 %v470, 7
    %v472 = vsub.s32 %v469, %v471
    %v473 = vrot.slane %v465, %v472
    %v475 = vunpack.c.l.s4 1934713408
    %v476 = vunpack.c.0.s8 %v475
    %v477 = vlaneseq
    %v478 = vshrl.u32 %v477, 7
    %v479 = vsub.s32 %v476, %v478
    %v480 = vrot.slane %v466, %v479
    %v481 = vcombine.high %v457, 0
    %v482 = vcombine.high %v464, 0
    %v483 = vcombine.high %v473, 0
    %v484 = vcombine.high %v480, 0
    %v485 = vcombine.high %v339, %v332
    %v487 = vunpack.c.l.s4 1983009808
    %v488 = vunpack.c.0.s8 %v487
    %v489 = vlaneseq
    %v490 = vshrl.u32 %v489, 7
    %v491 = vsub.s32 %v488, %v490
    %v492 = vrot.slane %v339, %v491
    %v494 = vunpack.c.l.s4 1983009808
    %v495 = vunpack.c.0.s8 %v494
    %v496 = vlaneseq
    %v497 = vshrl.u32 %v496, 7
    %v498 = vsub.s32 %v495, %v497
    %v499 = vrot.slane %v485, %v498
    %v500 = vcombine.high %v347, %v332
    %v502 = vunpack.c.l.s4 1983009808
    %v503 = vunpack.c.0.s8 %v502
    %v504 = vlaneseq
    %v505 = vshrl.u32 %v504, 7
    %v506 = vsub.s32 %v503, %v505
    %v507 = vrot.slane %v347, %v506
    %v509 = vunpack.c.l.s4 1983009808
    %v510 = vunpack.c.0.s8 %v509
    %v511 = vlaneseq
    %v512 = vshrl.u32 %v511, 7
    %v513 = vsub.s32 %v510, %v512
    %v514 = vrot.slane %v500, %v513
    %v515 = vcombine.low %v492, %v507
    %v516 = vcombine.high %v492, %v507
    %v518 = vunpack.c.l.s4 1934713408
    %v519 = vunpack.c.0.s8 %v518
    %v520 = vlaneseq
    %v521 = vshrl.u32 %v520, 7
    %v522 = vsub.s32 %v519, %v521
    %v523 = vrot.slane %v515, %v522
    %v525 = vunpack.c.l.s4 1934713408
    %v526 = vunpack.c.0.s8 %v525
    %v527 = vlaneseq
    %v528 = vshrl.u32 %v527, 7
    %v529 = vsub.s32 %v526, %v528
    %v530 = vrot.slane %v516, %v529
    %v531 = vcombine.low %v499, %v514
    %v532 = vcombine.high %v499, %v514
    %v534 = vunpack.c.l.s4 1934713408
    %v535 = vunpack.c.0.s8 %v534
    %v536 = vlaneseq
    %v537 = vshrl.u32 %v536, 7
    %v538 = vsub.s32 %v535, %v537
    %v539 = vrot.slane %v531, %v538
    %v541 = vunpack.c.l.s4 1934713408
    %v542 = vunpack.c.0.s8 %v541
    %v543 = vlaneseq
    %v544 = vshrl.u32 %v543, 7
    %v545 = vsub.s32 %v542, %v544
    %v546 = vrot.slane %v532, %v545
    %v547 = vcombine.high %v523, 0
    %v548 = vcombine.high %v530, 0
    %v549 = vcombine.high %v539, 0
    %v550 = vcombine.high %v546, 0
    %v551 = vcombine.high %v343, %v335
    %v553 = vunpack.c.l.s4 1983009808
    %v554 = vunpack.c.0.s8 %v553
    %v555 = vlaneseq
    %v556 = vshrl.u32 %v555, 7
    %v557 = vsub.s32 %v554, %v556
    %v558 = vrot.slane %v343, %v557
    %v560 = vunpack.c.l.s4 1983009808
    %v561 = vunpack.c.0.s8 %v560
    %v562 = vlaneseq
    %v563 = vshrl.u32 %v562, 7
    %v564 = vsub.s32 %v561, %v563
    %v565 = vrot.slane %v551, %v564
    %v566 = vcombine.high %v351, %v335
    %v568 = vunpack.c.l.s4 1983009808
    %v569 = vunpack.c.0.s8 %v568
    %v570 = vlaneseq
    %v571 = vshrl.u32 %v570, 7
    %v572 = vsub.s32 %v569, %v571
    %v573 = vrot.slane %v351, %v572
    %v575 = vunpack.c.l.s4 1983009808
    %v576 = vunpack.c.0.s8 %v575
    %v577 = vlaneseq
    %v578 = vshrl.u32 %v577, 7
    %v579 = vsub.s32 %v576, %v578
    %v580 = vrot.slane %v566, %v579
    %v581 = vcombine.low %v558, %v573
    %v582 = vcombine.high %v558, %v573
    %v584 = vunpack.c.l.s4 1934713408
    %v585 = vunpack.c.0.s8 %v584
    %v586 = vlaneseq
    %v587 = vshrl.u32 %v586, 7
    %v588 = vsub.s32 %v585, %v587
    %v589 = vrot.slane %v581, %v588
    %v591 = vunpack.c.l.s4 1934713408
    %v592 = vunpack.c.0.s8 %v591
    %v593 = vlaneseq
    %v594 = vshrl.u32 %v593, 7
    %v595 = vsub.s32 %v592, %v594
    %v596 = vrot.slane %v582, %v595
    %v597 = vcombine.low %v565, %v580
    %v598 = vcombine.high %v565, %v580
    %v600 = vunpack.c.l.s4 1934713408
    %v601 = vunpack.c.0.s8 %v600
    %v602 = vlaneseq
    %v603 = vshrl.u32 %v602, 7
    %v604 = vsub.s32 %v601, %v603
    %v605 = vrot.slane %v597, %v604
    %v607 = vunpack.c.l.s4 1934713408
    %v608 = vunpack.c.0.s8 %v607
    %v609 = vlaneseq
    %v610 = vshrl.u32 %v609, 7
    %v611 = vsub.s32 %v608, %v610
    %v612 = vrot.slane %v598, %v611
    %v613 = vcombine.high %v589, 0
    %v614 = vcombine.high %v596, 0
    %v615 = vcombine.high %v605, 0
    %v616 = vcombine.high %v612, 0
    %v617 = vcombine.low %v391, %v398
    %v619 = vunpack.c.l.s4 1983009808
    %v620 = vunpack.c.0.s8 %v619
    %v621 = vlaneseq
    %v622 = vshrl.u32 %v621, 7
    %v623 = vsub.s32 %v620, %v622
    %v624 = vrot.slane %v617, %v623
    %v625 = vcombine.low %v415, %v416
    %v627 = vunpack.c.l.s4 1983009808
    %v628 = vunpack.c.0.s8 %v627
    %v629 = vlaneseq
    %v630 = vshrl.u32 %v629, 7
    %v631 = vsub.s32 %v628, %v630
    %v632 = vrot.slane %v625, %v631
    %v633 = vcombine.low %v624, %v632
    %v635 = vunpack.c.l.s4 1934713408
    %v636 = vunpack.c.0.s8 %v635
    %v637 = vlaneseq
    %v638 = vshrl.u32 %v637, 7
    %v639 = vsub.s32 %v636, %v638
    %v640 = vrot.slane %v633, %v639
    %v641 = vcombine.high %v640, 0
    %v642 = vcombine.low %v457, %v464
    %v644 = vunpack.c.l.s4 1983009808
    %v645 = vunpack.c.0.s8 %v644
    %v646 = vlaneseq
    %v647 = vshrl.u32 %v646, 7
    %v648 = vsub.s32 %v645, %v647
    %v649 = vrot.slane %v642, %v648
    %v650 = vcombine.low %v481, %v482
    %v652 = vunpack.c.l.s4 1983009808
    %v653 = vunpack.c.0.s8 %v652
    %v654 = vlaneseq
    %v655 = vshrl.u32 %v654, 7
    %v656 = vsub.s32 %v653, %v655
    %v657 = vrot.slane %v650, %v656
    %v658 = vcombine.low %v649, %v657
    %v660 = vunpack.c.l.s4 1934713408
    %v661 = vunpack.c.0.s8 %v660
    %v662 = vlaneseq
    %v663 = vshrl.u32 %v662, 7
    %v664 = vsub.s32 %v661, %v663
    %v665 = vrot.slane %v658, %v664
    %v666 = vcombine.high %v665, 0
    %v667 = vcombine.low %v407, %v414
    %v669 = vunpack.c.l.s4 1983009808
    %v670 = vunpack.c.0.s8 %v669
    %v671 = vlaneseq
    %v672 = vshrl.u32 %v671, 7
    %v673 = vsub.s32 %v670, %v672
    %v674 = vrot.slane %v667, %v673
    %v675 = vcombine.low %v417, %v418
    %v677 = vunpack.c.l.s4 1983009808
    %v678 = vunpack.c.0.s8 %v677
    %v679 = vlaneseq
    %v680 = vshrl.u32 %v679, 7
    %v681 = vsub.s32 %v678, %v680
    %v682 = vrot.slane %v675, %v681
    %v683 = vcombine.low %v674, %v682
    %v685 = vunpack.c.l.s4 1934713408
    %v686 = vunpack.c.0.s8 %v685
    %v687 = vlaneseq
    %v688 = vshrl.u32 %v687, 7
    %v689 = vsub.s32 %v686, %v688
    %v690 = vrot.slane %v683, %v689
    %v691 = vcombine.high %v690, 0
    %v692 = vcombine.low %v473, %v480
    %v694 = vunpack.c.l.s4 1983009808
    %v695 = vunpack.c.0.s8 %v694
    %v696 = vlaneseq
    %v697 = vshrl.u32 %v696, 7
    %v698 = vsub.s32 %v695, %v697
    %v699 = vrot.slane %v692, %v698
    %v700 = vcombine.low %v483, %v484
    %v702 = vunpack.c.l.s4 1983009808
    %v703 = vunpack.c.0.s8 %v702
    %v704 = vlaneseq
    %v705 = vshrl.u32 %v704, 7
    %v706 = vsub.s32 %v703, %v705
    %v707 = vrot.slane %v700, %v706
    %v708 = vcombine.low %v699, %v707
    %v710 = vunpack.c.l.s4 1934713408
    %v711 = vunpack.c.0.s8 %v710
    %v712 = vlaneseq
    %v713 = vshrl.u32 %v712, 7
    %v714 = vsub.s32 %v711, %v713
    %v715 = vrot.slane %v708, %v714
    %v716 = vcombine.high %v715, 0
    %v717 = vcombine.low %v523, %v530
    %v719 = vunpack.c.l.s4 1983009808
    %v720 = vunpack.c.0.s8 %v719
    %v721 = vlaneseq
    %v722 = vshrl.u32 %v721, 7
    %v723 = vsub.s32 %v720, %v722
    %v724 = vrot.slane %v717, %v723
    %v725 = vcombine.low %v547, %v548
    %v727 = vunpack.c.l.s4 1983009808
    %v728 = vunpack.c.0.s8 %v727
    %v729 = vlaneseq
    %v730 = vshrl.u32 %v729, 7
    %v731 = vsub.s32 %v728, %v730
    %v732 = vrot.slane %v725, %v731
    %v733 = vcombine.low %v724, %v732
    %v735 = vunpack.c.l.s4 1934713408
    %v736 = vunpack.c.0.s8 %v735
    %v737 = vlaneseq
    %v738 = vshrl.u32 %v737, 7
    %v739 = vsub.s32 %v736, %v738
    %v740 = vrot.slane %v733, %v739
    %v741 = vcombine.high %v740, 0
    %v742 = vcombine.low %v589, %v596
    %v744 = vunpack.c.l.s4 1983009808
    %v745 = vunpack.c.0.s8 %v744
    %v746 = vlaneseq
    %v747 = vshrl.u32 %v746, 7
    %v748 = vsub.s32 %v745, %v747
    %v749 = vrot.slane %v742, %v748
    %v750 = vcombine.low %v613, %v614
    %v752 = vunpack.c.l.s4 1983009808
    %v753 = vunpack.c.0.s8 %v752
    %v754 = vlaneseq
    %v755 = vshrl.u32 %v754, 7
    %v756 = vsub.s32 %v753, %v755
    %v757 = vrot.slane %v750, %v756
    %v758 = vcombine.low %v749, %v757
    %v760 = vunpack.c.l.s4 1934713408
    %v761 = vunpack.c.0.s8 %v760
    %v762 = vlaneseq
    %v763 = vshrl.u32 %v762, 7
    %v764 = vsub.s32 %v761, %v763
    %v765 = vrot.slane %v758, %v764
    %v766 = vcombine.high %v765, 0
    %v767 = vcombine.low %v539, %v546
    %v769 = vunpack.c.l.s4 1983009808
    %v770 = vunpack.c.0.s8 %v769
    %v771 = vlaneseq
    %v772 = vshrl.u32 %v771, 7
    %v773 = vsub.s32 %v770, %v772
    %v774 = vrot.slane %v767, %v773
    %v775 = vcombine.low %v549, %v550
    %v777 = vunpack.c.l.s4 1983009808
    %v778 = vunpack.c.0.s8 %v777
    %v779 = vlaneseq
    %v780 = vshrl.u32 %v779, 7
    %v781 = vsub.s32 %v778, %v780
    %v782 = vrot.slane %v775, %v781
    %v783 = vcombine.low %v774, %v782
    %v785 = vunpack.c.l.s4 1934713408
    %v786 = vunpack.c.0.s8 %v785
    %v787 = vlaneseq
    %v788 = vshrl.u32 %v787, 7
    %v789 = vsub.s32 %v786, %v788
    %v790 = vrot.slane %v783, %v789
    %v791 = vcombine.high %v790, 0
    %v792 = vcombine.low %v605, %v612
    %v794 = vunpack.c.l.s4 1983009808
    %v795 = vunpack.c.0.s8 %v794
    %v796 = vlaneseq
    %v797 = vshrl.u32 %v796, 7
    %v798 = vsub.s32 %v795, %v797
    %v799 = vrot.slane %v792, %v798
    %v800 = vcombine.low %v615, %v616
    %v802 = vunpack.c.l.s4 1983009808
    %v803 = vunpack.c.0.s8 %v802
    %v804 = vlaneseq
    %v805 = vshrl.u32 %v804, 7
    %v806 = vsub.s32 %v803, %v805
    %v807 = vrot.slane %v800, %v806
    %v808 = vcombine.low %v799, %v807
    %v810 = vunpack.c.l.s4 1934713408
    %v811 = vunpack.c.0.s8 %v810
    %v812 = vlaneseq
    %v813 = vshrl.u32 %v812, 7
    %v814 = vsub.s32 %v811, %v813
    %v815 = vrot.slane %v808, %v814
    %v816 = vcombine.high %v815, 0
    %v819 = vpack.i.b16 %v665, %v640
    %v820 = vshrl.u32 %v640, 16
    %v821 = vshrl.u32 %v665, 16
    %v822 = vpack.i.b16 %v821, %v820
    %v825 = vpack.i.b16 %v666, %v641
    %v826 = vshrl.u32 %v641, 16
    %v827 = vshrl.u32 %v666, 16
    %v828 = vpack.i.b16 %v827, %v826
    %v831 = vpack.i.b16 %v715, %v690
    %v832 = vshrl.u32 %v690, 16
    %v833 = vshrl.u32 %v715, 16
    %v834 = vpack.i.b16 %v833, %v832
    %v837 = vpack.i.b16 %v716, %v691
    %v838 = vshrl.u32 %v691, 16
    %v839 = vshrl.u32 %v716, 16
    %v840 = vpack.i.b16 %v839, %v838
    %v843 = vpack.i.b16 %v765, %v740
    %v844 = vshrl.u32 %v740, 16
    %v845 = vshrl.u32 %v765, 16
    %v846 = vpack.i.b16 %v845, %v844
    %v849 = vpack.i.b16 %v766, %v741
    %v850 = vshrl.u32 %v741, 16
    %v851 = vshrl.u32 %v766, 16
    %v852 = vpack.i.b16 %v851, %v850
    %v855 = vpack.i.b16 %v815, %v790
    %v856 = vshrl.u32 %v790, 16
    %v857 = vshrl.u32 %v815, 16
    %v858 = vpack.i.b16 %v857, %v856
    %v861 = vpack.i.b16 %v816, %v791
    %v862 = vshrl.u32 %v791, 16
    %v863 = vshrl.u32 %v816, 16
    %v864 = vpack.i.b16 %v863, %v862
    %865 = vrot.lane.b32.xlu0 %v299, 96
    %v866 = vpop.permute.xlu0 %865
    %867 = vrot.lane.b32.xlu0 %v300, 96
    %v868 = vpop.permute.xlu0 %867
    %869 = vrot.lane.b32.xlu0 %v304, 96
    %v870 = vpop.permute.xlu0 %869
    %871 = vrot.lane.b32.xlu0 %v306, 96
    %v872 = vpop.permute.xlu0 %871
    %873 = vrot.lane.b32.xlu0 %v308, 96
    %v874 = vpop.permute.xlu0 %873
    %875 = vrot.lane.b32.xlu0 %v310, 96
    %v876 = vpop.permute.xlu0 %875
    %877 = vrot.lane.b32.xlu0 %v312, 96
    %v878 = vpop.permute.xlu0 %877
    %879 = vrot.lane.b32.xlu0 %v314, 96
    %v880 = vpop.permute.xlu0 %879
    %v883 = vpack.i.b16 %v870, %v866
    %v885 = vshrl.u32 %v866, 16
    %v886 = vshrl.u32 %v870, 16
    %v887 = vpack.i.b16 %v886, %v885
    %v891 = vpack.i.b16 %v878, %v874
    %v893 = vshrl.u32 %v874, 16
    %v894 = vshrl.u32 %v878, 16
    %v895 = vpack.i.b16 %v894, %v893
    %v899 = vpack.i.b16 %v872, %v868
    %v901 = vshrl.u32 %v868, 16
    %v902 = vshrl.u32 %v872, 16
    %v903 = vpack.i.b16 %v902, %v901
    %v907 = vpack.i.b16 %v880, %v876
    %v909 = vshrl.u32 %v876, 16
    %v910 = vshrl.u32 %v880, 16
    %v911 = vpack.i.b16 %v910, %v909
    %v913 = vcombine.high %v883, %v332
    %v915 = vunpack.c.l.s4 1983009808
    %v916 = vunpack.c.0.s8 %v915
    %v917 = vlaneseq
    %v918 = vshrl.u32 %v917, 7
    %v919 = vsub.s32 %v916, %v918
    %v920 = vrot.slane %v883, %v919
    %v922 = vunpack.c.l.s4 1983009808
    %v923 = vunpack.c.0.s8 %v922
    %v924 = vlaneseq
    %v925 = vshrl.u32 %v924, 7
    %v926 = vsub.s32 %v923, %v925
    %v927 = vrot.slane %v913, %v926
    %v928 = vcombine.high %v891, %v332
    %v930 = vunpack.c.l.s4 1983009808
    %v931 = vunpack.c.0.s8 %v930
    %v932 = vlaneseq
    %v933 = vshrl.u32 %v932, 7
    %v934 = vsub.s32 %v931, %v933
    %v935 = vrot.slane %v891, %v934
    %v937 = vunpack.c.l.s4 1983009808
    %v938 = vunpack.c.0.s8 %v937
    %v939 = vlaneseq
    %v940 = vshrl.u32 %v939, 7
    %v941 = vsub.s32 %v938, %v940
    %v942 = vrot.slane %v928, %v941
    %v943 = vcombine.low %v920, %v935
    %v944 = vcombine.high %v920, %v935
    %v946 = vunpack.c.l.s4 1934713408
    %v947 = vunpack.c.0.s8 %v946
    %v948 = vlaneseq
    %v949 = vshrl.u32 %v948, 7
    %v950 = vsub.s32 %v947, %v949
    %v951 = vrot.slane %v943, %v950
    %v953 = vunpack.c.l.s4 1934713408
    %v954 = vunpack.c.0.s8 %v953
    %v955 = vlaneseq
    %v956 = vshrl.u32 %v955, 7
    %v957 = vsub.s32 %v954, %v956
    %v958 = vrot.slane %v944, %v957
    %v959 = vcombine.low %v927, %v942
    %v960 = vcombine.high %v927, %v942
    %v962 = vunpack.c.l.s4 1934713408
    %v963 = vunpack.c.0.s8 %v962
    %v964 = vlaneseq
    %v965 = vshrl.u32 %v964, 7
    %v966 = vsub.s32 %v963, %v965
    %v967 = vrot.slane %v959, %v966
    %v969 = vunpack.c.l.s4 1934713408
    %v970 = vunpack.c.0.s8 %v969
    %v971 = vlaneseq
    %v972 = vshrl.u32 %v971, 7
    %v973 = vsub.s32 %v970, %v972
    %v974 = vrot.slane %v960, %v973
    %v975 = vcombine.high %v951, 0
    %v976 = vcombine.high %v958, 0
    %v977 = vcombine.high %v967, 0
    %v978 = vcombine.high %v974, 0
    %v979 = vcombine.high %v887, %v335
    %v981 = vunpack.c.l.s4 1983009808
    %v982 = vunpack.c.0.s8 %v981
    %v983 = vlaneseq
    %v984 = vshrl.u32 %v983, 7
    %v985 = vsub.s32 %v982, %v984
    %v986 = vrot.slane %v887, %v985
    %v988 = vunpack.c.l.s4 1983009808
    %v989 = vunpack.c.0.s8 %v988
    %v990 = vlaneseq
    %v991 = vshrl.u32 %v990, 7
    %v992 = vsub.s32 %v989, %v991
    %v993 = vrot.slane %v979, %v992
    %v994 = vcombine.high %v895, %v335
    %v996 = vunpack.c.l.s4 1983009808
    %v997 = vunpack.c.0.s8 %v996
    %v998 = vlaneseq
    %v999 = vshrl.u32 %v998, 7
    %v1000 = vsub.s32 %v997, %v999
    %v1001 = vrot.slane %v895, %v1000
    %v1003 = vunpack.c.l.s4 1983009808
    %v1004 = vunpack.c.0.s8 %v1003
    %v1005 = vlaneseq
    %v1006 = vshrl.u32 %v1005, 7
    %v1007 = vsub.s32 %v1004, %v1006
    %v1008 = vrot.slane %v994, %v1007
    %v1009 = vcombine.low %v986, %v1001
    %v1010 = vcombine.high %v986, %v1001
    %v1012 = vunpack.c.l.s4 1934713408
    %v1013 = vunpack.c.0.s8 %v1012
    %v1014 = vlaneseq
    %v1015 = vshrl.u32 %v1014, 7
    %v1016 = vsub.s32 %v1013, %v1015
    %v1017 = vrot.slane %v1009, %v1016
    %v1019 = vunpack.c.l.s4 1934713408
    %v1020 = vunpack.c.0.s8 %v1019
    %v1021 = vlaneseq
    %v1022 = vshrl.u32 %v1021, 7
    %v1023 = vsub.s32 %v1020, %v1022
    %v1024 = vrot.slane %v1010, %v1023
    %v1025 = vcombine.low %v993, %v1008
    %v1026 = vcombine.high %v993, %v1008
    %v1028 = vunpack.c.l.s4 1934713408
    %v1029 = vunpack.c.0.s8 %v1028
    %v1030 = vlaneseq
    %v1031 = vshrl.u32 %v1030, 7
    %v1032 = vsub.s32 %v1029, %v1031
    %v1033 = vrot.slane %v1025, %v1032
    %v1035 = vunpack.c.l.s4 1934713408
    %v1036 = vunpack.c.0.s8 %v1035
    %v1037 = vlaneseq
    %v1038 = vshrl.u32 %v1037, 7
    %v1039 = vsub.s32 %v1036, %v1038
    %v1040 = vrot.slane %v1026, %v1039
    %v1041 = vcombine.high %v1017, 0
    %v1042 = vcombine.high %v1024, 0
    %v1043 = vcombine.high %v1033, 0
    %v1044 = vcombine.high %v1040, 0
    %v1045 = vcombine.high %v899, %v332
    %v1047 = vunpack.c.l.s4 1983009808
    %v1048 = vunpack.c.0.s8 %v1047
    %v1049 = vlaneseq
    %v1050 = vshrl.u32 %v1049, 7
    %v1051 = vsub.s32 %v1048, %v1050
    %v1052 = vrot.slane %v899, %v1051
    %v1054 = vunpack.c.l.s4 1983009808
    %v1055 = vunpack.c.0.s8 %v1054
    %v1056 = vlaneseq
    %v1057 = vshrl.u32 %v1056, 7
    %v1058 = vsub.s32 %v1055, %v1057
    %v1059 = vrot.slane %v1045, %v1058
    %v1060 = vcombine.high %v907, %v332
    %v1062 = vunpack.c.l.s4 1983009808
    %v1063 = vunpack.c.0.s8 %v1062
    %v1064 = vlaneseq
    %v1065 = vshrl.u32 %v1064, 7
    %v1066 = vsub.s32 %v1063, %v1065
    %v1067 = vrot.slane %v907, %v1066
    %v1069 = vunpack.c.l.s4 1983009808
    %v1070 = vunpack.c.0.s8 %v1069
    %v1071 = vlaneseq
    %v1072 = vshrl.u32 %v1071, 7
    %v1073 = vsub.s32 %v1070, %v1072
    %v1074 = vrot.slane %v1060, %v1073
    %v1075 = vcombine.low %v1052, %v1067
    %v1076 = vcombine.high %v1052, %v1067
    %v1078 = vunpack.c.l.s4 1934713408
    %v1079 = vunpack.c.0.s8 %v1078
    %v1080 = vlaneseq
    %v1081 = vshrl.u32 %v1080, 7
    %v1082 = vsub.s32 %v1079, %v1081
    %v1083 = vrot.slane %v1075, %v1082
    %v1085 = vunpack.c.l.s4 1934713408
    %v1086 = vunpack.c.0.s8 %v1085
    %v1087 = vlaneseq
    %v1088 = vshrl.u32 %v1087, 7
    %v1089 = vsub.s32 %v1086, %v1088
    %v1090 = vrot.slane %v1076, %v1089
    %v1091 = vcombine.low %v1059, %v1074
    %v1092 = vcombine.high %v1059, %v1074
    %v1094 = vunpack.c.l.s4 1934713408
    %v1095 = vunpack.c.0.s8 %v1094
    %v1096 = vlaneseq
    %v1097 = vshrl.u32 %v1096, 7
    %v1098 = vsub.s32 %v1095, %v1097
    %v1099 = vrot.slane %v1091, %v1098
    %v1101 = vunpack.c.l.s4 1934713408
    %v1102 = vunpack.c.0.s8 %v1101
    %v1103 = vlaneseq
    %v1104 = vshrl.u32 %v1103, 7
    %v1105 = vsub.s32 %v1102, %v1104
    %v1106 = vrot.slane %v1092, %v1105
    %v1107 = vcombine.high %v1083, 0
    %v1108 = vcombine.high %v1090, 0
    %v1109 = vcombine.high %v1099, 0
    %v1110 = vcombine.high %v1106, 0
    %v1111 = vcombine.high %v903, %v335
    %v1113 = vunpack.c.l.s4 1983009808
    %v1114 = vunpack.c.0.s8 %v1113
    %v1115 = vlaneseq
    %v1116 = vshrl.u32 %v1115, 7
    %v1117 = vsub.s32 %v1114, %v1116
    %v1118 = vrot.slane %v903, %v1117
    %v1120 = vunpack.c.l.s4 1983009808
    %v1121 = vunpack.c.0.s8 %v1120
    %v1122 = vlaneseq
    %v1123 = vshrl.u32 %v1122, 7
    %v1124 = vsub.s32 %v1121, %v1123
    %v1125 = vrot.slane %v1111, %v1124
    %v1126 = vcombine.high %v911, %v335
    %v1128 = vunpack.c.l.s4 1983009808
    %v1129 = vunpack.c.0.s8 %v1128
    %v1130 = vlaneseq
    %v1131 = vshrl.u32 %v1130, 7
    %v1132 = vsub.s32 %v1129, %v1131
    %v1133 = vrot.slane %v911, %v1132
    %v1135 = vunpack.c.l.s4 1983009808
    %v1136 = vunpack.c.0.s8 %v1135
    %v1137 = vlaneseq
    %v1138 = vshrl.u32 %v1137, 7
    %v1139 = vsub.s32 %v1136, %v1138
    %v1140 = vrot.slane %v1126, %v1139
    %v1141 = vcombine.low %v1118, %v1133
    %v1142 = vcombine.high %v1118, %v1133
    %v1144 = vunpack.c.l.s4 1934713408
    %v1145 = vunpack.c.0.s8 %v1144
    %v1146 = vlaneseq
    %v1147 = vshrl.u32 %v1146, 7
    %v1148 = vsub.s32 %v1145, %v1147
    %v1149 = vrot.slane %v1141, %v1148
    %v1151 = vunpack.c.l.s4 1934713408
    %v1152 = vunpack.c.0.s8 %v1151
    %v1153 = vlaneseq
    %v1154 = vshrl.u32 %v1153, 7
    %v1155 = vsub.s32 %v1152, %v1154
    %v1156 = vrot.slane %v1142, %v1155
    %v1157 = vcombine.low %v1125, %v1140
    %v1158 = vcombine.high %v1125, %v1140
    %v1160 = vunpack.c.l.s4 1934713408
    %v1161 = vunpack.c.0.s8 %v1160
    %v1162 = vlaneseq
    %v1163 = vshrl.u32 %v1162, 7
    %v1164 = vsub.s32 %v1161, %v1163
    %v1165 = vrot.slane %v1157, %v1164
    %v1167 = vunpack.c.l.s4 1934713408
    %v1168 = vunpack.c.0.s8 %v1167
    %v1169 = vlaneseq
    %v1170 = vshrl.u32 %v1169, 7
    %v1171 = vsub.s32 %v1168, %v1170
    %v1172 = vrot.slane %v1158, %v1171
    %v1173 = vcombine.high %v1149, 0
    %v1174 = vcombine.high %v1156, 0
    %v1175 = vcombine.high %v1165, 0
    %v1176 = vcombine.high %v1172, 0
    %v1177 = vcombine.low %v951, %v958
    %v1179 = vunpack.c.l.s4 1983009808
    %v1180 = vunpack.c.0.s8 %v1179
    %v1181 = vlaneseq
    %v1182 = vshrl.u32 %v1181, 7
    %v1183 = vsub.s32 %v1180, %v1182
    %v1184 = vrot.slane %v1177, %v1183
    %v1185 = vcombine.low %v975, %v976
    %v1187 = vunpack.c.l.s4 1983009808
    %v1188 = vunpack.c.0.s8 %v1187
    %v1189 = vlaneseq
    %v1190 = vshrl.u32 %v1189, 7
    %v1191 = vsub.s32 %v1188, %v1190
    %v1192 = vrot.slane %v1185, %v1191
    %v1193 = vcombine.low %v1184, %v1192
    %v1195 = vunpack.c.l.s4 1934713408
    %v1196 = vunpack.c.0.s8 %v1195
    %v1197 = vlaneseq
    %v1198 = vshrl.u32 %v1197, 7
    %v1199 = vsub.s32 %v1196, %v1198
    %v1200 = vrot.slane %v1193, %v1199
    %v1201 = vcombine.high %v1200, 0
    %v1202 = vcombine.low %v1017, %v1024
    %v1204 = vunpack.c.l.s4 1983009808
    %v1205 = vunpack.c.0.s8 %v1204
    %v1206 = vlaneseq
    %v1207 = vshrl.u32 %v1206, 7
    %v1208 = vsub.s32 %v1205, %v1207
    %v1209 = vrot.slane %v1202, %v1208
    %v1210 = vcombine.low %v1041, %v1042
    %v1212 = vunpack.c.l.s4 1983009808
    %v1213 = vunpack.c.0.s8 %v1212
    %v1214 = vlaneseq
    %v1215 = vshrl.u32 %v1214, 7
    %v1216 = vsub.s32 %v1213, %v1215
    %v1217 = vrot.slane %v1210, %v1216
    %v1218 = vcombine.low %v1209, %v1217
    %v1220 = vunpack.c.l.s4 1934713408
    %v1221 = vunpack.c.0.s8 %v1220
    %v1222 = vlaneseq
    %v1223 = vshrl.u32 %v1222, 7
    %v1224 = vsub.s32 %v1221, %v1223
    %v1225 = vrot.slane %v1218, %v1224
    %v1226 = vcombine.high %v1225, 0
    %v1227 = vcombine.low %v967, %v974
    %v1229 = vunpack.c.l.s4 1983009808
    %v1230 = vunpack.c.0.s8 %v1229
    %v1231 = vlaneseq
    %v1232 = vshrl.u32 %v1231, 7
    %v1233 = vsub.s32 %v1230, %v1232
    %v1234 = vrot.slane %v1227, %v1233
    %v1235 = vcombine.low %v977, %v978
    %v1237 = vunpack.c.l.s4 1983009808
    %v1238 = vunpack.c.0.s8 %v1237
    %v1239 = vlaneseq
    %v1240 = vshrl.u32 %v1239, 7
    %v1241 = vsub.s32 %v1238, %v1240
    %v1242 = vrot.slane %v1235, %v1241
    %v1243 = vcombine.low %v1234, %v1242
    %v1245 = vunpack.c.l.s4 1934713408
    %v1246 = vunpack.c.0.s8 %v1245
    %v1247 = vlaneseq
    %v1248 = vshrl.u32 %v1247, 7
    %v1249 = vsub.s32 %v1246, %v1248
    %v1250 = vrot.slane %v1243, %v1249
    %v1251 = vcombine.high %v1250, 0
    %v1252 = vcombine.low %v1033, %v1040
    %v1254 = vunpack.c.l.s4 1983009808
    %v1255 = vunpack.c.0.s8 %v1254
    %v1256 = vlaneseq
    %v1257 = vshrl.u32 %v1256, 7
    %v1258 = vsub.s32 %v1255, %v1257
    %v1259 = vrot.slane %v1252, %v1258
    %v1260 = vcombine.low %v1043, %v1044
    %v1262 = vunpack.c.l.s4 1983009808
    %v1263 = vunpack.c.0.s8 %v1262
    %v1264 = vlaneseq
    %v1265 = vshrl.u32 %v1264, 7
    %v1266 = vsub.s32 %v1263, %v1265
    %v1267 = vrot.slane %v1260, %v1266
    %v1268 = vcombine.low %v1259, %v1267
    %v1270 = vunpack.c.l.s4 1934713408
    %v1271 = vunpack.c.0.s8 %v1270
    %v1272 = vlaneseq
    %v1273 = vshrl.u32 %v1272, 7
    %v1274 = vsub.s32 %v1271, %v1273
    %v1275 = vrot.slane %v1268, %v1274
    %v1276 = vcombine.high %v1275, 0
    %v1277 = vcombine.low %v1083, %v1090
    %v1279 = vunpack.c.l.s4 1983009808
    %v1280 = vunpack.c.0.s8 %v1279
    %v1281 = vlaneseq
    %v1282 = vshrl.u32 %v1281, 7
    %v1283 = vsub.s32 %v1280, %v1282
    %v1284 = vrot.slane %v1277, %v1283
    %v1285 = vcombine.low %v1107, %v1108
    %v1287 = vunpack.c.l.s4 1983009808
    %v1288 = vunpack.c.0.s8 %v1287
    %v1289 = vlaneseq
    %v1290 = vshrl.u32 %v1289, 7
    %v1291 = vsub.s32 %v1288, %v1290
    %v1292 = vrot.slane %v1285, %v1291
    %v1293 = vcombine.low %v1284, %v1292
    %v1295 = vunpack.c.l.s4 1934713408
    %v1296 = vunpack.c.0.s8 %v1295
    %v1297 = vlaneseq
    %v1298 = vshrl.u32 %v1297, 7
    %v1299 = vsub.s32 %v1296, %v1298
    %v1300 = vrot.slane %v1293, %v1299
    %v1301 = vcombine.high %v1300, 0
    %v1302 = vcombine.low %v1149, %v1156
    %v1304 = vunpack.c.l.s4 1983009808
    %v1305 = vunpack.c.0.s8 %v1304
    %v1306 = vlaneseq
    %v1307 = vshrl.u32 %v1306, 7
    %v1308 = vsub.s32 %v1305, %v1307
    %v1309 = vrot.slane %v1302, %v1308
    %v1310 = vcombine.low %v1173, %v1174
    %v1312 = vunpack.c.l.s4 1983009808
    %v1313 = vunpack.c.0.s8 %v1312
    %v1314 = vlaneseq
    %v1315 = vshrl.u32 %v1314, 7
    %v1316 = vsub.s32 %v1313, %v1315
    %v1317 = vrot.slane %v1310, %v1316
    %v1318 = vcombine.low %v1309, %v1317
    %v1320 = vunpack.c.l.s4 1934713408
    %v1321 = vunpack.c.0.s8 %v1320
    %v1322 = vlaneseq
    %v1323 = vshrl.u32 %v1322, 7
    %v1324 = vsub.s32 %v1321, %v1323
    %v1325 = vrot.slane %v1318, %v1324
    %v1326 = vcombine.high %v1325, 0
    %v1327 = vcombine.low %v1099, %v1106
    %v1329 = vunpack.c.l.s4 1983009808
    %v1330 = vunpack.c.0.s8 %v1329
    %v1331 = vlaneseq
    %v1332 = vshrl.u32 %v1331, 7
    %v1333 = vsub.s32 %v1330, %v1332
    %v1334 = vrot.slane %v1327, %v1333
    %v1335 = vcombine.low %v1109, %v1110
    %v1337 = vunpack.c.l.s4 1983009808
    %v1338 = vunpack.c.0.s8 %v1337
    %v1339 = vlaneseq
    %v1340 = vshrl.u32 %v1339, 7
    %v1341 = vsub.s32 %v1338, %v1340
    %v1342 = vrot.slane %v1335, %v1341
    %v1343 = vcombine.low %v1334, %v1342
    %v1345 = vunpack.c.l.s4 1934713408
    %v1346 = vunpack.c.0.s8 %v1345
    %v1347 = vlaneseq
    %v1348 = vshrl.u32 %v1347, 7
    %v1349 = vsub.s32 %v1346, %v1348
    %v1350 = vrot.slane %v1343, %v1349
    %v1351 = vcombine.high %v1350, 0
    %v1352 = vcombine.low %v1165, %v1172
    %v1354 = vunpack.c.l.s4 1983009808
    %v1355 = vunpack.c.0.s8 %v1354
    %v1356 = vlaneseq
    %v1357 = vshrl.u32 %v1356, 7
    %v1358 = vsub.s32 %v1355, %v1357
    %v1359 = vrot.slane %v1352, %v1358
    %v1360 = vcombine.low %v1175, %v1176
    %v1362 = vunpack.c.l.s4 1983009808
    %v1363 = vunpack.c.0.s8 %v1362
    %v1364 = vlaneseq
    %v1365 = vshrl.u32 %v1364, 7
    %v1366 = vsub.s32 %v1363, %v1365
    %v1367 = vrot.slane %v1360, %v1366
    %v1368 = vcombine.low %v1359, %v1367
    %v1370 = vunpack.c.l.s4 1934713408
    %v1371 = vunpack.c.0.s8 %v1370
    %v1372 = vlaneseq
    %v1373 = vshrl.u32 %v1372, 7
    %v1374 = vsub.s32 %v1371, %v1373
    %v1375 = vrot.slane %v1368, %v1374
    %v1376 = vcombine.high %v1375, 0
    %v1379 = vpack.i.b16 %v1225, %v1200
    %v1380 = vshrl.u32 %v1200, 16
    %v1381 = vshrl.u32 %v1225, 16
    %v1382 = vpack.i.b16 %v1381, %v1380
    %v1385 = vpack.i.b16 %v1226, %v1201
    %v1386 = vshrl.u32 %v1201, 16
    %v1387 = vshrl.u32 %v1226, 16
    %v1388 = vpack.i.b16 %v1387, %v1386
    %v1391 = vpack.i.b16 %v1275, %v1250
    %v1392 = vshrl.u32 %v1250, 16
    %v1393 = vshrl.u32 %v1275, 16
    %v1394 = vpack.i.b16 %v1393, %v1392
    %v1397 = vpack.i.b16 %v1276, %v1251
    %v1398 = vshrl.u32 %v1251, 16
    %v1399 = vshrl.u32 %v1276, 16
    %v1400 = vpack.i.b16 %v1399, %v1398
    %v1403 = vpack.i.b16 %v1325, %v1300
    %v1404 = vshrl.u32 %v1300, 16
    %v1405 = vshrl.u32 %v1325, 16
    %v1406 = vpack.i.b16 %v1405, %v1404
    %v1409 = vpack.i.b16 %v1326, %v1301
    %v1410 = vshrl.u32 %v1301, 16
    %v1411 = vshrl.u32 %v1326, 16
    %v1412 = vpack.i.b16 %v1411, %v1410
    %v1415 = vpack.i.b16 %v1375, %v1350
    %v1416 = vshrl.u32 %v1350, 16
    %v1417 = vshrl.u32 %v1375, 16
    %v1418 = vpack.i.b16 %v1417, %v1416
    %v1421 = vpack.i.b16 %v1376, %v1351
    %v1422 = vshrl.u32 %v1351, 16
    %v1423 = vshrl.u32 %v1376, 16
    %v1424 = vpack.i.b16 %v1423, %v1422
    %1425 = vrot.lane.b32.xlu0 %v299, 64
    %v1426 = vpop.permute.xlu0 %1425
    %1427 = vrot.lane.b32.xlu0 %v300, 64
    %v1428 = vpop.permute.xlu0 %1427
    %1429 = vrot.lane.b32.xlu0 %v304, 64
    %v1430 = vpop.permute.xlu0 %1429
    %1431 = vrot.lane.b32.xlu0 %v306, 64
    %v1432 = vpop.permute.xlu0 %1431
    %1433 = vrot.lane.b32.xlu0 %v308, 64
    %v1434 = vpop.permute.xlu0 %1433
    %1435 = vrot.lane.b32.xlu0 %v310, 64
    %v1436 = vpop.permute.xlu0 %1435
    %1437 = vrot.lane.b32.xlu0 %v312, 64
    %v1438 = vpop.permute.xlu0 %1437
    %1439 = vrot.lane.b32.xlu0 %v314, 64
    %v1440 = vpop.permute.xlu0 %1439
    %v1443 = vpack.i.b16 %v1430, %v1426
    %v1445 = vshrl.u32 %v1426, 16
    %v1446 = vshrl.u32 %v1430, 16
    %v1447 = vpack.i.b16 %v1446, %v1445
    %v1451 = vpack.i.b16 %v1438, %v1434
    %v1453 = vshrl.u32 %v1434, 16
    %v1454 = vshrl.u32 %v1438, 16
    %v1455 = vpack.i.b16 %v1454, %v1453
    %v1459 = vpack.i.b16 %v1432, %v1428
    %v1461 = vshrl.u32 %v1428, 16
    %v1462 = vshrl.u32 %v1432, 16
    %v1463 = vpack.i.b16 %v1462, %v1461
    %v1467 = vpack.i.b16 %v1440, %v1436
    %v1469 = vshrl.u32 %v1436, 16
    %v1470 = vshrl.u32 %v1440, 16
    %v1471 = vpack.i.b16 %v1470, %v1469
    %v1473 = vcombine.high %v1443, %v332
    %v1475 = vunpack.c.l.s4 1983009808
    %v1476 = vunpack.c.0.s8 %v1475
    %v1477 = vlaneseq
    %v1478 = vshrl.u32 %v1477, 7
    %v1479 = vsub.s32 %v1476, %v1478
    %v1480 = vrot.slane %v1443, %v1479
    %v1482 = vunpack.c.l.s4 1983009808
    %v1483 = vunpack.c.0.s8 %v1482
    %v1484 = vlaneseq
    %v1485 = vshrl.u32 %v1484, 7
    %v1486 = vsub.s32 %v1483, %v1485
    %v1487 = vrot.slane %v1473, %v1486
    %v1488 = vcombine.high %v1451, %v332
    %v1490 = vunpack.c.l.s4 1983009808
    %v1491 = vunpack.c.0.s8 %v1490
    %v1492 = vlaneseq
    %v1493 = vshrl.u32 %v1492, 7
    %v1494 = vsub.s32 %v1491, %v1493
    %v1495 = vrot.slane %v1451, %v1494
    %v1497 = vunpack.c.l.s4 1983009808
    %v1498 = vunpack.c.0.s8 %v1497
    %v1499 = vlaneseq
    %v1500 = vshrl.u32 %v1499, 7
    %v1501 = vsub.s32 %v1498, %v1500
    %v1502 = vrot.slane %v1488, %v1501
    %v1503 = vcombine.low %v1480, %v1495
    %v1504 = vcombine.high %v1480, %v1495
    %v1506 = vunpack.c.l.s4 1934713408
    %v1507 = vunpack.c.0.s8 %v1506
    %v1508 = vlaneseq
    %v1509 = vshrl.u32 %v1508, 7
    %v1510 = vsub.s32 %v1507, %v1509
    %v1511 = vrot.slane %v1503, %v1510
    %v1513 = vunpack.c.l.s4 1934713408
    %v1514 = vunpack.c.0.s8 %v1513
    %v1515 = vlaneseq
    %v1516 = vshrl.u32 %v1515, 7
    %v1517 = vsub.s32 %v1514, %v1516
    %v1518 = vrot.slane %v1504, %v1517
    %v1519 = vcombine.low %v1487, %v1502
    %v1520 = vcombine.high %v1487, %v1502
    %v1522 = vunpack.c.l.s4 1934713408
    %v1523 = vunpack.c.0.s8 %v1522
    %v1524 = vlaneseq
    %v1525 = vshrl.u32 %v1524, 7
    %v1526 = vsub.s32 %v1523, %v1525
    %v1527 = vrot.slane %v1519, %v1526
    %v1529 = vunpack.c.l.s4 1934713408
    %v1530 = vunpack.c.0.s8 %v1529
    %v1531 = vlaneseq
    %v1532 = vshrl.u32 %v1531, 7
    %v1533 = vsub.s32 %v1530, %v1532
    %v1534 = vrot.slane %v1520, %v1533
    %v1535 = vcombine.high %v1511, 0
    %v1536 = vcombine.high %v1518, 0
    %v1537 = vcombine.high %v1527, 0
    %v1538 = vcombine.high %v1534, 0
    %v1539 = vcombine.high %v1447, %v335
    %v1541 = vunpack.c.l.s4 1983009808
    %v1542 = vunpack.c.0.s8 %v1541
    %v1543 = vlaneseq
    %v1544 = vshrl.u32 %v1543, 7
    %v1545 = vsub.s32 %v1542, %v1544
    %v1546 = vrot.slane %v1447, %v1545
    %v1548 = vunpack.c.l.s4 1983009808
    %v1549 = vunpack.c.0.s8 %v1548
    %v1550 = vlaneseq
    %v1551 = vshrl.u32 %v1550, 7
    %v1552 = vsub.s32 %v1549, %v1551
    %v1553 = vrot.slane %v1539, %v1552
    %v1554 = vcombine.high %v1455, %v335
    %v1556 = vunpack.c.l.s4 1983009808
    %v1557 = vunpack.c.0.s8 %v1556
    %v1558 = vlaneseq
    %v1559 = vshrl.u32 %v1558, 7
    %v1560 = vsub.s32 %v1557, %v1559
    %v1561 = vrot.slane %v1455, %v1560
    %v1563 = vunpack.c.l.s4 1983009808
    %v1564 = vunpack.c.0.s8 %v1563
    %v1565 = vlaneseq
    %v1566 = vshrl.u32 %v1565, 7
    %v1567 = vsub.s32 %v1564, %v1566
    %v1568 = vrot.slane %v1554, %v1567
    %v1569 = vcombine.low %v1546, %v1561
    %v1570 = vcombine.high %v1546, %v1561
    %v1572 = vunpack.c.l.s4 1934713408
    %v1573 = vunpack.c.0.s8 %v1572
    %v1574 = vlaneseq
    %v1575 = vshrl.u32 %v1574, 7
    %v1576 = vsub.s32 %v1573, %v1575
    %v1577 = vrot.slane %v1569, %v1576
    %v1579 = vunpack.c.l.s4 1934713408
    %v1580 = vunpack.c.0.s8 %v1579
    %v1581 = vlaneseq
    %v1582 = vshrl.u32 %v1581, 7
    %v1583 = vsub.s32 %v1580, %v1582
    %v1584 = vrot.slane %v1570, %v1583
    %v1585 = vcombine.low %v1553, %v1568
    %v1586 = vcombine.high %v1553, %v1568
    %v1588 = vunpack.c.l.s4 1934713408
    %v1589 = vunpack.c.0.s8 %v1588
    %v1590 = vlaneseq
    %v1591 = vshrl.u32 %v1590, 7
    %v1592 = vsub.s32 %v1589, %v1591
    %v1593 = vrot.slane %v1585, %v1592
    %v1595 = vunpack.c.l.s4 1934713408
    %v1596 = vunpack.c.0.s8 %v1595
    %v1597 = vlaneseq
    %v1598 = vshrl.u32 %v1597, 7
    %v1599 = vsub.s32 %v1596, %v1598
    %v1600 = vrot.slane %v1586, %v1599
    %v1601 = vcombine.high %v1577, 0
    %v1602 = vcombine.high %v1584, 0
    %v1603 = vcombine.high %v1593, 0
    %v1604 = vcombine.high %v1600, 0
    %v1605 = vcombine.high %v1459, %v332
    %v1607 = vunpack.c.l.s4 1983009808
    %v1608 = vunpack.c.0.s8 %v1607
    %v1609 = vlaneseq
    %v1610 = vshrl.u32 %v1609, 7
    %v1611 = vsub.s32 %v1608, %v1610
    %v1612 = vrot.slane %v1459, %v1611
    %v1614 = vunpack.c.l.s4 1983009808
    %v1615 = vunpack.c.0.s8 %v1614
    %v1616 = vlaneseq
    %v1617 = vshrl.u32 %v1616, 7
    %v1618 = vsub.s32 %v1615, %v1617
    %v1619 = vrot.slane %v1605, %v1618
    %v1620 = vcombine.high %v1467, %v332
    %v1622 = vunpack.c.l.s4 1983009808
    %v1623 = vunpack.c.0.s8 %v1622
    %v1624 = vlaneseq
    %v1625 = vshrl.u32 %v1624, 7
    %v1626 = vsub.s32 %v1623, %v1625
    %v1627 = vrot.slane %v1467, %v1626
    %v1629 = vunpack.c.l.s4 1983009808
    %v1630 = vunpack.c.0.s8 %v1629
    %v1631 = vlaneseq
    %v1632 = vshrl.u32 %v1631, 7
    %v1633 = vsub.s32 %v1630, %v1632
    %v1634 = vrot.slane %v1620, %v1633
    %v1635 = vcombine.low %v1612, %v1627
    %v1636 = vcombine.high %v1612, %v1627
    %v1638 = vunpack.c.l.s4 1934713408
    %v1639 = vunpack.c.0.s8 %v1638
    %v1640 = vlaneseq
    %v1641 = vshrl.u32 %v1640, 7
    %v1642 = vsub.s32 %v1639, %v1641
    %v1643 = vrot.slane %v1635, %v1642
    %v1645 = vunpack.c.l.s4 1934713408
    %v1646 = vunpack.c.0.s8 %v1645
    %v1647 = vlaneseq
    %v1648 = vshrl.u32 %v1647, 7
    %v1649 = vsub.s32 %v1646, %v1648
    %v1650 = vrot.slane %v1636, %v1649
    %v1651 = vcombine.low %v1619, %v1634
    %v1652 = vcombine.high %v1619, %v1634
    %v1654 = vunpack.c.l.s4 1934713408
    %v1655 = vunpack.c.0.s8 %v1654
    %v1656 = vlaneseq
    %v1657 = vshrl.u32 %v1656, 7
    %v1658 = vsub.s32 %v1655, %v1657
    %v1659 = vrot.slane %v1651, %v1658
    %v1661 = vunpack.c.l.s4 1934713408
    %v1662 = vunpack.c.0.s8 %v1661
    %v1663 = vlaneseq
    %v1664 = vshrl.u32 %v1663, 7
    %v1665 = vsub.s32 %v1662, %v1664
    %v1666 = vrot.slane %v1652, %v1665
    %v1667 = vcombine.high %v1643, 0
    %v1668 = vcombine.high %v1650, 0
    %v1669 = vcombine.high %v1659, 0
    %v1670 = vcombine.high %v1666, 0
    %v1671 = vcombine.high %v1463, %v335
    %v1673 = vunpack.c.l.s4 1983009808
    %v1674 = vunpack.c.0.s8 %v1673
    %v1675 = vlaneseq
    %v1676 = vshrl.u32 %v1675, 7
    %v1677 = vsub.s32 %v1674, %v1676
    %v1678 = vrot.slane %v1463, %v1677
    %v1680 = vunpack.c.l.s4 1983009808
    %v1681 = vunpack.c.0.s8 %v1680
    %v1682 = vlaneseq
    %v1683 = vshrl.u32 %v1682, 7
    %v1684 = vsub.s32 %v1681, %v1683
    %v1685 = vrot.slane %v1671, %v1684
    %v1686 = vcombine.high %v1471, %v335
    %v1688 = vunpack.c.l.s4 1983009808
    %v1689 = vunpack.c.0.s8 %v1688
    %v1690 = vlaneseq
    %v1691 = vshrl.u32 %v1690, 7
    %v1692 = vsub.s32 %v1689, %v1691
    %v1693 = vrot.slane %v1471, %v1692
    %v1695 = vunpack.c.l.s4 1983009808
    %v1696 = vunpack.c.0.s8 %v1695
    %v1697 = vlaneseq
    %v1698 = vshrl.u32 %v1697, 7
    %v1699 = vsub.s32 %v1696, %v1698
    %v1700 = vrot.slane %v1686, %v1699
    %v1701 = vcombine.low %v1678, %v1693
    %v1702 = vcombine.high %v1678, %v1693
    %v1704 = vunpack.c.l.s4 1934713408
    %v1705 = vunpack.c.0.s8 %v1704
    %v1706 = vlaneseq
    %v1707 = vshrl.u32 %v1706, 7
    %v1708 = vsub.s32 %v1705, %v1707
    %v1709 = vrot.slane %v1701, %v1708
    %v1711 = vunpack.c.l.s4 1934713408
    %v1712 = vunpack.c.0.s8 %v1711
    %v1713 = vlaneseq
    %v1714 = vshrl.u32 %v1713, 7
    %v1715 = vsub.s32 %v1712, %v1714
    %v1716 = vrot.slane %v1702, %v1715
    %v1717 = vcombine.low %v1685, %v1700
    %v1718 = vcombine.high %v1685, %v1700
    %v1720 = vunpack.c.l.s4 1934713408
    %v1721 = vunpack.c.0.s8 %v1720
    %v1722 = vlaneseq
    %v1723 = vshrl.u32 %v1722, 7
    %v1724 = vsub.s32 %v1721, %v1723
    %v1725 = vrot.slane %v1717, %v1724
    %v1727 = vunpack.c.l.s4 1934713408
    %v1728 = vunpack.c.0.s8 %v1727
    %v1729 = vlaneseq
    %v1730 = vshrl.u32 %v1729, 7
    %v1731 = vsub.s32 %v1728, %v1730
    %v1732 = vrot.slane %v1718, %v1731
    %v1733 = vcombine.high %v1709, 0
    %v1734 = vcombine.high %v1716, 0
    %v1735 = vcombine.high %v1725, 0
    %v1736 = vcombine.high %v1732, 0
    %v1737 = vcombine.low %v1511, %v1518
    %v1739 = vunpack.c.l.s4 1983009808
    %v1740 = vunpack.c.0.s8 %v1739
    %v1741 = vlaneseq
    %v1742 = vshrl.u32 %v1741, 7
    %v1743 = vsub.s32 %v1740, %v1742
    %v1744 = vrot.slane %v1737, %v1743
    %v1745 = vcombine.low %v1535, %v1536
    %v1747 = vunpack.c.l.s4 1983009808
    %v1748 = vunpack.c.0.s8 %v1747
    %v1749 = vlaneseq
    %v1750 = vshrl.u32 %v1749, 7
    %v1751 = vsub.s32 %v1748, %v1750
    %v1752 = vrot.slane %v1745, %v1751
    %v1753 = vcombine.low %v1744, %v1752
    %v1755 = vunpack.c.l.s4 1934713408
    %v1756 = vunpack.c.0.s8 %v1755
    %v1757 = vlaneseq
    %v1758 = vshrl.u32 %v1757, 7
    %v1759 = vsub.s32 %v1756, %v1758
    %v1760 = vrot.slane %v1753, %v1759
    %v1761 = vcombine.high %v1760, 0
    %v1762 = vcombine.low %v1577, %v1584
    %v1764 = vunpack.c.l.s4 1983009808
    %v1765 = vunpack.c.0.s8 %v1764
    %v1766 = vlaneseq
    %v1767 = vshrl.u32 %v1766, 7
    %v1768 = vsub.s32 %v1765, %v1767
    %v1769 = vrot.slane %v1762, %v1768
    %v1770 = vcombine.low %v1601, %v1602
    %v1772 = vunpack.c.l.s4 1983009808
    %v1773 = vunpack.c.0.s8 %v1772
    %v1774 = vlaneseq
    %v1775 = vshrl.u32 %v1774, 7
    %v1776 = vsub.s32 %v1773, %v1775
    %v1777 = vrot.slane %v1770, %v1776
    %v1778 = vcombine.low %v1769, %v1777
    %v1780 = vunpack.c.l.s4 1934713408
    %v1781 = vunpack.c.0.s8 %v1780
    %v1782 = vlaneseq
    %v1783 = vshrl.u32 %v1782, 7
    %v1784 = vsub.s32 %v1781, %v1783
    %v1785 = vrot.slane %v1778, %v1784
    %v1786 = vcombine.high %v1785, 0
    %v1787 = vcombine.low %v1527, %v1534
    %v1789 = vunpack.c.l.s4 1983009808
    %v1790 = vunpack.c.0.s8 %v1789
    %v1791 = vlaneseq
    %v1792 = vshrl.u32 %v1791, 7
    %v1793 = vsub.s32 %v1790, %v1792
    %v1794 = vrot.slane %v1787, %v1793
    %v1795 = vcombine.low %v1537, %v1538
    %v1797 = vunpack.c.l.s4 1983009808
    %v1798 = vunpack.c.0.s8 %v1797
    %v1799 = vlaneseq
    %v1800 = vshrl.u32 %v1799, 7
    %v1801 = vsub.s32 %v1798, %v1800
    %v1802 = vrot.slane %v1795, %v1801
    %v1803 = vcombine.low %v1794, %v1802
    %v1805 = vunpack.c.l.s4 1934713408
    %v1806 = vunpack.c.0.s8 %v1805
    %v1807 = vlaneseq
    %v1808 = vshrl.u32 %v1807, 7
    %v1809 = vsub.s32 %v1806, %v1808
    %v1810 = vrot.slane %v1803, %v1809
    %v1811 = vcombine.high %v1810, 0
    %v1812 = vcombine.low %v1593, %v1600
    %v1814 = vunpack.c.l.s4 1983009808
    %v1815 = vunpack.c.0.s8 %v1814
    %v1816 = vlaneseq
    %v1817 = vshrl.u32 %v1816, 7
    %v1818 = vsub.s32 %v1815, %v1817
    %v1819 = vrot.slane %v1812, %v1818
    %v1820 = vcombine.low %v1603, %v1604
    %v1822 = vunpack.c.l.s4 1983009808
    %v1823 = vunpack.c.0.s8 %v1822
    %v1824 = vlaneseq
    %v1825 = vshrl.u32 %v1824, 7
    %v1826 = vsub.s32 %v1823, %v1825
    %v1827 = vrot.slane %v1820, %v1826
    %v1828 = vcombine.low %v1819, %v1827
    %v1830 = vunpack.c.l.s4 1934713408
    %v1831 = vunpack.c.0.s8 %v1830
    %v1832 = vlaneseq
    %v1833 = vshrl.u32 %v1832, 7
    %v1834 = vsub.s32 %v1831, %v1833
    %v1835 = vrot.slane %v1828, %v1834
    %v1836 = vcombine.high %v1835, 0
    %v1837 = vcombine.low %v1643, %v1650
    %v1839 = vunpack.c.l.s4 1983009808
    %v1840 = vunpack.c.0.s8 %v1839
    %v1841 = vlaneseq
    %v1842 = vshrl.u32 %v1841, 7
    %v1843 = vsub.s32 %v1840, %v1842
    %v1844 = vrot.slane %v1837, %v1843
    %v1845 = vcombine.low %v1667, %v1668
    %v1847 = vunpack.c.l.s4 1983009808
    %v1848 = vunpack.c.0.s8 %v1847
    %v1849 = vlaneseq
    %v1850 = vshrl.u32 %v1849, 7
    %v1851 = vsub.s32 %v1848, %v1850
    %v1852 = vrot.slane %v1845, %v1851
    %v1853 = vcombine.low %v1844, %v1852
    %v1855 = vunpack.c.l.s4 1934713408
    %v1856 = vunpack.c.0.s8 %v1855
    %v1857 = vlaneseq
    %v1858 = vshrl.u32 %v1857, 7
    %v1859 = vsub.s32 %v1856, %v1858
    %v1860 = vrot.slane %v1853, %v1859
    %v1861 = vcombine.high %v1860, 0
    %v1862 = vcombine.low %v1709, %v1716
    %v1864 = vunpack.c.l.s4 1983009808
    %v1865 = vunpack.c.0.s8 %v1864
    %v1866 = vlaneseq
    %v1867 = vshrl.u32 %v1866, 7
    %v1868 = vsub.s32 %v1865, %v1867
    %v1869 = vrot.slane %v1862, %v1868
    %v1870 = vcombine.low %v1733, %v1734
    %v1872 = vunpack.c.l.s4 1983009808
    %v1873 = vunpack.c.0.s8 %v1872
    %v1874 = vlaneseq
    %v1875 = vshrl.u32 %v1874, 7
    %v1876 = vsub.s32 %v1873, %v1875
    %v1877 = vrot.slane %v1870, %v1876
    %v1878 = vcombine.low %v1869, %v1877
    %v1880 = vunpack.c.l.s4 1934713408
    %v1881 = vunpack.c.0.s8 %v1880
    %v1882 = vlaneseq
    %v1883 = vshrl.u32 %v1882, 7
    %v1884 = vsub.s32 %v1881, %v1883
    %v1885 = vrot.slane %v1878, %v1884
    %v1886 = vcombine.high %v1885, 0
    %v1887 = vcombine.low %v1659, %v1666
    %v1889 = vunpack.c.l.s4 1983009808
    %v1890 = vunpack.c.0.s8 %v1889
    %v1891 = vlaneseq
    %v1892 = vshrl.u32 %v1891, 7
    %v1893 = vsub.s32 %v1890, %v1892
    %v1894 = vrot.slane %v1887, %v1893
    %v1895 = vcombine.low %v1669, %v1670
    %v1897 = vunpack.c.l.s4 1983009808
    %v1898 = vunpack.c.0.s8 %v1897
    %v1899 = vlaneseq
    %v1900 = vshrl.u32 %v1899, 7
    %v1901 = vsub.s32 %v1898, %v1900
    %v1902 = vrot.slane %v1895, %v1901
    %v1903 = vcombine.low %v1894, %v1902
    %v1905 = vunpack.c.l.s4 1934713408
    %v1906 = vunpack.c.0.s8 %v1905
    %v1907 = vlaneseq
    %v1908 = vshrl.u32 %v1907, 7
    %v1909 = vsub.s32 %v1906, %v1908
    %v1910 = vrot.slane %v1903, %v1909
    %v1911 = vcombine.high %v1910, 0
    %v1912 = vcombine.low %v1725, %v1732
    %v1914 = vunpack.c.l.s4 1983009808
    %v1915 = vunpack.c.0.s8 %v1914
    %v1916 = vlaneseq
    %v1917 = vshrl.u32 %v1916, 7
    %v1918 = vsub.s32 %v1915, %v1917
    %v1919 = vrot.slane %v1912, %v1918
    %v1920 = vcombine.low %v1735, %v1736
    %v1922 = vunpack.c.l.s4 1983009808
    %v1923 = vunpack.c.0.s8 %v1922
    %v1924 = vlaneseq
    %v1925 = vshrl.u32 %v1924, 7
    %v1926 = vsub.s32 %v1923, %v1925
    %v1927 = vrot.slane %v1920, %v1926
    %v1928 = vcombine.low %v1919, %v1927
    %v1930 = vunpack.c.l.s4 1934713408
    %v1931 = vunpack.c.0.s8 %v1930
    %v1932 = vlaneseq
    %v1933 = vshrl.u32 %v1932, 7
    %v1934 = vsub.s32 %v1931, %v1933
    %v1935 = vrot.slane %v1928, %v1934
    %v1936 = vcombine.high %v1935, 0
    %v1939 = vpack.i.b16 %v1785, %v1760
    %v1940 = vshrl.u32 %v1760, 16
    %v1941 = vshrl.u32 %v1785, 16
    %v1942 = vpack.i.b16 %v1941, %v1940
    %v1945 = vpack.i.b16 %v1786, %v1761
    %v1946 = vshrl.u32 %v1761, 16
    %v1947 = vshrl.u32 %v1786, 16
    %v1948 = vpack.i.b16 %v1947, %v1946
    %v1951 = vpack.i.b16 %v1835, %v1810
    %v1952 = vshrl.u32 %v1810, 16
    %v1953 = vshrl.u32 %v1835, 16
    %v1954 = vpack.i.b16 %v1953, %v1952
    %v1957 = vpack.i.b16 %v1836, %v1811
    %v1958 = vshrl.u32 %v1811, 16
    %v1959 = vshrl.u32 %v1836, 16
    %v1960 = vpack.i.b16 %v1959, %v1958
    %v1963 = vpack.i.b16 %v1885, %v1860
    %v1964 = vshrl.u32 %v1860, 16
    %v1965 = vshrl.u32 %v1885, 16
    %v1966 = vpack.i.b16 %v1965, %v1964
    %v1969 = vpack.i.b16 %v1886, %v1861
    %v1970 = vshrl.u32 %v1861, 16
    %v1971 = vshrl.u32 %v1886, 16
    %v1972 = vpack.i.b16 %v1971, %v1970
    %v1975 = vpack.i.b16 %v1935, %v1910
    %v1976 = vshrl.u32 %v1910, 16
    %v1977 = vshrl.u32 %v1935, 16
    %v1978 = vpack.i.b16 %v1977, %v1976
    %v1981 = vpack.i.b16 %v1936, %v1911
    %v1982 = vshrl.u32 %v1911, 16
    %v1983 = vshrl.u32 %v1936, 16
    %v1984 = vpack.i.b16 %v1983, %v1982
    %vm1985 = vcmask 64512
    %v1987 = vsel %vm1985, %v819, 0
    %v1990 = vsel %vm1985, %v1379, 0
    %1992 = vmatprep.subr.bf16.mxu0 0
    %1993 = vmatpush1.bf16.xpose.msra.mxu0 %v1990
    %1994 = vmatprep.subr.bf16.mxu0 0
    %1995 = vmatpush1.bf16.xpose.msra.mxu0 0
    %1996 = vmatprep.subr.bf16.mxu0 0
    %1997 = vmatpush1.bf16.xpose.msra.mxu0 0
    %1998 = vmatprep.subr.bf16.mxu0 0
    %1999 = vmatpush1.bf16.xpose.msra.mxu0 0
    %2000 = vmatprep.subr.bf16.mxu0 0
    %2001 = vmatpush1.bf16.xpose.msra.mxu0 0
    %2002 = vmatprep.subr.bf16.mxu0 0
    %2003 = vmatpush1.bf16.xpose.msra.mxu0 0
    %2004 = vmatprep.subr.bf16.mxu0 0
    %2005 = vmatpush1.bf16.xpose.msra.mxu0 0
    %2006 = vmatprep.subr.bf16.mxu0 0
    %2007 = vmatpush1.bf16.xpose.msra.mxu0 0
    %2008 = vmatprep.subr.bf16.mxu0 0
    %2009 = vmatpush1.bf16.xpose.msra.mxu0 0
    %2010 = vmatprep.subr.bf16.mxu0 0
    %2011 = vmatpush1.bf16.xpose.msra.mxu0 0
    %2012 = vmatprep.subr.bf16.mxu0 0
    %2013 = vmatpush1.bf16.xpose.msra.mxu0 0
    %2014 = vmatprep.subr.bf16.mxu0 0
    %2015 = vmatpush1.bf16.xpose.msra.mxu0 0
    %2016 = vmatprep.subr.bf16.mxu0 0
    %2017 = vmatpush1.bf16.xpose.msra.mxu0 0
    %2018 = vmatprep.subr.bf16.mxu0 0
    %2019 = vmatpush1.bf16.xpose.msra.mxu0 0
    %2020 = vmatprep.subr.bf16.mxu0 0
    %2021 = vmatpush1.bf16.xpose.msra.mxu0 0
    %2022 = vmatprep.subr.bf16.mxu0 0
    %2023 = vmatpush1.bf16.xpose.msra.mxu0 0
    %2024 = vmatprep.mubr.bf16.mxu0 0
    %2025 = vmatmul.mubr.bf16.gmra.mrb[0].mxu0 %v1987
    %v2026 = vpop.f32.mrb[0].mxu0
    %v2027 = vadd.f32 %v206, %v2026
    %v2028 = vpop.f32.mrb[0].mxu0
    %v2029 = vpop.f32.mrb[0].mxu0
    %v2030 = vpop.f32.mrb[0].mxu0
    %2031 = vdwg.mxu0
    %v2033 = vsel %vm1985, %v822, 0
    %v2036 = vsel %vm1985, %v1382, 0
    %2038 = vmatprep.subr.bf16.mxu0 0
    %2039 = vmatpush1.bf16.xpose.msra.mxu0 %v2036
    %2040 = vmatprep.subr.bf16.mxu0 0
    %2041 = vmatpush1.bf16.xpose.msra.mxu0 0
    %2042 = vmatprep.subr.bf16.mxu0 0
    %2043 = vmatpush1.bf16.xpose.msra.mxu0 0
    %2044 = vmatprep.subr.bf16.mxu0 0
    %2045 = vmatpush1.bf16.xpose.msra.mxu0 0
    %2046 = vmatprep.subr.bf16.mxu0 0
    %2047 = vmatpush1.bf16.xpose.msra.mxu0 0
    %2048 = vmatprep.subr.bf16.mxu0 0
    %2049 = vmatpush1.bf16.xpose.msra.mxu0 0
    %2050 = vmatprep.subr.bf16.mxu0 0
    %2051 = vmatpush1.bf16.xpose.msra.mxu0 0
    %2052 = vmatprep.subr.bf16.mxu0 0
    %2053 = vmatpush1.bf16.xpose.msra.mxu0 0
    %2054 = vmatprep.subr.bf16.mxu0 0
    %2055 = vmatpush1.bf16.xpose.msra.mxu0 0
    %2056 = vmatprep.subr.bf16.mxu0 0
    %2057 = vmatpush1.bf16.xpose.msra.mxu0 0
    %2058 = vmatprep.subr.bf16.mxu0 0
    %2059 = vmatpush1.bf16.xpose.msra.mxu0 0
    %2060 = vmatprep.subr.bf16.mxu0 0
    %2061 = vmatpush1.bf16.xpose.msra.mxu0 0
    %2062 = vmatprep.subr.bf16.mxu0 0
    %2063 = vmatpush1.bf16.xpose.msra.mxu0 0
    %2064 = vmatprep.subr.bf16.mxu0 0
    %2065 = vmatpush1.bf16.xpose.msra.mxu0 0
    %2066 = vmatprep.subr.bf16.mxu0 0
    %2067 = vmatpush1.bf16.xpose.msra.mxu0 0
    %2068 = vmatprep.subr.bf16.mxu0 0
    %2069 = vmatpush1.bf16.xpose.msra.mxu0 0
    %2070 = vmatprep.mubr.bf16.mxu0 0
    %2071 = vmatmul.mubr.bf16.gmra.mrb[0].mxu0 %v2033
    %v2072 = vpop.f32.mrb[0].mxu0
    %v2073 = vadd.f32 %v206, %v2072
    %v2074 = vpop.f32.mrb[0].mxu0
    %v2075 = vpop.f32.mrb[0].mxu0
    %v2076 = vpop.f32.mrb[0].mxu0
    %2077 = vdwg.mxu0
    %v2079 = vsel %vm1985, %v825, 0
    %v2082 = vsel %vm1985, %v1385, 0
    %2084 = vmatprep.subr.bf16.mxu0 0
    %2085 = vmatpush1.bf16.xpose.msra.mxu0 %v2082
    %2086 = vmatprep.subr.bf16.mxu0 0
    %2087 = vmatpush1.bf16.xpose.msra.mxu0 0
    %2088 = vmatprep.subr.bf16.mxu0 0
    %2089 = vmatpush1.bf16.xpose.msra.mxu0 0
    %2090 = vmatprep.subr.bf16.mxu0 0
    %2091 = vmatpush1.bf16.xpose.msra.mxu0 0
    %2092 = vmatprep.subr.bf16.mxu0 0
    %2093 = vmatpush1.bf16.xpose.msra.mxu0 0
    %2094 = vmatprep.subr.bf16.mxu0 0
    %2095 = vmatpush1.bf16.xpose.msra.mxu0 0
    %2096 = vmatprep.subr.bf16.mxu0 0
    %2097 = vmatpush1.bf16.xpose.msra.mxu0 0
    %2098 = vmatprep.subr.bf16.mxu0 0
    %2099 = vmatpush1.bf16.xpose.msra.mxu0 0
    %2100 = vmatprep.subr.bf16.mxu0 0
    %2101 = vmatpush1.bf16.xpose.msra.mxu0 0
    %2102 = vmatprep.subr.bf16.mxu0 0
    %2103 = vmatpush1.bf16.xpose.msra.mxu0 0
    %2104 = vmatprep.subr.bf16.mxu0 0
    %2105 = vmatpush1.bf16.xpose.msra.mxu0 0
    %2106 = vmatprep.subr.bf16.mxu0 0
    %2107 = vmatpush1.bf16.xpose.msra.mxu0 0
    %2108 = vmatprep.subr.bf16.mxu0 0
    %2109 = vmatpush1.bf16.xpose.msra.mxu0 0
    %2110 = vmatprep.subr.bf16.mxu0 0
    %2111 = vmatpush1.bf16.xpose.msra.mxu0 0
    %2112 = vmatprep.subr.bf16.mxu0 0
    %2113 = vmatpush1.bf16.xpose.msra.mxu0 0
    %2114 = vmatprep.subr.bf16.mxu0 0
    %2115 = vmatpush1.bf16.xpose.msra.mxu0 0
    %2116 = vmatprep.mubr.bf16.mxu0 0
    %2117 = vmatmul.mubr.bf16.gmra.mrb[0].mxu0 %v2079
    %v2118 = vpop.f32.mrb[0].mxu0
    %v2119 = vadd.f32 %v206, %v2118
    %v2120 = vpop.f32.mrb[0].mxu0
    %v2121 = vpop.f32.mrb[0].mxu0
    %v2122 = vpop.f32.mrb[0].mxu0
    %2123 = vdwg.mxu0
    %v2125 = vsel %vm1985, %v828, 0
    %v2128 = vsel %vm1985, %v1388, 0
    %2130 = vmatprep.subr.bf16.mxu0 0
    %2131 = vmatpush1.bf16.xpose.msra.mxu0 %v2128
    %2132 = vmatprep.subr.bf16.mxu0 0
    %2133 = vmatpush1.bf16.xpose.msra.mxu0 0
    %2134 = vmatprep.subr.bf16.mxu0 0
    %2135 = vmatpush1.bf16.xpose.msra.mxu0 0
    %2136 = vmatprep.subr.bf16.mxu0 0
    %2137 = vmatpush1.bf16.xpose.msra.mxu0 0
    %2138 = vmatprep.subr.bf16.mxu0 0
    %2139 = vmatpush1.bf16.xpose.msra.mxu0 0
    %2140 = vmatprep.subr.bf16.mxu0 0
    %2141 = vmatpush1.bf16.xpose.msra.mxu0 0
    %2142 = vmatprep.subr.bf16.mxu0 0
    %2143 = vmatpush1.bf16.xpose.msra.mxu0 0
    %2144 = vmatprep.subr.bf16.mxu0 0
    %2145 = vmatpush1.bf16.xpose.msra.mxu0 0
    %2146 = vmatprep.subr.bf16.mxu0 0
    %2147 = vmatpush1.bf16.xpose.msra.mxu0 0
    %2148 = vmatprep.subr.bf16.mxu0 0
    %2149 = vmatpush1.bf16.xpose.msra.mxu0 0
    %2150 = vmatprep.subr.bf16.mxu0 0
    %2151 = vmatpush1.bf16.xpose.msra.mxu0 0
    %2152 = vmatprep.subr.bf16.mxu0 0
    %2153 = vmatpush1.bf16.xpose.msra.mxu0 0
    %2154 = vmatprep.subr.bf16.mxu0 0
    %2155 = vmatpush1.bf16.xpose.msra.mxu0 0
    %2156 = vmatprep.subr.bf16.mxu0 0
    %2157 = vmatpush1.bf16.xpose.msra.mxu0 0
    %2158 = vmatprep.subr.bf16.mxu0 0
    %2159 = vmatpush1.bf16.xpose.msra.mxu0 0
    %2160 = vmatprep.subr.bf16.mxu0 0
    %2161 = vmatpush1.bf16.xpose.msra.mxu0 0
    %2162 = vmatprep.mubr.bf16.mxu0 0
    %2163 = vmatmul.mubr.bf16.gmra.mrb[0].mxu0 %v2125
    %v2164 = vpop.f32.mrb[0].mxu0
    %v2165 = vadd.f32 %v206, %v2164
    %v2166 = vpop.f32.mrb[0].mxu0
    %v2167 = vpop.f32.mrb[0].mxu0
    %v2168 = vpop.f32.mrb[0].mxu0
    %2169 = vdwg.mxu0
    %v2171 = vsel %vm1985, %v831, 0
    %v2174 = vsel %vm1985, %v1391, 0
    %2176 = vmatprep.subr.bf16.mxu0 0
    %2177 = vmatpush1.bf16.xpose.msra.mxu0 %v2174
    %2178 = vmatprep.subr.bf16.mxu0 0
    %2179 = vmatpush1.bf16.xpose.msra.mxu0 0
    %2180 = vmatprep.subr.bf16.mxu0 0
    %2181 = vmatpush1.bf16.xpose.msra.mxu0 0
    %2182 = vmatprep.subr.bf16.mxu0 0
    %2183 = vmatpush1.bf16.xpose.msra.mxu0 0
    %2184 = vmatprep.subr.bf16.mxu0 0
    %2185 = vmatpush1.bf16.xpose.msra.mxu0 0
    %2186 = vmatprep.subr.bf16.mxu0 0
    %2187 = vmatpush1.bf16.xpose.msra.mxu0 0
    %2188 = vmatprep.subr.bf16.mxu0 0
    %2189 = vmatpush1.bf16.xpose.msra.mxu0 0
    %2190 = vmatprep.subr.bf16.mxu0 0
    %2191 = vmatpush1.bf16.xpose.msra.mxu0 0
    %2192 = vmatprep.subr.bf16.mxu0 0
    %2193 = vmatpush1.bf16.xpose.msra.mxu0 0
    %2194 = vmatprep.subr.bf16.mxu0 0
    %2195 = vmatpush1.bf16.xpose.msra.mxu0 0
    %2196 = vmatprep.subr.bf16.mxu0 0
    %2197 = vmatpush1.bf16.xpose.msra.mxu0 0
    %2198 = vmatprep.subr.bf16.mxu0 0
    %2199 = vmatpush1.bf16.xpose.msra.mxu0 0
    %2200 = vmatprep.subr.bf16.mxu0 0
    %2201 = vmatpush1.bf16.xpose.msra.mxu0 0
    %2202 = vmatprep.subr.bf16.mxu0 0
    %2203 = vmatpush1.bf16.xpose.msra.mxu0 0
    %2204 = vmatprep.subr.bf16.mxu0 0
    %2205 = vmatpush1.bf16.xpose.msra.mxu0 0
    %2206 = vmatprep.subr.bf16.mxu0 0
    %2207 = vmatpush1.bf16.xpose.msra.mxu0 0
    %2208 = vmatprep.mubr.bf16.mxu0 0
    %2209 = vmatmul.mubr.bf16.gmra.mrb[0].mxu0 %v2171
    %v2210 = vpop.f32.mrb[0].mxu0
    %v2211 = vadd.f32 %v210, %v2210
    %v2212 = vpop.f32.mrb[0].mxu0
    %v2213 = vpop.f32.mrb[0].mxu0
    %v2214 = vpop.f32.mrb[0].mxu0
    %2215 = vdwg.mxu0
    %v2217 = vsel %vm1985, %v834, 0
    %v2220 = vsel %vm1985, %v1394, 0
    %2222 = vmatprep.subr.bf16.mxu0 0
    %2223 = vmatpush1.bf16.xpose.msra.mxu0 %v2220
    %2224 = vmatprep.subr.bf16.mxu0 0
    %2225 = vmatpush1.bf16.xpose.msra.mxu0 0
    %2226 = vmatprep.subr.bf16.mxu0 0
    %2227 = vmatpush1.bf16.xpose.msra.mxu0 0
    %2228 = vmatprep.subr.bf16.mxu0 0
    %2229 = vmatpush1.bf16.xpose.msra.mxu0 0
    %2230 = vmatprep.subr.bf16.mxu0 0
    %2231 = vmatpush1.bf16.xpose.msra.mxu0 0
    %2232 = vmatprep.subr.bf16.mxu0 0
    %2233 = vmatpush1.bf16.xpose.msra.mxu0 0
    %2234 = vmatprep.subr.bf16.mxu0 0
    %2235 = vmatpush1.bf16.xpose.msra.mxu0 0
    %2236 = vmatprep.subr.bf16.mxu0 0
    %2237 = vmatpush1.bf16.xpose.msra.mxu0 0
    %2238 = vmatprep.subr.bf16.mxu0 0
    %2239 = vmatpush1.bf16.xpose.msra.mxu0 0
    %2240 = vmatprep.subr.bf16.mxu0 0
    %2241 = vmatpush1.bf16.xpose.msra.mxu0 0
    %2242 = vmatprep.subr.bf16.mxu0 0
    %2243 = vmatpush1.bf16.xpose.msra.mxu0 0
    %2244 = vmatprep.subr.bf16.mxu0 0
    %2245 = vmatpush1.bf16.xpose.msra.mxu0 0
    %2246 = vmatprep.subr.bf16.mxu0 0
    %2247 = vmatpush1.bf16.xpose.msra.mxu0 0
    %2248 = vmatprep.subr.bf16.mxu0 0
    %2249 = vmatpush1.bf16.xpose.msra.mxu0 0
    %2250 = vmatprep.subr.bf16.mxu0 0
    %2251 = vmatpush1.bf16.xpose.msra.mxu0 0
    %2252 = vmatprep.subr.bf16.mxu0 0
    %2253 = vmatpush1.bf16.xpose.msra.mxu0 0
    %2254 = vmatprep.mubr.bf16.mxu0 0
    %2255 = vmatmul.mubr.bf16.gmra.mrb[0].mxu0 %v2217
    %v2256 = vpop.f32.mrb[0].mxu0
    %v2257 = vadd.f32 %v210, %v2256
    %v2258 = vpop.f32.mrb[0].mxu0
    %v2259 = vpop.f32.mrb[0].mxu0
    %v2260 = vpop.f32.mrb[0].mxu0
    %2261 = vdwg.mxu0
    %v2263 = vsel %vm1985, %v837, 0
    %v2266 = vsel %vm1985, %v1397, 0
    %2268 = vmatprep.subr.bf16.mxu0 0
    %2269 = vmatpush1.bf16.xpose.msra.mxu0 %v2266
    %2270 = vmatprep.subr.bf16.mxu0 0
    %2271 = vmatpush1.bf16.xpose.msra.mxu0 0
    %2272 = vmatprep.subr.bf16.mxu0 0
    %2273 = vmatpush1.bf16.xpose.msra.mxu0 0
    %2274 = vmatprep.subr.bf16.mxu0 0
    %2275 = vmatpush1.bf16.xpose.msra.mxu0 0
    %2276 = vmatprep.subr.bf16.mxu0 0
    %2277 = vmatpush1.bf16.xpose.msra.mxu0 0
    %2278 = vmatprep.subr.bf16.mxu0 0
    %2279 = vmatpush1.bf16.xpose.msra.mxu0 0
    %2280 = vmatprep.subr.bf16.mxu0 0
    %2281 = vmatpush1.bf16.xpose.msra.mxu0 0
    %2282 = vmatprep.subr.bf16.mxu0 0
    %2283 = vmatpush1.bf16.xpose.msra.mxu0 0
    %2284 = vmatprep.subr.bf16.mxu0 0
    %2285 = vmatpush1.bf16.xpose.msra.mxu0 0
    %2286 = vmatprep.subr.bf16.mxu0 0
    %2287 = vmatpush1.bf16.xpose.msra.mxu0 0
    %2288 = vmatprep.subr.bf16.mxu0 0
    %2289 = vmatpush1.bf16.xpose.msra.mxu0 0
    %2290 = vmatprep.subr.bf16.mxu0 0
    %2291 = vmatpush1.bf16.xpose.msra.mxu0 0
    %2292 = vmatprep.subr.bf16.mxu0 0
    %2293 = vmatpush1.bf16.xpose.msra.mxu0 0
    %2294 = vmatprep.subr.bf16.mxu0 0
    %2295 = vmatpush1.bf16.xpose.msra.mxu0 0
    %2296 = vmatprep.subr.bf16.mxu0 0
    %2297 = vmatpush1.bf16.xpose.msra.mxu0 0
    %2298 = vmatprep.subr.bf16.mxu0 0
    %2299 = vmatpush1.bf16.xpose.msra.mxu0 0
    %2300 = vmatprep.mubr.bf16.mxu0 0
    %2301 = vmatmul.mubr.bf16.gmra.mrb[0].mxu0 %v2263
    %v2302 = vpop.f32.mrb[0].mxu0
    %v2303 = vadd.f32 %v210, %v2302
    %v2304 = vpop.f32.mrb[0].mxu0
    %v2305 = vpop.f32.mrb[0].mxu0
    %v2306 = vpop.f32.mrb[0].mxu0
    %2307 = vdwg.mxu0
    %v2309 = vsel %vm1985, %v840, 0
    %v2312 = vsel %vm1985, %v1400, 0
    %2314 = vmatprep.subr.bf16.mxu0 0
    %2315 = vmatpush1.bf16.xpose.msra.mxu0 %v2312
    %2316 = vmatprep.subr.bf16.mxu0 0
    %2317 = vmatpush1.bf16.xpose.msra.mxu0 0
    %2318 = vmatprep.subr.bf16.mxu0 0
    %2319 = vmatpush1.bf16.xpose.msra.mxu0 0
    %2320 = vmatprep.subr.bf16.mxu0 0
    %2321 = vmatpush1.bf16.xpose.msra.mxu0 0
    %2322 = vmatprep.subr.bf16.mxu0 0
    %2323 = vmatpush1.bf16.xpose.msra.mxu0 0
    %2324 = vmatprep.subr.bf16.mxu0 0
    %2325 = vmatpush1.bf16.xpose.msra.mxu0 0
    %2326 = vmatprep.subr.bf16.mxu0 0
    %2327 = vmatpush1.bf16.xpose.msra.mxu0 0
    %2328 = vmatprep.subr.bf16.mxu0 0
    %2329 = vmatpush1.bf16.xpose.msra.mxu0 0
    %2330 = vmatprep.subr.bf16.mxu0 0
    %2331 = vmatpush1.bf16.xpose.msra.mxu0 0
    %2332 = vmatprep.subr.bf16.mxu0 0
    %2333 = vmatpush1.bf16.xpose.msra.mxu0 0
    %2334 = vmatprep.subr.bf16.mxu0 0
    %2335 = vmatpush1.bf16.xpose.msra.mxu0 0
    %2336 = vmatprep.subr.bf16.mxu0 0
    %2337 = vmatpush1.bf16.xpose.msra.mxu0 0
    %2338 = vmatprep.subr.bf16.mxu0 0
    %2339 = vmatpush1.bf16.xpose.msra.mxu0 0
    %2340 = vmatprep.subr.bf16.mxu0 0
    %2341 = vmatpush1.bf16.xpose.msra.mxu0 0
    %2342 = vmatprep.subr.bf16.mxu0 0
    %2343 = vmatpush1.bf16.xpose.msra.mxu0 0
    %2344 = vmatprep.subr.bf16.mxu0 0
    %2345 = vmatpush1.bf16.xpose.msra.mxu0 0
    %2346 = vmatprep.mubr.bf16.mxu0 0
    %2347 = vmatmul.mubr.bf16.gmra.mrb[0].mxu0 %v2309
    %v2348 = vpop.f32.mrb[0].mxu0
    %v2349 = vadd.f32 %v210, %v2348
    %v2350 = vpop.f32.mrb[0].mxu0
    %v2351 = vpop.f32.mrb[0].mxu0
    %v2352 = vpop.f32.mrb[0].mxu0
    %2353 = vdwg.mxu0
    %v2355 = vsel %vm1985, %v843, 0
    %v2358 = vsel %vm1985, %v1403, 0
    %2360 = vmatprep.subr.bf16.mxu0 0
    %2361 = vmatpush1.bf16.xpose.msra.mxu0 %v2358
    %2362 = vmatprep.subr.bf16.mxu0 0
    %2363 = vmatpush1.bf16.xpose.msra.mxu0 0
    %2364 = vmatprep.subr.bf16.mxu0 0
    %2365 = vmatpush1.bf16.xpose.msra.mxu0 0
    %2366 = vmatprep.subr.bf16.mxu0 0
    %2367 = vmatpush1.bf16.xpose.msra.mxu0 0
    %2368 = vmatprep.subr.bf16.mxu0 0
    %2369 = vmatpush1.bf16.xpose.msra.mxu0 0
    %2370 = vmatprep.subr.bf16.mxu0 0
    %2371 = vmatpush1.bf16.xpose.msra.mxu0 0
    %2372 = vmatprep.subr.bf16.mxu0 0
    %2373 = vmatpush1.bf16.xpose.msra.mxu0 0
    %2374 = vmatprep.subr.bf16.mxu0 0
    %2375 = vmatpush1.bf16.xpose.msra.mxu0 0
    %2376 = vmatprep.subr.bf16.mxu0 0
    %2377 = vmatpush1.bf16.xpose.msra.mxu0 0
    %2378 = vmatprep.subr.bf16.mxu0 0
    %2379 = vmatpush1.bf16.xpose.msra.mxu0 0
    %2380 = vmatprep.subr.bf16.mxu0 0
    %2381 = vmatpush1.bf16.xpose.msra.mxu0 0
    %2382 = vmatprep.subr.bf16.mxu0 0
    %2383 = vmatpush1.bf16.xpose.msra.mxu0 0
    %2384 = vmatprep.subr.bf16.mxu0 0
    %2385 = vmatpush1.bf16.xpose.msra.mxu0 0
    %2386 = vmatprep.subr.bf16.mxu0 0
    %2387 = vmatpush1.bf16.xpose.msra.mxu0 0
    %2388 = vmatprep.subr.bf16.mxu0 0
    %2389 = vmatpush1.bf16.xpose.msra.mxu0 0
    %2390 = vmatprep.subr.bf16.mxu0 0
    %2391 = vmatpush1.bf16.xpose.msra.mxu0 0
    %2392 = vmatprep.mubr.bf16.mxu0 0
    %2393 = vmatmul.mubr.bf16.gmra.mrb[0].mxu0 %v2355
    %v2394 = vpop.f32.mrb[0].mxu0
    %v2395 = vadd.f32 %v214, %v2394
    %v2396 = vpop.f32.mrb[0].mxu0
    %v2397 = vpop.f32.mrb[0].mxu0
    %v2398 = vpop.f32.mrb[0].mxu0
    %2399 = vdwg.mxu0
    %v2401 = vsel %vm1985, %v846, 0
    %v2404 = vsel %vm1985, %v1406, 0
    %2406 = vmatprep.subr.bf16.mxu0 0
    %2407 = vmatpush1.bf16.xpose.msra.mxu0 %v2404
    %2408 = vmatprep.subr.bf16.mxu0 0
    %2409 = vmatpush1.bf16.xpose.msra.mxu0 0
    %2410 = vmatprep.subr.bf16.mxu0 0
    %2411 = vmatpush1.bf16.xpose.msra.mxu0 0
    %2412 = vmatprep.subr.bf16.mxu0 0
    %2413 = vmatpush1.bf16.xpose.msra.mxu0 0
    %2414 = vmatprep.subr.bf16.mxu0 0
    %2415 = vmatpush1.bf16.xpose.msra.mxu0 0
    %2416 = vmatprep.subr.bf16.mxu0 0
    %2417 = vmatpush1.bf16.xpose.msra.mxu0 0
    %2418 = vmatprep.subr.bf16.mxu0 0
    %2419 = vmatpush1.bf16.xpose.msra.mxu0 0
    %2420 = vmatprep.subr.bf16.mxu0 0
    %2421 = vmatpush1.bf16.xpose.msra.mxu0 0
    %2422 = vmatprep.subr.bf16.mxu0 0
    %2423 = vmatpush1.bf16.xpose.msra.mxu0 0
    %2424 = vmatprep.subr.bf16.mxu0 0
    %2425 = vmatpush1.bf16.xpose.msra.mxu0 0
    %2426 = vmatprep.subr.bf16.mxu0 0
    %2427 = vmatpush1.bf16.xpose.msra.mxu0 0
    %2428 = vmatprep.subr.bf16.mxu0 0
    %2429 = vmatpush1.bf16.xpose.msra.mxu0 0
    %2430 = vmatprep.subr.bf16.mxu0 0
    %2431 = vmatpush1.bf16.xpose.msra.mxu0 0
    %2432 = vmatprep.subr.bf16.mxu0 0
    %2433 = vmatpush1.bf16.xpose.msra.mxu0 0
    %2434 = vmatprep.subr.bf16.mxu0 0
    %2435 = vmatpush1.bf16.xpose.msra.mxu0 0
    %2436 = vmatprep.subr.bf16.mxu0 0
    %2437 = vmatpush1.bf16.xpose.msra.mxu0 0
    %2438 = vmatprep.mubr.bf16.mxu0 0
    %2439 = vmatmul.mubr.bf16.gmra.mrb[0].mxu0 %v2401
    %v2440 = vpop.f32.mrb[0].mxu0
    %v2441 = vadd.f32 %v214, %v2440
    %v2442 = vpop.f32.mrb[0].mxu0
    %v2443 = vpop.f32.mrb[0].mxu0
    %v2444 = vpop.f32.mrb[0].mxu0
    %2445 = vdwg.mxu0
    %v2447 = vsel %vm1985, %v849, 0
    %v2450 = vsel %vm1985, %v1409, 0
    %2452 = vmatprep.subr.bf16.mxu0 0
    %2453 = vmatpush1.bf16.xpose.msra.mxu0 %v2450
    %2454 = vmatprep.subr.bf16.mxu0 0
    %2455 = vmatpush1.bf16.xpose.msra.mxu0 0
    %2456 = vmatprep.subr.bf16.mxu0 0
    %2457 = vmatpush1.bf16.xpose.msra.mxu0 0
    %2458 = vmatprep.subr.bf16.mxu0 0
    %2459 = vmatpush1.bf16.xpose.msra.mxu0 0
    %2460 = vmatprep.subr.bf16.mxu0 0
    %2461 = vmatpush1.bf16.xpose.msra.mxu0 0
    %2462 = vmatprep.subr.bf16.mxu0 0
    %2463 = vmatpush1.bf16.xpose.msra.mxu0 0
    %2464 = vmatprep.subr.bf16.mxu0 0
    %2465 = vmatpush1.bf16.xpose.msra.mxu0 0
    %2466 = vmatprep.subr.bf16.mxu0 0
    %2467 = vmatpush1.bf16.xpose.msra.mxu0 0
    %2468 = vmatprep.subr.bf16.mxu0 0
    %2469 = vmatpush1.bf16.xpose.msra.mxu0 0
    %2470 = vmatprep.subr.bf16.mxu0 0
    %2471 = vmatpush1.bf16.xpose.msra.mxu0 0
    %2472 = vmatprep.subr.bf16.mxu0 0
    %2473 = vmatpush1.bf16.xpose.msra.mxu0 0
    %2474 = vmatprep.subr.bf16.mxu0 0
    %2475 = vmatpush1.bf16.xpose.msra.mxu0 0
    %2476 = vmatprep.subr.bf16.mxu0 0
    %2477 = vmatpush1.bf16.xpose.msra.mxu0 0
    %2478 = vmatprep.subr.bf16.mxu0 0
    %2479 = vmatpush1.bf16.xpose.msra.mxu0 0
    %2480 = vmatprep.subr.bf16.mxu0 0
    %2481 = vmatpush1.bf16.xpose.msra.mxu0 0
    %2482 = vmatprep.subr.bf16.mxu0 0
    %2483 = vmatpush1.bf16.xpose.msra.mxu0 0
    %2484 = vmatprep.mubr.bf16.mxu0 0
    %2485 = vmatmul.mubr.bf16.gmra.mrb[0].mxu0 %v2447
    %v2486 = vpop.f32.mrb[0].mxu0
    %v2487 = vadd.f32 %v214, %v2486
    %v2488 = vpop.f32.mrb[0].mxu0
    %v2489 = vpop.f32.mrb[0].mxu0
    %v2490 = vpop.f32.mrb[0].mxu0
    %2491 = vdwg.mxu0
    %v2493 = vsel %vm1985, %v852, 0
    %v2496 = vsel %vm1985, %v1412, 0
    %2498 = vmatprep.subr.bf16.mxu0 0
    %2499 = vmatpush1.bf16.xpose.msra.mxu0 %v2496
    %2500 = vmatprep.subr.bf16.mxu0 0
    %2501 = vmatpush1.bf16.xpose.msra.mxu0 0
    %2502 = vmatprep.subr.bf16.mxu0 0
    %2503 = vmatpush1.bf16.xpose.msra.mxu0 0
    %2504 = vmatprep.subr.bf16.mxu0 0
    %2505 = vmatpush1.bf16.xpose.msra.mxu0 0
    %2506 = vmatprep.subr.bf16.mxu0 0
    %2507 = vmatpush1.bf16.xpose.msra.mxu0 0
    %2508 = vmatprep.subr.bf16.mxu0 0
    %2509 = vmatpush1.bf16.xpose.msra.mxu0 0
    %2510 = vmatprep.subr.bf16.mxu0 0
    %2511 = vmatpush1.bf16.xpose.msra.mxu0 0
    %2512 = vmatprep.subr.bf16.mxu0 0
    %2513 = vmatpush1.bf16.xpose.msra.mxu0 0
    %2514 = vmatprep.subr.bf16.mxu0 0
    %2515 = vmatpush1.bf16.xpose.msra.mxu0 0
    %2516 = vmatprep.subr.bf16.mxu0 0
    %2517 = vmatpush1.bf16.xpose.msra.mxu0 0
    %2518 = vmatprep.subr.bf16.mxu0 0
    %2519 = vmatpush1.bf16.xpose.msra.mxu0 0
    %2520 = vmatprep.subr.bf16.mxu0 0
    %2521 = vmatpush1.bf16.xpose.msra.mxu0 0
    %2522 = vmatprep.subr.bf16.mxu0 0
    %2523 = vmatpush1.bf16.xpose.msra.mxu0 0
    %2524 = vmatprep.subr.bf16.mxu0 0
    %2525 = vmatpush1.bf16.xpose.msra.mxu0 0
    %2526 = vmatprep.subr.bf16.mxu0 0
    %2527 = vmatpush1.bf16.xpose.msra.mxu0 0
    %2528 = vmatprep.subr.bf16.mxu0 0
    %2529 = vmatpush1.bf16.xpose.msra.mxu0 0
    %2530 = vmatprep.mubr.bf16.mxu0 0
    %2531 = vmatmul.mubr.bf16.gmra.mrb[0].mxu0 %v2493
    %v2532 = vpop.f32.mrb[0].mxu0
    %v2533 = vadd.f32 %v214, %v2532
    %v2534 = vpop.f32.mrb[0].mxu0
    %v2535 = vpop.f32.mrb[0].mxu0
    %v2536 = vpop.f32.mrb[0].mxu0
    %2537 = vdwg.mxu0
    %v2539 = vsel %vm1985, %v855, 0
    %v2542 = vsel %vm1985, %v1415, 0
    %2544 = vmatprep.subr.bf16.mxu0 0
    %2545 = vmatpush1.bf16.xpose.msra.mxu0 %v2542
    %2546 = vmatprep.subr.bf16.mxu0 0
    %2547 = vmatpush1.bf16.xpose.msra.mxu0 0
    %2548 = vmatprep.subr.bf16.mxu0 0
    %2549 = vmatpush1.bf16.xpose.msra.mxu0 0
    %2550 = vmatprep.subr.bf16.mxu0 0
    %2551 = vmatpush1.bf16.xpose.msra.mxu0 0
    %2552 = vmatprep.subr.bf16.mxu0 0
    %2553 = vmatpush1.bf16.xpose.msra.mxu0 0
    %2554 = vmatprep.subr.bf16.mxu0 0
    %2555 = vmatpush1.bf16.xpose.msra.mxu0 0
    %2556 = vmatprep.subr.bf16.mxu0 0
    %2557 = vmatpush1.bf16.xpose.msra.mxu0 0
    %2558 = vmatprep.subr.bf16.mxu0 0
    %2559 = vmatpush1.bf16.xpose.msra.mxu0 0
    %2560 = vmatprep.subr.bf16.mxu0 0
    %2561 = vmatpush1.bf16.xpose.msra.mxu0 0
    %2562 = vmatprep.subr.bf16.mxu0 0
    %2563 = vmatpush1.bf16.xpose.msra.mxu0 0
    %2564 = vmatprep.subr.bf16.mxu0 0
    %2565 = vmatpush1.bf16.xpose.msra.mxu0 0
    %2566 = vmatprep.subr.bf16.mxu0 0
    %2567 = vmatpush1.bf16.xpose.msra.mxu0 0
    %2568 = vmatprep.subr.bf16.mxu0 0
    %2569 = vmatpush1.bf16.xpose.msra.mxu0 0
    %2570 = vmatprep.subr.bf16.mxu0 0
    %2571 = vmatpush1.bf16.xpose.msra.mxu0 0
    %2572 = vmatprep.subr.bf16.mxu0 0
    %2573 = vmatpush1.bf16.xpose.msra.mxu0 0
    %2574 = vmatprep.subr.bf16.mxu0 0
    %2575 = vmatpush1.bf16.xpose.msra.mxu0 0
    %2576 = vmatprep.mubr.bf16.mxu0 0
    %2577 = vmatmul.mubr.bf16.gmra.mrb[0].mxu0 %v2539
    %v2578 = vpop.f32.mrb[0].mxu0
    %v2579 = vadd.f32 %v218, %v2578
    %v2580 = vpop.f32.mrb[0].mxu0
    %v2581 = vpop.f32.mrb[0].mxu0
    %v2582 = vpop.f32.mrb[0].mxu0
    %2583 = vdwg.mxu0
    %v2585 = vsel %vm1985, %v858, 0
    %v2588 = vsel %vm1985, %v1418, 0
    %2590 = vmatprep.subr.bf16.mxu0 0
    %2591 = vmatpush1.bf16.xpose.msra.mxu0 %v2588
    %2592 = vmatprep.subr.bf16.mxu0 0
    %2593 = vmatpush1.bf16.xpose.msra.mxu0 0
    %2594 = vmatprep.subr.bf16.mxu0 0
    %2595 = vmatpush1.bf16.xpose.msra.mxu0 0
    %2596 = vmatprep.subr.bf16.mxu0 0
    %2597 = vmatpush1.bf16.xpose.msra.mxu0 0
    %2598 = vmatprep.subr.bf16.mxu0 0
    %2599 = vmatpush1.bf16.xpose.msra.mxu0 0
    %2600 = vmatprep.subr.bf16.mxu0 0
    %2601 = vmatpush1.bf16.xpose.msra.mxu0 0
    %2602 = vmatprep.subr.bf16.mxu0 0
    %2603 = vmatpush1.bf16.xpose.msra.mxu0 0
    %2604 = vmatprep.subr.bf16.mxu0 0
    %2605 = vmatpush1.bf16.xpose.msra.mxu0 0
    %2606 = vmatprep.subr.bf16.mxu0 0
    %2607 = vmatpush1.bf16.xpose.msra.mxu0 0
    %2608 = vmatprep.subr.bf16.mxu0 0
    %2609 = vmatpush1.bf16.xpose.msra.mxu0 0
    %2610 = vmatprep.subr.bf16.mxu0 0
    %2611 = vmatpush1.bf16.xpose.msra.mxu0 0
    %2612 = vmatprep.subr.bf16.mxu0 0
    %2613 = vmatpush1.bf16.xpose.msra.mxu0 0
    %2614 = vmatprep.subr.bf16.mxu0 0
    %2615 = vmatpush1.bf16.xpose.msra.mxu0 0
    %2616 = vmatprep.subr.bf16.mxu0 0
    %2617 = vmatpush1.bf16.xpose.msra.mxu0 0
    %2618 = vmatprep.subr.bf16.mxu0 0
    %2619 = vmatpush1.bf16.xpose.msra.mxu0 0
    %2620 = vmatprep.subr.bf16.mxu0 0
    %2621 = vmatpush1.bf16.xpose.msra.mxu0 0
    %2622 = vmatprep.mubr.bf16.mxu0 0
    %2623 = vmatmul.mubr.bf16.gmra.mrb[0].mxu0 %v2585
    %v2624 = vpop.f32.mrb[0].mxu0
    %v2625 = vadd.f32 %v218, %v2624
    %v2626 = vpop.f32.mrb[0].mxu0
    %v2627 = vpop.f32.mrb[0].mxu0
    %v2628 = vpop.f32.mrb[0].mxu0
    %2629 = vdwg.mxu0
    %v2631 = vsel %vm1985, %v861, 0
    %v2634 = vsel %vm1985, %v1421, 0
    %2636 = vmatprep.subr.bf16.mxu0 0
    %2637 = vmatpush1.bf16.xpose.msra.mxu0 %v2634
    %2638 = vmatprep.subr.bf16.mxu0 0
    %2639 = vmatpush1.bf16.xpose.msra.mxu0 0
    %2640 = vmatprep.subr.bf16.mxu0 0
    %2641 = vmatpush1.bf16.xpose.msra.mxu0 0
    %2642 = vmatprep.subr.bf16.mxu0 0
    %2643 = vmatpush1.bf16.xpose.msra.mxu0 0
    %2644 = vmatprep.subr.bf16.mxu0 0
    %2645 = vmatpush1.bf16.xpose.msra.mxu0 0
    %2646 = vmatprep.subr.bf16.mxu0 0
    %2647 = vmatpush1.bf16.xpose.msra.mxu0 0
    %2648 = vmatprep.subr.bf16.mxu0 0
    %2649 = vmatpush1.bf16.xpose.msra.mxu0 0
    %2650 = vmatprep.subr.bf16.mxu0 0
    %2651 = vmatpush1.bf16.xpose.msra.mxu0 0
    %2652 = vmatprep.subr.bf16.mxu0 0
    %2653 = vmatpush1.bf16.xpose.msra.mxu0 0
    %2654 = vmatprep.subr.bf16.mxu0 0
    %2655 = vmatpush1.bf16.xpose.msra.mxu0 0
    %2656 = vmatprep.subr.bf16.mxu0 0
    %2657 = vmatpush1.bf16.xpose.msra.mxu0 0
    %2658 = vmatprep.subr.bf16.mxu0 0
    %2659 = vmatpush1.bf16.xpose.msra.mxu0 0
    %2660 = vmatprep.subr.bf16.mxu0 0
    %2661 = vmatpush1.bf16.xpose.msra.mxu0 0
    %2662 = vmatprep.subr.bf16.mxu0 0
    %2663 = vmatpush1.bf16.xpose.msra.mxu0 0
    %2664 = vmatprep.subr.bf16.mxu0 0
    %2665 = vmatpush1.bf16.xpose.msra.mxu0 0
    %2666 = vmatprep.subr.bf16.mxu0 0
    %2667 = vmatpush1.bf16.xpose.msra.mxu0 0
    %2668 = vmatprep.mubr.bf16.mxu0 0
    %2669 = vmatmul.mubr.bf16.gmra.mrb[0].mxu0 %v2631
    %v2670 = vpop.f32.mrb[0].mxu0
    %v2671 = vadd.f32 %v218, %v2670
    %v2672 = vpop.f32.mrb[0].mxu0
    %v2673 = vpop.f32.mrb[0].mxu0
    %v2674 = vpop.f32.mrb[0].mxu0
    %2675 = vdwg.mxu0
    %v2677 = vsel %vm1985, %v864, 0
    %v2680 = vsel %vm1985, %v1424, 0
    %2682 = vmatprep.subr.bf16.mxu0 0
    %2683 = vmatpush1.bf16.xpose.msra.mxu0 %v2680
    %2684 = vmatprep.subr.bf16.mxu0 0
    %2685 = vmatpush1.bf16.xpose.msra.mxu0 0
    %2686 = vmatprep.subr.bf16.mxu0 0
    %2687 = vmatpush1.bf16.xpose.msra.mxu0 0
    %2688 = vmatprep.subr.bf16.mxu0 0
    %2689 = vmatpush1.bf16.xpose.msra.mxu0 0
    %2690 = vmatprep.subr.bf16.mxu0 0
    %2691 = vmatpush1.bf16.xpose.msra.mxu0 0
    %2692 = vmatprep.subr.bf16.mxu0 0
    %2693 = vmatpush1.bf16.xpose.msra.mxu0 0
    %2694 = vmatprep.subr.bf16.mxu0 0
    %2695 = vmatpush1.bf16.xpose.msra.mxu0 0
    %2696 = vmatprep.subr.bf16.mxu0 0
    %2697 = vmatpush1.bf16.xpose.msra.mxu0 0
    %2698 = vmatprep.subr.bf16.mxu0 0
    %2699 = vmatpush1.bf16.xpose.msra.mxu0 0
    %2700 = vmatprep.subr.bf16.mxu0 0
    %2701 = vmatpush1.bf16.xpose.msra.mxu0 0
    %2702 = vmatprep.subr.bf16.mxu0 0
    %2703 = vmatpush1.bf16.xpose.msra.mxu0 0
    %2704 = vmatprep.subr.bf16.mxu0 0
    %2705 = vmatpush1.bf16.xpose.msra.mxu0 0
    %2706 = vmatprep.subr.bf16.mxu0 0
    %2707 = vmatpush1.bf16.xpose.msra.mxu0 0
    %2708 = vmatprep.subr.bf16.mxu0 0
    %2709 = vmatpush1.bf16.xpose.msra.mxu0 0
    %2710 = vmatprep.subr.bf16.mxu0 0
    %2711 = vmatpush1.bf16.xpose.msra.mxu0 0
    %2712 = vmatprep.subr.bf16.mxu0 0
    %2713 = vmatpush1.bf16.xpose.msra.mxu0 0
    %2714 = vmatprep.mubr.bf16.mxu0 0
    %2715 = vmatmul.mubr.bf16.gmra.mrb[0].mxu0 %v2677
    %v2716 = vpop.f32.mrb[0].mxu0
    %v2717 = vadd.f32 %v218, %v2716
    %v2718 = vpop.f32.mrb[0].mxu0
    %v2719 = vpop.f32.mrb[0].mxu0
    %v2720 = vpop.f32.mrb[0].mxu0
    %2721 = vdwg.mxu0
    %v2722 = vsel %vm1985, %v2027, -inf
    %2723 = vmax.xlane.f32.xlu0 %v2722
    %v2724 = vpop.xlane.xlu0 %2723
    %v2725 = vsel %vm1985, %v2073, -inf
    %2726 = vmax.xlane.f32.xlu0 %v2725
    %v2727 = vpop.xlane.xlu0 %2726
    %v2728 = vsel %vm1985, %v2119, -inf
    %2729 = vmax.xlane.f32.xlu0 %v2728
    %v2730 = vpop.xlane.xlu0 %2729
    %v2731 = vsel %vm1985, %v2165, -inf
    %2732 = vmax.xlane.f32.xlu0 %v2731
    %v2733 = vpop.xlane.xlu0 %2732
    %v2734 = vsel %vm1985, %v2211, -inf
    %2735 = vmax.xlane.f32.xlu0 %v2734
    %v2736 = vpop.xlane.xlu0 %2735
    %v2737 = vsel %vm1985, %v2257, -inf
    %2738 = vmax.xlane.f32.xlu0 %v2737
    %v2739 = vpop.xlane.xlu0 %2738
    %v2740 = vsel %vm1985, %v2303, -inf
    %2741 = vmax.xlane.f32.xlu0 %v2740
    %v2742 = vpop.xlane.xlu0 %2741
    %v2743 = vsel %vm1985, %v2349, -inf
    %2744 = vmax.xlane.f32.xlu0 %v2743
    %v2745 = vpop.xlane.xlu0 %2744
    %v2746 = vsel %vm1985, %v2395, -inf
    %2747 = vmax.xlane.f32.xlu0 %v2746
    %v2748 = vpop.xlane.xlu0 %2747
    %v2749 = vsel %vm1985, %v2441, -inf
    %2750 = vmax.xlane.f32.xlu0 %v2749
    %v2751 = vpop.xlane.xlu0 %2750
    %v2752 = vsel %vm1985, %v2487, -inf
    %2753 = vmax.xlane.f32.xlu0 %v2752
    %v2754 = vpop.xlane.xlu0 %2753
    %v2755 = vsel %vm1985, %v2533, -inf
    %2756 = vmax.xlane.f32.xlu0 %v2755
    %v2757 = vpop.xlane.xlu0 %2756
    %v2758 = vsel %vm1985, %v2579, -inf
    %2759 = vmax.xlane.f32.xlu0 %v2758
    %v2760 = vpop.xlane.xlu0 %2759
    %v2761 = vsel %vm1985, %v2625, -inf
    %2762 = vmax.xlane.f32.xlu0 %v2761
    %v2763 = vpop.xlane.xlu0 %2762
    %v2764 = vsel %vm1985, %v2671, -inf
    %2765 = vmax.xlane.f32.xlu0 %v2764
    %v2766 = vpop.xlane.xlu0 %2765
    %v2767 = vsel %vm1985, %v2717, -inf
    %2768 = vmax.xlane.f32.xlu0 %v2767
    %v2769 = vpop.xlane.xlu0 %2768
    %v2770 = vsub.f32 %v2027, %v2724
    %v2771 = vsub.f32 %v2073, %v2727
    %v2772 = vsub.f32 %v2119, %v2730
    %v2773 = vsub.f32 %v2165, %v2733
    %v2774 = vsub.f32 %v2211, %v2736
    %v2775 = vsub.f32 %v2257, %v2739
    %v2776 = vsub.f32 %v2303, %v2742
    %v2777 = vsub.f32 %v2349, %v2745
    %v2778 = vsub.f32 %v2395, %v2748
    %v2779 = vsub.f32 %v2441, %v2751
    %v2780 = vsub.f32 %v2487, %v2754
    %v2781 = vsub.f32 %v2533, %v2757
    %v2782 = vsub.f32 %v2579, %v2760
    %v2783 = vsub.f32 %v2625, %v2763
    %v2784 = vsub.f32 %v2671, %v2766
    %v2785 = vsub.f32 %v2717, %v2769
    %v2786 = vmul.f32 %v2770, 1.442695
    %v2787 = vpow.pop %v2786
    %v2788 = vmul.f32 %v2771, 1.442695
    %v2789 = vpow.pop %v2788
    %v2790 = vmul.f32 %v2772, 1.442695
    %v2791 = vpow.pop %v2790
    %v2792 = vmul.f32 %v2773, 1.442695
    %v2793 = vpow.pop %v2792
    %v2794 = vmul.f32 %v2774, 1.442695
    %v2795 = vpow.pop %v2794
    %v2796 = vmul.f32 %v2775, 1.442695
    %v2797 = vpow.pop %v2796
    %v2798 = vmul.f32 %v2776, 1.442695
    %v2799 = vpow.pop %v2798
    %v2800 = vmul.f32 %v2777, 1.442695
    %v2801 = vpow.pop %v2800
    %v2802 = vmul.f32 %v2778, 1.442695
    %v2803 = vpow.pop %v2802
    %v2804 = vmul.f32 %v2779, 1.442695
    %v2805 = vpow.pop %v2804
    %v2806 = vmul.f32 %v2780, 1.442695
    %v2807 = vpow.pop %v2806
    %v2808 = vmul.f32 %v2781, 1.442695
    %v2809 = vpow.pop %v2808
    %v2810 = vmul.f32 %v2782, 1.442695
    %v2811 = vpow.pop %v2810
    %v2812 = vmul.f32 %v2783, 1.442695
    %v2813 = vpow.pop %v2812
    %v2814 = vmul.f32 %v2784, 1.442695
    %v2815 = vpow.pop %v2814
    %v2816 = vmul.f32 %v2785, 1.442695
    %v2817 = vpow.pop %v2816
    %v2818 = vsel %vm1985, %v2787, 0.0
    %2819 = vadd.xlane.f32.xlu0 %v2818
    %v2820 = vpop.xlane.xlu0 %2819
    %v2821 = vsel %vm1985, %v2789, 0.0
    %2822 = vadd.xlane.f32.xlu0 %v2821
    %v2823 = vpop.xlane.xlu0 %2822
    %v2824 = vsel %vm1985, %v2791, 0.0
    %2825 = vadd.xlane.f32.xlu0 %v2824
    %v2826 = vpop.xlane.xlu0 %2825
    %v2827 = vsel %vm1985, %v2793, 0.0
    %2828 = vadd.xlane.f32.xlu0 %v2827
    %v2829 = vpop.xlane.xlu0 %2828
    %v2830 = vsel %vm1985, %v2795, 0.0
    %2831 = vadd.xlane.f32.xlu0 %v2830
    %v2832 = vpop.xlane.xlu0 %2831
    %v2833 = vsel %vm1985, %v2797, 0.0
    %2834 = vadd.xlane.f32.xlu0 %v2833
    %v2835 = vpop.xlane.xlu0 %2834
    %v2836 = vsel %vm1985, %v2799, 0.0
    %2837 = vadd.xlane.f32.xlu0 %v2836
    %v2838 = vpop.xlane.xlu0 %2837
    %v2839 = vsel %vm1985, %v2801, 0.0
    %2840 = vadd.xlane.f32.xlu0 %v2839
    %v2841 = vpop.xlane.xlu0 %2840
    %v2842 = vsel %vm1985, %v2803, 0.0
    %2843 = vadd.xlane.f32.xlu0 %v2842
    %v2844 = vpop.xlane.xlu0 %2843
    %v2845 = vsel %vm1985, %v2805, 0.0
    %2846 = vadd.xlane.f32.xlu0 %v2845
    %v2847 = vpop.xlane.xlu0 %2846
    %v2848 = vsel %vm1985, %v2807, 0.0
    %2849 = vadd.xlane.f32.xlu0 %v2848
    %v2850 = vpop.xlane.xlu0 %2849
    %v2851 = vsel %vm1985, %v2809, 0.0
    %2852 = vadd.xlane.f32.xlu0 %v2851
    %v2853 = vpop.xlane.xlu0 %2852
    %v2854 = vsel %vm1985, %v2811, 0.0
    %2855 = vadd.xlane.f32.xlu0 %v2854
    %v2856 = vpop.xlane.xlu0 %2855
    %v2857 = vsel %vm1985, %v2813, 0.0
    %2858 = vadd.xlane.f32.xlu0 %v2857
    %v2859 = vpop.xlane.xlu0 %2858
    %v2860 = vsel %vm1985, %v2815, 0.0
    %2861 = vadd.xlane.f32.xlu0 %v2860
    %v2862 = vpop.xlane.xlu0 %2861
    %v2863 = vsel %vm1985, %v2817, 0.0
    %2864 = vadd.xlane.f32.xlu0 %v2863
    %v2865 = vpop.xlane.xlu0 %2864
    %v2866 = vrcp.pop %v2820
    %v2867 = vrcp.pop %v2823
    %v2868 = vrcp.pop %v2826
    %v2869 = vrcp.pop %v2829
    %v2870 = vrcp.pop %v2832
    %v2871 = vrcp.pop %v2835
    %v2872 = vrcp.pop %v2838
    %v2873 = vrcp.pop %v2841
    %v2874 = vrcp.pop %v2844
    %v2875 = vrcp.pop %v2847
    %v2876 = vrcp.pop %v2850
    %v2877 = vrcp.pop %v2853
    %v2878 = vrcp.pop %v2856
    %v2879 = vrcp.pop %v2859
    %v2880 = vrcp.pop %v2862
    %v2881 = vrcp.pop %v2865
    %v2882 = vmul.f32 %v2787, %v2866
    %v2883 = vmul.f32 %v2789, %v2867
    %v2884 = vmul.f32 %v2791, %v2868
    %v2885 = vmul.f32 %v2793, %v2869
    %v2886 = vmul.f32 %v2795, %v2870
    %v2887 = vmul.f32 %v2797, %v2871
    %v2888 = vmul.f32 %v2799, %v2872
    %v2889 = vmul.f32 %v2801, %v2873
    %v2890 = vmul.f32 %v2803, %v2874
    %v2891 = vmul.f32 %v2805, %v2875
    %v2892 = vmul.f32 %v2807, %v2876
    %v2893 = vmul.f32 %v2809, %v2877
    %v2894 = vmul.f32 %v2811, %v2878
    %v2895 = vmul.f32 %v2813, %v2879
    %v2896 = vmul.f32 %v2815, %v2880
    %v2897 = vmul.f32 %v2817, %v2881
    %v2898 = vpack.c.bf16 %v2882, %v2882
    %v2899 = vpack.c.bf16 %v2883, %v2883
    %v2900 = vpack.c.bf16 %v2884, %v2884
    %v2901 = vpack.c.bf16 %v2885, %v2885
    %v2902 = vpack.c.bf16 %v2886, %v2886
    %v2903 = vpack.c.bf16 %v2887, %v2887
    %v2904 = vpack.c.bf16 %v2888, %v2888
    %v2905 = vpack.c.bf16 %v2889, %v2889
    %v2906 = vpack.c.bf16 %v2890, %v2890
    %v2907 = vpack.c.bf16 %v2891, %v2891
    %v2908 = vpack.c.bf16 %v2892, %v2892
    %v2909 = vpack.c.bf16 %v2893, %v2893
    %v2910 = vpack.c.bf16 %v2894, %v2894
    %v2911 = vpack.c.bf16 %v2895, %v2895
    %v2912 = vpack.c.bf16 %v2896, %v2896
    %v2913 = vpack.c.bf16 %v2897, %v2897
    %v2915 = vsel %vm1985, %v2898, 0
    %vm2917 = vcmask 1043456
    %v2919 = vsel %vm2917, %v1939, 0
    %2921 = vmatprep.subr.bf16.mxu0 0
    %2922 = vmatpush1.bf16.msra.mxu0 %v2919
    %2923 = vmatprep.subr.bf16.mxu0 0
    %2924 = vmatpush1.bf16.msra.mxu0 0
    %2925 = vmatprep.subr.bf16.mxu0 0
    %2926 = vmatpush1.bf16.msra.mxu0 0
    %2927 = vmatprep.subr.bf16.mxu0 0
    %2928 = vmatpush1.bf16.msra.mxu0 0
    %2929 = vmatprep.subr.bf16.mxu0 0
    %2930 = vmatpush1.bf16.msra.mxu0 0
    %2931 = vmatprep.subr.bf16.mxu0 0
    %2932 = vmatpush1.bf16.msra.mxu0 0
    %2933 = vmatprep.subr.bf16.mxu0 0
    %2934 = vmatpush1.bf16.msra.mxu0 0
    %2935 = vmatprep.subr.bf16.mxu0 0
    %2936 = vmatpush1.bf16.msra.mxu0 0
    %2937 = vmatprep.subr.bf16.mxu0 0
    %2938 = vmatpush1.bf16.msra.mxu0 0
    %2939 = vmatprep.subr.bf16.mxu0 0
    %2940 = vmatpush1.bf16.msra.mxu0 0
    %2941 = vmatprep.subr.bf16.mxu0 0
    %2942 = vmatpush1.bf16.msra.mxu0 0
    %2943 = vmatprep.subr.bf16.mxu0 0
    %2944 = vmatpush1.bf16.msra.mxu0 0
    %2945 = vmatprep.subr.bf16.mxu0 0
    %2946 = vmatpush1.bf16.msra.mxu0 0
    %2947 = vmatprep.subr.bf16.mxu0 0
    %2948 = vmatpush1.bf16.msra.mxu0 0
    %2949 = vmatprep.subr.bf16.mxu0 0
    %2950 = vmatpush1.bf16.msra.mxu0 0
    %2951 = vmatprep.subr.bf16.mxu0 0
    %2952 = vmatpush1.bf16.msra.mxu0 0
    %2953 = vmatprep.mubr.bf16.mxu0 0
    %2954 = vmatmul.mubr.bf16.gmra.mrb[0].mxu0 %v2915
    %v2955 = vpop.f32.mrb[0].mxu0
    %v2956 = vadd.f32 0.0, %v2955
    %v2957 = vpop.f32.mrb[0].mxu0
    %v2958 = vpop.f32.mrb[0].mxu0
    %v2959 = vpop.f32.mrb[0].mxu0
    %2960 = vdwg.mxu0
    %v2962 = vsel %vm1985, %v2899, 0
    %v2965 = vsel %vm2917, %v1942, 0
    %2967 = vmatprep.subr.bf16.mxu0 0
    %2968 = vmatpush1.bf16.msra.mxu0 %v2965
    %2969 = vmatprep.subr.bf16.mxu0 0
    %2970 = vmatpush1.bf16.msra.mxu0 0
    %2971 = vmatprep.subr.bf16.mxu0 0
    %2972 = vmatpush1.bf16.msra.mxu0 0
    %2973 = vmatprep.subr.bf16.mxu0 0
    %2974 = vmatpush1.bf16.msra.mxu0 0
    %2975 = vmatprep.subr.bf16.mxu0 0
    %2976 = vmatpush1.bf16.msra.mxu0 0
    %2977 = vmatprep.subr.bf16.mxu0 0
    %2978 = vmatpush1.bf16.msra.mxu0 0
    %2979 = vmatprep.subr.bf16.mxu0 0
    %2980 = vmatpush1.bf16.msra.mxu0 0
    %2981 = vmatprep.subr.bf16.mxu0 0
    %2982 = vmatpush1.bf16.msra.mxu0 0
    %2983 = vmatprep.subr.bf16.mxu0 0
    %2984 = vmatpush1.bf16.msra.mxu0 0
    %2985 = vmatprep.subr.bf16.mxu0 0
    %2986 = vmatpush1.bf16.msra.mxu0 0
    %2987 = vmatprep.subr.bf16.mxu0 0
    %2988 = vmatpush1.bf16.msra.mxu0 0
    %2989 = vmatprep.subr.bf16.mxu0 0
    %2990 = vmatpush1.bf16.msra.mxu0 0
    %2991 = vmatprep.subr.bf16.mxu0 0
    %2992 = vmatpush1.bf16.msra.mxu0 0
    %2993 = vmatprep.subr.bf16.mxu0 0
    %2994 = vmatpush1.bf16.msra.mxu0 0
    %2995 = vmatprep.subr.bf16.mxu0 0
    %2996 = vmatpush1.bf16.msra.mxu0 0
    %2997 = vmatprep.subr.bf16.mxu0 0
    %2998 = vmatpush1.bf16.msra.mxu0 0
    %2999 = vmatprep.mubr.bf16.mxu0 0
    %3000 = vmatmul.mubr.bf16.gmra.mrb[0].mxu0 %v2962
    %v3001 = vpop.f32.mrb[0].mxu0
    %v3002 = vadd.f32 0.0, %v3001
    %v3003 = vpop.f32.mrb[0].mxu0
    %v3004 = vpop.f32.mrb[0].mxu0
    %v3005 = vpop.f32.mrb[0].mxu0
    %3006 = vdwg.mxu0
    %v3008 = vsel %vm1985, %v2900, 0
    %v3011 = vsel %vm2917, %v1945, 0
    %3013 = vmatprep.subr.bf16.mxu0 0
    %3014 = vmatpush1.bf16.msra.mxu0 %v3011
    %3015 = vmatprep.subr.bf16.mxu0 0
    %3016 = vmatpush1.bf16.msra.mxu0 0
    %3017 = vmatprep.subr.bf16.mxu0 0
    %3018 = vmatpush1.bf16.msra.mxu0 0
    %3019 = vmatprep.subr.bf16.mxu0 0
    %3020 = vmatpush1.bf16.msra.mxu0 0
    %3021 = vmatprep.subr.bf16.mxu0 0
    %3022 = vmatpush1.bf16.msra.mxu0 0
    %3023 = vmatprep.subr.bf16.mxu0 0
    %3024 = vmatpush1.bf16.msra.mxu0 0
    %3025 = vmatprep.subr.bf16.mxu0 0
    %3026 = vmatpush1.bf16.msra.mxu0 0
    %3027 = vmatprep.subr.bf16.mxu0 0
    %3028 = vmatpush1.bf16.msra.mxu0 0
    %3029 = vmatprep.subr.bf16.mxu0 0
    %3030 = vmatpush1.bf16.msra.mxu0 0
    %3031 = vmatprep.subr.bf16.mxu0 0
    %3032 = vmatpush1.bf16.msra.mxu0 0
    %3033 = vmatprep.subr.bf16.mxu0 0
    %3034 = vmatpush1.bf16.msra.mxu0 0
    %3035 = vmatprep.subr.bf16.mxu0 0
    %3036 = vmatpush1.bf16.msra.mxu0 0
    %3037 = vmatprep.subr.bf16.mxu0 0
    %3038 = vmatpush1.bf16.msra.mxu0 0
    %3039 = vmatprep.subr.bf16.mxu0 0
    %3040 = vmatpush1.bf16.msra.mxu0 0
    %3041 = vmatprep.subr.bf16.mxu0 0
    %3042 = vmatpush1.bf16.msra.mxu0 0
    %3043 = vmatprep.subr.bf16.mxu0 0
    %3044 = vmatpush1.bf16.msra.mxu0 0
    %3045 = vmatprep.mubr.bf16.mxu0 0
    %3046 = vmatmul.mubr.bf16.gmra.mrb[0].mxu0 %v3008
    %v3047 = vpop.f32.mrb[0].mxu0
    %v3048 = vadd.f32 0.0, %v3047
    %v3049 = vpop.f32.mrb[0].mxu0
    %v3050 = vpop.f32.mrb[0].mxu0
    %v3051 = vpop.f32.mrb[0].mxu0
    %3052 = vdwg.mxu0
    %v3054 = vsel %vm1985, %v2901, 0
    %v3057 = vsel %vm2917, %v1948, 0
    %3059 = vmatprep.subr.bf16.mxu0 0
    %3060 = vmatpush1.bf16.msra.mxu0 %v3057
    %3061 = vmatprep.subr.bf16.mxu0 0
    %3062 = vmatpush1.bf16.msra.mxu0 0
    %3063 = vmatprep.subr.bf16.mxu0 0
    %3064 = vmatpush1.bf16.msra.mxu0 0
    %3065 = vmatprep.subr.bf16.mxu0 0
    %3066 = vmatpush1.bf16.msra.mxu0 0
    %3067 = vmatprep.subr.bf16.mxu0 0
    %3068 = vmatpush1.bf16.msra.mxu0 0
    %3069 = vmatprep.subr.bf16.mxu0 0
    %3070 = vmatpush1.bf16.msra.mxu0 0
    %3071 = vmatprep.subr.bf16.mxu0 0
    %3072 = vmatpush1.bf16.msra.mxu0 0
    %3073 = vmatprep.subr.bf16.mxu0 0
    %3074 = vmatpush1.bf16.msra.mxu0 0
    %3075 = vmatprep.subr.bf16.mxu0 0
    %3076 = vmatpush1.bf16.msra.mxu0 0
    %3077 = vmatprep.subr.bf16.mxu0 0
    %3078 = vmatpush1.bf16.msra.mxu0 0
    %3079 = vmatprep.subr.bf16.mxu0 0
    %3080 = vmatpush1.bf16.msra.mxu0 0
    %3081 = vmatprep.subr.bf16.mxu0 0
    %3082 = vmatpush1.bf16.msra.mxu0 0
    %3083 = vmatprep.subr.bf16.mxu0 0
    %3084 = vmatpush1.bf16.msra.mxu0 0
    %3085 = vmatprep.subr.bf16.mxu0 0
    %3086 = vmatpush1.bf16.msra.mxu0 0
    %3087 = vmatprep.subr.bf16.mxu0 0
    %3088 = vmatpush1.bf16.msra.mxu0 0
    %3089 = vmatprep.subr.bf16.mxu0 0
    %3090 = vmatpush1.bf16.msra.mxu0 0
    %3091 = vmatprep.mubr.bf16.mxu0 0
    %3092 = vmatmul.mubr.bf16.gmra.mrb[0].mxu0 %v3054
    %v3093 = vpop.f32.mrb[0].mxu0
    %v3094 = vadd.f32 0.0, %v3093
    %v3095 = vpop.f32.mrb[0].mxu0
    %v3096 = vpop.f32.mrb[0].mxu0
    %v3097 = vpop.f32.mrb[0].mxu0
    %3098 = vdwg.mxu0
    %v3100 = vsel %vm1985, %v2902, 0
    %v3103 = vsel %vm2917, %v1951, 0
    %3105 = vmatprep.subr.bf16.mxu0 0
    %3106 = vmatpush1.bf16.msra.mxu0 %v3103
    %3107 = vmatprep.subr.bf16.mxu0 0
    %3108 = vmatpush1.bf16.msra.mxu0 0
    %3109 = vmatprep.subr.bf16.mxu0 0
    %3110 = vmatpush1.bf16.msra.mxu0 0
    %3111 = vmatprep.subr.bf16.mxu0 0
    %3112 = vmatpush1.bf16.msra.mxu0 0
    %3113 = vmatprep.subr.bf16.mxu0 0
    %3114 = vmatpush1.bf16.msra.mxu0 0
    %3115 = vmatprep.subr.bf16.mxu0 0
    %3116 = vmatpush1.bf16.msra.mxu0 0
    %3117 = vmatprep.subr.bf16.mxu0 0
    %3118 = vmatpush1.bf16.msra.mxu0 0
    %3119 = vmatprep.subr.bf16.mxu0 0
    %3120 = vmatpush1.bf16.msra.mxu0 0
    %3121 = vmatprep.subr.bf16.mxu0 0
    %3122 = vmatpush1.bf16.msra.mxu0 0
    %3123 = vmatprep.subr.bf16.mxu0 0
    %3124 = vmatpush1.bf16.msra.mxu0 0
    %3125 = vmatprep.subr.bf16.mxu0 0
    %3126 = vmatpush1.bf16.msra.mxu0 0
    %3127 = vmatprep.subr.bf16.mxu0 0
    %3128 = vmatpush1.bf16.msra.mxu0 0
    %3129 = vmatprep.subr.bf16.mxu0 0
    %3130 = vmatpush1.bf16.msra.mxu0 0
    %3131 = vmatprep.subr.bf16.mxu0 0
    %3132 = vmatpush1.bf16.msra.mxu0 0
    %3133 = vmatprep.subr.bf16.mxu0 0
    %3134 = vmatpush1.bf16.msra.mxu0 0
    %3135 = vmatprep.subr.bf16.mxu0 0
    %3136 = vmatpush1.bf16.msra.mxu0 0
    %3137 = vmatprep.mubr.bf16.mxu0 0
    %3138 = vmatmul.mubr.bf16.gmra.mrb[0].mxu0 %v3100
    %v3139 = vpop.f32.mrb[0].mxu0
    %v3140 = vadd.f32 0.0, %v3139
    %v3141 = vpop.f32.mrb[0].mxu0
    %v3142 = vpop.f32.mrb[0].mxu0
    %v3143 = vpop.f32.mrb[0].mxu0
    %3144 = vdwg.mxu0
    %v3146 = vsel %vm1985, %v2903, 0
    %v3149 = vsel %vm2917, %v1954, 0
    %3151 = vmatprep.subr.bf16.mxu0 0
    %3152 = vmatpush1.bf16.msra.mxu0 %v3149
    %3153 = vmatprep.subr.bf16.mxu0 0
    %3154 = vmatpush1.bf16.msra.mxu0 0
    %3155 = vmatprep.subr.bf16.mxu0 0
    %3156 = vmatpush1.bf16.msra.mxu0 0
    %3157 = vmatprep.subr.bf16.mxu0 0
    %3158 = vmatpush1.bf16.msra.mxu0 0
    %3159 = vmatprep.subr.bf16.mxu0 0
    %3160 = vmatpush1.bf16.msra.mxu0 0
    %3161 = vmatprep.subr.bf16.mxu0 0
    %3162 = vmatpush1.bf16.msra.mxu0 0
    %3163 = vmatprep.subr.bf16.mxu0 0
    %3164 = vmatpush1.bf16.msra.mxu0 0
    %3165 = vmatprep.subr.bf16.mxu0 0
    %3166 = vmatpush1.bf16.msra.mxu0 0
    %3167 = vmatprep.subr.bf16.mxu0 0
    %3168 = vmatpush1.bf16.msra.mxu0 0
    %3169 = vmatprep.subr.bf16.mxu0 0
    %3170 = vmatpush1.bf16.msra.mxu0 0
    %3171 = vmatprep.subr.bf16.mxu0 0
    %3172 = vmatpush1.bf16.msra.mxu0 0
    %3173 = vmatprep.subr.bf16.mxu0 0
    %3174 = vmatpush1.bf16.msra.mxu0 0
    %3175 = vmatprep.subr.bf16.mxu0 0
    %3176 = vmatpush1.bf16.msra.mxu0 0
    %3177 = vmatprep.subr.bf16.mxu0 0
    %3178 = vmatpush1.bf16.msra.mxu0 0
    %3179 = vmatprep.subr.bf16.mxu0 0
    %3180 = vmatpush1.bf16.msra.mxu0 0
    %3181 = vmatprep.subr.bf16.mxu0 0
    %3182 = vmatpush1.bf16.msra.mxu0 0
    %3183 = vmatprep.mubr.bf16.mxu0 0
    %3184 = vmatmul.mubr.bf16.gmra.mrb[0].mxu0 %v3146
    %v3185 = vpop.f32.mrb[0].mxu0
    %v3186 = vadd.f32 0.0, %v3185
    %v3187 = vpop.f32.mrb[0].mxu0
    %v3188 = vpop.f32.mrb[0].mxu0
    %v3189 = vpop.f32.mrb[0].mxu0
    %3190 = vdwg.mxu0
    %v3192 = vsel %vm1985, %v2904, 0
    %v3195 = vsel %vm2917, %v1957, 0
    %3197 = vmatprep.subr.bf16.mxu0 0
    %3198 = vmatpush1.bf16.msra.mxu0 %v3195
    %3199 = vmatprep.subr.bf16.mxu0 0
    %3200 = vmatpush1.bf16.msra.mxu0 0
    %3201 = vmatprep.subr.bf16.mxu0 0
    %3202 = vmatpush1.bf16.msra.mxu0 0
    %3203 = vmatprep.subr.bf16.mxu0 0
    %3204 = vmatpush1.bf16.msra.mxu0 0
    %3205 = vmatprep.subr.bf16.mxu0 0
    %3206 = vmatpush1.bf16.msra.mxu0 0
    %3207 = vmatprep.subr.bf16.mxu0 0
    %3208 = vmatpush1.bf16.msra.mxu0 0
    %3209 = vmatprep.subr.bf16.mxu0 0
    %3210 = vmatpush1.bf16.msra.mxu0 0
    %3211 = vmatprep.subr.bf16.mxu0 0
    %3212 = vmatpush1.bf16.msra.mxu0 0
    %3213 = vmatprep.subr.bf16.mxu0 0
    %3214 = vmatpush1.bf16.msra.mxu0 0
    %3215 = vmatprep.subr.bf16.mxu0 0
    %3216 = vmatpush1.bf16.msra.mxu0 0
    %3217 = vmatprep.subr.bf16.mxu0 0
    %3218 = vmatpush1.bf16.msra.mxu0 0
    %3219 = vmatprep.subr.bf16.mxu0 0
    %3220 = vmatpush1.bf16.msra.mxu0 0
    %3221 = vmatprep.subr.bf16.mxu0 0
    %3222 = vmatpush1.bf16.msra.mxu0 0
    %3223 = vmatprep.subr.bf16.mxu0 0
    %3224 = vmatpush1.bf16.msra.mxu0 0
    %3225 = vmatprep.subr.bf16.mxu0 0
    %3226 = vmatpush1.bf16.msra.mxu0 0
    %3227 = vmatprep.subr.bf16.mxu0 0
    %3228 = vmatpush1.bf16.msra.mxu0 0
    %3229 = vmatprep.mubr.bf16.mxu0 0
    %3230 = vmatmul.mubr.bf16.gmra.mrb[0].mxu0 %v3192
    %v3231 = vpop.f32.mrb[0].mxu0
    %v3232 = vadd.f32 0.0, %v3231
    %v3233 = vpop.f32.mrb[0].mxu0
    %v3234 = vpop.f32.mrb[0].mxu0
    %v3235 = vpop.f32.mrb[0].mxu0
    %3236 = vdwg.mxu0
    %v3238 = vsel %vm1985, %v2905, 0
    %v3241 = vsel %vm2917, %v1960, 0
    %3243 = vmatprep.subr.bf16.mxu0 0
    %3244 = vmatpush1.bf16.msra.mxu0 %v3241
    %3245 = vmatprep.subr.bf16.mxu0 0
    %3246 = vmatpush1.bf16.msra.mxu0 0
    %3247 = vmatprep.subr.bf16.mxu0 0
    %3248 = vmatpush1.bf16.msra.mxu0 0
    %3249 = vmatprep.subr.bf16.mxu0 0
    %3250 = vmatpush1.bf16.msra.mxu0 0
    %3251 = vmatprep.subr.bf16.mxu0 0
    %3252 = vmatpush1.bf16.msra.mxu0 0
    %3253 = vmatprep.subr.bf16.mxu0 0
    %3254 = vmatpush1.bf16.msra.mxu0 0
    %3255 = vmatprep.subr.bf16.mxu0 0
    %3256 = vmatpush1.bf16.msra.mxu0 0
    %3257 = vmatprep.subr.bf16.mxu0 0
    %3258 = vmatpush1.bf16.msra.mxu0 0
    %3259 = vmatprep.subr.bf16.mxu0 0
    %3260 = vmatpush1.bf16.msra.mxu0 0
    %3261 = vmatprep.subr.bf16.mxu0 0
    %3262 = vmatpush1.bf16.msra.mxu0 0
    %3263 = vmatprep.subr.bf16.mxu0 0
    %3264 = vmatpush1.bf16.msra.mxu0 0
    %3265 = vmatprep.subr.bf16.mxu0 0
    %3266 = vmatpush1.bf16.msra.mxu0 0
    %3267 = vmatprep.subr.bf16.mxu0 0
    %3268 = vmatpush1.bf16.msra.mxu0 0
    %3269 = vmatprep.subr.bf16.mxu0 0
    %3270 = vmatpush1.bf16.msra.mxu0 0
    %3271 = vmatprep.subr.bf16.mxu0 0
    %3272 = vmatpush1.bf16.msra.mxu0 0
    %3273 = vmatprep.subr.bf16.mxu0 0
    %3274 = vmatpush1.bf16.msra.mxu0 0
    %3275 = vmatprep.mubr.bf16.mxu0 0
    %3276 = vmatmul.mubr.bf16.gmra.mrb[0].mxu0 %v3238
    %v3277 = vpop.f32.mrb[0].mxu0
    %v3278 = vadd.f32 0.0, %v3277
    %v3279 = vpop.f32.mrb[0].mxu0
    %v3280 = vpop.f32.mrb[0].mxu0
    %v3281 = vpop.f32.mrb[0].mxu0
    %3282 = vdwg.mxu0
    %v3284 = vsel %vm1985, %v2906, 0
    %v3287 = vsel %vm2917, %v1963, 0
    %3289 = vmatprep.subr.bf16.mxu0 0
    %3290 = vmatpush1.bf16.msra.mxu0 %v3287
    %3291 = vmatprep.subr.bf16.mxu0 0
    %3292 = vmatpush1.bf16.msra.mxu0 0
    %3293 = vmatprep.subr.bf16.mxu0 0
    %3294 = vmatpush1.bf16.msra.mxu0 0
    %3295 = vmatprep.subr.bf16.mxu0 0
    %3296 = vmatpush1.bf16.msra.mxu0 0
    %3297 = vmatprep.subr.bf16.mxu0 0
    %3298 = vmatpush1.bf16.msra.mxu0 0
    %3299 = vmatprep.subr.bf16.mxu0 0
    %3300 = vmatpush1.bf16.msra.mxu0 0
    %3301 = vmatprep.subr.bf16.mxu0 0
    %3302 = vmatpush1.bf16.msra.mxu0 0
    %3303 = vmatprep.subr.bf16.mxu0 0
    %3304 = vmatpush1.bf16.msra.mxu0 0
    %3305 = vmatprep.subr.bf16.mxu0 0
    %3306 = vmatpush1.bf16.msra.mxu0 0
    %3307 = vmatprep.subr.bf16.mxu0 0
    %3308 = vmatpush1.bf16.msra.mxu0 0
    %3309 = vmatprep.subr.bf16.mxu0 0
    %3310 = vmatpush1.bf16.msra.mxu0 0
    %3311 = vmatprep.subr.bf16.mxu0 0
    %3312 = vmatpush1.bf16.msra.mxu0 0
    %3313 = vmatprep.subr.bf16.mxu0 0
    %3314 = vmatpush1.bf16.msra.mxu0 0
    %3315 = vmatprep.subr.bf16.mxu0 0
    %3316 = vmatpush1.bf16.msra.mxu0 0
    %3317 = vmatprep.subr.bf16.mxu0 0
    %3318 = vmatpush1.bf16.msra.mxu0 0
    %3319 = vmatprep.subr.bf16.mxu0 0
    %3320 = vmatpush1.bf16.msra.mxu0 0
    %3321 = vmatprep.mubr.bf16.mxu0 0
    %3322 = vmatmul.mubr.bf16.gmra.mrb[0].mxu0 %v3284
    %v3323 = vpop.f32.mrb[0].mxu0
    %v3324 = vadd.f32 0.0, %v3323
    %v3325 = vpop.f32.mrb[0].mxu0
    %v3326 = vpop.f32.mrb[0].mxu0
    %v3327 = vpop.f32.mrb[0].mxu0
    %3328 = vdwg.mxu0
    %v3330 = vsel %vm1985, %v2907, 0
    %v3333 = vsel %vm2917, %v1966, 0
    %3335 = vmatprep.subr.bf16.mxu0 0
    %3336 = vmatpush1.bf16.msra.mxu0 %v3333
    %3337 = vmatprep.subr.bf16.mxu0 0
    %3338 = vmatpush1.bf16.msra.mxu0 0
    %3339 = vmatprep.subr.bf16.mxu0 0
    %3340 = vmatpush1.bf16.msra.mxu0 0
    %3341 = vmatprep.subr.bf16.mxu0 0
    %3342 = vmatpush1.bf16.msra.mxu0 0
    %3343 = vmatprep.subr.bf16.mxu0 0
    %3344 = vmatpush1.bf16.msra.mxu0 0
    %3345 = vmatprep.subr.bf16.mxu0 0
    %3346 = vmatpush1.bf16.msra.mxu0 0
    %3347 = vmatprep.subr.bf16.mxu0 0
    %3348 = vmatpush1.bf16.msra.mxu0 0
    %3349 = vmatprep.subr.bf16.mxu0 0
    %3350 = vmatpush1.bf16.msra.mxu0 0
    %3351 = vmatprep.subr.bf16.mxu0 0
    %3352 = vmatpush1.bf16.msra.mxu0 0
    %3353 = vmatprep.subr.bf16.mxu0 0
    %3354 = vmatpush1.bf16.msra.mxu0 0
    %3355 = vmatprep.subr.bf16.mxu0 0
    %3356 = vmatpush1.bf16.msra.mxu0 0
    %3357 = vmatprep.subr.bf16.mxu0 0
    %3358 = vmatpush1.bf16.msra.mxu0 0
    %3359 = vmatprep.subr.bf16.mxu0 0
    %3360 = vmatpush1.bf16.msra.mxu0 0
    %3361 = vmatprep.subr.bf16.mxu0 0
    %3362 = vmatpush1.bf16.msra.mxu0 0
    %3363 = vmatprep.subr.bf16.mxu0 0
    %3364 = vmatpush1.bf16.msra.mxu0 0
    %3365 = vmatprep.subr.bf16.mxu0 0
    %3366 = vmatpush1.bf16.msra.mxu0 0
    %3367 = vmatprep.mubr.bf16.mxu0 0
    %3368 = vmatmul.mubr.bf16.gmra.mrb[0].mxu0 %v3330
    %v3369 = vpop.f32.mrb[0].mxu0
    %v3370 = vadd.f32 0.0, %v3369
    %v3371 = vpop.f32.mrb[0].mxu0
    %v3372 = vpop.f32.mrb[0].mxu0
    %v3373 = vpop.f32.mrb[0].mxu0
    %3374 = vdwg.mxu0
    %v3376 = vsel %vm1985, %v2908, 0
    %v3379 = vsel %vm2917, %v1969, 0
    %3381 = vmatprep.subr.bf16.mxu0 0
    %3382 = vmatpush1.bf16.msra.mxu0 %v3379
    %3383 = vmatprep.subr.bf16.mxu0 0
    %3384 = vmatpush1.bf16.msra.mxu0 0
    %3385 = vmatprep.subr.bf16.mxu0 0
    %3386 = vmatpush1.bf16.msra.mxu0 0
    %3387 = vmatprep.subr.bf16.mxu0 0
    %3388 = vmatpush1.bf16.msra.mxu0 0
    %3389 = vmatprep.subr.bf16.mxu0 0
    %3390 = vmatpush1.bf16.msra.mxu0 0
    %3391 = vmatprep.subr.bf16.mxu0 0
    %3392 = vmatpush1.bf16.msra.mxu0 0
    %3393 = vmatprep.subr.bf16.mxu0 0
    %3394 = vmatpush1.bf16.msra.mxu0 0
    %3395 = vmatprep.subr.bf16.mxu0 0
    %3396 = vmatpush1.bf16.msra.mxu0 0
    %3397 = vmatprep.subr.bf16.mxu0 0
    %3398 = vmatpush1.bf16.msra.mxu0 0
    %3399 = vmatprep.subr.bf16.mxu0 0
    %3400 = vmatpush1.bf16.msra.mxu0 0
    %3401 = vmatprep.subr.bf16.mxu0 0
    %3402 = vmatpush1.bf16.msra.mxu0 0
    %3403 = vmatprep.subr.bf16.mxu0 0
    %3404 = vmatpush1.bf16.msra.mxu0 0
    %3405 = vmatprep.subr.bf16.mxu0 0
    %3406 = vmatpush1.bf16.msra.mxu0 0
    %3407 = vmatprep.subr.bf16.mxu0 0
    %3408 = vmatpush1.bf16.msra.mxu0 0
    %3409 = vmatprep.subr.bf16.mxu0 0
    %3410 = vmatpush1.bf16.msra.mxu0 0
    %3411 = vmatprep.subr.bf16.mxu0 0
    %3412 = vmatpush1.bf16.msra.mxu0 0
    %3413 = vmatprep.mubr.bf16.mxu0 0
    %3414 = vmatmul.mubr.bf16.gmra.mrb[0].mxu0 %v3376
    %v3415 = vpop.f32.mrb[0].mxu0
    %v3416 = vadd.f32 0.0, %v3415
    %v3417 = vpop.f32.mrb[0].mxu0
    %v3418 = vpop.f32.mrb[0].mxu0
    %v3419 = vpop.f32.mrb[0].mxu0
    %3420 = vdwg.mxu0
    %v3422 = vsel %vm1985, %v2909, 0
    %v3425 = vsel %vm2917, %v1972, 0
    %3427 = vmatprep.subr.bf16.mxu0 0
    %3428 = vmatpush1.bf16.msra.mxu0 %v3425
    %3429 = vmatprep.subr.bf16.mxu0 0
    %3430 = vmatpush1.bf16.msra.mxu0 0
    %3431 = vmatprep.subr.bf16.mxu0 0
    %3432 = vmatpush1.bf16.msra.mxu0 0
    %3433 = vmatprep.subr.bf16.mxu0 0
    %3434 = vmatpush1.bf16.msra.mxu0 0
    %3435 = vmatprep.subr.bf16.mxu0 0
    %3436 = vmatpush1.bf16.msra.mxu0 0
    %3437 = vmatprep.subr.bf16.mxu0 0
    %3438 = vmatpush1.bf16.msra.mxu0 0
    %3439 = vmatprep.subr.bf16.mxu0 0
    %3440 = vmatpush1.bf16.msra.mxu0 0
    %3441 = vmatprep.subr.bf16.mxu0 0
    %3442 = vmatpush1.bf16.msra.mxu0 0
    %3443 = vmatprep.subr.bf16.mxu0 0
    %3444 = vmatpush1.bf16.msra.mxu0 0
    %3445 = vmatprep.subr.bf16.mxu0 0
    %3446 = vmatpush1.bf16.msra.mxu0 0
    %3447 = vmatprep.subr.bf16.mxu0 0
    %3448 = vmatpush1.bf16.msra.mxu0 0
    %3449 = vmatprep.subr.bf16.mxu0 0
    %3450 = vmatpush1.bf16.msra.mxu0 0
    %3451 = vmatprep.subr.bf16.mxu0 0
    %3452 = vmatpush1.bf16.msra.mxu0 0
    %3453 = vmatprep.subr.bf16.mxu0 0
    %3454 = vmatpush1.bf16.msra.mxu0 0
    %3455 = vmatprep.subr.bf16.mxu0 0
    %3456 = vmatpush1.bf16.msra.mxu0 0
    %3457 = vmatprep.subr.bf16.mxu0 0
    %3458 = vmatpush1.bf16.msra.mxu0 0
    %3459 = vmatprep.mubr.bf16.mxu0 0
    %3460 = vmatmul.mubr.bf16.gmra.mrb[0].mxu0 %v3422
    %v3461 = vpop.f32.mrb[0].mxu0
    %v3462 = vadd.f32 0.0, %v3461
    %v3463 = vpop.f32.mrb[0].mxu0
    %v3464 = vpop.f32.mrb[0].mxu0
    %v3465 = vpop.f32.mrb[0].mxu0
    %3466 = vdwg.mxu0
    %v3468 = vsel %vm1985, %v2910, 0
    %v3471 = vsel %vm2917, %v1975, 0
    %3473 = vmatprep.subr.bf16.mxu0 0
    %3474 = vmatpush1.bf16.msra.mxu0 %v3471
    %3475 = vmatprep.subr.bf16.mxu0 0
    %3476 = vmatpush1.bf16.msra.mxu0 0
    %3477 = vmatprep.subr.bf16.mxu0 0
    %3478 = vmatpush1.bf16.msra.mxu0 0
    %3479 = vmatprep.subr.bf16.mxu0 0
    %3480 = vmatpush1.bf16.msra.mxu0 0
    %3481 = vmatprep.subr.bf16.mxu0 0
    %3482 = vmatpush1.bf16.msra.mxu0 0
    %3483 = vmatprep.subr.bf16.mxu0 0
    %3484 = vmatpush1.bf16.msra.mxu0 0
    %3485 = vmatprep.subr.bf16.mxu0 0
    %3486 = vmatpush1.bf16.msra.mxu0 0
    %3487 = vmatprep.subr.bf16.mxu0 0
    %3488 = vmatpush1.bf16.msra.mxu0 0
    %3489 = vmatprep.subr.bf16.mxu0 0
    %3490 = vmatpush1.bf16.msra.mxu0 0
    %3491 = vmatprep.subr.bf16.mxu0 0
    %3492 = vmatpush1.bf16.msra.mxu0 0
    %3493 = vmatprep.subr.bf16.mxu0 0
    %3494 = vmatpush1.bf16.msra.mxu0 0
    %3495 = vmatprep.subr.bf16.mxu0 0
    %3496 = vmatpush1.bf16.msra.mxu0 0
    %3497 = vmatprep.subr.bf16.mxu0 0
    %3498 = vmatpush1.bf16.msra.mxu0 0
    %3499 = vmatprep.subr.bf16.mxu0 0
    %3500 = vmatpush1.bf16.msra.mxu0 0
    %3501 = vmatprep.subr.bf16.mxu0 0
    %3502 = vmatpush1.bf16.msra.mxu0 0
    %3503 = vmatprep.subr.bf16.mxu0 0
    %3504 = vmatpush1.bf16.msra.mxu0 0
    %3505 = vmatprep.mubr.bf16.mxu0 0
    %3506 = vmatmul.mubr.bf16.gmra.mrb[0].mxu0 %v3468
    %v3507 = vpop.f32.mrb[0].mxu0
    %v3508 = vadd.f32 0.0, %v3507
    %v3509 = vpop.f32.mrb[0].mxu0
    %v3510 = vpop.f32.mrb[0].mxu0
    %v3511 = vpop.f32.mrb[0].mxu0
    %3512 = vdwg.mxu0
    %v3514 = vsel %vm1985, %v2911, 0
    %v3517 = vsel %vm2917, %v1978, 0
    %3519 = vmatprep.subr.bf16.mxu0 0
    %3520 = vmatpush1.bf16.msra.mxu0 %v3517
    %3521 = vmatprep.subr.bf16.mxu0 0
    %3522 = vmatpush1.bf16.msra.mxu0 0
    %3523 = vmatprep.subr.bf16.mxu0 0
    %3524 = vmatpush1.bf16.msra.mxu0 0
    %3525 = vmatprep.subr.bf16.mxu0 0
    %3526 = vmatpush1.bf16.msra.mxu0 0
    %3527 = vmatprep.subr.bf16.mxu0 0
    %3528 = vmatpush1.bf16.msra.mxu0 0
    %3529 = vmatprep.subr.bf16.mxu0 0
    %3530 = vmatpush1.bf16.msra.mxu0 0
    %3531 = vmatprep.subr.bf16.mxu0 0
    %3532 = vmatpush1.bf16.msra.mxu0 0
    %3533 = vmatprep.subr.bf16.mxu0 0
    %3534 = vmatpush1.bf16.msra.mxu0 0
    %3535 = vmatprep.subr.bf16.mxu0 0
    %3536 = vmatpush1.bf16.msra.mxu0 0
    %3537 = vmatprep.subr.bf16.mxu0 0
    %3538 = vmatpush1.bf16.msra.mxu0 0
    %3539 = vmatprep.subr.bf16.mxu0 0
    %3540 = vmatpush1.bf16.msra.mxu0 0
    %3541 = vmatprep.subr.bf16.mxu0 0
    %3542 = vmatpush1.bf16.msra.mxu0 0
    %3543 = vmatprep.subr.bf16.mxu0 0
    %3544 = vmatpush1.bf16.msra.mxu0 0
    %3545 = vmatprep.subr.bf16.mxu0 0
    %3546 = vmatpush1.bf16.msra.mxu0 0
    %3547 = vmatprep.subr.bf16.mxu0 0
    %3548 = vmatpush1.bf16.msra.mxu0 0
    %3549 = vmatprep.subr.bf16.mxu0 0
    %3550 = vmatpush1.bf16.msra.mxu0 0
    %3551 = vmatprep.mubr.bf16.mxu0 0
    %3552 = vmatmul.mubr.bf16.gmra.mrb[0].mxu0 %v3514
    %v3553 = vpop.f32.mrb[0].mxu0
    %v3554 = vadd.f32 0.0, %v3553
    %v3555 = vpop.f32.mrb[0].mxu0
    %v3556 = vpop.f32.mrb[0].mxu0
    %v3557 = vpop.f32.mrb[0].mxu0
    %3558 = vdwg.mxu0
    %v3560 = vsel %vm1985, %v2912, 0
    %v3563 = vsel %vm2917, %v1981, 0
    %3565 = vmatprep.subr.bf16.mxu0 0
    %3566 = vmatpush1.bf16.msra.mxu0 %v3563
    %3567 = vmatprep.subr.bf16.mxu0 0
    %3568 = vmatpush1.bf16.msra.mxu0 0
    %3569 = vmatprep.subr.bf16.mxu0 0
    %3570 = vmatpush1.bf16.msra.mxu0 0
    %3571 = vmatprep.subr.bf16.mxu0 0
    %3572 = vmatpush1.bf16.msra.mxu0 0
    %3573 = vmatprep.subr.bf16.mxu0 0
    %3574 = vmatpush1.bf16.msra.mxu0 0
    %3575 = vmatprep.subr.bf16.mxu0 0
    %3576 = vmatpush1.bf16.msra.mxu0 0
    %3577 = vmatprep.subr.bf16.mxu0 0
    %3578 = vmatpush1.bf16.msra.mxu0 0
    %3579 = vmatprep.subr.bf16.mxu0 0
    %3580 = vmatpush1.bf16.msra.mxu0 0
    %3581 = vmatprep.subr.bf16.mxu0 0
    %3582 = vmatpush1.bf16.msra.mxu0 0
    %3583 = vmatprep.subr.bf16.mxu0 0
    %3584 = vmatpush1.bf16.msra.mxu0 0
    %3585 = vmatprep.subr.bf16.mxu0 0
    %3586 = vmatpush1.bf16.msra.mxu0 0
    %3587 = vmatprep.subr.bf16.mxu0 0
    %3588 = vmatpush1.bf16.msra.mxu0 0
    %3589 = vmatprep.subr.bf16.mxu0 0
    %3590 = vmatpush1.bf16.msra.mxu0 0
    %3591 = vmatprep.subr.bf16.mxu0 0
    %3592 = vmatpush1.bf16.msra.mxu0 0
    %3593 = vmatprep.subr.bf16.mxu0 0
    %3594 = vmatpush1.bf16.msra.mxu0 0
    %3595 = vmatprep.subr.bf16.mxu0 0
    %3596 = vmatpush1.bf16.msra.mxu0 0
    %3597 = vmatprep.mubr.bf16.mxu0 0
    %3598 = vmatmul.mubr.bf16.gmra.mrb[0].mxu0 %v3560
    %v3599 = vpop.f32.mrb[0].mxu0
    %v3600 = vadd.f32 0.0, %v3599
    %v3601 = vpop.f32.mrb[0].mxu0
    %v3602 = vpop.f32.mrb[0].mxu0
    %v3603 = vpop.f32.mrb[0].mxu0
    %3604 = vdwg.mxu0
    %v3606 = vsel %vm1985, %v2913, 0
    %v3609 = vsel %vm2917, %v1984, 0
    %3611 = vmatprep.subr.bf16.mxu0 0
    %3612 = vmatpush1.bf16.msra.mxu0 %v3609
    %3613 = vmatprep.subr.bf16.mxu0 0
    %3614 = vmatpush1.bf16.msra.mxu0 0
    %3615 = vmatprep.subr.bf16.mxu0 0
    %3616 = vmatpush1.bf16.msra.mxu0 0
    %3617 = vmatprep.subr.bf16.mxu0 0
    %3618 = vmatpush1.bf16.msra.mxu0 0
    %3619 = vmatprep.subr.bf16.mxu0 0
    %3620 = vmatpush1.bf16.msra.mxu0 0
    %3621 = vmatprep.subr.bf16.mxu0 0
    %3622 = vmatpush1.bf16.msra.mxu0 0
    %3623 = vmatprep.subr.bf16.mxu0 0
    %3624 = vmatpush1.bf16.msra.mxu0 0
    %3625 = vmatprep.subr.bf16.mxu0 0
    %3626 = vmatpush1.bf16.msra.mxu0 0
    %3627 = vmatprep.subr.bf16.mxu0 0
    %3628 = vmatpush1.bf16.msra.mxu0 0
    %3629 = vmatprep.subr.bf16.mxu0 0
    %3630 = vmatpush1.bf16.msra.mxu0 0
    %3631 = vmatprep.subr.bf16.mxu0 0
    %3632 = vmatpush1.bf16.msra.mxu0 0
    %3633 = vmatprep.subr.bf16.mxu0 0
    %3634 = vmatpush1.bf16.msra.mxu0 0
    %3635 = vmatprep.subr.bf16.mxu0 0
    %3636 = vmatpush1.bf16.msra.mxu0 0
    %3637 = vmatprep.subr.bf16.mxu0 0
    %3638 = vmatpush1.bf16.msra.mxu0 0
    %3639 = vmatprep.subr.bf16.mxu0 0
    %3640 = vmatpush1.bf16.msra.mxu0 0
    %3641 = vmatprep.subr.bf16.mxu0 0
    %3642 = vmatpush1.bf16.msra.mxu0 0
    %3643 = vmatprep.mubr.bf16.mxu0 0
    %3644 = vmatmul.mubr.bf16.gmra.mrb[0].mxu0 %v3606
    %v3645 = vpop.f32.mrb[0].mxu0
    %v3646 = vadd.f32 0.0, %v3645
    %v3647 = vpop.f32.mrb[0].mxu0
    %v3648 = vpop.f32.mrb[0].mxu0
    %v3649 = vpop.f32.mrb[0].mxu0
    %3650 = vdwg.mxu0
    %v3651 = vcombine.low %v2956, %v3048
    %v3652 = vcombine.high %v2956, %v3048
    %v3654 = vunpack.c.l.s4 1983009808
    %v3655 = vunpack.c.0.s8 %v3654
    %v3656 = vlaneseq
    %v3657 = vshrl.u32 %v3656, 7
    %v3658 = vsub.s32 %v3655, %v3657
    %v3659 = vrot.slane %v3651, %v3658
    %v3661 = vunpack.c.l.s4 1983009808
    %v3662 = vunpack.c.0.s8 %v3661
    %v3663 = vlaneseq
    %v3664 = vshrl.u32 %v3663, 7
    %v3665 = vsub.s32 %v3662, %v3664
    %v3666 = vrot.slane %v3652, %v3665
    %v3667 = vcombine.low %v3002, %v3094
    %v3668 = vcombine.high %v3002, %v3094
    %v3670 = vunpack.c.l.s4 1983009808
    %v3671 = vunpack.c.0.s8 %v3670
    %v3672 = vlaneseq
    %v3673 = vshrl.u32 %v3672, 7
    %v3674 = vsub.s32 %v3671, %v3673
    %v3675 = vrot.slane %v3667, %v3674
    %v3677 = vunpack.c.l.s4 1983009808
    %v3678 = vunpack.c.0.s8 %v3677
    %v3679 = vlaneseq
    %v3680 = vshrl.u32 %v3679, 7
    %v3681 = vsub.s32 %v3678, %v3680
    %v3682 = vrot.slane %v3668, %v3681
    %v3683 = vcombine.low %v3659, %v3675
    %v3684 = vcombine.high %v3659, %v3675
    %v3686 = vunpack.c.l.s4 1934713408
    %v3687 = vunpack.c.0.s8 %v3686
    %v3688 = vlaneseq
    %v3689 = vshrl.u32 %v3688, 7
    %v3690 = vsub.s32 %v3687, %v3689
    %v3691 = vrot.slane %v3683, %v3690
    %v3693 = vunpack.c.l.s4 1934713408
    %v3694 = vunpack.c.0.s8 %v3693
    %v3695 = vlaneseq
    %v3696 = vshrl.u32 %v3695, 7
    %v3697 = vsub.s32 %v3694, %v3696
    %v3698 = vrot.slane %v3684, %v3697
    %v3699 = vcombine.low %v3666, %v3682
    %v3700 = vcombine.high %v3666, %v3682
    %v3702 = vunpack.c.l.s4 1934713408
    %v3703 = vunpack.c.0.s8 %v3702
    %v3704 = vlaneseq
    %v3705 = vshrl.u32 %v3704, 7
    %v3706 = vsub.s32 %v3703, %v3705
    %v3707 = vrot.slane %v3699, %v3706
    %v3709 = vunpack.c.l.s4 1934713408
    %v3710 = vunpack.c.0.s8 %v3709
    %v3711 = vlaneseq
    %v3712 = vshrl.u32 %v3711, 7
    %v3713 = vsub.s32 %v3710, %v3712
    %v3714 = vrot.slane %v3700, %v3713
    %v3715 = vcombine.high %v3691, 0.0
    %v3716 = vcombine.high %v3698, 0.0
    %v3717 = vcombine.high %v3707, 0.0
    %v3718 = vcombine.high %v3714, 0.0
    %v3719 = vcombine.low %v3140, %v3232
    %v3720 = vcombine.high %v3140, %v3232
    %v3722 = vunpack.c.l.s4 1983009808
    %v3723 = vunpack.c.0.s8 %v3722
    %v3724 = vlaneseq
    %v3725 = vshrl.u32 %v3724, 7
    %v3726 = vsub.s32 %v3723, %v3725
    %v3727 = vrot.slane %v3719, %v3726
    %v3729 = vunpack.c.l.s4 1983009808
    %v3730 = vunpack.c.0.s8 %v3729
    %v3731 = vlaneseq
    %v3732 = vshrl.u32 %v3731, 7
    %v3733 = vsub.s32 %v3730, %v3732
    %v3734 = vrot.slane %v3720, %v3733
    %v3735 = vcombine.low %v3186, %v3278
    %v3736 = vcombine.high %v3186, %v3278
    %v3738 = vunpack.c.l.s4 1983009808
    %v3739 = vunpack.c.0.s8 %v3738
    %v3740 = vlaneseq
    %v3741 = vshrl.u32 %v3740, 7
    %v3742 = vsub.s32 %v3739, %v3741
    %v3743 = vrot.slane %v3735, %v3742
    %v3745 = vunpack.c.l.s4 1983009808
    %v3746 = vunpack.c.0.s8 %v3745
    %v3747 = vlaneseq
    %v3748 = vshrl.u32 %v3747, 7
    %v3749 = vsub.s32 %v3746, %v3748
    %v3750 = vrot.slane %v3736, %v3749
    %v3751 = vcombine.low %v3727, %v3743
    %v3752 = vcombine.high %v3727, %v3743
    %v3754 = vunpack.c.l.s4 1934713408
    %v3755 = vunpack.c.0.s8 %v3754
    %v3756 = vlaneseq
    %v3757 = vshrl.u32 %v3756, 7
    %v3758 = vsub.s32 %v3755, %v3757
    %v3759 = vrot.slane %v3751, %v3758
    %v3761 = vunpack.c.l.s4 1934713408
    %v3762 = vunpack.c.0.s8 %v3761
    %v3763 = vlaneseq
    %v3764 = vshrl.u32 %v3763, 7
    %v3765 = vsub.s32 %v3762, %v3764
    %v3766 = vrot.slane %v3752, %v3765
    %v3767 = vcombine.low %v3734, %v3750
    %v3768 = vcombine.high %v3734, %v3750
    %v3770 = vunpack.c.l.s4 1934713408
    %v3771 = vunpack.c.0.s8 %v3770
    %v3772 = vlaneseq
    %v3773 = vshrl.u32 %v3772, 7
    %v3774 = vsub.s32 %v3771, %v3773
    %v3775 = vrot.slane %v3767, %v3774
    %v3777 = vunpack.c.l.s4 1934713408
    %v3778 = vunpack.c.0.s8 %v3777
    %v3779 = vlaneseq
    %v3780 = vshrl.u32 %v3779, 7
    %v3781 = vsub.s32 %v3778, %v3780
    %v3782 = vrot.slane %v3768, %v3781
    %v3783 = vcombine.high %v3759, 0.0
    %v3784 = vcombine.high %v3766, 0.0
    %v3785 = vcombine.high %v3775, 0.0
    %v3786 = vcombine.high %v3782, 0.0
    %v3787 = vcombine.low %v3324, %v3416
    %v3788 = vcombine.high %v3324, %v3416
    %v3790 = vunpack.c.l.s4 1983009808
    %v3791 = vunpack.c.0.s8 %v3790
    %v3792 = vlaneseq
    %v3793 = vshrl.u32 %v3792, 7
    %v3794 = vsub.s32 %v3791, %v3793
    %v3795 = vrot.slane %v3787, %v3794
    %v3797 = vunpack.c.l.s4 1983009808
    %v3798 = vunpack.c.0.s8 %v3797
    %v3799 = vlaneseq
    %v3800 = vshrl.u32 %v3799, 7
    %v3801 = vsub.s32 %v3798, %v3800
    %v3802 = vrot.slane %v3788, %v3801
    %v3803 = vcombine.low %v3370, %v3462
    %v3804 = vcombine.high %v3370, %v3462
    %v3806 = vunpack.c.l.s4 1983009808
    %v3807 = vunpack.c.0.s8 %v3806
    %v3808 = vlaneseq
    %v3809 = vshrl.u32 %v3808, 7
    %v3810 = vsub.s32 %v3807, %v3809
    %v3811 = vrot.slane %v3803, %v3810
    %v3813 = vunpack.c.l.s4 1983009808
    %v3814 = vunpack.c.0.s8 %v3813
    %v3815 = vlaneseq
    %v3816 = vshrl.u32 %v3815, 7
    %v3817 = vsub.s32 %v3814, %v3816
    %v3818 = vrot.slane %v3804, %v3817
    %v3819 = vcombine.low %v3795, %v3811
    %v3820 = vcombine.high %v3795, %v3811
    %v3822 = vunpack.c.l.s4 1934713408
    %v3823 = vunpack.c.0.s8 %v3822
    %v3824 = vlaneseq
    %v3825 = vshrl.u32 %v3824, 7
    %v3826 = vsub.s32 %v3823, %v3825
    %v3827 = vrot.slane %v3819, %v3826
    %v3829 = vunpack.c.l.s4 1934713408
    %v3830 = vunpack.c.0.s8 %v3829
    %v3831 = vlaneseq
    %v3832 = vshrl.u32 %v3831, 7
    %v3833 = vsub.s32 %v3830, %v3832
    %v3834 = vrot.slane %v3820, %v3833
    %v3835 = vcombine.low %v3802, %v3818
    %v3836 = vcombine.high %v3802, %v3818
    %v3838 = vunpack.c.l.s4 1934713408
    %v3839 = vunpack.c.0.s8 %v3838
    %v3840 = vlaneseq
    %v3841 = vshrl.u32 %v3840, 7
    %v3842 = vsub.s32 %v3839, %v3841
    %v3843 = vrot.slane %v3835, %v3842
    %v3845 = vunpack.c.l.s4 1934713408
    %v3846 = vunpack.c.0.s8 %v3845
    %v3847 = vlaneseq
    %v3848 = vshrl.u32 %v3847, 7
    %v3849 = vsub.s32 %v3846, %v3848
    %v3850 = vrot.slane %v3836, %v3849
    %v3851 = vcombine.high %v3827, 0.0
    %v3852 = vcombine.high %v3834, 0.0
    %v3853 = vcombine.high %v3843, 0.0
    %v3854 = vcombine.high %v3850, 0.0
    %v3855 = vcombine.low %v3508, %v3600
    %v3856 = vcombine.high %v3508, %v3600
    %v3858 = vunpack.c.l.s4 1983009808
    %v3859 = vunpack.c.0.s8 %v3858
    %v3860 = vlaneseq
    %v3861 = vshrl.u32 %v3860, 7
    %v3862 = vsub.s32 %v3859, %v3861
    %v3863 = vrot.slane %v3855, %v3862
    %v3865 = vunpack.c.l.s4 1983009808
    %v3866 = vunpack.c.0.s8 %v3865
    %v3867 = vlaneseq
    %v3868 = vshrl.u32 %v3867, 7
    %v3869 = vsub.s32 %v3866, %v3868
    %v3870 = vrot.slane %v3856, %v3869
    %v3871 = vcombine.low %v3554, %v3646
    %v3872 = vcombine.high %v3554, %v3646
    %v3874 = vunpack.c.l.s4 1983009808
    %v3875 = vunpack.c.0.s8 %v3874
    %v3876 = vlaneseq
    %v3877 = vshrl.u32 %v3876, 7
    %v3878 = vsub.s32 %v3875, %v3877
    %v3879 = vrot.slane %v3871, %v3878
    %v3881 = vunpack.c.l.s4 1983009808
    %v3882 = vunpack.c.0.s8 %v3881
    %v3883 = vlaneseq
    %v3884 = vshrl.u32 %v3883, 7
    %v3885 = vsub.s32 %v3882, %v3884
    %v3886 = vrot.slane %v3872, %v3885
    %v3887 = vcombine.low %v3863, %v3879
    %v3888 = vcombine.high %v3863, %v3879
    %v3890 = vunpack.c.l.s4 1934713408
    %v3891 = vunpack.c.0.s8 %v3890
    %v3892 = vlaneseq
    %v3893 = vshrl.u32 %v3892, 7
    %v3894 = vsub.s32 %v3891, %v3893
    %v3895 = vrot.slane %v3887, %v3894
    %v3897 = vunpack.c.l.s4 1934713408
    %v3898 = vunpack.c.0.s8 %v3897
    %v3899 = vlaneseq
    %v3900 = vshrl.u32 %v3899, 7
    %v3901 = vsub.s32 %v3898, %v3900
    %v3902 = vrot.slane %v3888, %v3901
    %v3903 = vcombine.low %v3870, %v3886
    %v3904 = vcombine.high %v3870, %v3886
    %v3906 = vunpack.c.l.s4 1934713408
    %v3907 = vunpack.c.0.s8 %v3906
    %v3908 = vlaneseq
    %v3909 = vshrl.u32 %v3908, 7
    %v3910 = vsub.s32 %v3907, %v3909
    %v3911 = vrot.slane %v3903, %v3910
    %v3913 = vunpack.c.l.s4 1934713408
    %v3914 = vunpack.c.0.s8 %v3913
    %v3915 = vlaneseq
    %v3916 = vshrl.u32 %v3915, 7
    %v3917 = vsub.s32 %v3914, %v3916
    %v3918 = vrot.slane %v3904, %v3917
    %v3919 = vcombine.high %v3895, 0.0
    %v3920 = vcombine.high %v3902, 0.0
    %v3921 = vcombine.high %v3911, 0.0
    %v3922 = vcombine.high %v3918, 0.0
    %v3923 = vcombine.low %v3691, %v3698
    %v3925 = vunpack.c.l.s4 1983009808
    %v3926 = vunpack.c.0.s8 %v3925
    %v3927 = vlaneseq
    %v3928 = vshrl.u32 %v3927, 7
    %v3929 = vsub.s32 %v3926, %v3928
    %v3930 = vrot.slane %v3923, %v3929
    %v3931 = vcombine.low %v3715, %v3716
    %v3933 = vunpack.c.l.s4 1983009808
    %v3934 = vunpack.c.0.s8 %v3933
    %v3935 = vlaneseq
    %v3936 = vshrl.u32 %v3935, 7
    %v3937 = vsub.s32 %v3934, %v3936
    %v3938 = vrot.slane %v3931, %v3937
    %v3939 = vcombine.low %v3707, %v3714
    %v3941 = vunpack.c.l.s4 1983009808
    %v3942 = vunpack.c.0.s8 %v3941
    %v3943 = vlaneseq
    %v3944 = vshrl.u32 %v3943, 7
    %v3945 = vsub.s32 %v3942, %v3944
    %v3946 = vrot.slane %v3939, %v3945
    %v3947 = vcombine.low %v3717, %v3718
    %v3949 = vunpack.c.l.s4 1983009808
    %v3950 = vunpack.c.0.s8 %v3949
    %v3951 = vlaneseq
    %v3952 = vshrl.u32 %v3951, 7
    %v3953 = vsub.s32 %v3950, %v3952
    %v3954 = vrot.slane %v3947, %v3953
    %v3955 = vcombine.low %v3930, %v3938
    %v3956 = vcombine.high %v3930, %v3938
    %v3958 = vunpack.c.l.s4 1934713408
    %v3959 = vunpack.c.0.s8 %v3958
    %v3960 = vlaneseq
    %v3961 = vshrl.u32 %v3960, 7
    %v3962 = vsub.s32 %v3959, %v3961
    %v3963 = vrot.slane %v3955, %v3962
    %v3965 = vunpack.c.l.s4 1934713408
    %v3966 = vunpack.c.0.s8 %v3965
    %v3967 = vlaneseq
    %v3968 = vshrl.u32 %v3967, 7
    %v3969 = vsub.s32 %v3966, %v3968
    %v3970 = vrot.slane %v3956, %v3969
    %v3971 = vcombine.low %v3946, %v3954
    %v3972 = vcombine.high %v3946, %v3954
    %v3974 = vunpack.c.l.s4 1934713408
    %v3975 = vunpack.c.0.s8 %v3974
    %v3976 = vlaneseq
    %v3977 = vshrl.u32 %v3976, 7
    %v3978 = vsub.s32 %v3975, %v3977
    %v3979 = vrot.slane %v3971, %v3978
    %v3981 = vunpack.c.l.s4 1934713408
    %v3982 = vunpack.c.0.s8 %v3981
    %v3983 = vlaneseq
    %v3984 = vshrl.u32 %v3983, 7
    %v3985 = vsub.s32 %v3982, %v3984
    %v3986 = vrot.slane %v3972, %v3985
    %v3987 = vcombine.low %v3963, %v3979
    %v3988 = vcombine.high %v3963, %v3979
    %v3989 = vcombine.low %v3970, %v3986
    %v3990 = vcombine.high %v3970, %v3986
    %v3991 = vcombine.low %v3759, %v3766
    %v3993 = vunpack.c.l.s4 1983009808
    %v3994 = vunpack.c.0.s8 %v3993
    %v3995 = vlaneseq
    %v3996 = vshrl.u32 %v3995, 7
    %v3997 = vsub.s32 %v3994, %v3996
    %v3998 = vrot.slane %v3991, %v3997
    %v3999 = vcombine.low %v3783, %v3784
    %v4001 = vunpack.c.l.s4 1983009808
    %v4002 = vunpack.c.0.s8 %v4001
    %v4003 = vlaneseq
    %v4004 = vshrl.u32 %v4003, 7
    %v4005 = vsub.s32 %v4002, %v4004
    %v4006 = vrot.slane %v3999, %v4005
    %v4007 = vcombine.low %v3775, %v3782
    %v4009 = vunpack.c.l.s4 1983009808
    %v4010 = vunpack.c.0.s8 %v4009
    %v4011 = vlaneseq
    %v4012 = vshrl.u32 %v4011, 7
    %v4013 = vsub.s32 %v4010, %v4012
    %v4014 = vrot.slane %v4007, %v4013
    %v4015 = vcombine.low %v3785, %v3786
    %v4017 = vunpack.c.l.s4 1983009808
    %v4018 = vunpack.c.0.s8 %v4017
    %v4019 = vlaneseq
    %v4020 = vshrl.u32 %v4019, 7
    %v4021 = vsub.s32 %v4018, %v4020
    %v4022 = vrot.slane %v4015, %v4021
    %v4023 = vcombine.low %v3998, %v4006
    %v4024 = vcombine.high %v3998, %v4006
    %v4026 = vunpack.c.l.s4 1934713408
    %v4027 = vunpack.c.0.s8 %v4026
    %v4028 = vlaneseq
    %v4029 = vshrl.u32 %v4028, 7
    %v4030 = vsub.s32 %v4027, %v4029
    %v4031 = vrot.slane %v4023, %v4030
    %v4033 = vunpack.c.l.s4 1934713408
    %v4034 = vunpack.c.0.s8 %v4033
    %v4035 = vlaneseq
    %v4036 = vshrl.u32 %v4035, 7
    %v4037 = vsub.s32 %v4034, %v4036
    %v4038 = vrot.slane %v4024, %v4037
    %v4039 = vcombine.low %v4014, %v4022
    %v4040 = vcombine.high %v4014, %v4022
    %v4042 = vunpack.c.l.s4 1934713408
    %v4043 = vunpack.c.0.s8 %v4042
    %v4044 = vlaneseq
    %v4045 = vshrl.u32 %v4044, 7
    %v4046 = vsub.s32 %v4043, %v4045
    %v4047 = vrot.slane %v4039, %v4046
    %v4049 = vunpack.c.l.s4 1934713408
    %v4050 = vunpack.c.0.s8 %v4049
    %v4051 = vlaneseq
    %v4052 = vshrl.u32 %v4051, 7
    %v4053 = vsub.s32 %v4050, %v4052
    %v4054 = vrot.slane %v4040, %v4053
    %v4055 = vcombine.low %v4031, %v4047
    %v4056 = vcombine.high %v4031, %v4047
    %v4057 = vcombine.low %v4038, %v4054
    %v4058 = vcombine.high %v4038, %v4054
    %v4059 = vcombine.low %v3827, %v3834
    %v4061 = vunpack.c.l.s4 1983009808
    %v4062 = vunpack.c.0.s8 %v4061
    %v4063 = vlaneseq
    %v4064 = vshrl.u32 %v4063, 7
    %v4065 = vsub.s32 %v4062, %v4064
    %v4066 = vrot.slane %v4059, %v4065
    %v4067 = vcombine.low %v3851, %v3852
    %v4069 = vunpack.c.l.s4 1983009808
    %v4070 = vunpack.c.0.s8 %v4069
    %v4071 = vlaneseq
    %v4072 = vshrl.u32 %v4071, 7
    %v4073 = vsub.s32 %v4070, %v4072
    %v4074 = vrot.slane %v4067, %v4073
    %v4075 = vcombine.low %v3843, %v3850
    %v4077 = vunpack.c.l.s4 1983009808
    %v4078 = vunpack.c.0.s8 %v4077
    %v4079 = vlaneseq
    %v4080 = vshrl.u32 %v4079, 7
    %v4081 = vsub.s32 %v4078, %v4080
    %v4082 = vrot.slane %v4075, %v4081
    %v4083 = vcombine.low %v3853, %v3854
    %v4085 = vunpack.c.l.s4 1983009808
    %v4086 = vunpack.c.0.s8 %v4085
    %v4087 = vlaneseq
    %v4088 = vshrl.u32 %v4087, 7
    %v4089 = vsub.s32 %v4086, %v4088
    %v4090 = vrot.slane %v4083, %v4089
    %v4091 = vcombine.low %v4066, %v4074
    %v4092 = vcombine.high %v4066, %v4074
    %v4094 = vunpack.c.l.s4 1934713408
    %v4095 = vunpack.c.0.s8 %v4094
    %v4096 = vlaneseq
    %v4097 = vshrl.u32 %v4096, 7
    %v4098 = vsub.s32 %v4095, %v4097
    %v4099 = vrot.slane %v4091, %v4098
    %v4101 = vunpack.c.l.s4 1934713408
    %v4102 = vunpack.c.0.s8 %v4101
    %v4103 = vlaneseq
    %v4104 = vshrl.u32 %v4103, 7
    %v4105 = vsub.s32 %v4102, %v4104
    %v4106 = vrot.slane %v4092, %v4105
    %v4107 = vcombine.low %v4082, %v4090
    %v4108 = vcombine.high %v4082, %v4090
    %v4110 = vunpack.c.l.s4 1934713408
    %v4111 = vunpack.c.0.s8 %v4110
    %v4112 = vlaneseq
    %v4113 = vshrl.u32 %v4112, 7
    %v4114 = vsub.s32 %v4111, %v4113
    %v4115 = vrot.slane %v4107, %v4114
    %v4117 = vunpack.c.l.s4 1934713408
    %v4118 = vunpack.c.0.s8 %v4117
    %v4119 = vlaneseq
    %v4120 = vshrl.u32 %v4119, 7
    %v4121 = vsub.s32 %v4118, %v4120
    %v4122 = vrot.slane %v4108, %v4121
    %v4123 = vcombine.low %v4099, %v4115
    %v4124 = vcombine.high %v4099, %v4115
    %v4125 = vcombine.low %v4106, %v4122
    %v4126 = vcombine.high %v4106, %v4122
    %v4127 = vcombine.low %v3895, %v3902
    %v4129 = vunpack.c.l.s4 1983009808
    %v4130 = vunpack.c.0.s8 %v4129
    %v4131 = vlaneseq
    %v4132 = vshrl.u32 %v4131, 7
    %v4133 = vsub.s32 %v4130, %v4132
    %v4134 = vrot.slane %v4127, %v4133
    %v4135 = vcombine.low %v3919, %v3920
    %v4137 = vunpack.c.l.s4 1983009808
    %v4138 = vunpack.c.0.s8 %v4137
    %v4139 = vlaneseq
    %v4140 = vshrl.u32 %v4139, 7
    %v4141 = vsub.s32 %v4138, %v4140
    %v4142 = vrot.slane %v4135, %v4141
    %v4143 = vcombine.low %v3911, %v3918
    %v4145 = vunpack.c.l.s4 1983009808
    %v4146 = vunpack.c.0.s8 %v4145
    %v4147 = vlaneseq
    %v4148 = vshrl.u32 %v4147, 7
    %v4149 = vsub.s32 %v4146, %v4148
    %v4150 = vrot.slane %v4143, %v4149
    %v4151 = vcombine.low %v3921, %v3922
    %v4153 = vunpack.c.l.s4 1983009808
    %v4154 = vunpack.c.0.s8 %v4153
    %v4155 = vlaneseq
    %v4156 = vshrl.u32 %v4155, 7
    %v4157 = vsub.s32 %v4154, %v4156
    %v4158 = vrot.slane %v4151, %v4157
    %v4159 = vcombine.low %v4134, %v4142
    %v4160 = vcombine.high %v4134, %v4142
    %v4162 = vunpack.c.l.s4 1934713408
    %v4163 = vunpack.c.0.s8 %v4162
    %v4164 = vlaneseq
    %v4165 = vshrl.u32 %v4164, 7
    %v4166 = vsub.s32 %v4163, %v4165
    %v4167 = vrot.slane %v4159, %v4166
    %v4169 = vunpack.c.l.s4 1934713408
    %v4170 = vunpack.c.0.s8 %v4169
    %v4171 = vlaneseq
    %v4172 = vshrl.u32 %v4171, 7
    %v4173 = vsub.s32 %v4170, %v4172
    %v4174 = vrot.slane %v4160, %v4173
    %v4175 = vcombine.low %v4150, %v4158
    %v4176 = vcombine.high %v4150, %v4158
    %v4178 = vunpack.c.l.s4 1934713408
    %v4179 = vunpack.c.0.s8 %v4178
    %v4180 = vlaneseq
    %v4181 = vshrl.u32 %v4180, 7
    %v4182 = vsub.s32 %v4179, %v4181
    %v4183 = vrot.slane %v4175, %v4182
    %v4185 = vunpack.c.l.s4 1934713408
    %v4186 = vunpack.c.0.s8 %v4185
    %v4187 = vlaneseq
    %v4188 = vshrl.u32 %v4187, 7
    %v4189 = vsub.s32 %v4186, %v4188
    %v4190 = vrot.slane %v4176, %v4189
    %v4191 = vcombine.low %v4167, %v4183
    %v4192 = vcombine.high %v4167, %v4183
    %v4193 = vcombine.low %v4174, %v4190
    %v4194 = vcombine.high %v4174, %v4190
    %4199 = vrot.lane.b32.xlu0 %v3988, 8
    %v4200 = vpop.permute.xlu0 %4199
    %4201 = vrot.lane.b32.xlu0 %v4056, 8
    %v4202 = vpop.permute.xlu0 %4201
    %4203 = vrot.lane.b32.xlu0 %v4124, 8
    %v4204 = vpop.permute.xlu0 %4203
    %4205 = vrot.lane.b32.xlu0 %v4192, 8
    %v4206 = vpop.permute.xlu0 %4205
    %4215 = vrot.lane.b32.xlu0 %v3989, 16
    %v4216 = vpop.permute.xlu0 %4215
    %4217 = vrot.lane.b32.xlu0 %v4057, 16
    %v4218 = vpop.permute.xlu0 %4217
    %4219 = vrot.lane.b32.xlu0 %v4125, 16
    %v4220 = vpop.permute.xlu0 %4219
    %4221 = vrot.lane.b32.xlu0 %v4193, 16
    %v4222 = vpop.permute.xlu0 %4221
    %4231 = vrot.lane.b32.xlu0 %v3990, 24
    %v4232 = vpop.permute.xlu0 %4231
    %4233 = vrot.lane.b32.xlu0 %v4058, 24
    %v4234 = vpop.permute.xlu0 %4233
    %4235 = vrot.lane.b32.xlu0 %v4126, 24
    %v4236 = vpop.permute.xlu0 %4235
    %4237 = vrot.lane.b32.xlu0 %v4194, 24
    %v4238 = vpop.permute.xlu0 %4237
    %v4243 = vsel %vm1985, %v3987, %v4200
    %v4244 = vsel %vm1985, %v4055, %v4202
    %v4245 = vsel %vm1985, %v4123, %v4204
    %v4246 = vsel %vm1985, %v4191, %v4206
    %vm4247 = vcmask 130048
    %v4248 = vsel %vm4247, %v4243, %v4216
    %v4249 = vsel %vm4247, %v4244, %v4218
    %v4250 = vsel %vm4247, %v4245, %v4220
    %v4251 = vsel %vm4247, %v4246, %v4222
    %vm4252 = vcmask 195584
    %v4253 = vsel %vm4252, %v4248, %v4232
    %v4254 = vsel %vm4252, %v4249, %v4234
    %v4255 = vsel %vm4252, %v4250, %v4236
    %v4256 = vsel %vm4252, %v4251, %v4238
    %v4257 = vpack.c.bf16 %v4254, %v4253
    %v4258 = vpack.c.bf16 %v4256, %v4255
    %v4260 = vlaneseq
    %v4261 = vshrl.u32 %v4260, 7
    %v4262 = vsub.s32 0, %v4261
    %v4263 = vrot.slane %v138, %v4262
    %v4269 = vunpack.c.l.b16 %v130
    %v4270 = vunpack.c.l.b16 %v131
    %v4271 = vunpack.c.l.b16 %v132
    %v4272 = vunpack.c.l.b16 %v133
    %v4273 = vpack.c.b16 %v4270, %v4269
    %v4274 = vpack.c.b16 %v4272, %v4271
    %v4278 = vsel %vm243, %v4257, 0
    %v4281 = vsel %vm243, %v4258, 0
    %4283 = vmatprep.subr.bf16.mxu0 0
    %4284 = vmatpush1.bf16.msra.mxu0 %v4273
    %4285 = vmatprep.subr.bf16.mxu0 0
    %4286 = vmatpush1.bf16.msra.mxu0 %v4274
    %4287 = vmatprep.subr.bf16.mxu0 0
    %4288 = vmatpush1.bf16.msra.mxu0 0
    %4289 = vmatprep.subr.bf16.mxu0 0
    %4290 = vmatpush1.bf16.msra.mxu0 0
    %4291 = vmatprep.subr.bf16.mxu0 0
    %4292 = vmatpush1.bf16.msra.mxu0 0
    %4293 = vmatprep.subr.bf16.mxu0 0
    %4294 = vmatpush1.bf16.msra.mxu0 0
    %4295 = vmatprep.subr.bf16.mxu0 0
    %4296 = vmatpush1.bf16.msra.mxu0 0
    %4297 = vmatprep.subr.bf16.mxu0 0
    %4298 = vmatpush1.bf16.msra.mxu0 0
    %4299 = vmatprep.subr.bf16.mxu0 0
    %4300 = vmatpush1.bf16.msra.mxu0 0
    %4301 = vmatprep.subr.bf16.mxu0 0
    %4302 = vmatpush1.bf16.msra.mxu0 0
    %4303 = vmatprep.subr.bf16.mxu0 0
    %4304 = vmatpush1.bf16.msra.mxu0 0
    %4305 = vmatprep.subr.bf16.mxu0 0
    %4306 = vmatpush1.bf16.msra.mxu0 0
    %4307 = vmatprep.subr.bf16.mxu0 0
    %4308 = vmatpush1.bf16.msra.mxu0 0
    %4309 = vmatprep.subr.bf16.mxu0 0
    %4310 = vmatpush1.bf16.msra.mxu0 0
    %4311 = vmatprep.subr.bf16.mxu0 0
    %4312 = vmatpush1.bf16.msra.mxu0 0
    %4313 = vmatprep.subr.bf16.mxu0 0
    %4314 = vmatpush1.bf16.msra.mxu0 0
    %4315 = vmatprep.mubr.bf16.mxu0 0
    %4316 = vmatmul.mubr.bf16.gmra.mrb[0].mxu0 %v4278
    %v4317 = vpop.f32.mrb[0].mxu0
    %v4318 = vadd.f32 %v4263, %v4317
    %v4319 = vpop.f32.mrb[0].mxu0
    %v4320 = vpop.f32.mrb[0].mxu0
    %v4321 = vadd.f32 %v4263, %v4320
    %v4322 = vpop.f32.mrb[0].mxu0
    %4323 = vmatprep.mubr.bf16.mxu0 0
    %4324 = vmatmul.mubr.bf16.gmra.mrb[0].mxu0 %v4281
    %v4325 = vpop.f32.mrb[0].mxu0
    %v4326 = vadd.f32 %v4263, %v4325
    %v4327 = vpop.f32.mrb[0].mxu0
    %v4328 = vpop.f32.mrb[0].mxu0
    %v4329 = vadd.f32 %v4263, %v4328
    %v4330 = vpop.f32.mrb[0].mxu0
    %4331 = vdwg.mxu0
    %v4332 = vadd.f32 %v115, %v4318
    %v4333 = vadd.f32 %v116, %v4321
    %v4334 = vadd.f32 %v117, %v4326
    %v4335 = vadd.f32 %v118, %v4329
    %v4336 = vsel %vm243, %v4332, 0.0
    %4337 = vadd.xlane.f32.xlu0 %v4336
    %v4338 = vpop.xlane.xlu0 %4337
    %v4339 = vsel %vm243, %v4333, 0.0
    %4340 = vadd.xlane.f32.xlu0 %v4339
    %v4341 = vpop.xlane.xlu0 %4340
    %v4342 = vsel %vm243, %v4334, 0.0
    %4343 = vadd.xlane.f32.xlu0 %v4342
    %v4344 = vpop.xlane.xlu0 %4343
    %v4345 = vsel %vm243, %v4335, 0.0
    %4346 = vadd.xlane.f32.xlu0 %v4345
    %v4347 = vpop.xlane.xlu0 %4346
    %v4348 = vrcp.pop 32.0
    %v4349 = vmul.f32 %v4338, %v4348
    %v4350 = vmul.f32 %v4341, %v4348
    %v4351 = vmul.f32 %v4344, %v4348
    %v4352 = vmul.f32 %v4347, %v4348
    %v4353 = vmul.f32 %v4332, %v4332
    %v4354 = vmul.f32 %v4333, %v4333
    %v4355 = vmul.f32 %v4334, %v4334
    %v4356 = vmul.f32 %v4335, %v4335
    %v4357 = vsel %vm243, %v4353, 0.0
    %4358 = vadd.xlane.f32.xlu0 %v4357
    %v4359 = vpop.xlane.xlu0 %4358
    %v4360 = vsel %vm243, %v4354, 0.0
    %4361 = vadd.xlane.f32.xlu0 %v4360
    %v4362 = vpop.xlane.xlu0 %4361
    %v4363 = vsel %vm243, %v4355, 0.0
    %4364 = vadd.xlane.f32.xlu0 %v4363
    %v4365 = vpop.xlane.xlu0 %4364
    %v4366 = vsel %vm243, %v4356, 0.0
    %4367 = vadd.xlane.f32.xlu0 %v4366
    %v4368 = vpop.xlane.xlu0 %4367
    %v4369 = vmul.f32 %v4359, %v4348
    %v4370 = vmul.f32 %v4362, %v4348
    %v4371 = vmul.f32 %v4365, %v4348
    %v4372 = vmul.f32 %v4368, %v4348
    %v4373 = vmul.f32 %v4349, %v4349
    %v4374 = vmul.f32 %v4350, %v4350
    %v4375 = vmul.f32 %v4351, %v4351
    %v4376 = vmul.f32 %v4352, %v4352
    %v4377 = vsub.f32 %v4369, %v4373
    %v4378 = vsub.f32 %v4370, %v4374
    %v4379 = vsub.f32 %v4371, %v4375
    %v4380 = vsub.f32 %v4372, %v4376
    %v4381 = vmax.f32 %v4377, 0.0
    %v4382 = vmax.f32 %v4378, 0.0
    %v4383 = vmax.f32 %v4379, 0.0
    %v4384 = vmax.f32 %v4380, 0.0
    %v4385 = vsub.f32 %v4332, %v4349
    %v4386 = vsub.f32 %v4333, %v4350
    %v4387 = vsub.f32 %v4334, %v4351
    %v4388 = vsub.f32 %v4335, %v4352
    %v4389 = vadd.f32 %v4381, 1e-12
    %v4390 = vadd.f32 %v4382, 1e-12
    %v4391 = vadd.f32 %v4383, 1e-12
    %v4392 = vadd.f32 %v4384, 1e-12
    %v4393 = vrsqrt.pop %v4389
    %v4394 = vrsqrt.pop %v4390
    %v4395 = vrsqrt.pop %v4391
    %v4396 = vrsqrt.pop %v4392
    %v4397 = vmul.f32 %v4385, %v4393
    %v4398 = vmul.f32 %v4386, %v4394
    %v4399 = vmul.f32 %v4387, %v4395
    %v4400 = vmul.f32 %v4388, %v4396
    %v4402 = vlaneseq
    %v4403 = vshrl.u32 %v4402, 7
    %v4404 = vsub.s32 0, %v4403
    %v4405 = vrot.slane %v140, %v4404
    %v4407 = vmul.f32 %v4397, %v4405
    %v4408 = vmul.f32 %v4398, %v4405
    %v4409 = vmul.f32 %v4399, %v4405
    %v4410 = vmul.f32 %v4400, %v4405
    %v4412 = vlaneseq
    %v4413 = vshrl.u32 %v4412, 7
    %v4414 = vsub.s32 0, %v4413
    %v4415 = vrot.slane %v142, %v4414
    %v4417 = vadd.f32 %v4407, %v4415
    %v4418 = vadd.f32 %v4408, %v4415
    %v4419 = vadd.f32 %v4409, %v4415
    %v4420 = vadd.f32 %v4410, %v4415
    %v4421 = vpack.c.bf16 %v4418, %v4417
    %v4422 = vpack.c.bf16 %v4420, %v4419
    %v4424 = vlaneseq
    %v4425 = vshrl.u32 %v4424, 7
    %v4426 = vsub.s32 0, %v4425
    %v4427 = vrot.slane %v152, %v4426
    %v4433 = vunpack.c.l.b16 %v144
    %v4434 = vunpack.c.l.b16 %v145
    %v4435 = vunpack.c.l.b16 %v146
    %v4436 = vunpack.c.l.b16 %v147
    %v4437 = vpack.c.b16 %v4434, %v4433
    %v4438 = vpack.c.b16 %v4436, %v4435
    %v4442 = vsel %vm243, %v4421, 0
    %v4445 = vsel %vm243, %v4422, 0
    %4447 = vmatprep.subr.bf16.mxu0 0
    %4448 = vmatpush1.bf16.msra.mxu0 %v4437
    %4449 = vmatprep.subr.bf16.mxu0 0
    %4450 = vmatpush1.bf16.msra.mxu0 %v4438
    %4451 = vmatprep.subr.bf16.mxu0 0
    %4452 = vmatpush1.bf16.msra.mxu0 0
    %4453 = vmatprep.subr.bf16.mxu0 0
    %4454 = vmatpush1.bf16.msra.mxu0 0
    %4455 = vmatprep.subr.bf16.mxu0 0
    %4456 = vmatpush1.bf16.msra.mxu0 0
    %4457 = vmatprep.subr.bf16.mxu0 0
    %4458 = vmatpush1.bf16.msra.mxu0 0
    %4459 = vmatprep.subr.bf16.mxu0 0
    %4460 = vmatpush1.bf16.msra.mxu0 0
    %4461 = vmatprep.subr.bf16.mxu0 0
    %4462 = vmatpush1.bf16.msra.mxu0 0
    %4463 = vmatprep.subr.bf16.mxu0 0
    %4464 = vmatpush1.bf16.msra.mxu0 0
    %4465 = vmatprep.subr.bf16.mxu0 0
    %4466 = vmatpush1.bf16.msra.mxu0 0
    %4467 = vmatprep.subr.bf16.mxu0 0
    %4468 = vmatpush1.bf16.msra.mxu0 0
    %4469 = vmatprep.subr.bf16.mxu0 0
    %4470 = vmatpush1.bf16.msra.mxu0 0
    %4471 = vmatprep.subr.bf16.mxu0 0
    %4472 = vmatpush1.bf16.msra.mxu0 0
    %4473 = vmatprep.subr.bf16.mxu0 0
    %4474 = vmatpush1.bf16.msra.mxu0 0
    %4475 = vmatprep.subr.bf16.mxu0 0
    %4476 = vmatpush1.bf16.msra.mxu0 0
    %4477 = vmatprep.subr.bf16.mxu0 0
    %4478 = vmatpush1.bf16.msra.mxu0 0
    %4479 = vmatprep.mubr.bf16.mxu0 0
    %4480 = vmatmul.mubr.bf16.gmra.mrb[0].mxu0 %v4442
    %v4481 = vpop.f32.mrb[0].mxu0
    %v4482 = vadd.f32 %v4427, %v4481
    %v4483 = vpop.f32.mrb[0].mxu0
    %v4484 = vpop.f32.mrb[0].mxu0
    %v4485 = vadd.f32 %v4427, %v4484
    %v4486 = vpop.f32.mrb[0].mxu0
    %4487 = vmatprep.mubr.bf16.mxu0 0
    %4488 = vmatmul.mubr.bf16.gmra.mrb[0].mxu0 %v4445
    %v4489 = vpop.f32.mrb[0].mxu0
    %v4490 = vadd.f32 %v4427, %v4489
    %v4491 = vpop.f32.mrb[0].mxu0
    %v4492 = vpop.f32.mrb[0].mxu0
    %v4493 = vadd.f32 %v4427, %v4492
    %v4494 = vpop.f32.mrb[0].mxu0
    %4495 = vdwg.mxu0
    %v4496 = vmul.f32 %v4482, 0.5
    %v4497 = vmul.f32 %v4485, 0.5
    %v4498 = vmul.f32 %v4490, 0.5
    %v4499 = vmul.f32 %v4493, 0.5
    %v4500 = vmul.f32 %v4482, 0.044715
    %v4501 = vmul.f32 %v4485, 0.044715
    %v4502 = vmul.f32 %v4490, 0.044715
    %v4503 = vmul.f32 %v4493, 0.044715
    %v4504 = vmul.f32 %v4500, %v4482
    %v4505 = vmul.f32 %v4501, %v4485
    %v4506 = vmul.f32 %v4502, %v4490
    %v4507 = vmul.f32 %v4503, %v4493
    %v4508 = vmul.f32 %v4504, %v4482
    %v4509 = vmul.f32 %v4505, %v4485
    %v4510 = vmul.f32 %v4506, %v4490
    %v4511 = vmul.f32 %v4507, %v4493
    %v4512 = vadd.f32 %v4482, %v4508
    %v4513 = vadd.f32 %v4485, %v4509
    %v4514 = vadd.f32 %v4490, %v4510
    %v4515 = vadd.f32 %v4493, %v4511
    %v4516 = vmul.f32 %v4512, 0.7978846
    %v4517 = vmul.f32 %v4513, 0.7978846
    %v4518 = vmul.f32 %v4514, 0.7978846
    %v4519 = vmul.f32 %v4515, 0.7978846
    %v4520 = vtanh.pop %v4516
    %v4521 = vtanh.pop %v4517
    %v4522 = vtanh.pop %v4518
    %v4523 = vtanh.pop %v4519
    %v4524 = vadd.f32 %v4520, 1.0
    %v4525 = vadd.f32 %v4521, 1.0
    %v4526 = vadd.f32 %v4522, 1.0
    %v4527 = vadd.f32 %v4523, 1.0
    %v4528 = vmul.f32 %v4496, %v4524
    %v4529 = vmul.f32 %v4497, %v4525
    %v4530 = vmul.f32 %v4498, %v4526
    %v4531 = vmul.f32 %v4499, %v4527
    %v4532 = vpack.c.bf16 %v4529, %v4528
    %v4533 = vpack.c.bf16 %v4531, %v4530
    %v4535 = vlaneseq
    %v4536 = vshrl.u32 %v4535, 7
    %v4537 = vsub.s32 0, %v4536
    %v4538 = vrot.slane %v170, %v4537
    %v4548 = vunpack.c.l.b16 %v154
    %v4549 = vunpack.c.l.b16 %v155
    %v4550 = vunpack.c.l.b16 %v156
    %v4551 = vunpack.c.l.b16 %v157
    %v4552 = vunpack.c.l.b16 %v158
    %v4553 = vunpack.c.l.b16 %v159
    %v4554 = vunpack.c.l.b16 %v160
    %v4555 = vunpack.c.l.b16 %v161
    %v4556 = vpack.c.b16 %v4549, %v4548
    %v4557 = vpack.c.b16 %v4551, %v4550
    %v4558 = vpack.c.b16 %v4553, %v4552
    %v4559 = vpack.c.b16 %v4555, %v4554
    %vm4564 = vcmask 523264
    %v4566 = vsel %vm4564, %v4532, 0
    %v4569 = vsel %vm4564, %v4533, 0
    %4571 = vmatprep.subr.bf16.mxu0 0
    %4572 = vmatpush1.bf16.msra.mxu0 %v4556
    %4573 = vmatprep.subr.bf16.mxu0 0
    %4574 = vmatpush1.bf16.msra.mxu0 %v4557
    %4575 = vmatprep.subr.bf16.mxu0 0
    %4576 = vmatpush1.bf16.msra.mxu0 %v4558
    %4577 = vmatprep.subr.bf16.mxu0 0
    %4578 = vmatpush1.bf16.msra.mxu0 %v4559
    %4579 = vmatprep.subr.bf16.mxu0 0
    %4580 = vmatpush1.bf16.msra.mxu0 0
    %4581 = vmatprep.subr.bf16.mxu0 0
    %4582 = vmatpush1.bf16.msra.mxu0 0
    %4583 = vmatprep.subr.bf16.mxu0 0
    %4584 = vmatpush1.bf16.msra.mxu0 0
    %4585 = vmatprep.subr.bf16.mxu0 0
    %4586 = vmatpush1.bf16.msra.mxu0 0
    %4587 = vmatprep.subr.bf16.mxu0 0
    %4588 = vmatpush1.bf16.msra.mxu0 0
    %4589 = vmatprep.subr.bf16.mxu0 0
    %4590 = vmatpush1.bf16.msra.mxu0 0
    %4591 = vmatprep.subr.bf16.mxu0 0
    %4592 = vmatpush1.bf16.msra.mxu0 0
    %4593 = vmatprep.subr.bf16.mxu0 0
    %4594 = vmatpush1.bf16.msra.mxu0 0
    %4595 = vmatprep.subr.bf16.mxu0 0
    %4596 = vmatpush1.bf16.msra.mxu0 0
    %4597 = vmatprep.subr.bf16.mxu0 0
    %4598 = vmatpush1.bf16.msra.mxu0 0
    %4599 = vmatprep.subr.bf16.mxu0 0
    %4600 = vmatpush1.bf16.msra.mxu0 0
    %4601 = vmatprep.subr.bf16.mxu0 0
    %4602 = vmatpush1.bf16.msra.mxu0 0
    %4603 = vmatprep.mubr.bf16.mxu0 0
    %4604 = vmatmul.mubr.bf16.gmra.mrb[0].mxu0 %v4566
    %v4605 = vpop.f32.mrb[0].mxu0
    %v4606 = vadd.f32 %v4538, %v4605
    %v4607 = vpop.f32.mrb[0].mxu0
    %v4608 = vpop.f32.mrb[0].mxu0
    %v4609 = vadd.f32 %v4538, %v4608
    %v4610 = vpop.f32.mrb[0].mxu0
    %4611 = vmatprep.mubr.bf16.mxu0 0
    %4612 = vmatmul.mubr.bf16.gmra.mrb[0].mxu0 %v4569
    %v4613 = vpop.f32.mrb[0].mxu0
    %v4614 = vadd.f32 %v4538, %v4613
    %v4615 = vpop.f32.mrb[0].mxu0
    %v4616 = vpop.f32.mrb[0].mxu0
    %v4617 = vadd.f32 %v4538, %v4616
    %v4618 = vpop.f32.mrb[0].mxu0
    %4619 = vdwg.mxu0
    %v4620 = vadd.f32 %v4417, %v4606
    %v4621 = vadd.f32 %v4418, %v4609
    %v4622 = vadd.f32 %v4419, %v4614
    %v4623 = vadd.f32 %v4420, %v4617
    %v4624 = vsel %vm243, %v4620, 0.0
    %4625 = vadd.xlane.f32.xlu0 %v4624
    %v4626 = vpop.xlane.xlu0 %4625
    %v4627 = vsel %vm243, %v4621, 0.0
    %4628 = vadd.xlane.f32.xlu0 %v4627
    %v4629 = vpop.xlane.xlu0 %4628
    %v4630 = vsel %vm243, %v4622, 0.0
    %4631 = vadd.xlane.f32.xlu0 %v4630
    %v4632 = vpop.xlane.xlu0 %4631
    %v4633 = vsel %vm243, %v4623, 0.0
    %4634 = vadd.xlane.f32.xlu0 %v4633
    %v4635 = vpop.xlane.xlu0 %4634
    %v4636 = vmul.f32 %v4626, %v4348
    %v4637 = vmul.f32 %v4629, %v4348
    %v4638 = vmul.f32 %v4632, %v4348
    %v4639 = vmul.f32 %v4635, %v4348
    %v4640 = vmul.f32 %v4620, %v4620
    %v4641 = vmul.f32 %v4621, %v4621
    %v4642 = vmul.f32 %v4622, %v4622
    %v4643 = vmul.f32 %v4623, %v4623
    %v4644 = vsel %vm243, %v4640, 0.0
    %4645 = vadd.xlane.f32.xlu0 %v4644
    %v4646 = vpop.xlane.xlu0 %4645
    %v4647 = vsel %vm243, %v4641, 0.0
    %4648 = vadd.xlane.f32.xlu0 %v4647
    %v4649 = vpop.xlane.xlu0 %4648
    %v4650 = vsel %vm243, %v4642, 0.0
    %4651 = vadd.xlane.f32.xlu0 %v4650
    %v4652 = vpop.xlane.xlu0 %4651
    %v4653 = vsel %vm243, %v4643, 0.0
    %4654 = vadd.xlane.f32.xlu0 %v4653
    %v4655 = vpop.xlane.xlu0 %4654
    %v4656 = vmul.f32 %v4646, %v4348
    %v4657 = vmul.f32 %v4649, %v4348
    %v4658 = vmul.f32 %v4652, %v4348
    %v4659 = vmul.f32 %v4655, %v4348
    %v4660 = vmul.f32 %v4636, %v4636
    %v4661 = vmul.f32 %v4637, %v4637
    %v4662 = vmul.f32 %v4638, %v4638
    %v4663 = vmul.f32 %v4639, %v4639
    %v4664 = vsub.f32 %v4656, %v4660
    %v4665 = vsub.f32 %v4657, %v4661
    %v4666 = vsub.f32 %v4658, %v4662
    %v4667 = vsub.f32 %v4659, %v4663
    %v4668 = vmax.f32 %v4664, 0.0
    %v4669 = vmax.f32 %v4665, 0.0
    %v4670 = vmax.f32 %v4666, 0.0
    %v4671 = vmax.f32 %v4667, 0.0
    %v4672 = vsub.f32 %v4620, %v4636
    %v4673 = vsub.f32 %v4621, %v4637
    %v4674 = vsub.f32 %v4622, %v4638
    %v4675 = vsub.f32 %v4623, %v4639
    %v4676 = vadd.f32 %v4668, 1e-12
    %v4677 = vadd.f32 %v4669, 1e-12
    %v4678 = vadd.f32 %v4670, 1e-12
    %v4679 = vadd.f32 %v4671, 1e-12
    %v4680 = vrsqrt.pop %v4676
    %v4681 = vrsqrt.pop %v4677
    %v4682 = vrsqrt.pop %v4678
    %v4683 = vrsqrt.pop %v4679
    %v4684 = vmul.f32 %v4672, %v4680
    %v4685 = vmul.f32 %v4673, %v4681
    %v4686 = vmul.f32 %v4674, %v4682
    %v4687 = vmul.f32 %v4675, %v4683
    %v4689 = vlaneseq
    %v4690 = vshrl.u32 %v4689, 7
    %v4691 = vsub.s32 0, %v4690
    %v4692 = vrot.slane %v172, %v4691
    %v4694 = vmul.f32 %v4684, %v4692
    %v4695 = vmul.f32 %v4685, %v4692
    %v4696 = vmul.f32 %v4686, %v4692
    %v4697 = vmul.f32 %v4687, %v4692
    %v4699 = vlaneseq
    %v4700 = vshrl.u32 %v4699, 7
    %v4701 = vsub.s32 0, %v4700
    %v4702 = vrot.slane %v174, %v4701
    %v4704 = vadd.f32 %v4694, %v4702
    %v4705 = vadd.f32 %v4695, %v4702
    %v4706 = vadd.f32 %v4696, %v4702
    %v4707 = vadd.f32 %v4697, %v4702
    %v4708 = vpack.c.bf16 %v4705, %v4704
    %v4709 = vpack.c.bf16 %v4707, %v4706
    %v4711 = vlaneseq
    %v4712 = vshrl.u32 %v4711, 7
    %v4713 = vsub.s32 0, %v4712
    %v4714 = vrot.slane %v129, %v4713
    %v4720 = vunpack.c.l.b16 %v124
    %v4721 = vunpack.c.l.b16 %v125
    %v4722 = vunpack.c.l.b16 %v126
    %v4723 = vunpack.c.l.b16 %v127
    %v4724 = vpack.c.b16 %v4721, %v4720
    %v4725 = vpack.c.b16 %v4723, %v4722
    %v4729 = vsel %vm243, %v4708, 0
    %v4732 = vsel %vm243, %v4709, 0
    %4734 = vmatprep.subr.bf16.mxu0 0
    %4735 = vmatpush1.bf16.msra.mxu0 %v4724
    %4736 = vmatprep.subr.bf16.mxu0 0
    %4737 = vmatpush1.bf16.msra.mxu0 %v4725
    %4738 = vmatprep.subr.bf16.mxu0 0
    %4739 = vmatpush1.bf16.msra.mxu0 0
    %4740 = vmatprep.subr.bf16.mxu0 0
    %4741 = vmatpush1.bf16.msra.mxu0 0
    %4742 = vmatprep.subr.bf16.mxu0 0
    %4743 = vmatpush1.bf16.msra.mxu0 0
    %4744 = vmatprep.subr.bf16.mxu0 0
    %4745 = vmatpush1.bf16.msra.mxu0 0
    %4746 = vmatprep.subr.bf16.mxu0 0
    %4747 = vmatpush1.bf16.msra.mxu0 0
    %4748 = vmatprep.subr.bf16.mxu0 0
    %4749 = vmatpush1.bf16.msra.mxu0 0
    %4750 = vmatprep.subr.bf16.mxu0 0
    %4751 = vmatpush1.bf16.msra.mxu0 0
    %4752 = vmatprep.subr.bf16.mxu0 0
    %4753 = vmatpush1.bf16.msra.mxu0 0
    %4754 = vmatprep.subr.bf16.mxu0 0
    %4755 = vmatpush1.bf16.msra.mxu0 0
    %4756 = vmatprep.subr.bf16.mxu0 0
    %4757 = vmatpush1.bf16.msra.mxu0 0
    %4758 = vmatprep.subr.bf16.mxu0 0
    %4759 = vmatpush1.bf16.msra.mxu0 0
    %4760 = vmatprep.subr.bf16.mxu0 0
    %4761 = vmatpush1.bf16.msra.mxu0 0
    %4762 = vmatprep.subr.bf16.mxu0 0
    %4763 = vmatpush1.bf16.msra.mxu0 0
    %4764 = vmatprep.subr.bf16.mxu0 0
    %4765 = vmatpush1.bf16.msra.mxu0 0
    %4766 = vmatprep.mubr.bf16.mxu0 0
    %4767 = vmatmul.mubr.bf16.gmra.mrb[0].mxu0 %v4729
    %v4768 = vpop.f32.mrb[0].mxu0
    %v4769 = vadd.f32 %v4714, %v4768
    %v4770 = vpop.f32.mrb[0].mxu0
    %v4771 = vpop.f32.mrb[0].mxu0
    %v4772 = vadd.f32 %v4714, %v4771
    %v4773 = vpop.f32.mrb[0].mxu0
    %4774 = vmatprep.mubr.bf16.mxu0 0
    %4775 = vmatmul.mubr.bf16.gmra.mrb[0].mxu0 %v4732
    %v4776 = vpop.f32.mrb[0].mxu0
    %v4777 = vadd.f32 %v4714, %v4776
    %v4778 = vpop.f32.mrb[0].mxu0
    %v4779 = vpop.f32.mrb[0].mxu0
    %v4780 = vadd.f32 %v4714, %v4779
    %v4781 = vpop.f32.mrb[0].mxu0
    %4782 = vdwg.mxu0
    %v4783 = vpack.c.bf16 %v4772, %v4769
    %v4784 = vpack.c.bf16 %v4780, %v4777
    %4787 = vrot.lane.b32.xlu0 %v4783, 120
    %v4788 = vpop.permute.xlu0 %4787
    %4789 = vrot.lane.b32.xlu0 %v4784, 120
    %v4790 = vpop.permute.xlu0 %4789
    %4791 = vrot.lane.b32.xlu0 %v4783, 112
    %v4792 = vpop.permute.xlu0 %4791
    %4793 = vrot.lane.b32.xlu0 %v4784, 112
    %v4794 = vpop.permute.xlu0 %4793
    %4795 = vrot.lane.b32.xlu0 %v4783, 104
    %v4796 = vpop.permute.xlu0 %4795
    %4797 = vrot.lane.b32.xlu0 %v4784, 104
    %v4798 = vpop.permute.xlu0 %4797
    %v4801 = vpack.i.b16 %v4788, %v4783
    %v4803 = vshrl.u32 %v4783, 16
    %v4804 = vshrl.u32 %v4788, 16
    %v4805 = vpack.i.b16 %v4804, %v4803
    %v4809 = vpack.i.b16 %v4796, %v4792
    %v4811 = vshrl.u32 %v4792, 16
    %v4812 = vshrl.u32 %v4796, 16
    %v4813 = vpack.i.b16 %v4812, %v4811
    %v4817 = vpack.i.b16 %v4790, %v4784
    %v4819 = vshrl.u32 %v4784, 16
    %v4820 = vshrl.u32 %v4790, 16
    %v4821 = vpack.i.b16 %v4820, %v4819
    %v4825 = vpack.i.b16 %v4798, %v4794
    %v4827 = vshrl.u32 %v4794, 16
    %v4828 = vshrl.u32 %v4798, 16
    %v4829 = vpack.i.b16 %v4828, %v4827
    %v4831 = vcombine.high %v4801, %v332
    %v4833 = vunpack.c.l.s4 1983009808
    %v4834 = vunpack.c.0.s8 %v4833
    %v4835 = vlaneseq
    %v4836 = vshrl.u32 %v4835, 7
    %v4837 = vsub.s32 %v4834, %v4836
    %v4838 = vrot.slane %v4801, %v4837
    %v4840 = vunpack.c.l.s4 1983009808
    %v4841 = vunpack.c.0.s8 %v4840
    %v4842 = vlaneseq
    %v4843 = vshrl.u32 %v4842, 7
    %v4844 = vsub.s32 %v4841, %v4843
    %v4845 = vrot.slane %v4831, %v4844
    %v4846 = vcombine.high %v4809, %v332
    %v4848 = vunpack.c.l.s4 1983009808
    %v4849 = vunpack.c.0.s8 %v4848
    %v4850 = vlaneseq
    %v4851 = vshrl.u32 %v4850, 7
    %v4852 = vsub.s32 %v4849, %v4851
    %v4853 = vrot.slane %v4809, %v4852
    %v4855 = vunpack.c.l.s4 1983009808
    %v4856 = vunpack.c.0.s8 %v4855
    %v4857 = vlaneseq
    %v4858 = vshrl.u32 %v4857, 7
    %v4859 = vsub.s32 %v4856, %v4858
    %v4860 = vrot.slane %v4846, %v4859
    %v4861 = vcombine.low %v4838, %v4853
    %v4862 = vcombine.high %v4838, %v4853
    %v4864 = vunpack.c.l.s4 1934713408
    %v4865 = vunpack.c.0.s8 %v4864
    %v4866 = vlaneseq
    %v4867 = vshrl.u32 %v4866, 7
    %v4868 = vsub.s32 %v4865, %v4867
    %v4869 = vrot.slane %v4861, %v4868
    %v4871 = vunpack.c.l.s4 1934713408
    %v4872 = vunpack.c.0.s8 %v4871
    %v4873 = vlaneseq
    %v4874 = vshrl.u32 %v4873, 7
    %v4875 = vsub.s32 %v4872, %v4874
    %v4876 = vrot.slane %v4862, %v4875
    %v4877 = vcombine.low %v4845, %v4860
    %v4878 = vcombine.high %v4845, %v4860
    %v4880 = vunpack.c.l.s4 1934713408
    %v4881 = vunpack.c.0.s8 %v4880
    %v4882 = vlaneseq
    %v4883 = vshrl.u32 %v4882, 7
    %v4884 = vsub.s32 %v4881, %v4883
    %v4885 = vrot.slane %v4877, %v4884
    %v4887 = vunpack.c.l.s4 1934713408
    %v4888 = vunpack.c.0.s8 %v4887
    %v4889 = vlaneseq
    %v4890 = vshrl.u32 %v4889, 7
    %v4891 = vsub.s32 %v4888, %v4890
    %v4892 = vrot.slane %v4878, %v4891
    %v4893 = vcombine.high %v4869, 0
    %v4894 = vcombine.high %v4876, 0
    %v4895 = vcombine.high %v4885, 0
    %v4896 = vcombine.high %v4892, 0
    %v4897 = vcombine.high %v4805, %v335
    %v4899 = vunpack.c.l.s4 1983009808
    %v4900 = vunpack.c.0.s8 %v4899
    %v4901 = vlaneseq
    %v4902 = vshrl.u32 %v4901, 7
    %v4903 = vsub.s32 %v4900, %v4902
    %v4904 = vrot.slane %v4805, %v4903
    %v4906 = vunpack.c.l.s4 1983009808
    %v4907 = vunpack.c.0.s8 %v4906
    %v4908 = vlaneseq
    %v4909 = vshrl.u32 %v4908, 7
    %v4910 = vsub.s32 %v4907, %v4909
    %v4911 = vrot.slane %v4897, %v4910
    %v4912 = vcombine.high %v4813, %v335
    %v4914 = vunpack.c.l.s4 1983009808
    %v4915 = vunpack.c.0.s8 %v4914
    %v4916 = vlaneseq
    %v4917 = vshrl.u32 %v4916, 7
    %v4918 = vsub.s32 %v4915, %v4917
    %v4919 = vrot.slane %v4813, %v4918
    %v4921 = vunpack.c.l.s4 1983009808
    %v4922 = vunpack.c.0.s8 %v4921
    %v4923 = vlaneseq
    %v4924 = vshrl.u32 %v4923, 7
    %v4925 = vsub.s32 %v4922, %v4924
    %v4926 = vrot.slane %v4912, %v4925
    %v4927 = vcombine.low %v4904, %v4919
    %v4928 = vcombine.high %v4904, %v4919
    %v4930 = vunpack.c.l.s4 1934713408
    %v4931 = vunpack.c.0.s8 %v4930
    %v4932 = vlaneseq
    %v4933 = vshrl.u32 %v4932, 7
    %v4934 = vsub.s32 %v4931, %v4933
    %v4935 = vrot.slane %v4927, %v4934
    %v4937 = vunpack.c.l.s4 1934713408
    %v4938 = vunpack.c.0.s8 %v4937
    %v4939 = vlaneseq
    %v4940 = vshrl.u32 %v4939, 7
    %v4941 = vsub.s32 %v4938, %v4940
    %v4942 = vrot.slane %v4928, %v4941
    %v4943 = vcombine.low %v4911, %v4926
    %v4944 = vcombine.high %v4911, %v4926
    %v4946 = vunpack.c.l.s4 1934713408
    %v4947 = vunpack.c.0.s8 %v4946
    %v4948 = vlaneseq
    %v4949 = vshrl.u32 %v4948, 7
    %v4950 = vsub.s32 %v4947, %v4949
    %v4951 = vrot.slane %v4943, %v4950
    %v4953 = vunpack.c.l.s4 1934713408
    %v4954 = vunpack.c.0.s8 %v4953
    %v4955 = vlaneseq
    %v4956 = vshrl.u32 %v4955, 7
    %v4957 = vsub.s32 %v4954, %v4956
    %v4958 = vrot.slane %v4944, %v4957
    %v4959 = vcombine.high %v4935, 0
    %v4960 = vcombine.high %v4942, 0
    %v4961 = vcombine.high %v4951, 0
    %v4962 = vcombine.high %v4958, 0
    %v4963 = vcombine.high %v4817, %v332
    %v4965 = vunpack.c.l.s4 1983009808
    %v4966 = vunpack.c.0.s8 %v4965
    %v4967 = vlaneseq
    %v4968 = vshrl.u32 %v4967, 7
    %v4969 = vsub.s32 %v4966, %v4968
    %v4970 = vrot.slane %v4817, %v4969
    %v4972 = vunpack.c.l.s4 1983009808
    %v4973 = vunpack.c.0.s8 %v4972
    %v4974 = vlaneseq
    %v4975 = vshrl.u32 %v4974, 7
    %v4976 = vsub.s32 %v4973, %v4975
    %v4977 = vrot.slane %v4963, %v4976
    %v4978 = vcombine.high %v4825, %v332
    %v4980 = vunpack.c.l.s4 1983009808
    %v4981 = vunpack.c.0.s8 %v4980
    %v4982 = vlaneseq
    %v4983 = vshrl.u32 %v4982, 7
    %v4984 = vsub.s32 %v4981, %v4983
    %v4985 = vrot.slane %v4825, %v4984
    %v4987 = vunpack.c.l.s4 1983009808
    %v4988 = vunpack.c.0.s8 %v4987
    %v4989 = vlaneseq
    %v4990 = vshrl.u32 %v4989, 7
    %v4991 = vsub.s32 %v4988, %v4990
    %v4992 = vrot.slane %v4978, %v4991
    %v4993 = vcombine.low %v4970, %v4985
    %v4994 = vcombine.high %v4970, %v4985
    %v4996 = vunpack.c.l.s4 1934713408
    %v4997 = vunpack.c.0.s8 %v4996
    %v4998 = vlaneseq
    %v4999 = vshrl.u32 %v4998, 7
    %v5000 = vsub.s32 %v4997, %v4999
    %v5001 = vrot.slane %v4993, %v5000
    %v5003 = vunpack.c.l.s4 1934713408
    %v5004 = vunpack.c.0.s8 %v5003
    %v5005 = vlaneseq
    %v5006 = vshrl.u32 %v5005, 7
    %v5007 = vsub.s32 %v5004, %v5006
    %v5008 = vrot.slane %v4994, %v5007
    %v5009 = vcombine.low %v4977, %v4992
    %v5010 = vcombine.high %v4977, %v4992
    %v5012 = vunpack.c.l.s4 1934713408
    %v5013 = vunpack.c.0.s8 %v5012
    %v5014 = vlaneseq
    %v5015 = vshrl.u32 %v5014, 7
    %v5016 = vsub.s32 %v5013, %v5015
    %v5017 = vrot.slane %v5009, %v5016
    %v5019 = vunpack.c.l.s4 1934713408
    %v5020 = vunpack.c.0.s8 %v5019
    %v5021 = vlaneseq
    %v5022 = vshrl.u32 %v5021, 7
    %v5023 = vsub.s32 %v5020, %v5022
    %v5024 = vrot.slane %v5010, %v5023
    %v5025 = vcombine.high %v5001, 0
    %v5026 = vcombine.high %v5008, 0
    %v5027 = vcombine.high %v5017, 0
    %v5028 = vcombine.high %v5024, 0
    %v5029 = vcombine.high %v4821, %v335
    %v5031 = vunpack.c.l.s4 1983009808
    %v5032 = vunpack.c.0.s8 %v5031
    %v5033 = vlaneseq
    %v5034 = vshrl.u32 %v5033, 7
    %v5035 = vsub.s32 %v5032, %v5034
    %v5036 = vrot.slane %v4821, %v5035
    %v5038 = vunpack.c.l.s4 1983009808
    %v5039 = vunpack.c.0.s8 %v5038
    %v5040 = vlaneseq
    %v5041 = vshrl.u32 %v5040, 7
    %v5042 = vsub.s32 %v5039, %v5041
    %v5043 = vrot.slane %v5029, %v5042
    %v5044 = vcombine.high %v4829, %v335
    %v5046 = vunpack.c.l.s4 1983009808
    %v5047 = vunpack.c.0.s8 %v5046
    %v5048 = vlaneseq
    %v5049 = vshrl.u32 %v5048, 7
    %v5050 = vsub.s32 %v5047, %v5049
    %v5051 = vrot.slane %v4829, %v5050
    %v5053 = vunpack.c.l.s4 1983009808
    %v5054 = vunpack.c.0.s8 %v5053
    %v5055 = vlaneseq
    %v5056 = vshrl.u32 %v5055, 7
    %v5057 = vsub.s32 %v5054, %v5056
    %v5058 = vrot.slane %v5044, %v5057
    %v5059 = vcombine.low %v5036, %v5051
    %v5060 = vcombine.high %v5036, %v5051
    %v5062 = vunpack.c.l.s4 1934713408
    %v5063 = vunpack.c.0.s8 %v5062
    %v5064 = vlaneseq
    %v5065 = vshrl.u32 %v5064, 7
    %v5066 = vsub.s32 %v5063, %v5065
    %v5067 = vrot.slane %v5059, %v5066
    %v5069 = vunpack.c.l.s4 1934713408
    %v5070 = vunpack.c.0.s8 %v5069
    %v5071 = vlaneseq
    %v5072 = vshrl.u32 %v5071, 7
    %v5073 = vsub.s32 %v5070, %v5072
    %v5074 = vrot.slane %v5060, %v5073
    %v5075 = vcombine.low %v5043, %v5058
    %v5076 = vcombine.high %v5043, %v5058
    %v5078 = vunpack.c.l.s4 1934713408
    %v5079 = vunpack.c.0.s8 %v5078
    %v5080 = vlaneseq
    %v5081 = vshrl.u32 %v5080, 7
    %v5082 = vsub.s32 %v5079, %v5081
    %v5083 = vrot.slane %v5075, %v5082
    %v5085 = vunpack.c.l.s4 1934713408
    %v5086 = vunpack.c.0.s8 %v5085
    %v5087 = vlaneseq
    %v5088 = vshrl.u32 %v5087, 7
    %v5089 = vsub.s32 %v5086, %v5088
    %v5090 = vrot.slane %v5076, %v5089
    %v5091 = vcombine.high %v5067, 0
    %v5092 = vcombine.high %v5074, 0
    %v5093 = vcombine.high %v5083, 0
    %v5094 = vcombine.high %v5090, 0
    %v5095 = vcombine.low %v4869, %v4876
    %v5097 = vunpack.c.l.s4 1983009808
    %v5098 = vunpack.c.0.s8 %v5097
    %v5099 = vlaneseq
    %v5100 = vshrl.u32 %v5099, 7
    %v5101 = vsub.s32 %v5098, %v5100
    %v5102 = vrot.slane %v5095, %v5101
    %v5103 = vcombine.low %v4893, %v4894
    %v5105 = vunpack.c.l.s4 1983009808
    %v5106 = vunpack.c.0.s8 %v5105
    %v5107 = vlaneseq
    %v5108 = vshrl.u32 %v5107, 7
    %v5109 = vsub.s32 %v5106, %v5108
    %v5110 = vrot.slane %v5103, %v5109
    %v5111 = vcombine.low %v5102, %v5110
    %v5113 = vunpack.c.l.s4 1934713408
    %v5114 = vunpack.c.0.s8 %v5113
    %v5115 = vlaneseq
    %v5116 = vshrl.u32 %v5115, 7
    %v5117 = vsub.s32 %v5114, %v5116
    %v5118 = vrot.slane %v5111, %v5117
    %v5119 = vcombine.high %v5118, 0
    %v5120 = vcombine.low %v4935, %v4942
    %v5122 = vunpack.c.l.s4 1983009808
    %v5123 = vunpack.c.0.s8 %v5122
    %v5124 = vlaneseq
    %v5125 = vshrl.u32 %v5124, 7
    %v5126 = vsub.s32 %v5123, %v5125
    %v5127 = vrot.slane %v5120, %v5126
    %v5128 = vcombine.low %v4959, %v4960
    %v5130 = vunpack.c.l.s4 1983009808
    %v5131 = vunpack.c.0.s8 %v5130
    %v5132 = vlaneseq
    %v5133 = vshrl.u32 %v5132, 7
    %v5134 = vsub.s32 %v5131, %v5133
    %v5135 = vrot.slane %v5128, %v5134
    %v5136 = vcombine.low %v5127, %v5135
    %v5138 = vunpack.c.l.s4 1934713408
    %v5139 = vunpack.c.0.s8 %v5138
    %v5140 = vlaneseq
    %v5141 = vshrl.u32 %v5140, 7
    %v5142 = vsub.s32 %v5139, %v5141
    %v5143 = vrot.slane %v5136, %v5142
    %v5144 = vcombine.high %v5143, 0
    %v5145 = vcombine.low %v4885, %v4892
    %v5147 = vunpack.c.l.s4 1983009808
    %v5148 = vunpack.c.0.s8 %v5147
    %v5149 = vlaneseq
    %v5150 = vshrl.u32 %v5149, 7
    %v5151 = vsub.s32 %v5148, %v5150
    %v5152 = vrot.slane %v5145, %v5151
    %v5153 = vcombine.low %v4895, %v4896
    %v5155 = vunpack.c.l.s4 1983009808
    %v5156 = vunpack.c.0.s8 %v5155
    %v5157 = vlaneseq
    %v5158 = vshrl.u32 %v5157, 7
    %v5159 = vsub.s32 %v5156, %v5158
    %v5160 = vrot.slane %v5153, %v5159
    %v5161 = vcombine.low %v5152, %v5160
    %v5163 = vunpack.c.l.s4 1934713408
    %v5164 = vunpack.c.0.s8 %v5163
    %v5165 = vlaneseq
    %v5166 = vshrl.u32 %v5165, 7
    %v5167 = vsub.s32 %v5164, %v5166
    %v5168 = vrot.slane %v5161, %v5167
    %v5169 = vcombine.high %v5168, 0
    %v5170 = vcombine.low %v4951, %v4958
    %v5172 = vunpack.c.l.s4 1983009808
    %v5173 = vunpack.c.0.s8 %v5172
    %v5174 = vlaneseq
    %v5175 = vshrl.u32 %v5174, 7
    %v5176 = vsub.s32 %v5173, %v5175
    %v5177 = vrot.slane %v5170, %v5176
    %v5178 = vcombine.low %v4961, %v4962
    %v5180 = vunpack.c.l.s4 1983009808
    %v5181 = vunpack.c.0.s8 %v5180
    %v5182 = vlaneseq
    %v5183 = vshrl.u32 %v5182, 7
    %v5184 = vsub.s32 %v5181, %v5183
    %v5185 = vrot.slane %v5178, %v5184
    %v5186 = vcombine.low %v5177, %v5185
    %v5188 = vunpack.c.l.s4 1934713408
    %v5189 = vunpack.c.0.s8 %v5188
    %v5190 = vlaneseq
    %v5191 = vshrl.u32 %v5190, 7
    %v5192 = vsub.s32 %v5189, %v5191
    %v5193 = vrot.slane %v5186, %v5192
    %v5194 = vcombine.high %v5193, 0
    %v5195 = vcombine.low %v5001, %v5008
    %v5197 = vunpack.c.l.s4 1983009808
    %v5198 = vunpack.c.0.s8 %v5197
    %v5199 = vlaneseq
    %v5200 = vshrl.u32 %v5199, 7
    %v5201 = vsub.s32 %v5198, %v5200
    %v5202 = vrot.slane %v5195, %v5201
    %v5203 = vcombine.low %v5025, %v5026
    %v5205 = vunpack.c.l.s4 1983009808
    %v5206 = vunpack.c.0.s8 %v5205
    %v5207 = vlaneseq
    %v5208 = vshrl.u32 %v5207, 7
    %v5209 = vsub.s32 %v5206, %v5208
    %v5210 = vrot.slane %v5203, %v5209
    %v5211 = vcombine.low %v5202, %v5210
    %v5213 = vunpack.c.l.s4 1934713408
    %v5214 = vunpack.c.0.s8 %v5213
    %v5215 = vlaneseq
    %v5216 = vshrl.u32 %v5215, 7
    %v5217 = vsub.s32 %v5214, %v5216
    %v5218 = vrot.slane %v5211, %v5217
    %v5219 = vcombine.high %v5218, 0
    %v5220 = vcombine.low %v5067, %v5074
    %v5222 = vunpack.c.l.s4 1983009808
    %v5223 = vunpack.c.0.s8 %v5222
    %v5224 = vlaneseq
    %v5225 = vshrl.u32 %v5224, 7
    %v5226 = vsub.s32 %v5223, %v5225
    %v5227 = vrot.slane %v5220, %v5226
    %v5228 = vcombine.low %v5091, %v5092
    %v5230 = vunpack.c.l.s4 1983009808
    %v5231 = vunpack.c.0.s8 %v5230
    %v5232 = vlaneseq
    %v5233 = vshrl.u32 %v5232, 7
    %v5234 = vsub.s32 %v5231, %v5233
    %v5235 = vrot.slane %v5228, %v5234
    %v5236 = vcombine.low %v5227, %v5235
    %v5238 = vunpack.c.l.s4 1934713408
    %v5239 = vunpack.c.0.s8 %v5238
    %v5240 = vlaneseq
    %v5241 = vshrl.u32 %v5240, 7
    %v5242 = vsub.s32 %v5239, %v5241
    %v5243 = vrot.slane %v5236, %v5242
    %v5244 = vcombine.high %v5243, 0
    %v5245 = vcombine.low %v5017, %v5024
    %v5247 = vunpack.c.l.s4 1983009808
    %v5248 = vunpack.c.0.s8 %v5247
    %v5249 = vlaneseq
    %v5250 = vshrl.u32 %v5249, 7
    %v5251 = vsub.s32 %v5248, %v5250
    %v5252 = vrot.slane %v5245, %v5251
    %v5253 = vcombine.low %v5027, %v5028
    %v5255 = vunpack.c.l.s4 1983009808
    %v5256 = vunpack.c.0.s8 %v5255
    %v5257 = vlaneseq
    %v5258 = vshrl.u32 %v5257, 7
    %v5259 = vsub.s32 %v5256, %v5258
    %v5260 = vrot.slane %v5253, %v5259
    %v5261 = vcombine.low %v5252, %v5260
    %v5263 = vunpack.c.l.s4 1934713408
    %v5264 = vunpack.c.0.s8 %v5263
    %v5265 = vlaneseq
    %v5266 = vshrl.u32 %v5265, 7
    %v5267 = vsub.s32 %v5264, %v5266
    %v5268 = vrot.slane %v5261, %v5267
    %v5269 = vcombine.high %v5268, 0
    %v5270 = vcombine.low %v5083, %v5090
    %v5272 = vunpack.c.l.s4 1983009808
    %v5273 = vunpack.c.0.s8 %v5272
    %v5274 = vlaneseq
    %v5275 = vshrl.u32 %v5274, 7
    %v5276 = vsub.s32 %v5273, %v5275
    %v5277 = vrot.slane %v5270, %v5276
    %v5278 = vcombine.low %v5093, %v5094
    %v5280 = vunpack.c.l.s4 1983009808
    %v5281 = vunpack.c.0.s8 %v5280
    %v5282 = vlaneseq
    %v5283 = vshrl.u32 %v5282, 7
    %v5284 = vsub.s32 %v5281, %v5283
    %v5285 = vrot.slane %v5278, %v5284
    %v5286 = vcombine.low %v5277, %v5285
    %v5288 = vunpack.c.l.s4 1934713408
    %v5289 = vunpack.c.0.s8 %v5288
    %v5290 = vlaneseq
    %v5291 = vshrl.u32 %v5290, 7
    %v5292 = vsub.s32 %v5289, %v5291
    %v5293 = vrot.slane %v5286, %v5292
    %v5294 = vcombine.high %v5293, 0
    %v5297 = vpack.i.b16 %v5143, %v5118
    %v5298 = vshrl.u32 %v5118, 16
    %v5299 = vshrl.u32 %v5143, 16
    %v5300 = vpack.i.b16 %v5299, %v5298
    %v5303 = vpack.i.b16 %v5144, %v5119
    %v5304 = vshrl.u32 %v5119, 16
    %v5305 = vshrl.u32 %v5144, 16
    %v5306 = vpack.i.b16 %v5305, %v5304
    %v5309 = vpack.i.b16 %v5193, %v5168
    %v5310 = vshrl.u32 %v5168, 16
    %v5311 = vshrl.u32 %v5193, 16
    %v5312 = vpack.i.b16 %v5311, %v5310
    %v5315 = vpack.i.b16 %v5194, %v5169
    %v5316 = vshrl.u32 %v5169, 16
    %v5317 = vshrl.u32 %v5194, 16
    %v5318 = vpack.i.b16 %v5317, %v5316
    %v5321 = vpack.i.b16 %v5243, %v5218
    %v5322 = vshrl.u32 %v5218, 16
    %v5323 = vshrl.u32 %v5243, 16
    %v5324 = vpack.i.b16 %v5323, %v5322
    %v5327 = vpack.i.b16 %v5244, %v5219
    %v5328 = vshrl.u32 %v5219, 16
    %v5329 = vshrl.u32 %v5244, 16
    %v5330 = vpack.i.b16 %v5329, %v5328
    %v5333 = vpack.i.b16 %v5293, %v5268
    %v5334 = vshrl.u32 %v5268, 16
    %v5335 = vshrl.u32 %v5293, 16
    %v5336 = vpack.i.b16 %v5335, %v5334
    %v5339 = vpack.i.b16 %v5294, %v5269
    %v5340 = vshrl.u32 %v5269, 16
    %v5341 = vshrl.u32 %v5294, 16
    %v5342 = vpack.i.b16 %v5341, %v5340
    %5343 = vrot.lane.b32.xlu0 %v4783, 96
    %v5344 = vpop.permute.xlu0 %5343
    %5345 = vrot.lane.b32.xlu0 %v4784, 96
    %v5346 = vpop.permute.xlu0 %5345
    %5347 = vrot.lane.b32.xlu0 %v4788, 96
    %v5348 = vpop.permute.xlu0 %5347
    %5349 = vrot.lane.b32.xlu0 %v4790, 96
    %v5350 = vpop.permute.xlu0 %5349
    %5351 = vrot.lane.b32.xlu0 %v4792, 96
    %v5352 = vpop.permute.xlu0 %5351
    %5353 = vrot.lane.b32.xlu0 %v4794, 96
    %v5354 = vpop.permute.xlu0 %5353
    %5355 = vrot.lane.b32.xlu0 %v4796, 96
    %v5356 = vpop.permute.xlu0 %5355
    %5357 = vrot.lane.b32.xlu0 %v4798, 96
    %v5358 = vpop.permute.xlu0 %5357
    %v5361 = vpack.i.b16 %v5348, %v5344
    %v5363 = vshrl.u32 %v5344, 16
    %v5364 = vshrl.u32 %v5348, 16
    %v5365 = vpack.i.b16 %v5364, %v5363
    %v5369 = vpack.i.b16 %v5356, %v5352
    %v5371 = vshrl.u32 %v5352, 16
    %v5372 = vshrl.u32 %v5356, 16
    %v5373 = vpack.i.b16 %v5372, %v5371
    %v5377 = vpack.i.b16 %v5350, %v5346
    %v5379 = vshrl.u32 %v5346, 16
    %v5380 = vshrl.u32 %v5350, 16
    %v5381 = vpack.i.b16 %v5380, %v5379
    %v5385 = vpack.i.b16 %v5358, %v5354
    %v5387 = vshrl.u32 %v5354, 16
    %v5388 = vshrl.u32 %v5358, 16
    %v5389 = vpack.i.b16 %v5388, %v5387
    %v5391 = vcombine.high %v5361, %v332
    %v5393 = vunpack.c.l.s4 1983009808
    %v5394 = vunpack.c.0.s8 %v5393
    %v5395 = vlaneseq
    %v5396 = vshrl.u32 %v5395, 7
    %v5397 = vsub.s32 %v5394, %v5396
    %v5398 = vrot.slane %v5361, %v5397
    %v5400 = vunpack.c.l.s4 1983009808
    %v5401 = vunpack.c.0.s8 %v5400
    %v5402 = vlaneseq
    %v5403 = vshrl.u32 %v5402, 7
    %v5404 = vsub.s32 %v5401, %v5403
    %v5405 = vrot.slane %v5391, %v5404
    %v5406 = vcombine.high %v5369, %v332
    %v5408 = vunpack.c.l.s4 1983009808
    %v5409 = vunpack.c.0.s8 %v5408
    %v5410 = vlaneseq
    %v5411 = vshrl.u32 %v5410, 7
    %v5412 = vsub.s32 %v5409, %v5411
    %v5413 = vrot.slane %v5369, %v5412
    %v5415 = vunpack.c.l.s4 1983009808
    %v5416 = vunpack.c.0.s8 %v5415
    %v5417 = vlaneseq
    %v5418 = vshrl.u32 %v5417, 7
    %v5419 = vsub.s32 %v5416, %v5418
    %v5420 = vrot.slane %v5406, %v5419
    %v5421 = vcombine.low %v5398, %v5413
    %v5422 = vcombine.high %v5398, %v5413
    %v5424 = vunpack.c.l.s4 1934713408
    %v5425 = vunpack.c.0.s8 %v5424
    %v5426 = vlaneseq
    %v5427 = vshrl.u32 %v5426, 7
    %v5428 = vsub.s32 %v5425, %v5427
    %v5429 = vrot.slane %v5421, %v5428
    %v5431 = vunpack.c.l.s4 1934713408
    %v5432 = vunpack.c.0.s8 %v5431
    %v5433 = vlaneseq
    %v5434 = vshrl.u32 %v5433, 7
    %v5435 = vsub.s32 %v5432, %v5434
    %v5436 = vrot.slane %v5422, %v5435
    %v5437 = vcombine.low %v5405, %v5420
    %v5438 = vcombine.high %v5405, %v5420
    %v5440 = vunpack.c.l.s4 1934713408
    %v5441 = vunpack.c.0.s8 %v5440
    %v5442 = vlaneseq
    %v5443 = vshrl.u32 %v5442, 7
    %v5444 = vsub.s32 %v5441, %v5443
    %v5445 = vrot.slane %v5437, %v5444
    %v5447 = vunpack.c.l.s4 1934713408
    %v5448 = vunpack.c.0.s8 %v5447
    %v5449 = vlaneseq
    %v5450 = vshrl.u32 %v5449, 7
    %v5451 = vsub.s32 %v5448, %v5450
    %v5452 = vrot.slane %v5438, %v5451
    %v5453 = vcombine.high %v5429, 0
    %v5454 = vcombine.high %v5436, 0
    %v5455 = vcombine.high %v5445, 0
    %v5456 = vcombine.high %v5452, 0
    %v5457 = vcombine.high %v5365, %v335
    %v5459 = vunpack.c.l.s4 1983009808
    %v5460 = vunpack.c.0.s8 %v5459
    %v5461 = vlaneseq
    %v5462 = vshrl.u32 %v5461, 7
    %v5463 = vsub.s32 %v5460, %v5462
    %v5464 = vrot.slane %v5365, %v5463
    %v5466 = vunpack.c.l.s4 1983009808
    %v5467 = vunpack.c.0.s8 %v5466
    %v5468 = vlaneseq
    %v5469 = vshrl.u32 %v5468, 7
    %v5470 = vsub.s32 %v5467, %v5469
    %v5471 = vrot.slane %v5457, %v5470
    %v5472 = vcombine.high %v5373, %v335
    %v5474 = vunpack.c.l.s4 1983009808
    %v5475 = vunpack.c.0.s8 %v5474
    %v5476 = vlaneseq
    %v5477 = vshrl.u32 %v5476, 7
    %v5478 = vsub.s32 %v5475, %v5477
    %v5479 = vrot.slane %v5373, %v5478
    %v5481 = vunpack.c.l.s4 1983009808
    %v5482 = vunpack.c.0.s8 %v5481
    %v5483 = vlaneseq
    %v5484 = vshrl.u32 %v5483, 7
    %v5485 = vsub.s32 %v5482, %v5484
    %v5486 = vrot.slane %v5472, %v5485
    %v5487 = vcombine.low %v5464, %v5479
    %v5488 = vcombine.high %v5464, %v5479
    %v5490 = vunpack.c.l.s4 1934713408
    %v5491 = vunpack.c.0.s8 %v5490
    %v5492 = vlaneseq
    %v5493 = vshrl.u32 %v5492, 7
    %v5494 = vsub.s32 %v5491, %v5493
    %v5495 = vrot.slane %v5487, %v5494
    %v5497 = vunpack.c.l.s4 1934713408
    %v5498 = vunpack.c.0.s8 %v5497
    %v5499 = vlaneseq
    %v5500 = vshrl.u32 %v5499, 7
    %v5501 = vsub.s32 %v5498, %v5500
    %v5502 = vrot.slane %v5488, %v5501
    %v5503 = vcombine.low %v5471, %v5486
    %v5504 = vcombine.high %v5471, %v5486
    %v5506 = vunpack.c.l.s4 1934713408
    %v5507 = vunpack.c.0.s8 %v5506
    %v5508 = vlaneseq
    %v5509 = vshrl.u32 %v5508, 7
    %v5510 = vsub.s32 %v5507, %v5509
    %v5511 = vrot.slane %v5503, %v5510
    %v5513 = vunpack.c.l.s4 1934713408
    %v5514 = vunpack.c.0.s8 %v5513
    %v5515 = vlaneseq
    %v5516 = vshrl.u32 %v5515, 7
    %v5517 = vsub.s32 %v5514, %v5516
    %v5518 = vrot.slane %v5504, %v5517
    %v5519 = vcombine.high %v5495, 0
    %v5520 = vcombine.high %v5502, 0
    %v5521 = vcombine.high %v5511, 0
    %v5522 = vcombine.high %v5518, 0
    %v5523 = vcombine.high %v5377, %v332
    %v5525 = vunpack.c.l.s4 1983009808
    %v5526 = vunpack.c.0.s8 %v5525
    %v5527 = vlaneseq
    %v5528 = vshrl.u32 %v5527, 7
    %v5529 = vsub.s32 %v5526, %v5528
    %v5530 = vrot.slane %v5377, %v5529
    %v5532 = vunpack.c.l.s4 1983009808
    %v5533 = vunpack.c.0.s8 %v5532
    %v5534 = vlaneseq
    %v5535 = vshrl.u32 %v5534, 7
    %v5536 = vsub.s32 %v5533, %v5535
    %v5537 = vrot.slane %v5523, %v5536
    %v5538 = vcombine.high %v5385, %v332
    %v5540 = vunpack.c.l.s4 1983009808
    %v5541 = vunpack.c.0.s8 %v5540
    %v5542 = vlaneseq
    %v5543 = vshrl.u32 %v5542, 7
    %v5544 = vsub.s32 %v5541, %v5543
    %v5545 = vrot.slane %v5385, %v5544
    %v5547 = vunpack.c.l.s4 1983009808
    %v5548 = vunpack.c.0.s8 %v5547
    %v5549 = vlaneseq
    %v5550 = vshrl.u32 %v5549, 7
    %v5551 = vsub.s32 %v5548, %v5550
    %v5552 = vrot.slane %v5538, %v5551
    %v5553 = vcombine.low %v5530, %v5545
    %v5554 = vcombine.high %v5530, %v5545
    %v5556 = vunpack.c.l.s4 1934713408
    %v5557 = vunpack.c.0.s8 %v5556
    %v5558 = vlaneseq
    %v5559 = vshrl.u32 %v5558, 7
    %v5560 = vsub.s32 %v5557, %v5559
    %v5561 = vrot.slane %v5553, %v5560
    %v5563 = vunpack.c.l.s4 1934713408
    %v5564 = vunpack.c.0.s8 %v5563
    %v5565 = vlaneseq
    %v5566 = vshrl.u32 %v5565, 7
    %v5567 = vsub.s32 %v5564, %v5566
    %v5568 = vrot.slane %v5554, %v5567
    %v5569 = vcombine.low %v5537, %v5552
    %v5570 = vcombine.high %v5537, %v5552
    %v5572 = vunpack.c.l.s4 1934713408
    %v5573 = vunpack.c.0.s8 %v5572
    %v5574 = vlaneseq
    %v5575 = vshrl.u32 %v5574, 7
    %v5576 = vsub.s32 %v5573, %v5575
    %v5577 = vrot.slane %v5569, %v5576
    %v5579 = vunpack.c.l.s4 1934713408
    %v5580 = vunpack.c.0.s8 %v5579
    %v5581 = vlaneseq
    %v5582 = vshrl.u32 %v5581, 7
    %v5583 = vsub.s32 %v5580, %v5582
    %v5584 = vrot.slane %v5570, %v5583
    %v5585 = vcombine.high %v5561, 0
    %v5586 = vcombine.high %v5568, 0
    %v5587 = vcombine.high %v5577, 0
    %v5588 = vcombine.high %v5584, 0
    %v5589 = vcombine.high %v5381, %v335
    %v5591 = vunpack.c.l.s4 1983009808
    %v5592 = vunpack.c.0.s8 %v5591
    %v5593 = vlaneseq
    %v5594 = vshrl.u32 %v5593, 7
    %v5595 = vsub.s32 %v5592, %v5594
    %v5596 = vrot.slane %v5381, %v5595
    %v5598 = vunpack.c.l.s4 1983009808
    %v5599 = vunpack.c.0.s8 %v5598
    %v5600 = vlaneseq
    %v5601 = vshrl.u32 %v5600, 7
    %v5602 = vsub.s32 %v5599, %v5601
    %v5603 = vrot.slane %v5589, %v5602
    %v5604 = vcombine.high %v5389, %v335
    %v5606 = vunpack.c.l.s4 1983009808
    %v5607 = vunpack.c.0.s8 %v5606
    %v5608 = vlaneseq
    %v5609 = vshrl.u32 %v5608, 7
    %v5610 = vsub.s32 %v5607, %v5609
    %v5611 = vrot.slane %v5389, %v5610
    %v5613 = vunpack.c.l.s4 1983009808
    %v5614 = vunpack.c.0.s8 %v5613
    %v5615 = vlaneseq
    %v5616 = vshrl.u32 %v5615, 7
    %v5617 = vsub.s32 %v5614, %v5616
    %v5618 = vrot.slane %v5604, %v5617
    %v5619 = vcombine.low %v5596, %v5611
    %v5620 = vcombine.high %v5596, %v5611
    %v5622 = vunpack.c.l.s4 1934713408
    %v5623 = vunpack.c.0.s8 %v5622
    %v5624 = vlaneseq
    %v5625 = vshrl.u32 %v5624, 7
    %v5626 = vsub.s32 %v5623, %v5625
    %v5627 = vrot.slane %v5619, %v5626
    %v5629 = vunpack.c.l.s4 1934713408
    %v5630 = vunpack.c.0.s8 %v5629
    %v5631 = vlaneseq
    %v5632 = vshrl.u32 %v5631, 7
    %v5633 = vsub.s32 %v5630, %v5632
    %v5634 = vrot.slane %v5620, %v5633
    %v5635 = vcombine.low %v5603, %v5618
    %v5636 = vcombine.high %v5603, %v5618
    %v5638 = vunpack.c.l.s4 1934713408
    %v5639 = vunpack.c.0.s8 %v5638
    %v5640 = vlaneseq
    %v5641 = vshrl.u32 %v5640, 7
    %v5642 = vsub.s32 %v5639, %v5641
    %v5643 = vrot.slane %v5635, %v5642
    %v5645 = vunpack.c.l.s4 1934713408
    %v5646 = vunpack.c.0.s8 %v5645
    %v5647 = vlaneseq
    %v5648 = vshrl.u32 %v5647, 7
    %v5649 = vsub.s32 %v5646, %v5648
    %v5650 = vrot.slane %v5636, %v5649
    %v5651 = vcombine.high %v5627, 0
    %v5652 = vcombine.high %v5634, 0
    %v5653 = vcombine.high %v5643, 0
    %v5654 = vcombine.high %v5650, 0
    %v5655 = vcombine.low %v5429, %v5436
    %v5657 = vunpack.c.l.s4 1983009808
    %v5658 = vunpack.c.0.s8 %v5657
    %v5659 = vlaneseq
    %v5660 = vshrl.u32 %v5659, 7
    %v5661 = vsub.s32 %v5658, %v5660
    %v5662 = vrot.slane %v5655, %v5661
    %v5663 = vcombine.low %v5453, %v5454
    %v5665 = vunpack.c.l.s4 1983009808
    %v5666 = vunpack.c.0.s8 %v5665
    %v5667 = vlaneseq
    %v5668 = vshrl.u32 %v5667, 7
    %v5669 = vsub.s32 %v5666, %v5668
    %v5670 = vrot.slane %v5663, %v5669
    %v5671 = vcombine.low %v5662, %v5670
    %v5673 = vunpack.c.l.s4 1934713408
    %v5674 = vunpack.c.0.s8 %v5673
    %v5675 = vlaneseq
    %v5676 = vshrl.u32 %v5675, 7
    %v5677 = vsub.s32 %v5674, %v5676
    %v5678 = vrot.slane %v5671, %v5677
    %v5679 = vcombine.high %v5678, 0
    %v5680 = vcombine.low %v5495, %v5502
    %v5682 = vunpack.c.l.s4 1983009808
    %v5683 = vunpack.c.0.s8 %v5682
    %v5684 = vlaneseq
    %v5685 = vshrl.u32 %v5684, 7
    %v5686 = vsub.s32 %v5683, %v5685
    %v5687 = vrot.slane %v5680, %v5686
    %v5688 = vcombine.low %v5519, %v5520
    %v5690 = vunpack.c.l.s4 1983009808
    %v5691 = vunpack.c.0.s8 %v5690
    %v5692 = vlaneseq
    %v5693 = vshrl.u32 %v5692, 7
    %v5694 = vsub.s32 %v5691, %v5693
    %v5695 = vrot.slane %v5688, %v5694
    %v5696 = vcombine.low %v5687, %v5695
    %v5698 = vunpack.c.l.s4 1934713408
    %v5699 = vunpack.c.0.s8 %v5698
    %v5700 = vlaneseq
    %v5701 = vshrl.u32 %v5700, 7
    %v5702 = vsub.s32 %v5699, %v5701
    %v5703 = vrot.slane %v5696, %v5702
    %v5704 = vcombine.high %v5703, 0
    %v5705 = vcombine.low %v5445, %v5452
    %v5707 = vunpack.c.l.s4 1983009808
    %v5708 = vunpack.c.0.s8 %v5707
    %v5709 = vlaneseq
    %v5710 = vshrl.u32 %v5709, 7
    %v5711 = vsub.s32 %v5708, %v5710
    %v5712 = vrot.slane %v5705, %v5711
    %v5713 = vcombine.low %v5455, %v5456
    %v5715 = vunpack.c.l.s4 1983009808
    %v5716 = vunpack.c.0.s8 %v5715
    %v5717 = vlaneseq
    %v5718 = vshrl.u32 %v5717, 7
    %v5719 = vsub.s32 %v5716, %v5718
    %v5720 = vrot.slane %v5713, %v5719
    %v5721 = vcombine.low %v5712, %v5720
    %v5723 = vunpack.c.l.s4 1934713408
    %v5724 = vunpack.c.0.s8 %v5723
    %v5725 = vlaneseq
    %v5726 = vshrl.u32 %v5725, 7
    %v5727 = vsub.s32 %v5724, %v5726
    %v5728 = vrot.slane %v5721, %v5727
    %v5729 = vcombine.high %v5728, 0
    %v5730 = vcombine.low %v5511, %v5518
    %v5732 = vunpack.c.l.s4 1983009808
    %v5733 = vunpack.c.0.s8 %v5732
    %v5734 = vlaneseq
    %v5735 = vshrl.u32 %v5734, 7
    %v5736 = vsub.s32 %v5733, %v5735
    %v5737 = vrot.slane %v5730, %v5736
    %v5738 = vcombine.low %v5521, %v5522
    %v5740 = vunpack.c.l.s4 1983009808
    %v5741 = vunpack.c.0.s8 %v5740
    %v5742 = vlaneseq
    %v5743 = vshrl.u32 %v5742, 7
    %v5744 = vsub.s32 %v5741, %v5743
    %v5745 = vrot.slane %v5738, %v5744
    %v5746 = vcombine.low %v5737, %v5745
    %v5748 = vunpack.c.l.s4 1934713408
    %v5749 = vunpack.c.0.s8 %v5748
    %v5750 = vlaneseq
    %v5751 = vshrl.u32 %v5750, 7
    %v5752 = vsub.s32 %v5749, %v5751
    %v5753 = vrot.slane %v5746, %v5752
    %v5754 = vcombine.high %v5753, 0
    %v5755 = vcombine.low %v5561, %v5568
    %v5757 = vunpack.c.l.s4 1983009808
    %v5758 = vunpack.c.0.s8 %v5757
    %v5759 = vlaneseq
    %v5760 = vshrl.u32 %v5759, 7
    %v5761 = vsub.s32 %v5758, %v5760
    %v5762 = vrot.slane %v5755, %v5761
    %v5763 = vcombine.low %v5585, %v5586
    %v5765 = vunpack.c.l.s4 1983009808
    %v5766 = vunpack.c.0.s8 %v5765
    %v5767 = vlaneseq
    %v5768 = vshrl.u32 %v5767, 7
    %v5769 = vsub.s32 %v5766, %v5768
    %v5770 = vrot.slane %v5763, %v5769
    %v5771 = vcombine.low %v5762, %v5770
    %v5773 = vunpack.c.l.s4 1934713408
    %v5774 = vunpack.c.0.s8 %v5773
    %v5775 = vlaneseq
    %v5776 = vshrl.u32 %v5775, 7
    %v5777 = vsub.s32 %v5774, %v5776
    %v5778 = vrot.slane %v5771, %v5777
    %v5779 = vcombine.high %v5778, 0
    %v5780 = vcombine.low %v5627, %v5634
    %v5782 = vunpack.c.l.s4 1983009808
    %v5783 = vunpack.c.0.s8 %v5782
    %v5784 = vlaneseq
    %v5785 = vshrl.u32 %v5784, 7
    %v5786 = vsub.s32 %v5783, %v5785
    %v5787 = vrot.slane %v5780, %v5786
    %v5788 = vcombine.low %v5651, %v5652
    %v5790 = vunpack.c.l.s4 1983009808
    %v5791 = vunpack.c.0.s8 %v5790
    %v5792 = vlaneseq
    %v5793 = vshrl.u32 %v5792, 7
    %v5794 = vsub.s32 %v5791, %v5793
    %v5795 = vrot.slane %v5788, %v5794
    %v5796 = vcombine.low %v5787, %v5795
    %v5798 = vunpack.c.l.s4 1934713408
    %v5799 = vunpack.c.0.s8 %v5798
    %v5800 = vlaneseq
    %v5801 = vshrl.u32 %v5800, 7
    %v5802 = vsub.s32 %v5799, %v5801
    %v5803 = vrot.slane %v5796, %v5802
    %v5804 = vcombine.high %v5803, 0
    %v5805 = vcombine.low %v5577, %v5584
    %v5807 = vunpack.c.l.s4 1983009808
    %v5808 = vunpack.c.0.s8 %v5807
    %v5809 = vlaneseq
    %v5810 = vshrl.u32 %v5809, 7
    %v5811 = vsub.s32 %v5808, %v5810
    %v5812 = vrot.slane %v5805, %v5811
    %v5813 = vcombine.low %v5587, %v5588
    %v5815 = vunpack.c.l.s4 1983009808
    %v5816 = vunpack.c.0.s8 %v5815
    %v5817 = vlaneseq
    %v5818 = vshrl.u32 %v5817, 7
    %v5819 = vsub.s32 %v5816, %v5818
    %v5820 = vrot.slane %v5813, %v5819
    %v5821 = vcombine.low %v5812, %v5820
    %v5823 = vunpack.c.l.s4 1934713408
    %v5824 = vunpack.c.0.s8 %v5823
    %v5825 = vlaneseq
    %v5826 = vshrl.u32 %v5825, 7
    %v5827 = vsub.s32 %v5824, %v5826
    %v5828 = vrot.slane %v5821, %v5827
    %v5829 = vcombine.high %v5828, 0
    %v5830 = vcombine.low %v5643, %v5650
    %v5832 = vunpack.c.l.s4 1983009808
    %v5833 = vunpack.c.0.s8 %v5832
    %v5834 = vlaneseq
    %v5835 = vshrl.u32 %v5834, 7
    %v5836 = vsub.s32 %v5833, %v5835
    %v5837 = vrot.slane %v5830, %v5836
    %v5838 = vcombine.low %v5653, %v5654
    %v5840 = vunpack.c.l.s4 1983009808
    %v5841 = vunpack.c.0.s8 %v5840
    %v5842 = vlaneseq
    %v5843 = vshrl.u32 %v5842, 7
    %v5844 = vsub.s32 %v5841, %v5843
    %v5845 = vrot.slane %v5838, %v5844
    %v5846 = vcombine.low %v5837, %v5845
    %v5848 = vunpack.c.l.s4 1934713408
    %v5849 = vunpack.c.0.s8 %v5848
    %v5850 = vlaneseq
    %v5851 = vshrl.u32 %v5850, 7
    %v5852 = vsub.s32 %v5849, %v5851
    %v5853 = vrot.slane %v5846, %v5852
    %v5854 = vcombine.high %v5853, 0
    %v5857 = vpack.i.b16 %v5703, %v5678
    %v5858 = vshrl.u32 %v5678, 16
    %v5859 = vshrl.u32 %v5703, 16
    %v5860 = vpack.i.b16 %v5859, %v5858
    %v5863 = vpack.i.b16 %v5704, %v5679
    %v5864 = vshrl.u32 %v5679, 16
    %v5865 = vshrl.u32 %v5704, 16
    %v5866 = vpack.i.b16 %v5865, %v5864
    %v5869 = vpack.i.b16 %v5753, %v5728
    %v5870 = vshrl.u32 %v5728, 16
    %v5871 = vshrl.u32 %v5753, 16
    %v5872 = vpack.i.b16 %v5871, %v5870
    %v5875 = vpack.i.b16 %v5754, %v5729
    %v5876 = vshrl.u32 %v5729, 16
    %v5877 = vshrl.u32 %v5754, 16
    %v5878 = vpack.i.b16 %v5877, %v5876
    %v5881 = vpack.i.b16 %v5803, %v5778
    %v5882 = vshrl.u32 %v5778, 16
    %v5883 = vshrl.u32 %v5803, 16
    %v5884 = vpack.i.b16 %v5883, %v5882
    %v5887 = vpack.i.b16 %v5804, %v5779
    %v5888 = vshrl.u32 %v5779, 16
    %v5889 = vshrl.u32 %v5804, 16
    %v5890 = vpack.i.b16 %v5889, %v5888
    %v5893 = vpack.i.b16 %v5853, %v5828
    %v5894 = vshrl.u32 %v5828, 16
    %v5895 = vshrl.u32 %v5853, 16
    %v5896 = vpack.i.b16 %v5895, %v5894
    %v5899 = vpack.i.b16 %v5854, %v5829
    %v5900 = vshrl.u32 %v5829, 16
    %v5901 = vshrl.u32 %v5854, 16
    %v5902 = vpack.i.b16 %v5901, %v5900
    %5903 = vrot.lane.b32.xlu0 %v4783, 64
    %v5904 = vpop.permute.xlu0 %5903
    %5905 = vrot.lane.b32.xlu0 %v4784, 64
    %v5906 = vpop.permute.xlu0 %5905
    %5907 = vrot.lane.b32.xlu0 %v4788, 64
    %v5908 = vpop.permute.xlu0 %5907
    %5909 = vrot.lane.b32.xlu0 %v4790, 64
    %v5910 = vpop.permute.xlu0 %5909
    %5911 = vrot.lane.b32.xlu0 %v4792, 64
    %v5912 = vpop.permute.xlu0 %5911
    %5913 = vrot.lane.b32.xlu0 %v4794, 64
    %v5914 = vpop.permute.xlu0 %5913
    %5915 = vrot.lane.b32.xlu0 %v4796, 64
    %v5916 = vpop.permute.xlu0 %5915
    %5917 = vrot.lane.b32.xlu0 %v4798, 64
    %v5918 = vpop.permute.xlu0 %5917
    %v5921 = vpack.i.b16 %v5908, %v5904
    %v5923 = vshrl.u32 %v5904, 16
    %v5924 = vshrl.u32 %v5908, 16
    %v5925 = vpack.i.b16 %v5924, %v5923
    %v5929 = vpack.i.b16 %v5916, %v5912
    %v5931 = vshrl.u32 %v5912, 16
    %v5932 = vshrl.u32 %v5916, 16
    %v5933 = vpack.i.b16 %v5932, %v5931
    %v5937 = vpack.i.b16 %v5910, %v5906
    %v5939 = vshrl.u32 %v5906, 16
    %v5940 = vshrl.u32 %v5910, 16
    %v5941 = vpack.i.b16 %v5940, %v5939
    %v5945 = vpack.i.b16 %v5918, %v5914
    %v5947 = vshrl.u32 %v5914, 16
    %v5948 = vshrl.u32 %v5918, 16
    %v5949 = vpack.i.b16 %v5948, %v5947
    %v5951 = vcombine.high %v5921, %v332
    %v5953 = vunpack.c.l.s4 1983009808
    %v5954 = vunpack.c.0.s8 %v5953
    %v5955 = vlaneseq
    %v5956 = vshrl.u32 %v5955, 7
    %v5957 = vsub.s32 %v5954, %v5956
    %v5958 = vrot.slane %v5921, %v5957
    %v5960 = vunpack.c.l.s4 1983009808
    %v5961 = vunpack.c.0.s8 %v5960
    %v5962 = vlaneseq
    %v5963 = vshrl.u32 %v5962, 7
    %v5964 = vsub.s32 %v5961, %v5963
    %v5965 = vrot.slane %v5951, %v5964
    %v5966 = vcombine.high %v5929, %v332
    %v5968 = vunpack.c.l.s4 1983009808
    %v5969 = vunpack.c.0.s8 %v5968
    %v5970 = vlaneseq
    %v5971 = vshrl.u32 %v5970, 7
    %v5972 = vsub.s32 %v5969, %v5971
    %v5973 = vrot.slane %v5929, %v5972
    %v5975 = vunpack.c.l.s4 1983009808
    %v5976 = vunpack.c.0.s8 %v5975
    %v5977 = vlaneseq
    %v5978 = vshrl.u32 %v5977, 7
    %v5979 = vsub.s32 %v5976, %v5978
    %v5980 = vrot.slane %v5966, %v5979
    %v5981 = vcombine.low %v5958, %v5973
    %v5982 = vcombine.high %v5958, %v5973
    %v5984 = vunpack.c.l.s4 1934713408
    %v5985 = vunpack.c.0.s8 %v5984
    %v5986 = vlaneseq
    %v5987 = vshrl.u32 %v5986, 7
    %v5988 = vsub.s32 %v5985, %v5987
    %v5989 = vrot.slane %v5981, %v5988
    %v5991 = vunpack.c.l.s4 1934713408
    %v5992 = vunpack.c.0.s8 %v5991
    %v5993 = vlaneseq
    %v5994 = vshrl.u32 %v5993, 7
    %v5995 = vsub.s32 %v5992, %v5994
    %v5996 = vrot.slane %v5982, %v5995
    %v5997 = vcombine.low %v5965, %v5980
    %v5998 = vcombine.high %v5965, %v5980
    %v6000 = vunpack.c.l.s4 1934713408
    %v6001 = vunpack.c.0.s8 %v6000
    %v6002 = vlaneseq
    %v6003 = vshrl.u32 %v6002, 7
    %v6004 = vsub.s32 %v6001, %v6003
    %v6005 = vrot.slane %v5997, %v6004
    %v6007 = vunpack.c.l.s4 1934713408
    %v6008 = vunpack.c.0.s8 %v6007
    %v6009 = vlaneseq
    %v6010 = vshrl.u32 %v6009, 7
    %v6011 = vsub.s32 %v6008, %v6010
    %v6012 = vrot.slane %v5998, %v6011
    %v6013 = vcombine.high %v5989, 0
    %v6014 = vcombine.high %v5996, 0
    %v6015 = vcombine.high %v6005, 0
    %v6016 = vcombine.high %v6012, 0
    %v6017 = vcombine.high %v5925, %v335
    %v6019 = vunpack.c.l.s4 1983009808
    %v6020 = vunpack.c.0.s8 %v6019
    %v6021 = vlaneseq
    %v6022 = vshrl.u32 %v6021, 7
    %v6023 = vsub.s32 %v6020, %v6022
    %v6024 = vrot.slane %v5925, %v6023
    %v6026 = vunpack.c.l.s4 1983009808
    %v6027 = vunpack.c.0.s8 %v6026
    %v6028 = vlaneseq
    %v6029 = vshrl.u32 %v6028, 7
    %v6030 = vsub.s32 %v6027, %v6029
    %v6031 = vrot.slane %v6017, %v6030
    %v6032 = vcombine.high %v5933, %v335
    %v6034 = vunpack.c.l.s4 1983009808
    %v6035 = vunpack.c.0.s8 %v6034
    %v6036 = vlaneseq
    %v6037 = vshrl.u32 %v6036, 7
    %v6038 = vsub.s32 %v6035, %v6037
    %v6039 = vrot.slane %v5933, %v6038
    %v6041 = vunpack.c.l.s4 1983009808
    %v6042 = vunpack.c.0.s8 %v6041
    %v6043 = vlaneseq
    %v6044 = vshrl.u32 %v6043, 7
    %v6045 = vsub.s32 %v6042, %v6044
    %v6046 = vrot.slane %v6032, %v6045
    %v6047 = vcombine.low %v6024, %v6039
    %v6048 = vcombine.high %v6024, %v6039
    %v6050 = vunpack.c.l.s4 1934713408
    %v6051 = vunpack.c.0.s8 %v6050
    %v6052 = vlaneseq
    %v6053 = vshrl.u32 %v6052, 7
    %v6054 = vsub.s32 %v6051, %v6053
    %v6055 = vrot.slane %v6047, %v6054
    %v6057 = vunpack.c.l.s4 1934713408
    %v6058 = vunpack.c.0.s8 %v6057
    %v6059 = vlaneseq
    %v6060 = vshrl.u32 %v6059, 7
    %v6061 = vsub.s32 %v6058, %v6060
    %v6062 = vrot.slane %v6048, %v6061
    %v6063 = vcombine.low %v6031, %v6046
    %v6064 = vcombine.high %v6031, %v6046
    %v6066 = vunpack.c.l.s4 1934713408
    %v6067 = vunpack.c.0.s8 %v6066
    %v6068 = vlaneseq
    %v6069 = vshrl.u32 %v6068, 7
    %v6070 = vsub.s32 %v6067, %v6069
    %v6071 = vrot.slane %v6063, %v6070
    %v6073 = vunpack.c.l.s4 1934713408
    %v6074 = vunpack.c.0.s8 %v6073
    %v6075 = vlaneseq
    %v6076 = vshrl.u32 %v6075, 7
    %v6077 = vsub.s32 %v6074, %v6076
    %v6078 = vrot.slane %v6064, %v6077
    %v6079 = vcombine.high %v6055, 0
    %v6080 = vcombine.high %v6062, 0
    %v6081 = vcombine.high %v6071, 0
    %v6082 = vcombine.high %v6078, 0
    %v6083 = vcombine.high %v5937, %v332
    %v6085 = vunpack.c.l.s4 1983009808
    %v6086 = vunpack.c.0.s8 %v6085
    %v6087 = vlaneseq
    %v6088 = vshrl.u32 %v6087, 7
    %v6089 = vsub.s32 %v6086, %v6088
    %v6090 = vrot.slane %v5937, %v6089
    %v6092 = vunpack.c.l.s4 1983009808
    %v6093 = vunpack.c.0.s8 %v6092
    %v6094 = vlaneseq
    %v6095 = vshrl.u32 %v6094, 7
    %v6096 = vsub.s32 %v6093, %v6095
    %v6097 = vrot.slane %v6083, %v6096
    %v6098 = vcombine.high %v5945, %v332
    %v6100 = vunpack.c.l.s4 1983009808
    %v6101 = vunpack.c.0.s8 %v6100
    %v6102 = vlaneseq
    %v6103 = vshrl.u32 %v6102, 7
    %v6104 = vsub.s32 %v6101, %v6103
    %v6105 = vrot.slane %v5945, %v6104
    %v6107 = vunpack.c.l.s4 1983009808
    %v6108 = vunpack.c.0.s8 %v6107
    %v6109 = vlaneseq
    %v6110 = vshrl.u32 %v6109, 7
    %v6111 = vsub.s32 %v6108, %v6110
    %v6112 = vrot.slane %v6098, %v6111
    %v6113 = vcombine.low %v6090, %v6105
    %v6114 = vcombine.high %v6090, %v6105
    %v6116 = vunpack.c.l.s4 1934713408
    %v6117 = vunpack.c.0.s8 %v6116
    %v6118 = vlaneseq
    %v6119 = vshrl.u32 %v6118, 7
    %v6120 = vsub.s32 %v6117, %v6119
    %v6121 = vrot.slane %v6113, %v6120
    %v6123 = vunpack.c.l.s4 1934713408
    %v6124 = vunpack.c.0.s8 %v6123
    %v6125 = vlaneseq
    %v6126 = vshrl.u32 %v6125, 7
    %v6127 = vsub.s32 %v6124, %v6126
    %v6128 = vrot.slane %v6114, %v6127
    %v6129 = vcombine.low %v6097, %v6112
    %v6130 = vcombine.high %v6097, %v6112
    %v6132 = vunpack.c.l.s4 1934713408
    %v6133 = vunpack.c.0.s8 %v6132
    %v6134 = vlaneseq
    %v6135 = vshrl.u32 %v6134, 7
    %v6136 = vsub.s32 %v6133, %v6135
    %v6137 = vrot.slane %v6129, %v6136
    %v6139 = vunpack.c.l.s4 1934713408
    %v6140 = vunpack.c.0.s8 %v6139
    %v6141 = vlaneseq
    %v6142 = vshrl.u32 %v6141, 7
    %v6143 = vsub.s32 %v6140, %v6142
    %v6144 = vrot.slane %v6130, %v6143
    %v6145 = vcombine.high %v6121, 0
    %v6146 = vcombine.high %v6128, 0
    %v6147 = vcombine.high %v6137, 0
    %v6148 = vcombine.high %v6144, 0
    %v6149 = vcombine.high %v5941, %v335
    %v6151 = vunpack.c.l.s4 1983009808
    %v6152 = vunpack.c.0.s8 %v6151
    %v6153 = vlaneseq
    %v6154 = vshrl.u32 %v6153, 7
    %v6155 = vsub.s32 %v6152, %v6154
    %v6156 = vrot.slane %v5941, %v6155
    %v6158 = vunpack.c.l.s4 1983009808
    %v6159 = vunpack.c.0.s8 %v6158
    %v6160 = vlaneseq
    %v6161 = vshrl.u32 %v6160, 7
    %v6162 = vsub.s32 %v6159, %v6161
    %v6163 = vrot.slane %v6149, %v6162
    %v6164 = vcombine.high %v5949, %v335
    %v6166 = vunpack.c.l.s4 1983009808
    %v6167 = vunpack.c.0.s8 %v6166
    %v6168 = vlaneseq
    %v6169 = vshrl.u32 %v6168, 7
    %v6170 = vsub.s32 %v6167, %v6169
    %v6171 = vrot.slane %v5949, %v6170
    %v6173 = vunpack.c.l.s4 1983009808
    %v6174 = vunpack.c.0.s8 %v6173
    %v6175 = vlaneseq
    %v6176 = vshrl.u32 %v6175, 7
    %v6177 = vsub.s32 %v6174, %v6176
    %v6178 = vrot.slane %v6164, %v6177
    %v6179 = vcombine.low %v6156, %v6171
    %v6180 = vcombine.high %v6156, %v6171
    %v6182 = vunpack.c.l.s4 1934713408
    %v6183 = vunpack.c.0.s8 %v6182
    %v6184 = vlaneseq
    %v6185 = vshrl.u32 %v6184, 7
    %v6186 = vsub.s32 %v6183, %v6185
    %v6187 = vrot.slane %v6179, %v6186
    %v6189 = vunpack.c.l.s4 1934713408
    %v6190 = vunpack.c.0.s8 %v6189
    %v6191 = vlaneseq
    %v6192 = vshrl.u32 %v6191, 7
    %v6193 = vsub.s32 %v6190, %v6192
    %v6194 = vrot.slane %v6180, %v6193
    %v6195 = vcombine.low %v6163, %v6178
    %v6196 = vcombine.high %v6163, %v6178
    %v6198 = vunpack.c.l.s4 1934713408
    %v6199 = vunpack.c.0.s8 %v6198
    %v6200 = vlaneseq
    %v6201 = vshrl.u32 %v6200, 7
    %v6202 = vsub.s32 %v6199, %v6201
    %v6203 = vrot.slane %v6195, %v6202
    %v6205 = vunpack.c.l.s4 1934713408
    %v6206 = vunpack.c.0.s8 %v6205
    %v6207 = vlaneseq
    %v6208 = vshrl.u32 %v6207, 7
    %v6209 = vsub.s32 %v6206, %v6208
    %v6210 = vrot.slane %v6196, %v6209
    %v6211 = vcombine.high %v6187, 0
    %v6212 = vcombine.high %v6194, 0
    %v6213 = vcombine.high %v6203, 0
    %v6214 = vcombine.high %v6210, 0
    %v6215 = vcombine.low %v5989, %v5996
    %v6217 = vunpack.c.l.s4 1983009808
    %v6218 = vunpack.c.0.s8 %v6217
    %v6219 = vlaneseq
    %v6220 = vshrl.u32 %v6219, 7
    %v6221 = vsub.s32 %v6218, %v6220
    %v6222 = vrot.slane %v6215, %v6221
    %v6223 = vcombine.low %v6013, %v6014
    %v6225 = vunpack.c.l.s4 1983009808
    %v6226 = vunpack.c.0.s8 %v6225
    %v6227 = vlaneseq
    %v6228 = vshrl.u32 %v6227, 7
    %v6229 = vsub.s32 %v6226, %v6228
    %v6230 = vrot.slane %v6223, %v6229
    %v6231 = vcombine.low %v6222, %v6230
    %v6233 = vunpack.c.l.s4 1934713408
    %v6234 = vunpack.c.0.s8 %v6233
    %v6235 = vlaneseq
    %v6236 = vshrl.u32 %v6235, 7
    %v6237 = vsub.s32 %v6234, %v6236
    %v6238 = vrot.slane %v6231, %v6237
    %v6239 = vcombine.high %v6238, 0
    %v6240 = vcombine.low %v6055, %v6062
    %v6242 = vunpack.c.l.s4 1983009808
    %v6243 = vunpack.c.0.s8 %v6242
    %v6244 = vlaneseq
    %v6245 = vshrl.u32 %v6244, 7
    %v6246 = vsub.s32 %v6243, %v6245
    %v6247 = vrot.slane %v6240, %v6246
    %v6248 = vcombine.low %v6079, %v6080
    %v6250 = vunpack.c.l.s4 1983009808
    %v6251 = vunpack.c.0.s8 %v6250
    %v6252 = vlaneseq
    %v6253 = vshrl.u32 %v6252, 7
    %v6254 = vsub.s32 %v6251, %v6253
    %v6255 = vrot.slane %v6248, %v6254
    %v6256 = vcombine.low %v6247, %v6255
    %v6258 = vunpack.c.l.s4 1934713408
    %v6259 = vunpack.c.0.s8 %v6258
    %v6260 = vlaneseq
    %v6261 = vshrl.u32 %v6260, 7
    %v6262 = vsub.s32 %v6259, %v6261
    %v6263 = vrot.slane %v6256, %v6262
    %v6264 = vcombine.high %v6263, 0
    %v6265 = vcombine.low %v6005, %v6012
    %v6267 = vunpack.c.l.s4 1983009808
    %v6268 = vunpack.c.0.s8 %v6267
    %v6269 = vlaneseq
    %v6270 = vshrl.u32 %v6269, 7
    %v6271 = vsub.s32 %v6268, %v6270
    %v6272 = vrot.slane %v6265, %v6271
    %v6273 = vcombine.low %v6015, %v6016
    %v6275 = vunpack.c.l.s4 1983009808
    %v6276 = vunpack.c.0.s8 %v6275
    %v6277 = vlaneseq
    %v6278 = vshrl.u32 %v6277, 7
    %v6279 = vsub.s32 %v6276, %v6278
    %v6280 = vrot.slane %v6273, %v6279
    %v6281 = vcombine.low %v6272, %v6280
    %v6283 = vunpack.c.l.s4 1934713408
    %v6284 = vunpack.c.0.s8 %v6283
    %v6285 = vlaneseq
    %v6286 = vshrl.u32 %v6285, 7
    %v6287 = vsub.s32 %v6284, %v6286
    %v6288 = vrot.slane %v6281, %v6287
    %v6289 = vcombine.high %v6288, 0
    %v6290 = vcombine.low %v6071, %v6078
    %v6292 = vunpack.c.l.s4 1983009808
    %v6293 = vunpack.c.0.s8 %v6292
    %v6294 = vlaneseq
    %v6295 = vshrl.u32 %v6294, 7
    %v6296 = vsub.s32 %v6293, %v6295
    %v6297 = vrot.slane %v6290, %v6296
    %v6298 = vcombine.low %v6081, %v6082
    %v6300 = vunpack.c.l.s4 1983009808
    %v6301 = vunpack.c.0.s8 %v6300
    %v6302 = vlaneseq
    %v6303 = vshrl.u32 %v6302, 7
    %v6304 = vsub.s32 %v6301, %v6303
    %v6305 = vrot.slane %v6298, %v6304
    %v6306 = vcombine.low %v6297, %v6305
    %v6308 = vunpack.c.l.s4 1934713408
    %v6309 = vunpack.c.0.s8 %v6308
    %v6310 = vlaneseq
    %v6311 = vshrl.u32 %v6310, 7
    %v6312 = vsub.s32 %v6309, %v6311
    %v6313 = vrot.slane %v6306, %v6312
    %v6314 = vcombine.high %v6313, 0
    %v6315 = vcombine.low %v6121, %v6128
    %v6317 = vunpack.c.l.s4 1983009808
    %v6318 = vunpack.c.0.s8 %v6317
    %v6319 = vlaneseq
    %v6320 = vshrl.u32 %v6319, 7
    %v6321 = vsub.s32 %v6318, %v6320
    %v6322 = vrot.slane %v6315, %v6321
    %v6323 = vcombine.low %v6145, %v6146
    %v6325 = vunpack.c.l.s4 1983009808
    %v6326 = vunpack.c.0.s8 %v6325
    %v6327 = vlaneseq
    %v6328 = vshrl.u32 %v6327, 7
    %v6329 = vsub.s32 %v6326, %v6328
    %v6330 = vrot.slane %v6323, %v6329
    %v6331 = vcombine.low %v6322, %v6330
    %v6333 = vunpack.c.l.s4 1934713408
    %v6334 = vunpack.c.0.s8 %v6333
    %v6335 = vlaneseq
    %v6336 = vshrl.u32 %v6335, 7
    %v6337 = vsub.s32 %v6334, %v6336
    %v6338 = vrot.slane %v6331, %v6337
    %v6339 = vcombine.high %v6338, 0
    %v6340 = vcombine.low %v6187, %v6194
    %v6342 = vunpack.c.l.s4 1983009808
    %v6343 = vunpack.c.0.s8 %v6342
    %v6344 = vlaneseq
    %v6345 = vshrl.u32 %v6344, 7
    %v6346 = vsub.s32 %v6343, %v6345
    %v6347 = vrot.slane %v6340, %v6346
    %v6348 = vcombine.low %v6211, %v6212
    %v6350 = vunpack.c.l.s4 1983009808
    %v6351 = vunpack.c.0.s8 %v6350
    %v6352 = vlaneseq
    %v6353 = vshrl.u32 %v6352, 7
    %v6354 = vsub.s32 %v6351, %v6353
    %v6355 = vrot.slane %v6348, %v6354
    %v6356 = vcombine.low %v6347, %v6355
    %v6358 = vunpack.c.l.s4 1934713408
    %v6359 = vunpack.c.0.s8 %v6358
    %v6360 = vlaneseq
    %v6361 = vshrl.u32 %v6360, 7
    %v6362 = vsub.s32 %v6359, %v6361
    %v6363 = vrot.slane %v6356, %v6362
    %v6364 = vcombine.high %v6363, 0
    %v6365 = vcombine.low %v6137, %v6144
    %v6367 = vunpack.c.l.s4 1983009808
    %v6368 = vunpack.c.0.s8 %v6367
    %v6369 = vlaneseq
    %v6370 = vshrl.u32 %v6369, 7
    %v6371 = vsub.s32 %v6368, %v6370
    %v6372 = vrot.slane %v6365, %v6371
    %v6373 = vcombine.low %v6147, %v6148
    %v6375 = vunpack.c.l.s4 1983009808
    %v6376 = vunpack.c.0.s8 %v6375
    %v6377 = vlaneseq
    %v6378 = vshrl.u32 %v6377, 7
    %v6379 = vsub.s32 %v6376, %v6378
    %v6380 = vrot.slane %v6373, %v6379
    %v6381 = vcombine.low %v6372, %v6380
    %v6383 = vunpack.c.l.s4 1934713408
    %v6384 = vunpack.c.0.s8 %v6383
    %v6385 = vlaneseq
    %v6386 = vshrl.u32 %v6385, 7
    %v6387 = vsub.s32 %v6384, %v6386
    %v6388 = vrot.slane %v6381, %v6387
    %v6389 = vcombine.high %v6388, 0
    %v6390 = vcombine.low %v6203, %v6210
    %v6392 = vunpack.c.l.s4 1983009808
    %v6393 = vunpack.c.0.s8 %v6392
    %v6394 = vlaneseq
    %v6395 = vshrl.u32 %v6394, 7
    %v6396 = vsub.s32 %v6393, %v6395
    %v6397 = vrot.slane %v6390, %v6396
    %v6398 = vcombine.low %v6213, %v6214
    %v6400 = vunpack.c.l.s4 1983009808
    %v6401 = vunpack.c.0.s8 %v6400
    %v6402 = vlaneseq
    %v6403 = vshrl.u32 %v6402, 7
    %v6404 = vsub.s32 %v6401, %v6403
    %v6405 = vrot.slane %v6398, %v6404
    %v6406 = vcombine.low %v6397, %v6405
    %v6408 = vunpack.c.l.s4 1934713408
    %v6409 = vunpack.c.0.s8 %v6408
    %v6410 = vlaneseq
    %v6411 = vshrl.u32 %v6410, 7
    %v6412 = vsub.s32 %v6409, %v6411
    %v6413 = vrot.slane %v6406, %v6412
    %v6414 = vcombine.high %v6413, 0
    %v6417 = vpack.i.b16 %v6263, %v6238
    %v6418 = vshrl.u32 %v6238, 16
    %v6419 = vshrl.u32 %v6263, 16
    %v6420 = vpack.i.b16 %v6419, %v6418
    %v6423 = vpack.i.b16 %v6264, %v6239
    %v6424 = vshrl.u32 %v6239, 16
    %v6425 = vshrl.u32 %v6264, 16
    %v6426 = vpack.i.b16 %v6425, %v6424
    %v6429 = vpack.i.b16 %v6313, %v6288
    %v6430 = vshrl.u32 %v6288, 16
    %v6431 = vshrl.u32 %v6313, 16
    %v6432 = vpack.i.b16 %v6431, %v6430
    %v6435 = vpack.i.b16 %v6314, %v6289
    %v6436 = vshrl.u32 %v6289, 16
    %v6437 = vshrl.u32 %v6314, 16
    %v6438 = vpack.i.b16 %v6437, %v6436
    %v6441 = vpack.i.b16 %v6363, %v6338
    %v6442 = vshrl.u32 %v6338, 16
    %v6443 = vshrl.u32 %v6363, 16
    %v6444 = vpack.i.b16 %v6443, %v6442
    %v6447 = vpack.i.b16 %v6364, %v6339
    %v6448 = vshrl.u32 %v6339, 16
    %v6449 = vshrl.u32 %v6364, 16
    %v6450 = vpack.i.b16 %v6449, %v6448
    %v6453 = vpack.i.b16 %v6413, %v6388
    %v6454 = vshrl.u32 %v6388, 16
    %v6455 = vshrl.u32 %v6413, 16
    %v6456 = vpack.i.b16 %v6455, %v6454
    %v6459 = vpack.i.b16 %v6414, %v6389
    %v6460 = vshrl.u32 %v6389, 16
    %v6461 = vshrl.u32 %v6414, 16
    %v6462 = vpack.i.b16 %v6461, %v6460
    %v6464 = vsel %vm1985, %v5297, 0
    %v6467 = vsel %vm1985, %v5857, 0
    %6469 = vmatprep.subr.bf16.mxu0 0
    %6470 = vmatpush1.bf16.xpose.msra.mxu0 %v6467
    %6471 = vmatprep.subr.bf16.mxu0 0
    %6472 = vmatpush1.bf16.xpose.msra.mxu0 0
    %6473 = vmatprep.subr.bf16.mxu0 0
    %6474 = vmatpush1.bf16.xpose.msra.mxu0 0
    %6475 = vmatprep.subr.bf16.mxu0 0
    %6476 = vmatpush1.bf16.xpose.msra.mxu0 0
    %6477 = vmatprep.subr.bf16.mxu0 0
    %6478 = vmatpush1.bf16.xpose.msra.mxu0 0
    %6479 = vmatprep.subr.bf16.mxu0 0
    %6480 = vmatpush1.bf16.xpose.msra.mxu0 0
    %6481 = vmatprep.subr.bf16.mxu0 0
    %6482 = vmatpush1.bf16.xpose.msra.mxu0 0
    %6483 = vmatprep.subr.bf16.mxu0 0
    %6484 = vmatpush1.bf16.xpose.msra.mxu0 0
    %6485 = vmatprep.subr.bf16.mxu0 0
    %6486 = vmatpush1.bf16.xpose.msra.mxu0 0
    %6487 = vmatprep.subr.bf16.mxu0 0
    %6488 = vmatpush1.bf16.xpose.msra.mxu0 0
    %6489 = vmatprep.subr.bf16.mxu0 0
    %6490 = vmatpush1.bf16.xpose.msra.mxu0 0
    %6491 = vmatprep.subr.bf16.mxu0 0
    %6492 = vmatpush1.bf16.xpose.msra.mxu0 0
    %6493 = vmatprep.subr.bf16.mxu0 0
    %6494 = vmatpush1.bf16.xpose.msra.mxu0 0
    %6495 = vmatprep.subr.bf16.mxu0 0
    %6496 = vmatpush1.bf16.xpose.msra.mxu0 0
    %6497 = vmatprep.subr.bf16.mxu0 0
    %6498 = vmatpush1.bf16.xpose.msra.mxu0 0
    %6499 = vmatprep.subr.bf16.mxu0 0
    %6500 = vmatpush1.bf16.xpose.msra.mxu0 0
    %6501 = vmatprep.mubr.bf16.mxu0 0
    %6502 = vmatmul.mubr.bf16.gmra.mrb[0].mxu0 %v6464
    %v6503 = vpop.f32.mrb[0].mxu0
    %v6504 = vadd.f32 %v206, %v6503
    %v6505 = vpop.f32.mrb[0].mxu0
    %v6506 = vpop.f32.mrb[0].mxu0
    %v6507 = vpop.f32.mrb[0].mxu0
    %6508 = vdwg.mxu0
    %v6510 = vsel %vm1985, %v5300, 0
    %v6513 = vsel %vm1985, %v5860, 0
    %6515 = vmatprep.subr.bf16.mxu0 0
    %6516 = vmatpush1.bf16.xpose.msra.mxu0 %v6513
    %6517 = vmatprep.subr.bf16.mxu0 0
    %6518 = vmatpush1.bf16.xpose.msra.mxu0 0
    %6519 = vmatprep.subr.bf16.mxu0 0
    %6520 = vmatpush1.bf16.xpose.msra.mxu0 0
    %6521 = vmatprep.subr.bf16.mxu0 0
    %6522 = vmatpush1.bf16.xpose.msra.mxu0 0
    %6523 = vmatprep.subr.bf16.mxu0 0
    %6524 = vmatpush1.bf16.xpose.msra.mxu0 0
    %6525 = vmatprep.subr.bf16.mxu0 0
    %6526 = vmatpush1.bf16.xpose.msra.mxu0 0
    %6527 = vmatprep.subr.bf16.mxu0 0
    %6528 = vmatpush1.bf16.xpose.msra.mxu0 0
    %6529 = vmatprep.subr.bf16.mxu0 0
    %6530 = vmatpush1.bf16.xpose.msra.mxu0 0
    %6531 = vmatprep.subr.bf16.mxu0 0
    %6532 = vmatpush1.bf16.xpose.msra.mxu0 0
    %6533 = vmatprep.subr.bf16.mxu0 0
    %6534 = vmatpush1.bf16.xpose.msra.mxu0 0
    %6535 = vmatprep.subr.bf16.mxu0 0
    %6536 = vmatpush1.bf16.xpose.msra.mxu0 0
    %6537 = vmatprep.subr.bf16.mxu0 0
    %6538 = vmatpush1.bf16.xpose.msra.mxu0 0
    %6539 = vmatprep.subr.bf16.mxu0 0
    %6540 = vmatpush1.bf16.xpose.msra.mxu0 0
    %6541 = vmatprep.subr.bf16.mxu0 0
    %6542 = vmatpush1.bf16.xpose.msra.mxu0 0
    %6543 = vmatprep.subr.bf16.mxu0 0
    %6544 = vmatpush1.bf16.xpose.msra.mxu0 0
    %6545 = vmatprep.subr.bf16.mxu0 0
    %6546 = vmatpush1.bf16.xpose.msra.mxu0 0
    %6547 = vmatprep.mubr.bf16.mxu0 0
    %6548 = vmatmul.mubr.bf16.gmra.mrb[0].mxu0 %v6510
    %v6549 = vpop.f32.mrb[0].mxu0
    %v6550 = vadd.f32 %v206, %v6549
    %v6551 = vpop.f32.mrb[0].mxu0
    %v6552 = vpop.f32.mrb[0].mxu0
    %v6553 = vpop.f32.mrb[0].mxu0
    %6554 = vdwg.mxu0
    %v6556 = vsel %vm1985, %v5303, 0
    %v6559 = vsel %vm1985, %v5863, 0
    %6561 = vmatprep.subr.bf16.mxu0 0
    %6562 = vmatpush1.bf16.xpose.msra.mxu0 %v6559
    %6563 = vmatprep.subr.bf16.mxu0 0
    %6564 = vmatpush1.bf16.xpose.msra.mxu0 0
    %6565 = vmatprep.subr.bf16.mxu0 0
    %6566 = vmatpush1.bf16.xpose.msra.mxu0 0
    %6567 = vmatprep.subr.bf16.mxu0 0
    %6568 = vmatpush1.bf16.xpose.msra.mxu0 0
    %6569 = vmatprep.subr.bf16.mxu0 0
    %6570 = vmatpush1.bf16.xpose.msra.mxu0 0
    %6571 = vmatprep.subr.bf16.mxu0 0
    %6572 = vmatpush1.bf16.xpose.msra.mxu0 0
    %6573 = vmatprep.subr.bf16.mxu0 0
    %6574 = vmatpush1.bf16.xpose.msra.mxu0 0
    %6575 = vmatprep.subr.bf16.mxu0 0
    %6576 = vmatpush1.bf16.xpose.msra.mxu0 0
    %6577 = vmatprep.subr.bf16.mxu0 0
    %6578 = vmatpush1.bf16.xpose.msra.mxu0 0
    %6579 = vmatprep.subr.bf16.mxu0 0
    %6580 = vmatpush1.bf16.xpose.msra.mxu0 0
    %6581 = vmatprep.subr.bf16.mxu0 0
    %6582 = vmatpush1.bf16.xpose.msra.mxu0 0
    %6583 = vmatprep.subr.bf16.mxu0 0
    %6584 = vmatpush1.bf16.xpose.msra.mxu0 0
    %6585 = vmatprep.subr.bf16.mxu0 0
    %6586 = vmatpush1.bf16.xpose.msra.mxu0 0
    %6587 = vmatprep.subr.bf16.mxu0 0
    %6588 = vmatpush1.bf16.xpose.msra.mxu0 0
    %6589 = vmatprep.subr.bf16.mxu0 0
    %6590 = vmatpush1.bf16.xpose.msra.mxu0 0
    %6591 = vmatprep.subr.bf16.mxu0 0
    %6592 = vmatpush1.bf16.xpose.msra.mxu0 0
    %6593 = vmatprep.mubr.bf16.mxu0 0
    %6594 = vmatmul.mubr.bf16.gmra.mrb[0].mxu0 %v6556
    %v6595 = vpop.f32.mrb[0].mxu0
    %v6596 = vadd.f32 %v206, %v6595
    %v6597 = vpop.f32.mrb[0].mxu0
    %v6598 = vpop.f32.mrb[0].mxu0
    %v6599 = vpop.f32.mrb[0].mxu0
    %6600 = vdwg.mxu0
    %v6602 = vsel %vm1985, %v5306, 0
    %v6605 = vsel %vm1985, %v5866, 0
    %6607 = vmatprep.subr.bf16.mxu0 0
    %6608 = vmatpush1.bf16.xpose.msra.mxu0 %v6605
    %6609 = vmatprep.subr.bf16.mxu0 0
    %6610 = vmatpush1.bf16.xpose.msra.mxu0 0
    %6611 = vmatprep.subr.bf16.mxu0 0
    %6612 = vmatpush1.bf16.xpose.msra.mxu0 0
    %6613 = vmatprep.subr.bf16.mxu0 0
    %6614 = vmatpush1.bf16.xpose.msra.mxu0 0
    %6615 = vmatprep.subr.bf16.mxu0 0
    %6616 = vmatpush1.bf16.xpose.msra.mxu0 0
    %6617 = vmatprep.subr.bf16.mxu0 0
    %6618 = vmatpush1.bf16.xpose.msra.mxu0 0
    %6619 = vmatprep.subr.bf16.mxu0 0
    %6620 = vmatpush1.bf16.xpose.msra.mxu0 0
    %6621 = vmatprep.subr.bf16.mxu0 0
    %6622 = vmatpush1.bf16.xpose.msra.mxu0 0
    %6623 = vmatprep.subr.bf16.mxu0 0
    %6624 = vmatpush1.bf16.xpose.msra.mxu0 0
    %6625 = vmatprep.subr.bf16.mxu0 0
    %6626 = vmatpush1.bf16.xpose.msra.mxu0 0
    %6627 = vmatprep.subr.bf16.mxu0 0
    %6628 = vmatpush1.bf16.xpose.msra.mxu0 0
    %6629 = vmatprep.subr.bf16.mxu0 0
    %6630 = vmatpush1.bf16.xpose.msra.mxu0 0
    %6631 = vmatprep.subr.bf16.mxu0 0
    %6632 = vmatpush1.bf16.xpose.msra.mxu0 0
    %6633 = vmatprep.subr.bf16.mxu0 0
    %6634 = vmatpush1.bf16.xpose.msra.mxu0 0
    %6635 = vmatprep.subr.bf16.mxu0 0
    %6636 = vmatpush1.bf16.xpose.msra.mxu0 0
    %6637 = vmatprep.subr.bf16.mxu0 0
    %6638 = vmatpush1.bf16.xpose.msra.mxu0 0
    %6639 = vmatprep.mubr.bf16.mxu0 0
    %6640 = vmatmul.mubr.bf16.gmra.mrb[0].mxu0 %v6602
    %v6641 = vpop.f32.mrb[0].mxu0
    %v6642 = vadd.f32 %v206, %v6641
    %v6643 = vpop.f32.mrb[0].mxu0
    %v6644 = vpop.f32.mrb[0].mxu0
    %v6645 = vpop.f32.mrb[0].mxu0
    %6646 = vdwg.mxu0
    %v6648 = vsel %vm1985, %v5309, 0
    %v6651 = vsel %vm1985, %v5869, 0
    %6653 = vmatprep.subr.bf16.mxu0 0
    %6654 = vmatpush1.bf16.xpose.msra.mxu0 %v6651
    %6655 = vmatprep.subr.bf16.mxu0 0
    %6656 = vmatpush1.bf16.xpose.msra.mxu0 0
    %6657 = vmatprep.subr.bf16.mxu0 0
    %6658 = vmatpush1.bf16.xpose.msra.mxu0 0
    %6659 = vmatprep.subr.bf16.mxu0 0
    %6660 = vmatpush1.bf16.xpose.msra.mxu0 0
    %6661 = vmatprep.subr.bf16.mxu0 0
    %6662 = vmatpush1.bf16.xpose.msra.mxu0 0
    %6663 = vmatprep.subr.bf16.mxu0 0
    %6664 = vmatpush1.bf16.xpose.msra.mxu0 0
    %6665 = vmatprep.subr.bf16.mxu0 0
    %6666 = vmatpush1.bf16.xpose.msra.mxu0 0
    %6667 = vmatprep.subr.bf16.mxu0 0
    %6668 = vmatpush1.bf16.xpose.msra.mxu0 0
    %6669 = vmatprep.subr.bf16.mxu0 0
    %6670 = vmatpush1.bf16.xpose.msra.mxu0 0
    %6671 = vmatprep.subr.bf16.mxu0 0
    %6672 = vmatpush1.bf16.xpose.msra.mxu0 0
    %6673 = vmatprep.subr.bf16.mxu0 0
    %6674 = vmatpush1.bf16.xpose.msra.mxu0 0
    %6675 = vmatprep.subr.bf16.mxu0 0
    %6676 = vmatpush1.bf16.xpose.msra.mxu0 0
    %6677 = vmatprep.subr.bf16.mxu0 0
    %6678 = vmatpush1.bf16.xpose.msra.mxu0 0
    %6679 = vmatprep.subr.bf16.mxu0 0
    %6680 = vmatpush1.bf16.xpose.msra.mxu0 0
    %6681 = vmatprep.subr.bf16.mxu0 0
    %6682 = vmatpush1.bf16.xpose.msra.mxu0 0
    %6683 = vmatprep.subr.bf16.mxu0 0
    %6684 = vmatpush1.bf16.xpose.msra.mxu0 0
    %6685 = vmatprep.mubr.bf16.mxu0 0
    %6686 = vmatmul.mubr.bf16.gmra.mrb[0].mxu0 %v6648
    %v6687 = vpop.f32.mrb[0].mxu0
    %v6688 = vadd.f32 %v210, %v6687
    %v6689 = vpop.f32.mrb[0].mxu0
    %v6690 = vpop.f32.mrb[0].mxu0
    %v6691 = vpop.f32.mrb[0].mxu0
    %6692 = vdwg.mxu0
    %v6694 = vsel %vm1985, %v5312, 0
    %v6697 = vsel %vm1985, %v5872, 0
    %6699 = vmatprep.subr.bf16.mxu0 0
    %6700 = vmatpush1.bf16.xpose.msra.mxu0 %v6697
    %6701 = vmatprep.subr.bf16.mxu0 0
    %6702 = vmatpush1.bf16.xpose.msra.mxu0 0
    %6703 = vmatprep.subr.bf16.mxu0 0
    %6704 = vmatpush1.bf16.xpose.msra.mxu0 0
    %6705 = vmatprep.subr.bf16.mxu0 0
    %6706 = vmatpush1.bf16.xpose.msra.mxu0 0
    %6707 = vmatprep.subr.bf16.mxu0 0
    %6708 = vmatpush1.bf16.xpose.msra.mxu0 0
    %6709 = vmatprep.subr.bf16.mxu0 0
    %6710 = vmatpush1.bf16.xpose.msra.mxu0 0
    %6711 = vmatprep.subr.bf16.mxu0 0
    %6712 = vmatpush1.bf16.xpose.msra.mxu0 0
    %6713 = vmatprep.subr.bf16.mxu0 0
    %6714 = vmatpush1.bf16.xpose.msra.mxu0 0
    %6715 = vmatprep.subr.bf16.mxu0 0
    %6716 = vmatpush1.bf16.xpose.msra.mxu0 0
    %6717 = vmatprep.subr.bf16.mxu0 0
    %6718 = vmatpush1.bf16.xpose.msra.mxu0 0
    %6719 = vmatprep.subr.bf16.mxu0 0
    %6720 = vmatpush1.bf16.xpose.msra.mxu0 0
    %6721 = vmatprep.subr.bf16.mxu0 0
    %6722 = vmatpush1.bf16.xpose.msra.mxu0 0
    %6723 = vmatprep.subr.bf16.mxu0 0
    %6724 = vmatpush1.bf16.xpose.msra.mxu0 0
    %6725 = vmatprep.subr.bf16.mxu0 0
    %6726 = vmatpush1.bf16.xpose.msra.mxu0 0
    %6727 = vmatprep.subr.bf16.mxu0 0
    %6728 = vmatpush1.bf16.xpose.msra.mxu0 0
    %6729 = vmatprep.subr.bf16.mxu0 0
    %6730 = vmatpush1.bf16.xpose.msra.mxu0 0
    %6731 = vmatprep.mubr.bf16.mxu0 0
    %6732 = vmatmul.mubr.bf16.gmra.mrb[0].mxu0 %v6694
    %v6733 = vpop.f32.mrb[0].mxu0
    %v6734 = vadd.f32 %v210, %v6733
    %v6735 = vpop.f32.mrb[0].mxu0
    %v6736 = vpop.f32.mrb[0].mxu0
    %v6737 = vpop.f32.mrb[0].mxu0
    %6738 = vdwg.mxu0
    %v6740 = vsel %vm1985, %v5315, 0
    %v6743 = vsel %vm1985, %v5875, 0
    %6745 = vmatprep.subr.bf16.mxu0 0
    %6746 = vmatpush1.bf16.xpose.msra.mxu0 %v6743
    %6747 = vmatprep.subr.bf16.mxu0 0
    %6748 = vmatpush1.bf16.xpose.msra.mxu0 0
    %6749 = vmatprep.subr.bf16.mxu0 0
    %6750 = vmatpush1.bf16.xpose.msra.mxu0 0
    %6751 = vmatprep.subr.bf16.mxu0 0
    %6752 = vmatpush1.bf16.xpose.msra.mxu0 0
    %6753 = vmatprep.subr.bf16.mxu0 0
    %6754 = vmatpush1.bf16.xpose.msra.mxu0 0
    %6755 = vmatprep.subr.bf16.mxu0 0
    %6756 = vmatpush1.bf16.xpose.msra.mxu0 0
    %6757 = vmatprep.subr.bf16.mxu0 0
    %6758 = vmatpush1.bf16.xpose.msra.mxu0 0
    %6759 = vmatprep.subr.bf16.mxu0 0
    %6760 = vmatpush1.bf16.xpose.msra.mxu0 0
    %6761 = vmatprep.subr.bf16.mxu0 0
    %6762 = vmatpush1.bf16.xpose.msra.mxu0 0
    %6763 = vmatprep.subr.bf16.mxu0 0
    %6764 = vmatpush1.bf16.xpose.msra.mxu0 0
    %6765 = vmatprep.subr.bf16.mxu0 0
    %6766 = vmatpush1.bf16.xpose.msra.mxu0 0
    %6767 = vmatprep.subr.bf16.mxu0 0
    %6768 = vmatpush1.bf16.xpose.msra.mxu0 0
    %6769 = vmatprep.subr.bf16.mxu0 0
    %6770 = vmatpush1.bf16.xpose.msra.mxu0 0
    %6771 = vmatprep.subr.bf16.mxu0 0
    %6772 = vmatpush1.bf16.xpose.msra.mxu0 0
    %6773 = vmatprep.subr.bf16.mxu0 0
    %6774 = vmatpush1.bf16.xpose.msra.mxu0 0
    %6775 = vmatprep.subr.bf16.mxu0 0
    %6776 = vmatpush1.bf16.xpose.msra.mxu0 0
    %6777 = vmatprep.mubr.bf16.mxu0 0
    %6778 = vmatmul.mubr.bf16.gmra.mrb[0].mxu0 %v6740
    %v6779 = vpop.f32.mrb[0].mxu0
    %v6780 = vadd.f32 %v210, %v6779
    %v6781 = vpop.f32.mrb[0].mxu0
    %v6782 = vpop.f32.mrb[0].mxu0
    %v6783 = vpop.f32.mrb[0].mxu0
    %6784 = vdwg.mxu0
    %v6786 = vsel %vm1985, %v5318, 0
    %v6789 = vsel %vm1985, %v5878, 0
    %6791 = vmatprep.subr.bf16.mxu0 0
    %6792 = vmatpush1.bf16.xpose.msra.mxu0 %v6789
    %6793 = vmatprep.subr.bf16.mxu0 0
    %6794 = vmatpush1.bf16.xpose.msra.mxu0 0
    %6795 = vmatprep.subr.bf16.mxu0 0
    %6796 = vmatpush1.bf16.xpose.msra.mxu0 0
    %6797 = vmatprep.subr.bf16.mxu0 0
    %6798 = vmatpush1.bf16.xpose.msra.mxu0 0
    %6799 = vmatprep.subr.bf16.mxu0 0
    %6800 = vmatpush1.bf16.xpose.msra.mxu0 0
    %6801 = vmatprep.subr.bf16.mxu0 0
    %6802 = vmatpush1.bf16.xpose.msra.mxu0 0
    %6803 = vmatprep.subr.bf16.mxu0 0
    %6804 = vmatpush1.bf16.xpose.msra.mxu0 0
    %6805 = vmatprep.subr.bf16.mxu0 0
    %6806 = vmatpush1.bf16.xpose.msra.mxu0 0
    %6807 = vmatprep.subr.bf16.mxu0 0
    %6808 = vmatpush1.bf16.xpose.msra.mxu0 0
    %6809 = vmatprep.subr.bf16.mxu0 0
    %6810 = vmatpush1.bf16.xpose.msra.mxu0 0
    %6811 = vmatprep.subr.bf16.mxu0 0
    %6812 = vmatpush1.bf16.xpose.msra.mxu0 0
    %6813 = vmatprep.subr.bf16.mxu0 0
    %6814 = vmatpush1.bf16.xpose.msra.mxu0 0
    %6815 = vmatprep.subr.bf16.mxu0 0
    %6816 = vmatpush1.bf16.xpose.msra.mxu0 0
    %6817 = vmatprep.subr.bf16.mxu0 0
    %6818 = vmatpush1.bf16.xpose.msra.mxu0 0
    %6819 = vmatprep.subr.bf16.mxu0 0
    %6820 = vmatpush1.bf16.xpose.msra.mxu0 0
    %6821 = vmatprep.subr.bf16.mxu0 0
    %6822 = vmatpush1.bf16.xpose.msra.mxu0 0
    %6823 = vmatprep.mubr.bf16.mxu0 0
    %6824 = vmatmul.mubr.bf16.gmra.mrb[0].mxu0 %v6786
    %v6825 = vpop.f32.mrb[0].mxu0
    %v6826 = vadd.f32 %v210, %v6825
    %v6827 = vpop.f32.mrb[0].mxu0
    %v6828 = vpop.f32.mrb[0].mxu0
    %v6829 = vpop.f32.mrb[0].mxu0
    %6830 = vdwg.mxu0
    %v6832 = vsel %vm1985, %v5321, 0
    %v6835 = vsel %vm1985, %v5881, 0
    %6837 = vmatprep.subr.bf16.mxu0 0
    %6838 = vmatpush1.bf16.xpose.msra.mxu0 %v6835
    %6839 = vmatprep.subr.bf16.mxu0 0
    %6840 = vmatpush1.bf16.xpose.msra.mxu0 0
    %6841 = vmatprep.subr.bf16.mxu0 0
    %6842 = vmatpush1.bf16.xpose.msra.mxu0 0
    %6843 = vmatprep.subr.bf16.mxu0 0
    %6844 = vmatpush1.bf16.xpose.msra.mxu0 0
    %6845 = vmatprep.subr.bf16.mxu0 0
    %6846 = vmatpush1.bf16.xpose.msra.mxu0 0
    %6847 = vmatprep.subr.bf16.mxu0 0
    %6848 = vmatpush1.bf16.xpose.msra.mxu0 0
    %6849 = vmatprep.subr.bf16.mxu0 0
    %6850 = vmatpush1.bf16.xpose.msra.mxu0 0
    %6851 = vmatprep.subr.bf16.mxu0 0
    %6852 = vmatpush1.bf16.xpose.msra.mxu0 0
    %6853 = vmatprep.subr.bf16.mxu0 0
    %6854 = vmatpush1.bf16.xpose.msra.mxu0 0
    %6855 = vmatprep.subr.bf16.mxu0 0
    %6856 = vmatpush1.bf16.xpose.msra.mxu0 0
    %6857 = vmatprep.subr.bf16.mxu0 0
    %6858 = vmatpush1.bf16.xpose.msra.mxu0 0
    %6859 = vmatprep.subr.bf16.mxu0 0
    %6860 = vmatpush1.bf16.xpose.msra.mxu0 0
    %6861 = vmatprep.subr.bf16.mxu0 0
    %6862 = vmatpush1.bf16.xpose.msra.mxu0 0
    %6863 = vmatprep.subr.bf16.mxu0 0
    %6864 = vmatpush1.bf16.xpose.msra.mxu0 0
    %6865 = vmatprep.subr.bf16.mxu0 0
    %6866 = vmatpush1.bf16.xpose.msra.mxu0 0
    %6867 = vmatprep.subr.bf16.mxu0 0
    %6868 = vmatpush1.bf16.xpose.msra.mxu0 0
    %6869 = vmatprep.mubr.bf16.mxu0 0
    %6870 = vmatmul.mubr.bf16.gmra.mrb[0].mxu0 %v6832
    %v6871 = vpop.f32.mrb[0].mxu0
    %v6872 = vadd.f32 %v214, %v6871
    %v6873 = vpop.f32.mrb[0].mxu0
    %v6874 = vpop.f32.mrb[0].mxu0
    %v6875 = vpop.f32.mrb[0].mxu0
    %6876 = vdwg.mxu0
    %v6878 = vsel %vm1985, %v5324, 0
    %v6881 = vsel %vm1985, %v5884, 0
    %6883 = vmatprep.subr.bf16.mxu0 0
    %6884 = vmatpush1.bf16.xpose.msra.mxu0 %v6881
    %6885 = vmatprep.subr.bf16.mxu0 0
    %6886 = vmatpush1.bf16.xpose.msra.mxu0 0
    %6887 = vmatprep.subr.bf16.mxu0 0
    %6888 = vmatpush1.bf16.xpose.msra.mxu0 0
    %6889 = vmatprep.subr.bf16.mxu0 0
    %6890 = vmatpush1.bf16.xpose.msra.mxu0 0
    %6891 = vmatprep.subr.bf16.mxu0 0
    %6892 = vmatpush1.bf16.xpose.msra.mxu0 0
    %6893 = vmatprep.subr.bf16.mxu0 0
    %6894 = vmatpush1.bf16.xpose.msra.mxu0 0
    %6895 = vmatprep.subr.bf16.mxu0 0
    %6896 = vmatpush1.bf16.xpose.msra.mxu0 0
    %6897 = vmatprep.subr.bf16.mxu0 0
    %6898 = vmatpush1.bf16.xpose.msra.mxu0 0
    %6899 = vmatprep.subr.bf16.mxu0 0
    %6900 = vmatpush1.bf16.xpose.msra.mxu0 0
    %6901 = vmatprep.subr.bf16.mxu0 0
    %6902 = vmatpush1.bf16.xpose.msra.mxu0 0
    %6903 = vmatprep.subr.bf16.mxu0 0
    %6904 = vmatpush1.bf16.xpose.msra.mxu0 0
    %6905 = vmatprep.subr.bf16.mxu0 0
    %6906 = vmatpush1.bf16.xpose.msra.mxu0 0
    %6907 = vmatprep.subr.bf16.mxu0 0
    %6908 = vmatpush1.bf16.xpose.msra.mxu0 0
    %6909 = vmatprep.subr.bf16.mxu0 0
    %6910 = vmatpush1.bf16.xpose.msra.mxu0 0
    %6911 = vmatprep.subr.bf16.mxu0 0
    %6912 = vmatpush1.bf16.xpose.msra.mxu0 0
    %6913 = vmatprep.subr.bf16.mxu0 0
    %6914 = vmatpush1.bf16.xpose.msra.mxu0 0
    %6915 = vmatprep.mubr.bf16.mxu0 0
    %6916 = vmatmul.mubr.bf16.gmra.mrb[0].mxu0 %v6878
    %v6917 = vpop.f32.mrb[0].mxu0
    %v6918 = vadd.f32 %v214, %v6917
    %v6919 = vpop.f32.mrb[0].mxu0
    %v6920 = vpop.f32.mrb[0].mxu0
    %v6921 = vpop.f32.mrb[0].mxu0
    %6922 = vdwg.mxu0
    %v6924 = vsel %vm1985, %v5327, 0
    %v6927 = vsel %vm1985, %v5887, 0
    %6929 = vmatprep.subr.bf16.mxu0 0
    %6930 = vmatpush1.bf16.xpose.msra.mxu0 %v6927
    %6931 = vmatprep.subr.bf16.mxu0 0
    %6932 = vmatpush1.bf16.xpose.msra.mxu0 0
    %6933 = vmatprep.subr.bf16.mxu0 0
    %6934 = vmatpush1.bf16.xpose.msra.mxu0 0
    %6935 = vmatprep.subr.bf16.mxu0 0
    %6936 = vmatpush1.bf16.xpose.msra.mxu0 0
    %6937 = vmatprep.subr.bf16.mxu0 0
    %6938 = vmatpush1.bf16.xpose.msra.mxu0 0
    %6939 = vmatprep.subr.bf16.mxu0 0
    %6940 = vmatpush1.bf16.xpose.msra.mxu0 0
    %6941 = vmatprep.subr.bf16.mxu0 0
    %6942 = vmatpush1.bf16.xpose.msra.mxu0 0
    %6943 = vmatprep.subr.bf16.mxu0 0
    %6944 = vmatpush1.bf16.xpose.msra.mxu0 0
    %6945 = vmatprep.subr.bf16.mxu0 0
    %6946 = vmatpush1.bf16.xpose.msra.mxu0 0
    %6947 = vmatprep.subr.bf16.mxu0 0
    %6948 = vmatpush1.bf16.xpose.msra.mxu0 0
    %6949 = vmatprep.subr.bf16.mxu0 0
    %6950 = vmatpush1.bf16.xpose.msra.mxu0 0
    %6951 = vmatprep.subr.bf16.mxu0 0
    %6952 = vmatpush1.bf16.xpose.msra.mxu0 0
    %6953 = vmatprep.subr.bf16.mxu0 0
    %6954 = vmatpush1.bf16.xpose.msra.mxu0 0
    %6955 = vmatprep.subr.bf16.mxu0 0
    %6956 = vmatpush1.bf16.xpose.msra.mxu0 0
    %6957 = vmatprep.subr.bf16.mxu0 0
    %6958 = vmatpush1.bf16.xpose.msra.mxu0 0
    %6959 = vmatprep.subr.bf16.mxu0 0
    %6960 = vmatpush1.bf16.xpose.msra.mxu0 0
    %6961 = vmatprep.mubr.bf16.mxu0 0
    %6962 = vmatmul.mubr.bf16.gmra.mrb[0].mxu0 %v6924
    %v6963 = vpop.f32.mrb[0].mxu0
    %v6964 = vadd.f32 %v214, %v6963
    %v6965 = vpop.f32.mrb[0].mxu0
    %v6966 = vpop.f32.mrb[0].mxu0
    %v6967 = vpop.f32.mrb[0].mxu0
    %6968 = vdwg.mxu0
    %v6970 = vsel %vm1985, %v5330, 0
    %v6973 = vsel %vm1985, %v5890, 0
    %6975 = vmatprep.subr.bf16.mxu0 0
    %6976 = vmatpush1.bf16.xpose.msra.mxu0 %v6973
    %6977 = vmatprep.subr.bf16.mxu0 0
    %6978 = vmatpush1.bf16.xpose.msra.mxu0 0
    %6979 = vmatprep.subr.bf16.mxu0 0
    %6980 = vmatpush1.bf16.xpose.msra.mxu0 0
    %6981 = vmatprep.subr.bf16.mxu0 0
    %6982 = vmatpush1.bf16.xpose.msra.mxu0 0
    %6983 = vmatprep.subr.bf16.mxu0 0
    %6984 = vmatpush1.bf16.xpose.msra.mxu0 0
    %6985 = vmatprep.subr.bf16.mxu0 0
    %6986 = vmatpush1.bf16.xpose.msra.mxu0 0
    %6987 = vmatprep.subr.bf16.mxu0 0
    %6988 = vmatpush1.bf16.xpose.msra.mxu0 0
    %6989 = vmatprep.subr.bf16.mxu0 0
    %6990 = vmatpush1.bf16.xpose.msra.mxu0 0
    %6991 = vmatprep.subr.bf16.mxu0 0
    %6992 = vmatpush1.bf16.xpose.msra.mxu0 0
    %6993 = vmatprep.subr.bf16.mxu0 0
    %6994 = vmatpush1.bf16.xpose.msra.mxu0 0
    %6995 = vmatprep.subr.bf16.mxu0 0
    %6996 = vmatpush1.bf16.xpose.msra.mxu0 0
    %6997 = vmatprep.subr.bf16.mxu0 0
    %6998 = vmatpush1.bf16.xpose.msra.mxu0 0
    %6999 = vmatprep.subr.bf16.mxu0 0
    %7000 = vmatpush1.bf16.xpose.msra.mxu0 0
    %7001 = vmatprep.subr.bf16.mxu0 0
    %7002 = vmatpush1.bf16.xpose.msra.mxu0 0
    %7003 = vmatprep.subr.bf16.mxu0 0
    %7004 = vmatpush1.bf16.xpose.msra.mxu0 0
    %7005 = vmatprep.subr.bf16.mxu0 0
    %7006 = vmatpush1.bf16.xpose.msra.mxu0 0
    %7007 = vmatprep.mubr.bf16.mxu0 0
    %7008 = vmatmul.mubr.bf16.gmra.mrb[0].mxu0 %v6970
    %v7009 = vpop.f32.mrb[0].mxu0
    %v7010 = vadd.f32 %v214, %v7009
    %v7011 = vpop.f32.mrb[0].mxu0
    %v7012 = vpop.f32.mrb[0].mxu0
    %v7013 = vpop.f32.mrb[0].mxu0
    %7014 = vdwg.mxu0
    %v7016 = vsel %vm1985, %v5333, 0
    %v7019 = vsel %vm1985, %v5893, 0
    %7021 = vmatprep.subr.bf16.mxu0 0
    %7022 = vmatpush1.bf16.xpose.msra.mxu0 %v7019
    %7023 = vmatprep.subr.bf16.mxu0 0
    %7024 = vmatpush1.bf16.xpose.msra.mxu0 0
    %7025 = vmatprep.subr.bf16.mxu0 0
    %7026 = vmatpush1.bf16.xpose.msra.mxu0 0
    %7027 = vmatprep.subr.bf16.mxu0 0
    %7028 = vmatpush1.bf16.xpose.msra.mxu0 0
    %7029 = vmatprep.subr.bf16.mxu0 0
    %7030 = vmatpush1.bf16.xpose.msra.mxu0 0
    %7031 = vmatprep.subr.bf16.mxu0 0
    %7032 = vmatpush1.bf16.xpose.msra.mxu0 0
    %7033 = vmatprep.subr.bf16.mxu0 0
    %7034 = vmatpush1.bf16.xpose.msra.mxu0 0
    %7035 = vmatprep.subr.bf16.mxu0 0
    %7036 = vmatpush1.bf16.xpose.msra.mxu0 0
    %7037 = vmatprep.subr.bf16.mxu0 0
    %7038 = vmatpush1.bf16.xpose.msra.mxu0 0
    %7039 = vmatprep.subr.bf16.mxu0 0
    %7040 = vmatpush1.bf16.xpose.msra.mxu0 0
    %7041 = vmatprep.subr.bf16.mxu0 0
    %7042 = vmatpush1.bf16.xpose.msra.mxu0 0
    %7043 = vmatprep.subr.bf16.mxu0 0
    %7044 = vmatpush1.bf16.xpose.msra.mxu0 0
    %7045 = vmatprep.subr.bf16.mxu0 0
    %7046 = vmatpush1.bf16.xpose.msra.mxu0 0
    %7047 = vmatprep.subr.bf16.mxu0 0
    %7048 = vmatpush1.bf16.xpose.msra.mxu0 0
    %7049 = vmatprep.subr.bf16.mxu0 0
    %7050 = vmatpush1.bf16.xpose.msra.mxu0 0
    %7051 = vmatprep.subr.bf16.mxu0 0
    %7052 = vmatpush1.bf16.xpose.msra.mxu0 0
    %7053 = vmatprep.mubr.bf16.mxu0 0
    %7054 = vmatmul.mubr.bf16.gmra.mrb[0].mxu0 %v7016
    %v7055 = vpop.f32.mrb[0].mxu0
    %v7056 = vadd.f32 %v218, %v7055
    %v7057 = vpop.f32.mrb[0].mxu0
    %v7058 = vpop.f32.mrb[0].mxu0
    %v7059 = vpop.f32.mrb[0].mxu0
    %7060 = vdwg.mxu0
    %v7062 = vsel %vm1985, %v5336, 0
    %v7065 = vsel %vm1985, %v5896, 0
    %7067 = vmatprep.subr.bf16.mxu0 0
    %7068 = vmatpush1.bf16.xpose.msra.mxu0 %v7065
    %7069 = vmatprep.subr.bf16.mxu0 0
    %7070 = vmatpush1.bf16.xpose.msra.mxu0 0
    %7071 = vmatprep.subr.bf16.mxu0 0
    %7072 = vmatpush1.bf16.xpose.msra.mxu0 0
    %7073 = vmatprep.subr.bf16.mxu0 0
    %7074 = vmatpush1.bf16.xpose.msra.mxu0 0
    %7075 = vmatprep.subr.bf16.mxu0 0
    %7076 = vmatpush1.bf16.xpose.msra.mxu0 0
    %7077 = vmatprep.subr.bf16.mxu0 0
    %7078 = vmatpush1.bf16.xpose.msra.mxu0 0
    %7079 = vmatprep.subr.bf16.mxu0 0
    %7080 = vmatpush1.bf16.xpose.msra.mxu0 0
    %7081 = vmatprep.subr.bf16.mxu0 0
    %7082 = vmatpush1.bf16.xpose.msra.mxu0 0
    %7083 = vmatprep.subr.bf16.mxu0 0
    %7084 = vmatpush1.bf16.xpose.msra.mxu0 0
    %7085 = vmatprep.subr.bf16.mxu0 0
    %7086 = vmatpush1.bf16.xpose.msra.mxu0 0
    %7087 = vmatprep.subr.bf16.mxu0 0
    %7088 = vmatpush1.bf16.xpose.msra.mxu0 0
    %7089 = vmatprep.subr.bf16.mxu0 0
    %7090 = vmatpush1.bf16.xpose.msra.mxu0 0
    %7091 = vmatprep.subr.bf16.mxu0 0
    %7092 = vmatpush1.bf16.xpose.msra.mxu0 0
    %7093 = vmatprep.subr.bf16.mxu0 0
    %7094 = vmatpush1.bf16.xpose.msra.mxu0 0
    %7095 = vmatprep.subr.bf16.mxu0 0
    %7096 = vmatpush1.bf16.xpose.msra.mxu0 0
    %7097 = vmatprep.subr.bf16.mxu0 0
    %7098 = vmatpush1.bf16.xpose.msra.mxu0 0
    %7099 = vmatprep.mubr.bf16.mxu0 0
    %7100 = vmatmul.mubr.bf16.gmra.mrb[0].mxu0 %v7062
    %v7101 = vpop.f32.mrb[0].mxu0
    %v7102 = vadd.f32 %v218, %v7101
    %v7103 = vpop.f32.mrb[0].mxu0
    %v7104 = vpop.f32.mrb[0].mxu0
    %v7105 = vpop.f32.mrb[0].mxu0
    %7106 = vdwg.mxu0
    %v7108 = vsel %vm1985, %v5339, 0
    %v7111 = vsel %vm1985, %v5899, 0
    %7113 = vmatprep.subr.bf16.mxu0 0
    %7114 = vmatpush1.bf16.xpose.msra.mxu0 %v7111
    %7115 = vmatprep.subr.bf16.mxu0 0
    %7116 = vmatpush1.bf16.xpose.msra.mxu0 0
    %7117 = vmatprep.subr.bf16.mxu0 0
    %7118 = vmatpush1.bf16.xpose.msra.mxu0 0
    %7119 = vmatprep.subr.bf16.mxu0 0
    %7120 = vmatpush1.bf16.xpose.msra.mxu0 0
    %7121 = vmatprep.subr.bf16.mxu0 0
    %7122 = vmatpush1.bf16.xpose.msra.mxu0 0
    %7123 = vmatprep.subr.bf16.mxu0 0
    %7124 = vmatpush1.bf16.xpose.msra.mxu0 0
    %7125 = vmatprep.subr.bf16.mxu0 0
    %7126 = vmatpush1.bf16.xpose.msra.mxu0 0
    %7127 = vmatprep.subr.bf16.mxu0 0
    %7128 = vmatpush1.bf16.xpose.msra.mxu0 0
    %7129 = vmatprep.subr.bf16.mxu0 0
    %7130 = vmatpush1.bf16.xpose.msra.mxu0 0
    %7131 = vmatprep.subr.bf16.mxu0 0
    %7132 = vmatpush1.bf16.xpose.msra.mxu0 0
    %7133 = vmatprep.subr.bf16.mxu0 0
    %7134 = vmatpush1.bf16.xpose.msra.mxu0 0
    %7135 = vmatprep.subr.bf16.mxu0 0
    %7136 = vmatpush1.bf16.xpose.msra.mxu0 0
    %7137 = vmatprep.subr.bf16.mxu0 0
    %7138 = vmatpush1.bf16.xpose.msra.mxu0 0
    %7139 = vmatprep.subr.bf16.mxu0 0
    %7140 = vmatpush1.bf16.xpose.msra.mxu0 0
    %7141 = vmatprep.subr.bf16.mxu0 0
    %7142 = vmatpush1.bf16.xpose.msra.mxu0 0
    %7143 = vmatprep.subr.bf16.mxu0 0
    %7144 = vmatpush1.bf16.xpose.msra.mxu0 0
    %7145 = vmatprep.mubr.bf16.mxu0 0
    %7146 = vmatmul.mubr.bf16.gmra.mrb[0].mxu0 %v7108
    %v7147 = vpop.f32.mrb[0].mxu0
    %v7148 = vadd.f32 %v218, %v7147
    %v7149 = vpop.f32.mrb[0].mxu0
    %v7150 = vpop.f32.mrb[0].mxu0
    %v7151 = vpop.f32.mrb[0].mxu0
    %7152 = vdwg.mxu0
    %v7154 = vsel %vm1985, %v5342, 0
    %v7157 = vsel %vm1985, %v5902, 0
    %7159 = vmatprep.subr.bf16.mxu0 0
    %7160 = vmatpush1.bf16.xpose.msra.mxu0 %v7157
    %7161 = vmatprep.subr.bf16.mxu0 0
    %7162 = vmatpush1.bf16.xpose.msra.mxu0 0
    %7163 = vmatprep.subr.bf16.mxu0 0
    %7164 = vmatpush1.bf16.xpose.msra.mxu0 0
    %7165 = vmatprep.subr.bf16.mxu0 0
    %7166 = vmatpush1.bf16.xpose.msra.mxu0 0
    %7167 = vmatprep.subr.bf16.mxu0 0
    %7168 = vmatpush1.bf16.xpose.msra.mxu0 0
    %7169 = vmatprep.subr.bf16.mxu0 0
    %7170 = vmatpush1.bf16.xpose.msra.mxu0 0
    %7171 = vmatprep.subr.bf16.mxu0 0
    %7172 = vmatpush1.bf16.xpose.msra.mxu0 0
    %7173 = vmatprep.subr.bf16.mxu0 0
    %7174 = vmatpush1.bf16.xpose.msra.mxu0 0
    %7175 = vmatprep.subr.bf16.mxu0 0
    %7176 = vmatpush1.bf16.xpose.msra.mxu0 0
    %7177 = vmatprep.subr.bf16.mxu0 0
    %7178 = vmatpush1.bf16.xpose.msra.mxu0 0
    %7179 = vmatprep.subr.bf16.mxu0 0
    %7180 = vmatpush1.bf16.xpose.msra.mxu0 0
    %7181 = vmatprep.subr.bf16.mxu0 0
    %7182 = vmatpush1.bf16.xpose.msra.mxu0 0
    %7183 = vmatprep.subr.bf16.mxu0 0
    %7184 = vmatpush1.bf16.xpose.msra.mxu0 0
    %7185 = vmatprep.subr.bf16.mxu0 0
    %7186 = vmatpush1.bf16.xpose.msra.mxu0 0
    %7187 = vmatprep.subr.bf16.mxu0 0
    %7188 = vmatpush1.bf16.xpose.msra.mxu0 0
    %7189 = vmatprep.subr.bf16.mxu0 0
    %7190 = vmatpush1.bf16.xpose.msra.mxu0 0
    %7191 = vmatprep.mubr.bf16.mxu0 0
    %7192 = vmatmul.mubr.bf16.gmra.mrb[0].mxu0 %v7154
    %v7193 = vpop.f32.mrb[0].mxu0
    %v7194 = vadd.f32 %v218, %v7193
    %v7195 = vpop.f32.mrb[0].mxu0
    %v7196 = vpop.f32.mrb[0].mxu0
    %v7197 = vpop.f32.mrb[0].mxu0
    %7198 = vdwg.mxu0
    %v7199 = vsel %vm1985, %v6504, -inf
    %7200 = vmax.xlane.f32.xlu0 %v7199
    %v7201 = vpop.xlane.xlu0 %7200
    %v7202 = vsel %vm1985, %v6550, -inf
    %7203 = vmax.xlane.f32.xlu0 %v7202
    %v7204 = vpop.xlane.xlu0 %7203
    %v7205 = vsel %vm1985, %v6596, -inf
    %7206 = vmax.xlane.f32.xlu0 %v7205
    %v7207 = vpop.xlane.xlu0 %7206
    %v7208 = vsel %vm1985, %v6642, -inf
    %7209 = vmax.xlane.f32.xlu0 %v7208
    %v7210 = vpop.xlane.xlu0 %7209
    %v7211 = vsel %vm1985, %v6688, -inf
    %7212 = vmax.xlane.f32.xlu0 %v7211
    %v7213 = vpop.xlane.xlu0 %7212
    %v7214 = vsel %vm1985, %v6734, -inf
    %7215 = vmax.xlane.f32.xlu0 %v7214
    %v7216 = vpop.xlane.xlu0 %7215
    %v7217 = vsel %vm1985, %v6780, -inf
    %7218 = vmax.xlane.f32.xlu0 %v7217
    %v7219 = vpop.xlane.xlu0 %7218
    %v7220 = vsel %vm1985, %v6826, -inf
    %7221 = vmax.xlane.f32.xlu0 %v7220
    %v7222 = vpop.xlane.xlu0 %7221
    %v7223 = vsel %vm1985, %v6872, -inf
    %7224 = vmax.xlane.f32.xlu0 %v7223
    %v7225 = vpop.xlane.xlu0 %7224
    %v7226 = vsel %vm1985, %v6918, -inf
    %7227 = vmax.xlane.f32.xlu0 %v7226
    %v7228 = vpop.xlane.xlu0 %7227
    %v7229 = vsel %vm1985, %v6964, -inf
    %7230 = vmax.xlane.f32.xlu0 %v7229
    %v7231 = vpop.xlane.xlu0 %7230
    %v7232 = vsel %vm1985, %v7010, -inf
    %7233 = vmax.xlane.f32.xlu0 %v7232
    %v7234 = vpop.xlane.xlu0 %7233
    %v7235 = vsel %vm1985, %v7056, -inf
    %7236 = vmax.xlane.f32.xlu0 %v7235
    %v7237 = vpop.xlane.xlu0 %7236
    %v7238 = vsel %vm1985, %v7102, -inf
    %7239 = vmax.xlane.f32.xlu0 %v7238
    %v7240 = vpop.xlane.xlu0 %7239
    %v7241 = vsel %vm1985, %v7148, -inf
    %7242 = vmax.xlane.f32.xlu0 %v7241
    %v7243 = vpop.xlane.xlu0 %7242
    %v7244 = vsel %vm1985, %v7194, -inf
    %7245 = vmax.xlane.f32.xlu0 %v7244
    %v7246 = vpop.xlane.xlu0 %7245
    %v7247 = vsub.f32 %v6504, %v7201
    %v7248 = vsub.f32 %v6550, %v7204
    %v7249 = vsub.f32 %v6596, %v7207
    %v7250 = vsub.f32 %v6642, %v7210
    %v7251 = vsub.f32 %v6688, %v7213
    %v7252 = vsub.f32 %v6734, %v7216
    %v7253 = vsub.f32 %v6780, %v7219
    %v7254 = vsub.f32 %v6826, %v7222
    %v7255 = vsub.f32 %v6872, %v7225
    %v7256 = vsub.f32 %v6918, %v7228
    %v7257 = vsub.f32 %v6964, %v7231
    %v7258 = vsub.f32 %v7010, %v7234
    %v7259 = vsub.f32 %v7056, %v7237
    %v7260 = vsub.f32 %v7102, %v7240
    %v7261 = vsub.f32 %v7148, %v7243
    %v7262 = vsub.f32 %v7194, %v7246
    %v7263 = vmul.f32 %v7247, 1.442695
    %v7264 = vpow.pop %v7263
    %v7265 = vmul.f32 %v7248, 1.442695
    %v7266 = vpow.pop %v7265
    %v7267 = vmul.f32 %v7249, 1.442695
    %v7268 = vpow.pop %v7267
    %v7269 = vmul.f32 %v7250, 1.442695
    %v7270 = vpow.pop %v7269
    %v7271 = vmul.f32 %v7251, 1.442695
    %v7272 = vpow.pop %v7271
    %v7273 = vmul.f32 %v7252, 1.442695
    %v7274 = vpow.pop %v7273
    %v7275 = vmul.f32 %v7253, 1.442695
    %v7276 = vpow.pop %v7275
    %v7277 = vmul.f32 %v7254, 1.442695
    %v7278 = vpow.pop %v7277
    %v7279 = vmul.f32 %v7255, 1.442695
    %v7280 = vpow.pop %v7279
    %v7281 = vmul.f32 %v7256, 1.442695
    %v7282 = vpow.pop %v7281
    %v7283 = vmul.f32 %v7257, 1.442695
    %v7284 = vpow.pop %v7283
    %v7285 = vmul.f32 %v7258, 1.442695
    %v7286 = vpow.pop %v7285
    %v7287 = vmul.f32 %v7259, 1.442695
    %v7288 = vpow.pop %v7287
    %v7289 = vmul.f32 %v7260, 1.442695
    %v7290 = vpow.pop %v7289
    %v7291 = vmul.f32 %v7261, 1.442695
    %v7292 = vpow.pop %v7291
    %v7293 = vmul.f32 %v7262, 1.442695
    %v7294 = vpow.pop %v7293
    %v7295 = vsel %vm1985, %v7264, 0.0
    %7296 = vadd.xlane.f32.xlu0 %v7295
    %v7297 = vpop.xlane.xlu0 %7296
    %v7298 = vsel %vm1985, %v7266, 0.0
    %7299 = vadd.xlane.f32.xlu0 %v7298
    %v7300 = vpop.xlane.xlu0 %7299
    %v7301 = vsel %vm1985, %v7268, 0.0
    %7302 = vadd.xlane.f32.xlu0 %v7301
    %v7303 = vpop.xlane.xlu0 %7302
    %v7304 = vsel %vm1985, %v7270, 0.0
    %7305 = vadd.xlane.f32.xlu0 %v7304
    %v7306 = vpop.xlane.xlu0 %7305
    %v7307 = vsel %vm1985, %v7272, 0.0
    %7308 = vadd.xlane.f32.xlu0 %v7307
    %v7309 = vpop.xlane.xlu0 %7308
    %v7310 = vsel %vm1985, %v7274, 0.0
    %7311 = vadd.xlane.f32.xlu0 %v7310
    %v7312 = vpop.xlane.xlu0 %7311
    %v7313 = vsel %vm1985, %v7276, 0.0
    %7314 = vadd.xlane.f32.xlu0 %v7313
    %v7315 = vpop.xlane.xlu0 %7314
    %v7316 = vsel %vm1985, %v7278, 0.0
    %7317 = vadd.xlane.f32.xlu0 %v7316
    %v7318 = vpop.xlane.xlu0 %7317
    %v7319 = vsel %vm1985, %v7280, 0.0
    %7320 = vadd.xlane.f32.xlu0 %v7319
    %v7321 = vpop.xlane.xlu0 %7320
    %v7322 = vsel %vm1985, %v7282, 0.0
    %7323 = vadd.xlane.f32.xlu0 %v7322
    %v7324 = vpop.xlane.xlu0 %7323
    %v7325 = vsel %vm1985, %v7284, 0.0
    %7326 = vadd.xlane.f32.xlu0 %v7325
    %v7327 = vpop.xlane.xlu0 %7326
    %v7328 = vsel %vm1985, %v7286, 0.0
    %7329 = vadd.xlane.f32.xlu0 %v7328
    %v7330 = vpop.xlane.xlu0 %7329
    %v7331 = vsel %vm1985, %v7288, 0.0
    %7332 = vadd.xlane.f32.xlu0 %v7331
    %v7333 = vpop.xlane.xlu0 %7332
    %v7334 = vsel %vm1985, %v7290, 0.0
    %7335 = vadd.xlane.f32.xlu0 %v7334
    %v7336 = vpop.xlane.xlu0 %7335
    %v7337 = vsel %vm1985, %v7292, 0.0
    %7338 = vadd.xlane.f32.xlu0 %v7337
    %v7339 = vpop.xlane.xlu0 %7338
    %v7340 = vsel %vm1985, %v7294, 0.0
    %7341 = vadd.xlane.f32.xlu0 %v7340
    %v7342 = vpop.xlane.xlu0 %7341
    %v7343 = vrcp.pop %v7297
    %v7344 = vrcp.pop %v7300
    %v7345 = vrcp.pop %v7303
    %v7346 = vrcp.pop %v7306
    %v7347 = vrcp.pop %v7309
    %v7348 = vrcp.pop %v7312
    %v7349 = vrcp.pop %v7315
    %v7350 = vrcp.pop %v7318
    %v7351 = vrcp.pop %v7321
    %v7352 = vrcp.pop %v7324
    %v7353 = vrcp.pop %v7327
    %v7354 = vrcp.pop %v7330
    %v7355 = vrcp.pop %v7333
    %v7356 = vrcp.pop %v7336
    %v7357 = vrcp.pop %v7339
    %v7358 = vrcp.pop %v7342
    %v7359 = vmul.f32 %v7264, %v7343
    %v7360 = vmul.f32 %v7266, %v7344
    %v7361 = vmul.f32 %v7268, %v7345
    %v7362 = vmul.f32 %v7270, %v7346
    %v7363 = vmul.f32 %v7272, %v7347
    %v7364 = vmul.f32 %v7274, %v7348
    %v7365 = vmul.f32 %v7276, %v7349
    %v7366 = vmul.f32 %v7278, %v7350
    %v7367 = vmul.f32 %v7280, %v7351
    %v7368 = vmul.f32 %v7282, %v7352
    %v7369 = vmul.f32 %v7284, %v7353
    %v7370 = vmul.f32 %v7286, %v7354
    %v7371 = vmul.f32 %v7288, %v7355
    %v7372 = vmul.f32 %v7290, %v7356
    %v7373 = vmul.f32 %v7292, %v7357
    %v7374 = vmul.f32 %v7294, %v7358
    %v7375 = vpack.c.bf16 %v7359, %v7359
    %v7376 = vpack.c.bf16 %v7360, %v7360
    %v7377 = vpack.c.bf16 %v7361, %v7361
    %v7378 = vpack.c.bf16 %v7362, %v7362
    %v7379 = vpack.c.bf16 %v7363, %v7363
    %v7380 = vpack.c.bf16 %v7364, %v7364
    %v7381 = vpack.c.bf16 %v7365, %v7365
    %v7382 = vpack.c.bf16 %v7366, %v7366
    %v7383 = vpack.c.bf16 %v7367, %v7367
    %v7384 = vpack.c.bf16 %v7368, %v7368
    %v7385 = vpack.c.bf16 %v7369, %v7369
    %v7386 = vpack.c.bf16 %v7370, %v7370
    %v7387 = vpack.c.bf16 %v7371, %v7371
    %v7388 = vpack.c.bf16 %v7372, %v7372
    %v7389 = vpack.c.bf16 %v7373, %v7373
    %v7390 = vpack.c.bf16 %v7374, %v7374
    %v7392 = vsel %vm1985, %v7375, 0
    %v7395 = vsel %vm2917, %v6417, 0
    %7397 = vmatprep.subr.bf16.mxu0 0
    %7398 = vmatpush1.bf16.msra.mxu0 %v7395
    %7399 = vmatprep.subr.bf16.mxu0 0
    %7400 = vmatpush1.bf16.msra.mxu0 0
    %7401 = vmatprep.subr.bf16.mxu0 0
    %7402 = vmatpush1.bf16.msra.mxu0 0
    %7403 = vmatprep.subr.bf16.mxu0 0
    %7404 = vmatpush1.bf16.msra.mxu0 0
    %7405 = vmatprep.subr.bf16.mxu0 0
    %7406 = vmatpush1.bf16.msra.mxu0 0
    %7407 = vmatprep.subr.bf16.mxu0 0
    %7408 = vmatpush1.bf16.msra.mxu0 0
    %7409 = vmatprep.subr.bf16.mxu0 0
    %7410 = vmatpush1.bf16.msra.mxu0 0
    %7411 = vmatprep.subr.bf16.mxu0 0
    %7412 = vmatpush1.bf16.msra.mxu0 0
    %7413 = vmatprep.subr.bf16.mxu0 0
    %7414 = vmatpush1.bf16.msra.mxu0 0
    %7415 = vmatprep.subr.bf16.mxu0 0
    %7416 = vmatpush1.bf16.msra.mxu0 0
    %7417 = vmatprep.subr.bf16.mxu0 0
    %7418 = vmatpush1.bf16.msra.mxu0 0
    %7419 = vmatprep.subr.bf16.mxu0 0
    %7420 = vmatpush1.bf16.msra.mxu0 0
    %7421 = vmatprep.subr.bf16.mxu0 0
    %7422 = vmatpush1.bf16.msra.mxu0 0
    %7423 = vmatprep.subr.bf16.mxu0 0
    %7424 = vmatpush1.bf16.msra.mxu0 0
    %7425 = vmatprep.subr.bf16.mxu0 0
    %7426 = vmatpush1.bf16.msra.mxu0 0
    %7427 = vmatprep.subr.bf16.mxu0 0
    %7428 = vmatpush1.bf16.msra.mxu0 0
    %7429 = vmatprep.mubr.bf16.mxu0 0
    %7430 = vmatmul.mubr.bf16.gmra.mrb[0].mxu0 %v7392
    %v7431 = vpop.f32.mrb[0].mxu0
    %v7432 = vadd.f32 0.0, %v7431
    %v7433 = vpop.f32.mrb[0].mxu0
    %v7434 = vpop.f32.mrb[0].mxu0
    %v7435 = vpop.f32.mrb[0].mxu0
    %7436 = vdwg.mxu0
    %v7438 = vsel %vm1985, %v7376, 0
    %v7441 = vsel %vm2917, %v6420, 0
    %7443 = vmatprep.subr.bf16.mxu0 0
    %7444 = vmatpush1.bf16.msra.mxu0 %v7441
    %7445 = vmatprep.subr.bf16.mxu0 0
    %7446 = vmatpush1.bf16.msra.mxu0 0
    %7447 = vmatprep.subr.bf16.mxu0 0
    %7448 = vmatpush1.bf16.msra.mxu0 0
    %7449 = vmatprep.subr.bf16.mxu0 0
    %7450 = vmatpush1.bf16.msra.mxu0 0
    %7451 = vmatprep.subr.bf16.mxu0 0
    %7452 = vmatpush1.bf16.msra.mxu0 0
    %7453 = vmatprep.subr.bf16.mxu0 0
    %7454 = vmatpush1.bf16.msra.mxu0 0
    %7455 = vmatprep.subr.bf16.mxu0 0
    %7456 = vmatpush1.bf16.msra.mxu0 0
    %7457 = vmatprep.subr.bf16.mxu0 0
    %7458 = vmatpush1.bf16.msra.mxu0 0
    %7459 = vmatprep.subr.bf16.mxu0 0
    %7460 = vmatpush1.bf16.msra.mxu0 0
    %7461 = vmatprep.subr.bf16.mxu0 0
    %7462 = vmatpush1.bf16.msra.mxu0 0
    %7463 = vmatprep.subr.bf16.mxu0 0
    %7464 = vmatpush1.bf16.msra.mxu0 0
    %7465 = vmatprep.subr.bf16.mxu0 0
    %7466 = vmatpush1.bf16.msra.mxu0 0
    %7467 = vmatprep.subr.bf16.mxu0 0
    %7468 = vmatpush1.bf16.msra.mxu0 0
    %7469 = vmatprep.subr.bf16.mxu0 0
    %7470 = vmatpush1.bf16.msra.mxu0 0
    %7471 = vmatprep.subr.bf16.mxu0 0
    %7472 = vmatpush1.bf16.msra.mxu0 0
    %7473 = vmatprep.subr.bf16.mxu0 0
    %7474 = vmatpush1.bf16.msra.mxu0 0
    %7475 = vmatprep.mubr.bf16.mxu0 0
    %7476 = vmatmul.mubr.bf16.gmra.mrb[0].mxu0 %v7438
    %v7477 = vpop.f32.mrb[0].mxu0
    %v7478 = vadd.f32 0.0, %v7477
    %v7479 = vpop.f32.mrb[0].mxu0
    %v7480 = vpop.f32.mrb[0].mxu0
    %v7481 = vpop.f32.mrb[0].mxu0
    %7482 = vdwg.mxu0
    %v7484 = vsel %vm1985, %v7377, 0
    %v7487 = vsel %vm2917, %v6423, 0
    %7489 = vmatprep.subr.bf16.mxu0 0
    %7490 = vmatpush1.bf16.msra.mxu0 %v7487
    %7491 = vmatprep.subr.bf16.mxu0 0
    %7492 = vmatpush1.bf16.msra.mxu0 0
    %7493 = vmatprep.subr.bf16.mxu0 0
    %7494 = vmatpush1.bf16.msra.mxu0 0
    %7495 = vmatprep.subr.bf16.mxu0 0
    %7496 = vmatpush1.bf16.msra.mxu0 0
    %7497 = vmatprep.subr.bf16.mxu0 0
    %7498 = vmatpush1.bf16.msra.mxu0 0
    %7499 = vmatprep.subr.bf16.mxu0 0
    %7500 = vmatpush1.bf16.msra.mxu0 0
    %7501 = vmatprep.subr.bf16.mxu0 0
    %7502 = vmatpush1.bf16.msra.mxu0 0
    %7503 = vmatprep.subr.bf16.mxu0 0
    %7504 = vmatpush1.bf16.msra.mxu0 0
    %7505 = vmatprep.subr.bf16.mxu0 0
    %7506 = vmatpush1.bf16.msra.mxu0 0
    %7507 = vmatprep.subr.bf16.mxu0 0
    %7508 = vmatpush1.bf16.msra.mxu0 0
    %7509 = vmatprep.subr.bf16.mxu0 0
    %7510 = vmatpush1.bf16.msra.mxu0 0
    %7511 = vmatprep.subr.bf16.mxu0 0
    %7512 = vmatpush1.bf16.msra.mxu0 0
    %7513 = vmatprep.subr.bf16.mxu0 0
    %7514 = vmatpush1.bf16.msra.mxu0 0
    %7515 = vmatprep.subr.bf16.mxu0 0
    %7516 = vmatpush1.bf16.msra.mxu0 0
    %7517 = vmatprep.subr.bf16.mxu0 0
    %7518 = vmatpush1.bf16.msra.mxu0 0
    %7519 = vmatprep.subr.bf16.mxu0 0
    %7520 = vmatpush1.bf16.msra.mxu0 0
    %7521 = vmatprep.mubr.bf16.mxu0 0
    %7522 = vmatmul.mubr.bf16.gmra.mrb[0].mxu0 %v7484
    %v7523 = vpop.f32.mrb[0].mxu0
    %v7524 = vadd.f32 0.0, %v7523
    %v7525 = vpop.f32.mrb[0].mxu0
    %v7526 = vpop.f32.mrb[0].mxu0
    %v7527 = vpop.f32.mrb[0].mxu0
    %7528 = vdwg.mxu0
    %v7530 = vsel %vm1985, %v7378, 0
    %v7533 = vsel %vm2917, %v6426, 0
    %7535 = vmatprep.subr.bf16.mxu0 0
    %7536 = vmatpush1.bf16.msra.mxu0 %v7533
    %7537 = vmatprep.subr.bf16.mxu0 0
    %7538 = vmatpush1.bf16.msra.mxu0 0
    %7539 = vmatprep.subr.bf16.mxu0 0
    %7540 = vmatpush1.bf16.msra.mxu0 0
    %7541 = vmatprep.subr.bf16.mxu0 0
    %7542 = vmatpush1.bf16.msra.mxu0 0
    %7543 = vmatprep.subr.bf16.mxu0 0
    %7544 = vmatpush1.bf16.msra.mxu0 0
    %7545 = vmatprep.subr.bf16.mxu0 0
    %7546 = vmatpush1.bf16.msra.mxu0 0
    %7547 = vmatprep.subr.bf16.mxu0 0
    %7548 = vmatpush1.bf16.msra.mxu0 0
    %7549 = vmatprep.subr.bf16.mxu0 0
    %7550 = vmatpush1.bf16.msra.mxu0 0
    %7551 = vmatprep.subr.bf16.mxu0 0
    %7552 = vmatpush1.bf16.msra.mxu0 0
    %7553 = vmatprep.subr.bf16.mxu0 0
    %7554 = vmatpush1.bf16.msra.mxu0 0
    %7555 = vmatprep.subr.bf16.mxu0 0
    %7556 = vmatpush1.bf16.msra.mxu0 0
    %7557 = vmatprep.subr.bf16.mxu0 0
    %7558 = vmatpush1.bf16.msra.mxu0 0
    %7559 = vmatprep.subr.bf16.mxu0 0
    %7560 = vmatpush1.bf16.msra.mxu0 0
    %7561 = vmatprep.subr.bf16.mxu0 0
    %7562 = vmatpush1.bf16.msra.mxu0 0
    %7563 = vmatprep.subr.bf16.mxu0 0
    %7564 = vmatpush1.bf16.msra.mxu0 0
    %7565 = vmatprep.subr.bf16.mxu0 0
    %7566 = vmatpush1.bf16.msra.mxu0 0
    %7567 = vmatprep.mubr.bf16.mxu0 0
    %7568 = vmatmul.mubr.bf16.gmra.mrb[0].mxu0 %v7530
    %v7569 = vpop.f32.mrb[0].mxu0
    %v7570 = vadd.f32 0.0, %v7569
    %v7571 = vpop.f32.mrb[0].mxu0
    %v7572 = vpop.f32.mrb[0].mxu0
    %v7573 = vpop.f32.mrb[0].mxu0
    %7574 = vdwg.mxu0
    %v7576 = vsel %vm1985, %v7379, 0
    %v7579 = vsel %vm2917, %v6429, 0
    %7581 = vmatprep.subr.bf16.mxu0 0
    %7582 = vmatpush1.bf16.msra.mxu0 %v7579
    %7583 = vmatprep.subr.bf16.mxu0 0
    %7584 = vmatpush1.bf16.msra.mxu0 0
    %7585 = vmatprep.subr.bf16.mxu0 0
    %7586 = vmatpush1.bf16.msra.mxu0 0
    %7587 = vmatprep.subr.bf16.mxu0 0
    %7588 = vmatpush1.bf16.msra.mxu0 0
    %7589 = vmatprep.subr.bf16.mxu0 0
    %7590 = vmatpush1.bf16.msra.mxu0 0
    %7591 = vmatprep.subr.bf16.mxu0 0
    %7592 = vmatpush1.bf16.msra.mxu0 0
    %7593 = vmatprep.subr.bf16.mxu0 0
    %7594 = vmatpush1.bf16.msra.mxu0 0
    %7595 = vmatprep.subr.bf16.mxu0 0
    %7596 = vmatpush1.bf16.msra.mxu0 0
    %7597 = vmatprep.subr.bf16.mxu0 0
    %7598 = vmatpush1.bf16.msra.mxu0 0
    %7599 = vmatprep.subr.bf16.mxu0 0
    %7600 = vmatpush1.bf16.msra.mxu0 0
    %7601 = vmatprep.subr.bf16.mxu0 0
    %7602 = vmatpush1.bf16.msra.mxu0 0
    %7603 = vmatprep.subr.bf16.mxu0 0
    %7604 = vmatpush1.bf16.msra.mxu0 0
    %7605 = vmatprep.subr.bf16.mxu0 0
    %7606 = vmatpush1.bf16.msra.mxu0 0
    %7607 = vmatprep.subr.bf16.mxu0 0
    %7608 = vmatpush1.bf16.msra.mxu0 0
    %7609 = vmatprep.subr.bf16.mxu0 0
    %7610 = vmatpush1.bf16.msra.mxu0 0
    %7611 = vmatprep.subr.bf16.mxu0 0
    %7612 = vmatpush1.bf16.msra.mxu0 0
    %7613 = vmatprep.mubr.bf16.mxu0 0
    %7614 = vmatmul.mubr.bf16.gmra.mrb[0].mxu0 %v7576
    %v7615 = vpop.f32.mrb[0].mxu0
    %v7616 = vadd.f32 0.0, %v7615
    %v7617 = vpop.f32.mrb[0].mxu0
    %v7618 = vpop.f32.mrb[0].mxu0
    %v7619 = vpop.f32.mrb[0].mxu0
    %7620 = vdwg.mxu0
    %v7622 = vsel %vm1985, %v7380, 0
    %v7625 = vsel %vm2917, %v6432, 0
    %7627 = vmatprep.subr.bf16.mxu0 0
    %7628 = vmatpush1.bf16.msra.mxu0 %v7625
    %7629 = vmatprep.subr.bf16.mxu0 0
    %7630 = vmatpush1.bf16.msra.mxu0 0
    %7631 = vmatprep.subr.bf16.mxu0 0
    %7632 = vmatpush1.bf16.msra.mxu0 0
    %7633 = vmatprep.subr.bf16.mxu0 0
    %7634 = vmatpush1.bf16.msra.mxu0 0
    %7635 = vmatprep.subr.bf16.mxu0 0
    %7636 = vmatpush1.bf16.msra.mxu0 0
    %7637 = vmatprep.subr.bf16.mxu0 0
    %7638 = vmatpush1.bf16.msra.mxu0 0
    %7639 = vmatprep.subr.bf16.mxu0 0
    %7640 = vmatpush1.bf16.msra.mxu0 0
    %7641 = vmatprep.subr.bf16.mxu0 0
    %7642 = vmatpush1.bf16.msra.mxu0 0
    %7643 = vmatprep.subr.bf16.mxu0 0
    %7644 = vmatpush1.bf16.msra.mxu0 0
    %7645 = vmatprep.subr.bf16.mxu0 0
    %7646 = vmatpush1.bf16.msra.mxu0 0
    %7647 = vmatprep.subr.bf16.mxu0 0
    %7648 = vmatpush1.bf16.msra.mxu0 0
    %7649 = vmatprep.subr.bf16.mxu0 0
    %7650 = vmatpush1.bf16.msra.mxu0 0
    %7651 = vmatprep.subr.bf16.mxu0 0
    %7652 = vmatpush1.bf16.msra.mxu0 0
    %7653 = vmatprep.subr.bf16.mxu0 0
    %7654 = vmatpush1.bf16.msra.mxu0 0
    %7655 = vmatprep.subr.bf16.mxu0 0
    %7656 = vmatpush1.bf16.msra.mxu0 0
    %7657 = vmatprep.subr.bf16.mxu0 0
    %7658 = vmatpush1.bf16.msra.mxu0 0
    %7659 = vmatprep.mubr.bf16.mxu0 0
    %7660 = vmatmul.mubr.bf16.gmra.mrb[0].mxu0 %v7622
    %v7661 = vpop.f32.mrb[0].mxu0
    %v7662 = vadd.f32 0.0, %v7661
    %v7663 = vpop.f32.mrb[0].mxu0
    %v7664 = vpop.f32.mrb[0].mxu0
    %v7665 = vpop.f32.mrb[0].mxu0
    %7666 = vdwg.mxu0
    %v7668 = vsel %vm1985, %v7381, 0
    %v7671 = vsel %vm2917, %v6435, 0
    %7673 = vmatprep.subr.bf16.mxu0 0
    %7674 = vmatpush1.bf16.msra.mxu0 %v7671
    %7675 = vmatprep.subr.bf16.mxu0 0
    %7676 = vmatpush1.bf16.msra.mxu0 0
    %7677 = vmatprep.subr.bf16.mxu0 0
    %7678 = vmatpush1.bf16.msra.mxu0 0
    %7679 = vmatprep.subr.bf16.mxu0 0
    %7680 = vmatpush1.bf16.msra.mxu0 0
    %7681 = vmatprep.subr.bf16.mxu0 0
    %7682 = vmatpush1.bf16.msra.mxu0 0
    %7683 = vmatprep.subr.bf16.mxu0 0
    %7684 = vmatpush1.bf16.msra.mxu0 0
    %7685 = vmatprep.subr.bf16.mxu0 0
    %7686 = vmatpush1.bf16.msra.mxu0 0
    %7687 = vmatprep.subr.bf16.mxu0 0
    %7688 = vmatpush1.bf16.msra.mxu0 0
    %7689 = vmatprep.subr.bf16.mxu0 0
    %7690 = vmatpush1.bf16.msra.mxu0 0
    %7691 = vmatprep.subr.bf16.mxu0 0
    %7692 = vmatpush1.bf16.msra.mxu0 0
    %7693 = vmatprep.subr.bf16.mxu0 0
    %7694 = vmatpush1.bf16.msra.mxu0 0
    %7695 = vmatprep.subr.bf16.mxu0 0
    %7696 = vmatpush1.bf16.msra.mxu0 0
    %7697 = vmatprep.subr.bf16.mxu0 0
    %7698 = vmatpush1.bf16.msra.mxu0 0
    %7699 = vmatprep.subr.bf16.mxu0 0
    %7700 = vmatpush1.bf16.msra.mxu0 0
    %7701 = vmatprep.subr.bf16.mxu0 0
    %7702 = vmatpush1.bf16.msra.mxu0 0
    %7703 = vmatprep.subr.bf16.mxu0 0
    %7704 = vmatpush1.bf16.msra.mxu0 0
    %7705 = vmatprep.mubr.bf16.mxu0 0
    %7706 = vmatmul.mubr.bf16.gmra.mrb[0].mxu0 %v7668
    %v7707 = vpop.f32.mrb[0].mxu0
    %v7708 = vadd.f32 0.0, %v7707
    %v7709 = vpop.f32.mrb[0].mxu0
    %v7710 = vpop.f32.mrb[0].mxu0
    %v7711 = vpop.f32.mrb[0].mxu0
    %7712 = vdwg.mxu0
    %v7714 = vsel %vm1985, %v7382, 0
    %v7717 = vsel %vm2917, %v6438, 0
    %7719 = vmatprep.subr.bf16.mxu0 0
    %7720 = vmatpush1.bf16.msra.mxu0 %v7717
    %7721 = vmatprep.subr.bf16.mxu0 0
    %7722 = vmatpush1.bf16.msra.mxu0 0
    %7723 = vmatprep.subr.bf16.mxu0 0
    %7724 = vmatpush1.bf16.msra.mxu0 0
    %7725 = vmatprep.subr.bf16.mxu0 0
    %7726 = vmatpush1.bf16.msra.mxu0 0
    %7727 = vmatprep.subr.bf16.mxu0 0
    %7728 = vmatpush1.bf16.msra.mxu0 0
    %7729 = vmatprep.subr.bf16.mxu0 0
    %7730 = vmatpush1.bf16.msra.mxu0 0
    %7731 = vmatprep.subr.bf16.mxu0 0
    %7732 = vmatpush1.bf16.msra.mxu0 0
    %7733 = vmatprep.subr.bf16.mxu0 0
    %7734 = vmatpush1.bf16.msra.mxu0 0
    %7735 = vmatprep.subr.bf16.mxu0 0
    %7736 = vmatpush1.bf16.msra.mxu0 0
    %7737 = vmatprep.subr.bf16.mxu0 0
    %7738 = vmatpush1.bf16.msra.mxu0 0
    %7739 = vmatprep.subr.bf16.mxu0 0
    %7740 = vmatpush1.bf16.msra.mxu0 0
    %7741 = vmatprep.subr.bf16.mxu0 0
    %7742 = vmatpush1.bf16.msra.mxu0 0
    %7743 = vmatprep.subr.bf16.mxu0 0
    %7744 = vmatpush1.bf16.msra.mxu0 0
    %7745 = vmatprep.subr.bf16.mxu0 0
    %7746 = vmatpush1.bf16.msra.mxu0 0
    %7747 = vmatprep.subr.bf16.mxu0 0
    %7748 = vmatpush1.bf16.msra.mxu0 0
    %7749 = vmatprep.subr.bf16.mxu0 0
    %7750 = vmatpush1.bf16.msra.mxu0 0
    %7751 = vmatprep.mubr.bf16.mxu0 0
    %7752 = vmatmul.mubr.bf16.gmra.mrb[0].mxu0 %v7714
    %v7753 = vpop.f32.mrb[0].mxu0
    %v7754 = vadd.f32 0.0, %v7753
    %v7755 = vpop.f32.mrb[0].mxu0
    %v7756 = vpop.f32.mrb[0].mxu0
    %v7757 = vpop.f32.mrb[0].mxu0
    %7758 = vdwg.mxu0
    %v7760 = vsel %vm1985, %v7383, 0
    %v7763 = vsel %vm2917, %v6441, 0
    %7765 = vmatprep.subr.bf16.mxu0 0
    %7766 = vmatpush1.bf16.msra.mxu0 %v7763
    %7767 = vmatprep.subr.bf16.mxu0 0
    %7768 = vmatpush1.bf16.msra.mxu0 0
    %7769 = vmatprep.subr.bf16.mxu0 0
    %7770 = vmatpush1.bf16.msra.mxu0 0
    %7771 = vmatprep.subr.bf16.mxu0 0
    %7772 = vmatpush1.bf16.msra.mxu0 0
    %7773 = vmatprep.subr.bf16.mxu0 0
    %7774 = vmatpush1.bf16.msra.mxu0 0
    %7775 = vmatprep.subr.bf16.mxu0 0
    %7776 = vmatpush1.bf16.msra.mxu0 0
    %7777 = vmatprep.subr.bf16.mxu0 0
    %7778 = vmatpush1.bf16.msra.mxu0 0
    %7779 = vmatprep.subr.bf16.mxu0 0
    %7780 = vmatpush1.bf16.msra.mxu0 0
    %7781 = vmatprep.subr.bf16.mxu0 0
    %7782 = vmatpush1.bf16.msra.mxu0 0
    %7783 = vmatprep.subr.bf16.mxu0 0
    %7784 = vmatpush1.bf16.msra.mxu0 0
    %7785 = vmatprep.subr.bf16.mxu0 0
    %7786 = vmatpush1.bf16.msra.mxu0 0
    %7787 = vmatprep.subr.bf16.mxu0 0
    %7788 = vmatpush1.bf16.msra.mxu0 0
    %7789 = vmatprep.subr.bf16.mxu0 0
    %7790 = vmatpush1.bf16.msra.mxu0 0
    %7791 = vmatprep.subr.bf16.mxu0 0
    %7792 = vmatpush1.bf16.msra.mxu0 0
    %7793 = vmatprep.subr.bf16.mxu0 0
    %7794 = vmatpush1.bf16.msra.mxu0 0
    %7795 = vmatprep.subr.bf16.mxu0 0
    %7796 = vmatpush1.bf16.msra.mxu0 0
    %7797 = vmatprep.mubr.bf16.mxu0 0
    %7798 = vmatmul.mubr.bf16.gmra.mrb[0].mxu0 %v7760
    %v7799 = vpop.f32.mrb[0].mxu0
    %v7800 = vadd.f32 0.0, %v7799
    %v7801 = vpop.f32.mrb[0].mxu0
    %v7802 = vpop.f32.mrb[0].mxu0
    %v7803 = vpop.f32.mrb[0].mxu0
    %7804 = vdwg.mxu0
    %v7806 = vsel %vm1985, %v7384, 0
    %v7809 = vsel %vm2917, %v6444, 0
    %7811 = vmatprep.subr.bf16.mxu0 0
    %7812 = vmatpush1.bf16.msra.mxu0 %v7809
    %7813 = vmatprep.subr.bf16.mxu0 0
    %7814 = vmatpush1.bf16.msra.mxu0 0
    %7815 = vmatprep.subr.bf16.mxu0 0
    %7816 = vmatpush1.bf16.msra.mxu0 0
    %7817 = vmatprep.subr.bf16.mxu0 0
    %7818 = vmatpush1.bf16.msra.mxu0 0
    %7819 = vmatprep.subr.bf16.mxu0 0
    %7820 = vmatpush1.bf16.msra.mxu0 0
    %7821 = vmatprep.subr.bf16.mxu0 0
    %7822 = vmatpush1.bf16.msra.mxu0 0
    %7823 = vmatprep.subr.bf16.mxu0 0
    %7824 = vmatpush1.bf16.msra.mxu0 0
    %7825 = vmatprep.subr.bf16.mxu0 0
    %7826 = vmatpush1.bf16.msra.mxu0 0
    %7827 = vmatprep.subr.bf16.mxu0 0
    %7828 = vmatpush1.bf16.msra.mxu0 0
    %7829 = vmatprep.subr.bf16.mxu0 0
    %7830 = vmatpush1.bf16.msra.mxu0 0
    %7831 = vmatprep.subr.bf16.mxu0 0
    %7832 = vmatpush1.bf16.msra.mxu0 0
    %7833 = vmatprep.subr.bf16.mxu0 0
    %7834 = vmatpush1.bf16.msra.mxu0 0
    %7835 = vmatprep.subr.bf16.mxu0 0
    %7836 = vmatpush1.bf16.msra.mxu0 0
    %7837 = vmatprep.subr.bf16.mxu0 0
    %7838 = vmatpush1.bf16.msra.mxu0 0
    %7839 = vmatprep.subr.bf16.mxu0 0
    %7840 = vmatpush1.bf16.msra.mxu0 0
    %7841 = vmatprep.subr.bf16.mxu0 0
    %7842 = vmatpush1.bf16.msra.mxu0 0
    %7843 = vmatprep.mubr.bf16.mxu0 0
    %7844 = vmatmul.mubr.bf16.gmra.mrb[0].mxu0 %v7806
    %v7845 = vpop.f32.mrb[0].mxu0
    %v7846 = vadd.f32 0.0, %v7845
    %v7847 = vpop.f32.mrb[0].mxu0
    %v7848 = vpop.f32.mrb[0].mxu0
    %v7849 = vpop.f32.mrb[0].mxu0
    %7850 = vdwg.mxu0
    %v7852 = vsel %vm1985, %v7385, 0
    %v7855 = vsel %vm2917, %v6447, 0
    %7857 = vmatprep.subr.bf16.mxu0 0
    %7858 = vmatpush1.bf16.msra.mxu0 %v7855
    %7859 = vmatprep.subr.bf16.mxu0 0
    %7860 = vmatpush1.bf16.msra.mxu0 0
    %7861 = vmatprep.subr.bf16.mxu0 0
    %7862 = vmatpush1.bf16.msra.mxu0 0
    %7863 = vmatprep.subr.bf16.mxu0 0
    %7864 = vmatpush1.bf16.msra.mxu0 0
    %7865 = vmatprep.subr.bf16.mxu0 0
    %7866 = vmatpush1.bf16.msra.mxu0 0
    %7867 = vmatprep.subr.bf16.mxu0 0
    %7868 = vmatpush1.bf16.msra.mxu0 0
    %7869 = vmatprep.subr.bf16.mxu0 0
    %7870 = vmatpush1.bf16.msra.mxu0 0
    %7871 = vmatprep.subr.bf16.mxu0 0
    %7872 = vmatpush1.bf16.msra.mxu0 0
    %7873 = vmatprep.subr.bf16.mxu0 0
    %7874 = vmatpush1.bf16.msra.mxu0 0
    %7875 = vmatprep.subr.bf16.mxu0 0
    %7876 = vmatpush1.bf16.msra.mxu0 0
    %7877 = vmatprep.subr.bf16.mxu0 0
    %7878 = vmatpush1.bf16.msra.mxu0 0
    %7879 = vmatprep.subr.bf16.mxu0 0
    %7880 = vmatpush1.bf16.msra.mxu0 0
    %7881 = vmatprep.subr.bf16.mxu0 0
    %7882 = vmatpush1.bf16.msra.mxu0 0
    %7883 = vmatprep.subr.bf16.mxu0 0
    %7884 = vmatpush1.bf16.msra.mxu0 0
    %7885 = vmatprep.subr.bf16.mxu0 0
    %7886 = vmatpush1.bf16.msra.mxu0 0
    %7887 = vmatprep.subr.bf16.mxu0 0
    %7888 = vmatpush1.bf16.msra.mxu0 0
    %7889 = vmatprep.mubr.bf16.mxu0 0
    %7890 = vmatmul.mubr.bf16.gmra.mrb[0].mxu0 %v7852
    %v7891 = vpop.f32.mrb[0].mxu0
    %v7892 = vadd.f32 0.0, %v7891
    %v7893 = vpop.f32.mrb[0].mxu0
    %v7894 = vpop.f32.mrb[0].mxu0
    %v7895 = vpop.f32.mrb[0].mxu0
    %7896 = vdwg.mxu0
    %v7898 = vsel %vm1985, %v7386, 0
    %v7901 = vsel %vm2917, %v6450, 0
    %7903 = vmatprep.subr.bf16.mxu0 0
    %7904 = vmatpush1.bf16.msra.mxu0 %v7901
    %7905 = vmatprep.subr.bf16.mxu0 0
    %7906 = vmatpush1.bf16.msra.mxu0 0
    %7907 = vmatprep.subr.bf16.mxu0 0
    %7908 = vmatpush1.bf16.msra.mxu0 0
    %7909 = vmatprep.subr.bf16.mxu0 0
    %7910 = vmatpush1.bf16.msra.mxu0 0
    %7911 = vmatprep.subr.bf16.mxu0 0
    %7912 = vmatpush1.bf16.msra.mxu0 0
    %7913 = vmatprep.subr.bf16.mxu0 0
    %7914 = vmatpush1.bf16.msra.mxu0 0
    %7915 = vmatprep.subr.bf16.mxu0 0
    %7916 = vmatpush1.bf16.msra.mxu0 0
    %7917 = vmatprep.subr.bf16.mxu0 0
    %7918 = vmatpush1.bf16.msra.mxu0 0
    %7919 = vmatprep.subr.bf16.mxu0 0
    %7920 = vmatpush1.bf16.msra.mxu0 0
    %7921 = vmatprep.subr.bf16.mxu0 0
    %7922 = vmatpush1.bf16.msra.mxu0 0
    %7923 = vmatprep.subr.bf16.mxu0 0
    %7924 = vmatpush1.bf16.msra.mxu0 0
    %7925 = vmatprep.subr.bf16.mxu0 0
    %7926 = vmatpush1.bf16.msra.mxu0 0
    %7927 = vmatprep.subr.bf16.mxu0 0
    %7928 = vmatpush1.bf16.msra.mxu0 0
    %7929 = vmatprep.subr.bf16.mxu0 0
    %7930 = vmatpush1.bf16.msra.mxu0 0
    %7931 = vmatprep.subr.bf16.mxu0 0
    %7932 = vmatpush1.bf16.msra.mxu0 0
    %7933 = vmatprep.subr.bf16.mxu0 0
    %7934 = vmatpush1.bf16.msra.mxu0 0
    %7935 = vmatprep.mubr.bf16.mxu0 0
    %7936 = vmatmul.mubr.bf16.gmra.mrb[0].mxu0 %v7898
    %v7937 = vpop.f32.mrb[0].mxu0
    %v7938 = vadd.f32 0.0, %v7937
    %v7939 = vpop.f32.mrb[0].mxu0
    %v7940 = vpop.f32.mrb[0].mxu0
    %v7941 = vpop.f32.mrb[0].mxu0
    %7942 = vdwg.mxu0
    %v7944 = vsel %vm1985, %v7387, 0
    %v7947 = vsel %vm2917, %v6453, 0
    %7949 = vmatprep.subr.bf16.mxu0 0
    %7950 = vmatpush1.bf16.msra.mxu0 %v7947
    %7951 = vmatprep.subr.bf16.mxu0 0
    %7952 = vmatpush1.bf16.msra.mxu0 0
    %7953 = vmatprep.subr.bf16.mxu0 0
    %7954 = vmatpush1.bf16.msra.mxu0 0
    %7955 = vmatprep.subr.bf16.mxu0 0
    %7956 = vmatpush1.bf16.msra.mxu0 0
    %7957 = vmatprep.subr.bf16.mxu0 0
    %7958 = vmatpush1.bf16.msra.mxu0 0
    %7959 = vmatprep.subr.bf16.mxu0 0
    %7960 = vmatpush1.bf16.msra.mxu0 0
    %7961 = vmatprep.subr.bf16.mxu0 0
    %7962 = vmatpush1.bf16.msra.mxu0 0
    %7963 = vmatprep.subr.bf16.mxu0 0
    %7964 = vmatpush1.bf16.msra.mxu0 0
    %7965 = vmatprep.subr.bf16.mxu0 0
    %7966 = vmatpush1.bf16.msra.mxu0 0
    %7967 = vmatprep.subr.bf16.mxu0 0
    %7968 = vmatpush1.bf16.msra.mxu0 0
    %7969 = vmatprep.subr.bf16.mxu0 0
    %7970 = vmatpush1.bf16.msra.mxu0 0
    %7971 = vmatprep.subr.bf16.mxu0 0
    %7972 = vmatpush1.bf16.msra.mxu0 0
    %7973 = vmatprep.subr.bf16.mxu0 0
    %7974 = vmatpush1.bf16.msra.mxu0 0
    %7975 = vmatprep.subr.bf16.mxu0 0
    %7976 = vmatpush1.bf16.msra.mxu0 0
    %7977 = vmatprep.subr.bf16.mxu0 0
    %7978 = vmatpush1.bf16.msra.mxu0 0
    %7979 = vmatprep.subr.bf16.mxu0 0
    %7980 = vmatpush1.bf16.msra.mxu0 0
    %7981 = vmatprep.mubr.bf16.mxu0 0
    %7982 = vmatmul.mubr.bf16.gmra.mrb[0].mxu0 %v7944
    %v7983 = vpop.f32.mrb[0].mxu0
    %v7984 = vadd.f32 0.0, %v7983
    %v7985 = vpop.f32.mrb[0].mxu0
    %v7986 = vpop.f32.mrb[0].mxu0
    %v7987 = vpop.f32.mrb[0].mxu0
    %7988 = vdwg.mxu0
    %v7990 = vsel %vm1985, %v7388, 0
    %v7993 = vsel %vm2917, %v6456, 0
    %7995 = vmatprep.subr.bf16.mxu0 0
    %7996 = vmatpush1.bf16.msra.mxu0 %v7993
    %7997 = vmatprep.subr.bf16.mxu0 0
    %7998 = vmatpush1.bf16.msra.mxu0 0
    %7999 = vmatprep.subr.bf16.mxu0 0
    %8000 = vmatpush1.bf16.msra.mxu0 0
    %8001 = vmatprep.subr.bf16.mxu0 0
    %8002 = vmatpush1.bf16.msra.mxu0 0
    %8003 = vmatprep.subr.bf16.mxu0 0
    %8004 = vmatpush1.bf16.msra.mxu0 0
    %8005 = vmatprep.subr.bf16.mxu0 0
    %8006 = vmatpush1.bf16.msra.mxu0 0
    %8007 = vmatprep.subr.bf16.mxu0 0
    %8008 = vmatpush1.bf16.msra.mxu0 0
    %8009 = vmatprep.subr.bf16.mxu0 0
    %8010 = vmatpush1.bf16.msra.mxu0 0
    %8011 = vmatprep.subr.bf16.mxu0 0
    %8012 = vmatpush1.bf16.msra.mxu0 0
    %8013 = vmatprep.subr.bf16.mxu0 0
    %8014 = vmatpush1.bf16.msra.mxu0 0
    %8015 = vmatprep.subr.bf16.mxu0 0
    %8016 = vmatpush1.bf16.msra.mxu0 0
    %8017 = vmatprep.subr.bf16.mxu0 0
    %8018 = vmatpush1.bf16.msra.mxu0 0
    %8019 = vmatprep.subr.bf16.mxu0 0
    %8020 = vmatpush1.bf16.msra.mxu0 0
    %8021 = vmatprep.subr.bf16.mxu0 0
    %8022 = vmatpush1.bf16.msra.mxu0 0
    %8023 = vmatprep.subr.bf16.mxu0 0
    %8024 = vmatpush1.bf16.msra.mxu0 0
    %8025 = vmatprep.subr.bf16.mxu0 0
    %8026 = vmatpush1.bf16.msra.mxu0 0
    %8027 = vmatprep.mubr.bf16.mxu0 0
    %8028 = vmatmul.mubr.bf16.gmra.mrb[0].mxu0 %v7990
    %v8029 = vpop.f32.mrb[0].mxu0
    %v8030 = vadd.f32 0.0, %v8029
    %v8031 = vpop.f32.mrb[0].mxu0
    %v8032 = vpop.f32.mrb[0].mxu0
    %v8033 = vpop.f32.mrb[0].mxu0
    %8034 = vdwg.mxu0
    %v8036 = vsel %vm1985, %v7389, 0
    %v8039 = vsel %vm2917, %v6459, 0
    %8041 = vmatprep.subr.bf16.mxu0 0
    %8042 = vmatpush1.bf16.msra.mxu0 %v8039
    %8043 = vmatprep.subr.bf16.mxu0 0
    %8044 = vmatpush1.bf16.msra.mxu0 0
    %8045 = vmatprep.subr.bf16.mxu0 0
    %8046 = vmatpush1.bf16.msra.mxu0 0
    %8047 = vmatprep.subr.bf16.mxu0 0
    %8048 = vmatpush1.bf16.msra.mxu0 0
    %8049 = vmatprep.subr.bf16.mxu0 0
    %8050 = vmatpush1.bf16.msra.mxu0 0
    %8051 = vmatprep.subr.bf16.mxu0 0
    %8052 = vmatpush1.bf16.msra.mxu0 0
    %8053 = vmatprep.subr.bf16.mxu0 0
    %8054 = vmatpush1.bf16.msra.mxu0 0
    %8055 = vmatprep.subr.bf16.mxu0 0
    %8056 = vmatpush1.bf16.msra.mxu0 0
    %8057 = vmatprep.subr.bf16.mxu0 0
    %8058 = vmatpush1.bf16.msra.mxu0 0
    %8059 = vmatprep.subr.bf16.mxu0 0
    %8060 = vmatpush1.bf16.msra.mxu0 0
    %8061 = vmatprep.subr.bf16.mxu0 0
    %8062 = vmatpush1.bf16.msra.mxu0 0
    %8063 = vmatprep.subr.bf16.mxu0 0
    %8064 = vmatpush1.bf16.msra.mxu0 0
    %8065 = vmatprep.subr.bf16.mxu0 0
    %8066 = vmatpush1.bf16.msra.mxu0 0
    %8067 = vmatprep.subr.bf16.mxu0 0
    %8068 = vmatpush1.bf16.msra.mxu0 0
    %8069 = vmatprep.subr.bf16.mxu0 0
    %8070 = vmatpush1.bf16.msra.mxu0 0
    %8071 = vmatprep.subr.bf16.mxu0 0
    %8072 = vmatpush1.bf16.msra.mxu0 0
    %8073 = vmatprep.mubr.bf16.mxu0 0
    %8074 = vmatmul.mubr.bf16.gmra.mrb[0].mxu0 %v8036
    %v8075 = vpop.f32.mrb[0].mxu0
    %v8076 = vadd.f32 0.0, %v8075
    %v8077 = vpop.f32.mrb[0].mxu0
    %v8078 = vpop.f32.mrb[0].mxu0
    %v8079 = vpop.f32.mrb[0].mxu0
    %8080 = vdwg.mxu0
    %v8082 = vsel %vm1985, %v7390, 0
    %v8085 = vsel %vm2917, %v6462, 0
    %8087 = vmatprep.subr.bf16.mxu0 0
    %8088 = vmatpush1.bf16.msra.mxu0 %v8085
    %8089 = vmatprep.subr.bf16.mxu0 0
    %8090 = vmatpush1.bf16.msra.mxu0 0
    %8091 = vmatprep.subr.bf16.mxu0 0
    %8092 = vmatpush1.bf16.msra.mxu0 0
    %8093 = vmatprep.subr.bf16.mxu0 0
    %8094 = vmatpush1.bf16.msra.mxu0 0
    %8095 = vmatprep.subr.bf16.mxu0 0
    %8096 = vmatpush1.bf16.msra.mxu0 0
    %8097 = vmatprep.subr.bf16.mxu0 0
    %8098 = vmatpush1.bf16.msra.mxu0 0
    %8099 = vmatprep.subr.bf16.mxu0 0
    %8100 = vmatpush1.bf16.msra.mxu0 0
    %8101 = vmatprep.subr.bf16.mxu0 0
    %8102 = vmatpush1.bf16.msra.mxu0 0
    %8103 = vmatprep.subr.bf16.mxu0 0
    %8104 = vmatpush1.bf16.msra.mxu0 0
    %8105 = vmatprep.subr.bf16.mxu0 0
    %8106 = vmatpush1.bf16.msra.mxu0 0
    %8107 = vmatprep.subr.bf16.mxu0 0
    %8108 = vmatpush1.bf16.msra.mxu0 0
    %8109 = vmatprep.subr.bf16.mxu0 0
    %8110 = vmatpush1.bf16.msra.mxu0 0
    %8111 = vmatprep.subr.bf16.mxu0 0
    %8112 = vmatpush1.bf16.msra.mxu0 0
    %8113 = vmatprep.subr.bf16.mxu0 0
    %8114 = vmatpush1.bf16.msra.mxu0 0
    %8115 = vmatprep.subr.bf16.mxu0 0
    %8116 = vmatpush1.bf16.msra.mxu0 0
    %8117 = vmatprep.subr.bf16.mxu0 0
    %8118 = vmatpush1.bf16.msra.mxu0 0
    %8119 = vmatprep.mubr.bf16.mxu0 0
    %8120 = vmatmul.mubr.bf16.gmra.mrb[0].mxu0 %v8082
    %v8121 = vpop.f32.mrb[0].mxu0
    %v8122 = vadd.f32 0.0, %v8121
    %v8123 = vpop.f32.mrb[0].mxu0
    %v8124 = vpop.f32.mrb[0].mxu0
    %v8125 = vpop.f32.mrb[0].mxu0
    %8126 = vdwg.mxu0
    %v8127 = vcombine.low %v7432, %v7524
    %v8128 = vcombine.high %v7432, %v7524
    %v8130 = vunpack.c.l.s4 1983009808
    %v8131 = vunpack.c.0.s8 %v8130
    %v8132 = vlaneseq
    %v8133 = vshrl.u32 %v8132, 7
    %v8134 = vsub.s32 %v8131, %v8133
    %v8135 = vrot.slane %v8127, %v8134
    %v8137 = vunpack.c.l.s4 1983009808
    %v8138 = vunpack.c.0.s8 %v8137
    %v8139 = vlaneseq
    %v8140 = vshrl.u32 %v8139, 7
    %v8141 = vsub.s32 %v8138, %v8140
    %v8142 = vrot.slane %v8128, %v8141
    %v8143 = vcombine.low %v7478, %v7570
    %v8144 = vcombine.high %v7478, %v7570
    %v8146 = vunpack.c.l.s4 1983009808
    %v8147 = vunpack.c.0.s8 %v8146
    %v8148 = vlaneseq
    %v8149 = vshrl.u32 %v8148, 7
    %v8150 = vsub.s32 %v8147, %v8149
    %v8151 = vrot.slane %v8143, %v8150
    %v8153 = vunpack.c.l.s4 1983009808
    %v8154 = vunpack.c.0.s8 %v8153
    %v8155 = vlaneseq
    %v8156 = vshrl.u32 %v8155, 7
    %v8157 = vsub.s32 %v8154, %v8156
    %v8158 = vrot.slane %v8144, %v8157
    %v8159 = vcombine.low %v8135, %v8151
    %v8160 = vcombine.high %v8135, %v8151
    %v8162 = vunpack.c.l.s4 1934713408
    %v8163 = vunpack.c.0.s8 %v8162
    %v8164 = vlaneseq
    %v8165 = vshrl.u32 %v8164, 7
    %v8166 = vsub.s32 %v8163, %v8165
    %v8167 = vrot.slane %v8159, %v8166
    %v8169 = vunpack.c.l.s4 1934713408
    %v8170 = vunpack.c.0.s8 %v8169
    %v8171 = vlaneseq
    %v8172 = vshrl.u32 %v8171, 7
    %v8173 = vsub.s32 %v8170, %v8172
    %v8174 = vrot.slane %v8160, %v8173
    %v8175 = vcombine.low %v8142, %v8158
    %v8176 = vcombine.high %v8142, %v8158
    %v8178 = vunpack.c.l.s4 1934713408
    %v8179 = vunpack.c.0.s8 %v8178
    %v8180 = vlaneseq
    %v8181 = vshrl.u32 %v8180, 7
    %v8182 = vsub.s32 %v8179, %v8181
    %v8183 = vrot.slane %v8175, %v8182
    %v8185 = vunpack.c.l.s4 1934713408
    %v8186 = vunpack.c.0.s8 %v8185
    %v8187 = vlaneseq
    %v8188 = vshrl.u32 %v8187, 7
    %v8189 = vsub.s32 %v8186, %v8188
    %v8190 = vrot.slane %v8176, %v8189
    %v8191 = vcombine.high %v8167, 0.0
    %v8192 = vcombine.high %v8174, 0.0
    %v8193 = vcombine.high %v8183, 0.0
    %v8194 = vcombine.high %v8190, 0.0
    %v8195 = vcombine.low %v7616, %v7708
    %v8196 = vcombine.high %v7616, %v7708
    %v8198 = vunpack.c.l.s4 1983009808
    %v8199 = vunpack.c.0.s8 %v8198
    %v8200 = vlaneseq
    %v8201 = vshrl.u32 %v8200, 7
    %v8202 = vsub.s32 %v8199, %v8201
    %v8203 = vrot.slane %v8195, %v8202
    %v8205 = vunpack.c.l.s4 1983009808
    %v8206 = vunpack.c.0.s8 %v8205
    %v8207 = vlaneseq
    %v8208 = vshrl.u32 %v8207, 7
    %v8209 = vsub.s32 %v8206, %v8208
    %v8210 = vrot.slane %v8196, %v8209
    %v8211 = vcombine.low %v7662, %v7754
    %v8212 = vcombine.high %v7662, %v7754
    %v8214 = vunpack.c.l.s4 1983009808
    %v8215 = vunpack.c.0.s8 %v8214
    %v8216 = vlaneseq
    %v8217 = vshrl.u32 %v8216, 7
    %v8218 = vsub.s32 %v8215, %v8217
    %v8219 = vrot.slane %v8211, %v8218
    %v8221 = vunpack.c.l.s4 1983009808
    %v8222 = vunpack.c.0.s8 %v8221
    %v8223 = vlaneseq
    %v8224 = vshrl.u32 %v8223, 7
    %v8225 = vsub.s32 %v8222, %v8224
    %v8226 = vrot.slane %v8212, %v8225
    %v8227 = vcombine.low %v8203, %v8219
    %v8228 = vcombine.high %v8203, %v8219
    %v8230 = vunpack.c.l.s4 1934713408
    %v8231 = vunpack.c.0.s8 %v8230
    %v8232 = vlaneseq
    %v8233 = vshrl.u32 %v8232, 7
    %v8234 = vsub.s32 %v8231, %v8233
    %v8235 = vrot.slane %v8227, %v8234
    %v8237 = vunpack.c.l.s4 1934713408
    %v8238 = vunpack.c.0.s8 %v8237
    %v8239 = vlaneseq
    %v8240 = vshrl.u32 %v8239, 7
    %v8241 = vsub.s32 %v8238, %v8240
    %v8242 = vrot.slane %v8228, %v8241
    %v8243 = vcombine.low %v8210, %v8226
    %v8244 = vcombine.high %v8210, %v8226
    %v8246 = vunpack.c.l.s4 1934713408
    %v8247 = vunpack.c.0.s8 %v8246
    %v8248 = vlaneseq
    %v8249 = vshrl.u32 %v8248, 7
    %v8250 = vsub.s32 %v8247, %v8249
    %v8251 = vrot.slane %v8243, %v8250
    %v8253 = vunpack.c.l.s4 1934713408
    %v8254 = vunpack.c.0.s8 %v8253
    %v8255 = vlaneseq
    %v8256 = vshrl.u32 %v8255, 7
    %v8257 = vsub.s32 %v8254, %v8256
    %v8258 = vrot.slane %v8244, %v8257
    %v8259 = vcombine.high %v8235, 0.0
    %v8260 = vcombine.high %v8242, 0.0
    %v8261 = vcombine.high %v8251, 0.0
    %v8262 = vcombine.high %v8258, 0.0
    %v8263 = vcombine.low %v7800, %v7892
    %v8264 = vcombine.high %v7800, %v7892
    %v8266 = vunpack.c.l.s4 1983009808
    %v8267 = vunpack.c.0.s8 %v8266
    %v8268 = vlaneseq
    %v8269 = vshrl.u32 %v8268, 7
    %v8270 = vsub.s32 %v8267, %v8269
    %v8271 = vrot.slane %v8263, %v8270
    %v8273 = vunpack.c.l.s4 1983009808
    %v8274 = vunpack.c.0.s8 %v8273
    %v8275 = vlaneseq
    %v8276 = vshrl.u32 %v8275, 7
    %v8277 = vsub.s32 %v8274, %v8276
    %v8278 = vrot.slane %v8264, %v8277
    %v8279 = vcombine.low %v7846, %v7938
    %v8280 = vcombine.high %v7846, %v7938
    %v8282 = vunpack.c.l.s4 1983009808
    %v8283 = vunpack.c.0.s8 %v8282
    %v8284 = vlaneseq
    %v8285 = vshrl.u32 %v8284, 7
    %v8286 = vsub.s32 %v8283, %v8285
    %v8287 = vrot.slane %v8279, %v8286
    %v8289 = vunpack.c.l.s4 1983009808
    %v8290 = vunpack.c.0.s8 %v8289
    %v8291 = vlaneseq
    %v8292 = vshrl.u32 %v8291, 7
    %v8293 = vsub.s32 %v8290, %v8292
    %v8294 = vrot.slane %v8280, %v8293
    %v8295 = vcombine.low %v8271, %v8287
    %v8296 = vcombine.high %v8271, %v8287
    %v8298 = vunpack.c.l.s4 1934713408
    %v8299 = vunpack.c.0.s8 %v8298
    %v8300 = vlaneseq
    %v8301 = vshrl.u32 %v8300, 7
    %v8302 = vsub.s32 %v8299, %v8301
    %v8303 = vrot.slane %v8295, %v8302
    %v8305 = vunpack.c.l.s4 1934713408
    %v8306 = vunpack.c.0.s8 %v8305
    %v8307 = vlaneseq
    %v8308 = vshrl.u32 %v8307, 7
    %v8309 = vsub.s32 %v8306, %v8308
    %v8310 = vrot.slane %v8296, %v8309
    %v8311 = vcombine.low %v8278, %v8294
    %v8312 = vcombine.high %v8278, %v8294
    %v8314 = vunpack.c.l.s4 1934713408
    %v8315 = vunpack.c.0.s8 %v8314
    %v8316 = vlaneseq
    %v8317 = vshrl.u32 %v8316, 7
    %v8318 = vsub.s32 %v8315, %v8317
    %v8319 = vrot.slane %v8311, %v8318
    %v8321 = vunpack.c.l.s4 1934713408
    %v8322 = vunpack.c.0.s8 %v8321
    %v8323 = vlaneseq
    %v8324 = vshrl.u32 %v8323, 7
    %v8325 = vsub.s32 %v8322, %v8324
    %v8326 = vrot.slane %v8312, %v8325
    %v8327 = vcombine.high %v8303, 0.0
    %v8328 = vcombine.high %v8310, 0.0
    %v8329 = vcombine.high %v8319, 0.0
    %v8330 = vcombine.high %v8326, 0.0
    %v8331 = vcombine.low %v7984, %v8076
    %v8332 = vcombine.high %v7984, %v8076
    %v8334 = vunpack.c.l.s4 1983009808
    %v8335 = vunpack.c.0.s8 %v8334
    %v8336 = vlaneseq
    %v8337 = vshrl.u32 %v8336, 7
    %v8338 = vsub.s32 %v8335, %v8337
    %v8339 = vrot.slane %v8331, %v8338
    %v8341 = vunpack.c.l.s4 1983009808
    %v8342 = vunpack.c.0.s8 %v8341
    %v8343 = vlaneseq
    %v8344 = vshrl.u32 %v8343, 7
    %v8345 = vsub.s32 %v8342, %v8344
    %v8346 = vrot.slane %v8332, %v8345
    %v8347 = vcombine.low %v8030, %v8122
    %v8348 = vcombine.high %v8030, %v8122
    %v8350 = vunpack.c.l.s4 1983009808
    %v8351 = vunpack.c.0.s8 %v8350
    %v8352 = vlaneseq
    %v8353 = vshrl.u32 %v8352, 7
    %v8354 = vsub.s32 %v8351, %v8353
    %v8355 = vrot.slane %v8347, %v8354
    %v8357 = vunpack.c.l.s4 1983009808
    %v8358 = vunpack.c.0.s8 %v8357
    %v8359 = vlaneseq
    %v8360 = vshrl.u32 %v8359, 7
    %v8361 = vsub.s32 %v8358, %v8360
    %v8362 = vrot.slane %v8348, %v8361
    %v8363 = vcombine.low %v8339, %v8355
    %v8364 = vcombine.high %v8339, %v8355
    %v8366 = vunpack.c.l.s4 1934713408
    %v8367 = vunpack.c.0.s8 %v8366
    %v8368 = vlaneseq
    %v8369 = vshrl.u32 %v8368, 7
    %v8370 = vsub.s32 %v8367, %v8369
    %v8371 = vrot.slane %v8363, %v8370
    %v8373 = vunpack.c.l.s4 1934713408
    %v8374 = vunpack.c.0.s8 %v8373
    %v8375 = vlaneseq
    %v8376 = vshrl.u32 %v8375, 7
    %v8377 = vsub.s32 %v8374, %v8376
    %v8378 = vrot.slane %v8364, %v8377
    %v8379 = vcombine.low %v8346, %v8362
    %v8380 = vcombine.high %v8346, %v8362
    %v8382 = vunpack.c.l.s4 1934713408
    %v8383 = vunpack.c.0.s8 %v8382
    %v8384 = vlaneseq
    %v8385 = vshrl.u32 %v8384, 7
    %v8386 = vsub.s32 %v8383, %v8385
    %v8387 = vrot.slane %v8379, %v8386
    %v8389 = vunpack.c.l.s4 1934713408
    %v8390 = vunpack.c.0.s8 %v8389
    %v8391 = vlaneseq
    %v8392 = vshrl.u32 %v8391, 7
    %v8393 = vsub.s32 %v8390, %v8392
    %v8394 = vrot.slane %v8380, %v8393
    %v8395 = vcombine.high %v8371, 0.0
    %v8396 = vcombine.high %v8378, 0.0
    %v8397 = vcombine.high %v8387, 0.0
    %v8398 = vcombine.high %v8394, 0.0
    %v8399 = vcombine.low %v8167, %v8174
    %v8401 = vunpack.c.l.s4 1983009808
    %v8402 = vunpack.c.0.s8 %v8401
    %v8403 = vlaneseq
    %v8404 = vshrl.u32 %v8403, 7
    %v8405 = vsub.s32 %v8402, %v8404
    %v8406 = vrot.slane %v8399, %v8405
    %v8407 = vcombine.low %v8191, %v8192
    %v8409 = vunpack.c.l.s4 1983009808
    %v8410 = vunpack.c.0.s8 %v8409
    %v8411 = vlaneseq
    %v8412 = vshrl.u32 %v8411, 7
    %v8413 = vsub.s32 %v8410, %v8412
    %v8414 = vrot.slane %v8407, %v8413
    %v8415 = vcombine.low %v8183, %v8190
    %v8417 = vunpack.c.l.s4 1983009808
    %v8418 = vunpack.c.0.s8 %v8417
    %v8419 = vlaneseq
    %v8420 = vshrl.u32 %v8419, 7
    %v8421 = vsub.s32 %v8418, %v8420
    %v8422 = vrot.slane %v8415, %v8421
    %v8423 = vcombine.low %v8193, %v8194
    %v8425 = vunpack.c.l.s4 1983009808
    %v8426 = vunpack.c.0.s8 %v8425
    %v8427 = vlaneseq
    %v8428 = vshrl.u32 %v8427, 7
    %v8429 = vsub.s32 %v8426, %v8428
    %v8430 = vrot.slane %v8423, %v8429
    %v8431 = vcombine.low %v8406, %v8414
    %v8432 = vcombine.high %v8406, %v8414
    %v8434 = vunpack.c.l.s4 1934713408
    %v8435 = vunpack.c.0.s8 %v8434
    %v8436 = vlaneseq
    %v8437 = vshrl.u32 %v8436, 7
    %v8438 = vsub.s32 %v8435, %v8437
    %v8439 = vrot.slane %v8431, %v8438
    %v8441 = vunpack.c.l.s4 1934713408
    %v8442 = vunpack.c.0.s8 %v8441
    %v8443 = vlaneseq
    %v8444 = vshrl.u32 %v8443, 7
    %v8445 = vsub.s32 %v8442, %v8444
    %v8446 = vrot.slane %v8432, %v8445
    %v8447 = vcombine.low %v8422, %v8430
    %v8448 = vcombine.high %v8422, %v8430
    %v8450 = vunpack.c.l.s4 1934713408
    %v8451 = vunpack.c.0.s8 %v8450
    %v8452 = vlaneseq
    %v8453 = vshrl.u32 %v8452, 7
    %v8454 = vsub.s32 %v8451, %v8453
    %v8455 = vrot.slane %v8447, %v8454
    %v8457 = vunpack.c.l.s4 1934713408
    %v8458 = vunpack.c.0.s8 %v8457
    %v8459 = vlaneseq
    %v8460 = vshrl.u32 %v8459, 7
    %v8461 = vsub.s32 %v8458, %v8460
    %v8462 = vrot.slane %v8448, %v8461
    %v8463 = vcombine.low %v8439, %v8455
    %v8464 = vcombine.high %v8439, %v8455
    %v8465 = vcombine.low %v8446, %v8462
    %v8466 = vcombine.high %v8446, %v8462
    %v8467 = vcombine.low %v8235, %v8242
    %v8469 = vunpack.c.l.s4 1983009808
    %v8470 = vunpack.c.0.s8 %v8469
    %v8471 = vlaneseq
    %v8472 = vshrl.u32 %v8471, 7
    %v8473 = vsub.s32 %v8470, %v8472
    %v8474 = vrot.slane %v8467, %v8473
    %v8475 = vcombine.low %v8259, %v8260
    %v8477 = vunpack.c.l.s4 1983009808
    %v8478 = vunpack.c.0.s8 %v8477
    %v8479 = vlaneseq
    %v8480 = vshrl.u32 %v8479, 7
    %v8481 = vsub.s32 %v8478, %v8480
    %v8482 = vrot.slane %v8475, %v8481
    %v8483 = vcombine.low %v8251, %v8258
    %v8485 = vunpack.c.l.s4 1983009808
    %v8486 = vunpack.c.0.s8 %v8485
    %v8487 = vlaneseq
    %v8488 = vshrl.u32 %v8487, 7
    %v8489 = vsub.s32 %v8486, %v8488
    %v8490 = vrot.slane %v8483, %v8489
    %v8491 = vcombine.low %v8261, %v8262
    %v8493 = vunpack.c.l.s4 1983009808
    %v8494 = vunpack.c.0.s8 %v8493
    %v8495 = vlaneseq
    %v8496 = vshrl.u32 %v8495, 7
    %v8497 = vsub.s32 %v8494, %v8496
    %v8498 = vrot.slane %v8491, %v8497
    %v8499 = vcombine.low %v8474, %v8482
    %v8500 = vcombine.high %v8474, %v8482
    %v8502 = vunpack.c.l.s4 1934713408
    %v8503 = vunpack.c.0.s8 %v8502
    %v8504 = vlaneseq
    %v8505 = vshrl.u32 %v8504, 7
    %v8506 = vsub.s32 %v8503, %v8505
    %v8507 = vrot.slane %v8499, %v8506
    %v8509 = vunpack.c.l.s4 1934713408
    %v8510 = vunpack.c.0.s8 %v8509
    %v8511 = vlaneseq
    %v8512 = vshrl.u32 %v8511, 7
    %v8513 = vsub.s32 %v8510, %v8512
    %v8514 = vrot.slane %v8500, %v8513
    %v8515 = vcombine.low %v8490, %v8498
    %v8516 = vcombine.high %v8490, %v8498
    %v8518 = vunpack.c.l.s4 1934713408
    %v8519 = vunpack.c.0.s8 %v8518
    %v8520 = vlaneseq
    %v8521 = vshrl.u32 %v8520, 7
    %v8522 = vsub.s32 %v8519, %v8521
    %v8523 = vrot.slane %v8515, %v8522
    %v8525 = vunpack.c.l.s4 1934713408
    %v8526 = vunpack.c.0.s8 %v8525
    %v8527 = vlaneseq
    %v8528 = vshrl.u32 %v8527, 7
    %v8529 = vsub.s32 %v8526, %v8528
    %v8530 = vrot.slane %v8516, %v8529
    %v8531 = vcombine.low %v8507, %v8523
    %v8532 = vcombine.high %v8507, %v8523
    %v8533 = vcombine.low %v8514, %v8530
    %v8534 = vcombine.high %v8514, %v8530
    %v8535 = vcombine.low %v8303, %v8310
    %v8537 = vunpack.c.l.s4 1983009808
    %v8538 = vunpack.c.0.s8 %v8537
    %v8539 = vlaneseq
    %v8540 = vshrl.u32 %v8539, 7
    %v8541 = vsub.s32 %v8538, %v8540
    %v8542 = vrot.slane %v8535, %v8541
    %v8543 = vcombine.low %v8327, %v8328
    %v8545 = vunpack.c.l.s4 1983009808
    %v8546 = vunpack.c.0.s8 %v8545
    %v8547 = vlaneseq
    %v8548 = vshrl.u32 %v8547, 7
    %v8549 = vsub.s32 %v8546, %v8548
    %v8550 = vrot.slane %v8543, %v8549
    %v8551 = vcombine.low %v8319, %v8326
    %v8553 = vunpack.c.l.s4 1983009808
    %v8554 = vunpack.c.0.s8 %v8553
    %v8555 = vlaneseq
    %v8556 = vshrl.u32 %v8555, 7
    %v8557 = vsub.s32 %v8554, %v8556
    %v8558 = vrot.slane %v8551, %v8557
    %v8559 = vcombine.low %v8329, %v8330
    %v8561 = vunpack.c.l.s4 1983009808
    %v8562 = vunpack.c.0.s8 %v8561
    %v8563 = vlaneseq
    %v8564 = vshrl.u32 %v8563, 7
    %v8565 = vsub.s32 %v8562, %v8564
    %v8566 = vrot.slane %v8559, %v8565
    %v8567 = vcombine.low %v8542, %v8550
    %v8568 = vcombine.high %v8542, %v8550
    %v8570 = vunpack.c.l.s4 1934713408
    %v8571 = vunpack.c.0.s8 %v8570
    %v8572 = vlaneseq
    %v8573 = vshrl.u32 %v8572, 7
    %v8574 = vsub.s32 %v8571, %v8573
    %v8575 = vrot.slane %v8567, %v8574
    %v8577 = vunpack.c.l.s4 1934713408
    %v8578 = vunpack.c.0.s8 %v8577
    %v8579 = vlaneseq
    %v8580 = vshrl.u32 %v8579, 7
    %v8581 = vsub.s32 %v8578, %v8580
    %v8582 = vrot.slane %v8568, %v8581
    %v8583 = vcombine.low %v8558, %v8566
    %v8584 = vcombine.high %v8558, %v8566
    %v8586 = vunpack.c.l.s4 1934713408
    %v8587 = vunpack.c.0.s8 %v8586
    %v8588 = vlaneseq
    %v8589 = vshrl.u32 %v8588, 7
    %v8590 = vsub.s32 %v8587, %v8589
    %v8591 = vrot.slane %v8583, %v8590
    %v8593 = vunpack.c.l.s4 1934713408
    %v8594 = vunpack.c.0.s8 %v8593
    %v8595 = vlaneseq
    %v8596 = vshrl.u32 %v8595, 7
    %v8597 = vsub.s32 %v8594, %v8596
    %v8598 = vrot.slane %v8584, %v8597
    %v8599 = vcombine.low %v8575, %v8591
    %v8600 = vcombine.high %v8575, %v8591
    %v8601 = vcombine.low %v8582, %v8598
    %v8602 = vcombine.high %v8582, %v8598
    %v8603 = vcombine.low %v8371, %v8378
    %v8605 = vunpack.c.l.s4 1983009808
    %v8606 = vunpack.c.0.s8 %v8605
    %v8607 = vlaneseq
    %v8608 = vshrl.u32 %v8607, 7
    %v8609 = vsub.s32 %v8606, %v8608
    %v8610 = vrot.slane %v8603, %v8609
    %v8611 = vcombine.low %v8395, %v8396
    %v8613 = vunpack.c.l.s4 1983009808
    %v8614 = vunpack.c.0.s8 %v8613
    %v8615 = vlaneseq
    %v8616 = vshrl.u32 %v8615, 7
    %v8617 = vsub.s32 %v8614, %v8616
    %v8618 = vrot.slane %v8611, %v8617
    %v8619 = vcombine.low %v8387, %v8394
    %v8621 = vunpack.c.l.s4 1983009808
    %v8622 = vunpack.c.0.s8 %v8621
    %v8623 = vlaneseq
    %v8624 = vshrl.u32 %v8623, 7
    %v8625 = vsub.s32 %v8622, %v8624
    %v8626 = vrot.slane %v8619, %v8625
    %v8627 = vcombine.low %v8397, %v8398
    %v8629 = vunpack.c.l.s4 1983009808
    %v8630 = vunpack.c.0.s8 %v8629
    %v8631 = vlaneseq
    %v8632 = vshrl.u32 %v8631, 7
    %v8633 = vsub.s32 %v8630, %v8632
    %v8634 = vrot.slane %v8627, %v8633
    %v8635 = vcombine.low %v8610, %v8618
    %v8636 = vcombine.high %v8610, %v8618
    %v8638 = vunpack.c.l.s4 1934713408
    %v8639 = vunpack.c.0.s8 %v8638
    %v8640 = vlaneseq
    %v8641 = vshrl.u32 %v8640, 7
    %v8642 = vsub.s32 %v8639, %v8641
    %v8643 = vrot.slane %v8635, %v8642
    %v8645 = vunpack.c.l.s4 1934713408
    %v8646 = vunpack.c.0.s8 %v8645
    %v8647 = vlaneseq
    %v8648 = vshrl.u32 %v8647, 7
    %v8649 = vsub.s32 %v8646, %v8648
    %v8650 = vrot.slane %v8636, %v8649
    %v8651 = vcombine.low %v8626, %v8634
    %v8652 = vcombine.high %v8626, %v8634
    %v8654 = vunpack.c.l.s4 1934713408
    %v8655 = vunpack.c.0.s8 %v8654
    %v8656 = vlaneseq
    %v8657 = vshrl.u32 %v8656, 7
    %v8658 = vsub.s32 %v8655, %v8657
    %v8659 = vrot.slane %v8651, %v8658
    %v8661 = vunpack.c.l.s4 1934713408
    %v8662 = vunpack.c.0.s8 %v8661
    %v8663 = vlaneseq
    %v8664 = vshrl.u32 %v8663, 7
    %v8665 = vsub.s32 %v8662, %v8664
    %v8666 = vrot.slane %v8652, %v8665
    %v8667 = vcombine.low %v8643, %v8659
    %v8668 = vcombine.high %v8643, %v8659
    %v8669 = vcombine.low %v8650, %v8666
    %v8670 = vcombine.high %v8650, %v8666
    %8675 = vrot.lane.b32.xlu0 %v8464, 8
    %v8676 = vpop.permute.xlu0 %8675
    %8677 = vrot.lane.b32.xlu0 %v8532, 8
    %v8678 = vpop.permute.xlu0 %8677
    %8679 = vrot.lane.b32.xlu0 %v8600, 8
    %v8680 = vpop.permute.xlu0 %8679
    %8681 = vrot.lane.b32.xlu0 %v8668, 8
    %v8682 = vpop.permute.xlu0 %8681
    %8691 = vrot.lane.b32.xlu0 %v8465, 16
    %v8692 = vpop.permute.xlu0 %8691
    %8693 = vrot.lane.b32.xlu0 %v8533, 16
    %v8694 = vpop.permute.xlu0 %8693
    %8695 = vrot.lane.b32.xlu0 %v8601, 16
    %v8696 = vpop.permute.xlu0 %8695
    %8697 = vrot.lane.b32.xlu0 %v8669, 16
    %v8698 = vpop.permute.xlu0 %8697
    %8707 = vrot.lane.b32.xlu0 %v8466, 24
    %v8708 = vpop.permute.xlu0 %8707
    %8709 = vrot.lane.b32.xlu0 %v8534, 24
    %v8710 = vpop.permute.xlu0 %8709
    %8711 = vrot.lane.b32.xlu0 %v8602, 24
    %v8712 = vpop.permute.xlu0 %8711
    %8713 = vrot.lane.b32.xlu0 %v8670, 24
    %v8714 = vpop.permute.xlu0 %8713
    %v8719 = vsel %vm1985, %v8463, %v8676
    %v8720 = vsel %vm1985, %v8531, %v8678
    %v8721 = vsel %vm1985, %v8599, %v8680
    %v8722 = vsel %vm1985, %v8667, %v8682
    %v8723 = vsel %vm4247, %v8719, %v8692
    %v8724 = vsel %vm4247, %v8720, %v8694
    %v8725 = vsel %vm4247, %v8721, %v8696
    %v8726 = vsel %vm4247, %v8722, %v8698
    %v8727 = vsel %vm4252, %v8723, %v8708
    %v8728 = vsel %vm4252, %v8724, %v8710
    %v8729 = vsel %vm4252, %v8725, %v8712
    %v8730 = vsel %vm4252, %v8726, %v8714
    %v8731 = vpack.c.bf16 %v8728, %v8727
    %v8732 = vpack.c.bf16 %v8730, %v8729
    %v8734 = vlaneseq
    %v8735 = vshrl.u32 %v8734, 7
    %v8736 = vsub.s32 0, %v8735
    %v8737 = vrot.slane %v139, %v8736
    %v8743 = vunpack.c.l.b16 %v134
    %v8744 = vunpack.c.l.b16 %v135
    %v8745 = vunpack.c.l.b16 %v136
    %v8746 = vunpack.c.l.b16 %v137
    %v8747 = vpack.c.b16 %v8744, %v8743
    %v8748 = vpack.c.b16 %v8746, %v8745
    %v8752 = vsel %vm243, %v8731, 0
    %v8755 = vsel %vm243, %v8732, 0
    %8757 = vmatprep.subr.bf16.mxu0 0
    %8758 = vmatpush1.bf16.msra.mxu0 %v8747
    %8759 = vmatprep.subr.bf16.mxu0 0
    %8760 = vmatpush1.bf16.msra.mxu0 %v8748
    %8761 = vmatprep.subr.bf16.mxu0 0
    %8762 = vmatpush1.bf16.msra.mxu0 0
    %8763 = vmatprep.subr.bf16.mxu0 0
    %8764 = vmatpush1.bf16.msra.mxu0 0
    %8765 = vmatprep.subr.bf16.mxu0 0
    %8766 = vmatpush1.bf16.msra.mxu0 0
    %8767 = vmatprep.subr.bf16.mxu0 0
    %8768 = vmatpush1.bf16.msra.mxu0 0
    %8769 = vmatprep.subr.bf16.mxu0 0
    %8770 = vmatpush1.bf16.msra.mxu0 0
    %8771 = vmatprep.subr.bf16.mxu0 0
    %8772 = vmatpush1.bf16.msra.mxu0 0
    %8773 = vmatprep.subr.bf16.mxu0 0
    %8774 = vmatpush1.bf16.msra.mxu0 0
    %8775 = vmatprep.subr.bf16.mxu0 0
    %8776 = vmatpush1.bf16.msra.mxu0 0
    %8777 = vmatprep.subr.bf16.mxu0 0
    %8778 = vmatpush1.bf16.msra.mxu0 0
    %8779 = vmatprep.subr.bf16.mxu0 0
    %8780 = vmatpush1.bf16.msra.mxu0 0
    %8781 = vmatprep.subr.bf16.mxu0 0
    %8782 = vmatpush1.bf16.msra.mxu0 0
    %8783 = vmatprep.subr.bf16.mxu0 0
    %8784 = vmatpush1.bf16.msra.mxu0 0
    %8785 = vmatprep.subr.bf16.mxu0 0
    %8786 = vmatpush1.bf16.msra.mxu0 0
    %8787 = vmatprep.subr.bf16.mxu0 0
    %8788 = vmatpush1.bf16.msra.mxu0 0
    %8789 = vmatprep.mubr.bf16.mxu0 0
    %8790 = vmatmul.mubr.bf16.gmra.mrb[0].mxu0 %v8752
    %v8791 = vpop.f32.mrb[0].mxu0
    %v8792 = vadd.f32 %v8737, %v8791
    %v8793 = vpop.f32.mrb[0].mxu0
    %v8794 = vpop.f32.mrb[0].mxu0
    %v8795 = vadd.f32 %v8737, %v8794
    %v8796 = vpop.f32.mrb[0].mxu0
    %8797 = vmatprep.mubr.bf16.mxu0 0
    %8798 = vmatmul.mubr.bf16.gmra.mrb[0].mxu0 %v8755
    %v8799 = vpop.f32.mrb[0].mxu0
    %v8800 = vadd.f32 %v8737, %v8799
    %v8801 = vpop.f32.mrb[0].mxu0
    %v8802 = vpop.f32.mrb[0].mxu0
    %v8803 = vadd.f32 %v8737, %v8802
    %v8804 = vpop.f32.mrb[0].mxu0
    %8805 = vdwg.mxu0
    %v8806 = vadd.f32 %v4704, %v8792
    %v8807 = vadd.f32 %v4705, %v8795
    %v8808 = vadd.f32 %v4706, %v8800
    %v8809 = vadd.f32 %v4707, %v8803
    %v8810 = vsel %vm243, %v8806, 0.0
    %8811 = vadd.xlane.f32.xlu0 %v8810
    %v8812 = vpop.xlane.xlu0 %8811
    %v8813 = vsel %vm243, %v8807, 0.0
    %8814 = vadd.xlane.f32.xlu0 %v8813
    %v8815 = vpop.xlane.xlu0 %8814
    %v8816 = vsel %vm243, %v8808, 0.0
    %8817 = vadd.xlane.f32.xlu0 %v8816
    %v8818 = vpop.xlane.xlu0 %8817
    %v8819 = vsel %vm243, %v8809, 0.0
    %8820 = vadd.xlane.f32.xlu0 %v8819
    %v8821 = vpop.xlane.xlu0 %8820
    %v8822 = vmul.f32 %v8812, %v4348
    %v8823 = vmul.f32 %v8815, %v4348
    %v8824 = vmul.f32 %v8818, %v4348
    %v8825 = vmul.f32 %v8821, %v4348
    %v8826 = vmul.f32 %v8806, %v8806
    %v8827 = vmul.f32 %v8807, %v8807
    %v8828 = vmul.f32 %v8808, %v8808
    %v8829 = vmul.f32 %v8809, %v8809
    %v8830 = vsel %vm243, %v8826, 0.0
    %8831 = vadd.xlane.f32.xlu0 %v8830
    %v8832 = vpop.xlane.xlu0 %8831
    %v8833 = vsel %vm243, %v8827, 0.0
    %8834 = vadd.xlane.f32.xlu0 %v8833
    %v8835 = vpop.xlane.xlu0 %8834
    %v8836 = vsel %vm243, %v8828, 0.0
    %8837 = vadd.xlane.f32.xlu0 %v8836
    %v8838 = vpop.xlane.xlu0 %8837
    %v8839 = vsel %vm243, %v8829, 0.0
    %8840 = vadd.xlane.f32.xlu0 %v8839
    %v8841 = vpop.xlane.xlu0 %8840
    %v8842 = vmul.f32 %v8832, %v4348
    %v8843 = vmul.f32 %v8835, %v4348
    %v8844 = vmul.f32 %v8838, %v4348
    %v8845 = vmul.f32 %v8841, %v4348
    %v8846 = vmul.f32 %v8822, %v8822
    %v8847 = vmul.f32 %v8823, %v8823
    %v8848 = vmul.f32 %v8824, %v8824
    %v8849 = vmul.f32 %v8825, %v8825
    %v8850 = vsub.f32 %v8842, %v8846
    %v8851 = vsub.f32 %v8843, %v8847
    %v8852 = vsub.f32 %v8844, %v8848
    %v8853 = vsub.f32 %v8845, %v8849
    %v8854 = vmax.f32 %v8850, 0.0
    %v8855 = vmax.f32 %v8851, 0.0
    %v8856 = vmax.f32 %v8852, 0.0
    %v8857 = vmax.f32 %v8853, 0.0
    %v8858 = vsub.f32 %v8806, %v8822
    %v8859 = vsub.f32 %v8807, %v8823
    %v8860 = vsub.f32 %v8808, %v8824
    %v8861 = vsub.f32 %v8809, %v8825
    %v8862 = vadd.f32 %v8854, 1e-12
    %v8863 = vadd.f32 %v8855, 1e-12
    %v8864 = vadd.f32 %v8856, 1e-12
    %v8865 = vadd.f32 %v8857, 1e-12
    %v8866 = vrsqrt.pop %v8862
    %v8867 = vrsqrt.pop %v8863
    %v8868 = vrsqrt.pop %v8864
    %v8869 = vrsqrt.pop %v8865
    %v8870 = vmul.f32 %v8858, %v8866
    %v8871 = vmul.f32 %v8859, %v8867
    %v8872 = vmul.f32 %v8860, %v8868
    %v8873 = vmul.f32 %v8861, %v8869
    %v8875 = vlaneseq
    %v8876 = vshrl.u32 %v8875, 7
    %v8877 = vsub.s32 0, %v8876
    %v8878 = vrot.slane %v141, %v8877
    %v8880 = vmul.f32 %v8870, %v8878
    %v8881 = vmul.f32 %v8871, %v8878
    %v8882 = vmul.f32 %v8872, %v8878
    %v8883 = vmul.f32 %v8873, %v8878
    %v8885 = vlaneseq
    %v8886 = vshrl.u32 %v8885, 7
    %v8887 = vsub.s32 0, %v8886
    %v8888 = vrot.slane %v143, %v8887
    %v8890 = vadd.f32 %v8880, %v8888
    %v8891 = vadd.f32 %v8881, %v8888
    %v8892 = vadd.f32 %v8882, %v8888
    %v8893 = vadd.f32 %v8883, %v8888
    %v8894 = vpack.c.bf16 %v8891, %v8890
    %v8895 = vpack.c.bf16 %v8893, %v8892
    %v8897 = vlaneseq
    %v8898 = vshrl.u32 %v8897, 7
    %v8899 = vsub.s32 0, %v8898
    %v8900 = vrot.slane %v153, %v8899
    %v8906 = vunpack.c.l.b16 %v148
    %v8907 = vunpack.c.l.b16 %v149
    %v8908 = vunpack.c.l.b16 %v150
    %v8909 = vunpack.c.l.b16 %v151
    %v8910 = vpack.c.b16 %v8907, %v8906
    %v8911 = vpack.c.b16 %v8909, %v8908
    %v8915 = vsel %vm243, %v8894, 0
    %v8918 = vsel %vm243, %v8895, 0
    %8920 = vmatprep.subr.bf16.mxu0 0
    %8921 = vmatpush1.bf16.msra.mxu0 %v8910
    %8922 = vmatprep.subr.bf16.mxu0 0
    %8923 = vmatpush1.bf16.msra.mxu0 %v8911
    %8924 = vmatprep.subr.bf16.mxu0 0
    %8925 = vmatpush1.bf16.msra.mxu0 0
    %8926 = vmatprep.subr.bf16.mxu0 0
    %8927 = vmatpush1.bf16.msra.mxu0 0
    %8928 = vmatprep.subr.bf16.mxu0 0
    %8929 = vmatpush1.bf16.msra.mxu0 0
    %8930 = vmatprep.subr.bf16.mxu0 0
    %8931 = vmatpush1.bf16.msra.mxu0 0
    %8932 = vmatprep.subr.bf16.mxu0 0
    %8933 = vmatpush1.bf16.msra.mxu0 0
    %8934 = vmatprep.subr.bf16.mxu0 0
    %8935 = vmatpush1.bf16.msra.mxu0 0
    %8936 = vmatprep.subr.bf16.mxu0 0
    %8937 = vmatpush1.bf16.msra.mxu0 0
    %8938 = vmatprep.subr.bf16.mxu0 0
    %8939 = vmatpush1.bf16.msra.mxu0 0
    %8940 = vmatprep.subr.bf16.mxu0 0
    %8941 = vmatpush1.bf16.msra.mxu0 0
    %8942 = vmatprep.subr.bf16.mxu0 0
    %8943 = vmatpush1.bf16.msra.mxu0 0
    %8944 = vmatprep.subr.bf16.mxu0 0
    %8945 = vmatpush1.bf16.msra.mxu0 0
    %8946 = vmatprep.subr.bf16.mxu0 0
    %8947 = vmatpush1.bf16.msra.mxu0 0
    %8948 = vmatprep.subr.bf16.mxu0 0
    %8949 = vmatpush1.bf16.msra.mxu0 0
    %8950 = vmatprep.subr.bf16.mxu0 0
    %8951 = vmatpush1.bf16.msra.mxu0 0
    %8952 = vmatprep.mubr.bf16.mxu0 0
    %8953 = vmatmul.mubr.bf16.gmra.mrb[0].mxu0 %v8915
    %v8954 = vpop.f32.mrb[0].mxu0
    %v8955 = vadd.f32 %v8900, %v8954
    %v8956 = vpop.f32.mrb[0].mxu0
    %v8957 = vpop.f32.mrb[0].mxu0
    %v8958 = vadd.f32 %v8900, %v8957
    %v8959 = vpop.f32.mrb[0].mxu0
    %8960 = vmatprep.mubr.bf16.mxu0 0
    %8961 = vmatmul.mubr.bf16.gmra.mrb[0].mxu0 %v8918
    %v8962 = vpop.f32.mrb[0].mxu0
    %v8963 = vadd.f32 %v8900, %v8962
    %v8964 = vpop.f32.mrb[0].mxu0
    %v8965 = vpop.f32.mrb[0].mxu0
    %v8966 = vadd.f32 %v8900, %v8965
    %v8967 = vpop.f32.mrb[0].mxu0
    %8968 = vdwg.mxu0
    %v8969 = vmul.f32 %v8955, 0.5
    %v8970 = vmul.f32 %v8958, 0.5
    %v8971 = vmul.f32 %v8963, 0.5
    %v8972 = vmul.f32 %v8966, 0.5
    %v8973 = vmul.f32 %v8955, 0.044715
    %v8974 = vmul.f32 %v8958, 0.044715
    %v8975 = vmul.f32 %v8963, 0.044715
    %v8976 = vmul.f32 %v8966, 0.044715
    %v8977 = vmul.f32 %v8973, %v8955
    %v8978 = vmul.f32 %v8974, %v8958
    %v8979 = vmul.f32 %v8975, %v8963
    %v8980 = vmul.f32 %v8976, %v8966
    %v8981 = vmul.f32 %v8977, %v8955
    %v8982 = vmul.f32 %v8978, %v8958
    %v8983 = vmul.f32 %v8979, %v8963
    %v8984 = vmul.f32 %v8980, %v8966
    %v8985 = vadd.f32 %v8955, %v8981
    %v8986 = vadd.f32 %v8958, %v8982
    %v8987 = vadd.f32 %v8963, %v8983
    %v8988 = vadd.f32 %v8966, %v8984
    %v8989 = vmul.f32 %v8985, 0.7978846
    %v8990 = vmul.f32 %v8986, 0.7978846
    %v8991 = vmul.f32 %v8987, 0.7978846
    %v8992 = vmul.f32 %v8988, 0.7978846
    %v8993 = vtanh.pop %v8989
    %v8994 = vtanh.pop %v8990
    %v8995 = vtanh.pop %v8991
    %v8996 = vtanh.pop %v8992
    %v8997 = vadd.f32 %v8993, 1.0
    %v8998 = vadd.f32 %v8994, 1.0
    %v8999 = vadd.f32 %v8995, 1.0
    %v9000 = vadd.f32 %v8996, 1.0
    %v9001 = vmul.f32 %v8969, %v8997
    %v9002 = vmul.f32 %v8970, %v8998
    %v9003 = vmul.f32 %v8971, %v8999
    %v9004 = vmul.f32 %v8972, %v9000
    %v9005 = vpack.c.bf16 %v9002, %v9001
    %v9006 = vpack.c.bf16 %v9004, %v9003
    %v9008 = vlaneseq
    %v9009 = vshrl.u32 %v9008, 7
    %v9010 = vsub.s32 0, %v9009
    %v9011 = vrot.slane %v171, %v9010
    %v9021 = vunpack.c.l.b16 %v162
    %v9022 = vunpack.c.l.b16 %v163
    %v9023 = vunpack.c.l.b16 %v164
    %v9024 = vunpack.c.l.b16 %v165
    %v9025 = vunpack.c.l.b16 %v166
    %v9026 = vunpack.c.l.b16 %v167
    %v9027 = vunpack.c.l.b16 %v168
    %v9028 = vunpack.c.l.b16 %v169
    %v9029 = vpack.c.b16 %v9022, %v9021
    %v9030 = vpack.c.b16 %v9024, %v9023
    %v9031 = vpack.c.b16 %v9026, %v9025
    %v9032 = vpack.c.b16 %v9028, %v9027
    %v9038 = vsel %vm4564, %v9005, 0
    %v9041 = vsel %vm4564, %v9006, 0
    %9043 = vmatprep.subr.bf16.mxu0 0
    %9044 = vmatpush1.bf16.msra.mxu0 %v9029
    %9045 = vmatprep.subr.bf16.mxu0 0
    %9046 = vmatpush1.bf16.msra.mxu0 %v9030
    %9047 = vmatprep.subr.bf16.mxu0 0
    %9048 = vmatpush1.bf16.msra.mxu0 %v9031
    %9049 = vmatprep.subr.bf16.mxu0 0
    %9050 = vmatpush1.bf16.msra.mxu0 %v9032
    %9051 = vmatprep.subr.bf16.mxu0 0
    %9052 = vmatpush1.bf16.msra.mxu0 0
    %9053 = vmatprep.subr.bf16.mxu0 0
    %9054 = vmatpush1.bf16.msra.mxu0 0
    %9055 = vmatprep.subr.bf16.mxu0 0
    %9056 = vmatpush1.bf16.msra.mxu0 0
    %9057 = vmatprep.subr.bf16.mxu0 0
    %9058 = vmatpush1.bf16.msra.mxu0 0
    %9059 = vmatprep.subr.bf16.mxu0 0
    %9060 = vmatpush1.bf16.msra.mxu0 0
    %9061 = vmatprep.subr.bf16.mxu0 0
    %9062 = vmatpush1.bf16.msra.mxu0 0
    %9063 = vmatprep.subr.bf16.mxu0 0
    %9064 = vmatpush1.bf16.msra.mxu0 0
    %9065 = vmatprep.subr.bf16.mxu0 0
    %9066 = vmatpush1.bf16.msra.mxu0 0
    %9067 = vmatprep.subr.bf16.mxu0 0
    %9068 = vmatpush1.bf16.msra.mxu0 0
    %9069 = vmatprep.subr.bf16.mxu0 0
    %9070 = vmatpush1.bf16.msra.mxu0 0
    %9071 = vmatprep.subr.bf16.mxu0 0
    %9072 = vmatpush1.bf16.msra.mxu0 0
    %9073 = vmatprep.subr.bf16.mxu0 0
    %9074 = vmatpush1.bf16.msra.mxu0 0
    %9075 = vmatprep.mubr.bf16.mxu0 0
    %9076 = vmatmul.mubr.bf16.gmra.mrb[0].mxu0 %v9038
    %v9077 = vpop.f32.mrb[0].mxu0
    %v9078 = vadd.f32 %v9011, %v9077
    %v9079 = vpop.f32.mrb[0].mxu0
    %v9080 = vpop.f32.mrb[0].mxu0
    %v9081 = vadd.f32 %v9011, %v9080
    %v9082 = vpop.f32.mrb[0].mxu0
    %9083 = vmatprep.mubr.bf16.mxu0 0
    %9084 = vmatmul.mubr.bf16.gmra.mrb[0].mxu0 %v9041
    %v9085 = vpop.f32.mrb[0].mxu0
    %v9086 = vadd.f32 %v9011, %v9085
    %v9087 = vpop.f32.mrb[0].mxu0
    %v9088 = vpop.f32.mrb[0].mxu0
    %v9089 = vadd.f32 %v9011, %v9088
    %v9090 = vpop.f32.mrb[0].mxu0
    %9091 = vdwg.mxu0
    %v9092 = vadd.f32 %v8890, %v9078
    %v9093 = vadd.f32 %v8891, %v9081
    %v9094 = vadd.f32 %v8892, %v9086
    %v9095 = vadd.f32 %v8893, %v9089
    %v9096 = vsel %vm243, %v9092, 0.0
    %9097 = vadd.xlane.f32.xlu0 %v9096
    %v9098 = vpop.xlane.xlu0 %9097
    %v9099 = vsel %vm243, %v9093, 0.0
    %9100 = vadd.xlane.f32.xlu0 %v9099
    %v9101 = vpop.xlane.xlu0 %9100
    %v9102 = vsel %vm243, %v9094, 0.0
    %9103 = vadd.xlane.f32.xlu0 %v9102
    %v9104 = vpop.xlane.xlu0 %9103
    %v9105 = vsel %vm243, %v9095, 0.0
    %9106 = vadd.xlane.f32.xlu0 %v9105
    %v9107 = vpop.xlane.xlu0 %9106
    %v9108 = vmul.f32 %v9098, %v4348
    %v9109 = vmul.f32 %v9101, %v4348
    %v9110 = vmul.f32 %v9104, %v4348
    %v9111 = vmul.f32 %v9107, %v4348
    %v9112 = vmul.f32 %v9092, %v9092
    %v9113 = vmul.f32 %v9093, %v9093
    %v9114 = vmul.f32 %v9094, %v9094
    %v9115 = vmul.f32 %v9095, %v9095
    %v9116 = vsel %vm243, %v9112, 0.0
    %9117 = vadd.xlane.f32.xlu0 %v9116
    %v9118 = vpop.xlane.xlu0 %9117
    %v9119 = vsel %vm243, %v9113, 0.0
    %9120 = vadd.xlane.f32.xlu0 %v9119
    %v9121 = vpop.xlane.xlu0 %9120
    %v9122 = vsel %vm243, %v9114, 0.0
    %9123 = vadd.xlane.f32.xlu0 %v9122
    %v9124 = vpop.xlane.xlu0 %9123
    %v9125 = vsel %vm243, %v9115, 0.0
    %9126 = vadd.xlane.f32.xlu0 %v9125
    %v9127 = vpop.xlane.xlu0 %9126
    %v9128 = vmul.f32 %v9118, %v4348
    %v9129 = vmul.f32 %v9121, %v4348
    %v9130 = vmul.f32 %v9124, %v4348
    %v9131 = vmul.f32 %v9127, %v4348
    %v9132 = vmul.f32 %v9108, %v9108
    %v9133 = vmul.f32 %v9109, %v9109
    %v9134 = vmul.f32 %v9110, %v9110
    %v9135 = vmul.f32 %v9111, %v9111
    %v9136 = vsub.f32 %v9128, %v9132
    %v9137 = vsub.f32 %v9129, %v9133
    %v9138 = vsub.f32 %v9130, %v9134
    %v9139 = vsub.f32 %v9131, %v9135
    %v9140 = vmax.f32 %v9136, 0.0
    %v9141 = vmax.f32 %v9137, 0.0
    %v9142 = vmax.f32 %v9138, 0.0
    %v9143 = vmax.f32 %v9139, 0.0
    %v9144 = vsub.f32 %v9092, %v9108
    %v9145 = vsub.f32 %v9093, %v9109
    %v9146 = vsub.f32 %v9094, %v9110
    %v9147 = vsub.f32 %v9095, %v9111
    %v9148 = vadd.f32 %v9140, 1e-12
    %v9149 = vadd.f32 %v9141, 1e-12
    %v9150 = vadd.f32 %v9142, 1e-12
    %v9151 = vadd.f32 %v9143, 1e-12
    %v9152 = vrsqrt.pop %v9148
    %v9153 = vrsqrt.pop %v9149
    %v9154 = vrsqrt.pop %v9150
    %v9155 = vrsqrt.pop %v9151
    %v9156 = vmul.f32 %v9144, %v9152
    %v9157 = vmul.f32 %v9145, %v9153
    %v9158 = vmul.f32 %v9146, %v9154
    %v9159 = vmul.f32 %v9147, %v9155
    %v9161 = vlaneseq
    %v9162 = vshrl.u32 %v9161, 7
    %v9163 = vsub.s32 0, %v9162
    %v9164 = vrot.slane %v173, %v9163
    %v9166 = vmul.f32 %v9156, %v9164
    %v9167 = vmul.f32 %v9157, %v9164
    %v9168 = vmul.f32 %v9158, %v9164
    %v9169 = vmul.f32 %v9159, %v9164
    %v9171 = vlaneseq
    %v9172 = vshrl.u32 %v9171, 7
    %v9173 = vsub.s32 0, %v9172
    %v9174 = vrot.slane %v175, %v9173
    %v9176 = vadd.f32 %v9166, %v9174
    %v9177 = vadd.f32 %v9167, %v9174
    %v9178 = vadd.f32 %v9168, %v9174
    %v9179 = vadd.f32 %v9169, %v9174
    %v9182 = vunpack.c.l.s4 1966171168
    %v9183 = vunpack.c.0.s8 %v9182
    %v9184 = vlaneseq
    %v9185 = vshrl.u32 %v9184, 7
    %v9186 = vsub.s32 %v9183, %v9185
    %v9187 = vrot.slane %v119, %v9186
    %v9188 = vcombine.high %v9187, %v9187
    %v9190 = vunpack.c.l.s4 1966171168
    %v9191 = vunpack.c.0.s8 %v9190
    %v9192 = vlaneseq
    %v9193 = vshrl.u32 %v9192, 7
    %v9194 = vsub.s32 %v9191, %v9193
    %v9195 = vrot.slane %v9187, %v9194
    %v9197 = vunpack.c.l.s4 1966171168
    %v9198 = vunpack.c.0.s8 %v9197
    %v9199 = vlaneseq
    %v9200 = vshrl.u32 %v9199, 7
    %v9201 = vsub.s32 %v9198, %v9200
    %v9202 = vrot.slane %v9188, %v9201
    %v9203 = vcombine.high %v9195, %v9195
    %v9204 = vcombine.high %v9202, %v9202
    %v9209 = vpack.c.bf16 %v9195, %v9195
    %v9210 = vpack.c.bf16 %v9202, %v9202
    %v9211 = vpack.c.bf16 %v9203, %v9203
    %v9212 = vpack.c.bf16 %v9204, %v9204
    %v9213 = vpack.c.bf16 %v9176, %v9176
    %v9214 = vpack.c.bf16 %v9177, %v9177
    %v9215 = vpack.c.bf16 %v9178, %v9178
    %v9216 = vpack.c.bf16 %v9179, %v9179
    %v9218 = vsel %vm1985, %v9209, 0
    %v9221 = vsel %vm2917, %v9213, 0
    %9223 = vmatprep.subr.bf16.mxu0 0
    %9224 = vmatpush1.bf16.msra.mxu0 %v9221
    %9225 = vmatprep.subr.bf16.mxu0 0
    %9226 = vmatpush1.bf16.msra.mxu0 0
    %9227 = vmatprep.subr.bf16.mxu0 0
    %9228 = vmatpush1.bf16.msra.mxu0 0
    %9229 = vmatprep.subr.bf16.mxu0 0
    %9230 = vmatpush1.bf16.msra.mxu0 0
    %9231 = vmatprep.subr.bf16.mxu0 0
    %9232 = vmatpush1.bf16.msra.mxu0 0
    %9233 = vmatprep.subr.bf16.mxu0 0
    %9234 = vmatpush1.bf16.msra.mxu0 0
    %9235 = vmatprep.subr.bf16.mxu0 0
    %9236 = vmatpush1.bf16.msra.mxu0 0
    %9237 = vmatprep.subr.bf16.mxu0 0
    %9238 = vmatpush1.bf16.msra.mxu0 0
    %9239 = vmatprep.subr.bf16.mxu0 0
    %9240 = vmatpush1.bf16.msra.mxu0 0
    %9241 = vmatprep.subr.bf16.mxu0 0
    %9242 = vmatpush1.bf16.msra.mxu0 0
    %9243 = vmatprep.subr.bf16.mxu0 0
    %9244 = vmatpush1.bf16.msra.mxu0 0
    %9245 = vmatprep.subr.bf16.mxu0 0
    %9246 = vmatpush1.bf16.msra.mxu0 0
    %9247 = vmatprep.subr.bf16.mxu0 0
    %9248 = vmatpush1.bf16.msra.mxu0 0
    %9249 = vmatprep.subr.bf16.mxu0 0
    %9250 = vmatpush1.bf16.msra.mxu0 0
    %9251 = vmatprep.subr.bf16.mxu0 0
    %9252 = vmatpush1.bf16.msra.mxu0 0
    %9253 = vmatprep.subr.bf16.mxu0 0
    %9254 = vmatpush1.bf16.msra.mxu0 0
    %9255 = vmatprep.mubr.bf16.mxu0 0
    %9256 = vmatmul.mubr.bf16.gmra.mrb[0].mxu0 %v9218
    %v9257 = vpop.f32.mrb[0].mxu0
    %v9258 = vadd.f32 0.0, %v9257
    %v9259 = vpop.f32.mrb[0].mxu0
    %v9260 = vpop.f32.mrb[0].mxu0
    %v9261 = vpop.f32.mrb[0].mxu0
    %9262 = vdwg.mxu0
    %v9264 = vsel %vm1985, %v9210, 0
    %v9267 = vsel %vm2917, %v9214, 0
    %9269 = vmatprep.subr.bf16.mxu0 0
    %9270 = vmatpush1.bf16.msra.mxu0 %v9267
    %9271 = vmatprep.subr.bf16.mxu0 0
    %9272 = vmatpush1.bf16.msra.mxu0 0
    %9273 = vmatprep.subr.bf16.mxu0 0
    %9274 = vmatpush1.bf16.msra.mxu0 0
    %9275 = vmatprep.subr.bf16.mxu0 0
    %9276 = vmatpush1.bf16.msra.mxu0 0
    %9277 = vmatprep.subr.bf16.mxu0 0
    %9278 = vmatpush1.bf16.msra.mxu0 0
    %9279 = vmatprep.subr.bf16.mxu0 0
    %9280 = vmatpush1.bf16.msra.mxu0 0
    %9281 = vmatprep.subr.bf16.mxu0 0
    %9282 = vmatpush1.bf16.msra.mxu0 0
    %9283 = vmatprep.subr.bf16.mxu0 0
    %9284 = vmatpush1.bf16.msra.mxu0 0
    %9285 = vmatprep.subr.bf16.mxu0 0
    %9286 = vmatpush1.bf16.msra.mxu0 0
    %9287 = vmatprep.subr.bf16.mxu0 0
    %9288 = vmatpush1.bf16.msra.mxu0 0
    %9289 = vmatprep.subr.bf16.mxu0 0
    %9290 = vmatpush1.bf16.msra.mxu0 0
    %9291 = vmatprep.subr.bf16.mxu0 0
    %9292 = vmatpush1.bf16.msra.mxu0 0
    %9293 = vmatprep.subr.bf16.mxu0 0
    %9294 = vmatpush1.bf16.msra.mxu0 0
    %9295 = vmatprep.subr.bf16.mxu0 0
    %9296 = vmatpush1.bf16.msra.mxu0 0
    %9297 = vmatprep.subr.bf16.mxu0 0
    %9298 = vmatpush1.bf16.msra.mxu0 0
    %9299 = vmatprep.subr.bf16.mxu0 0
    %9300 = vmatpush1.bf16.msra.mxu0 0
    %9301 = vmatprep.mubr.bf16.mxu0 0
    %9302 = vmatmul.mubr.bf16.gmra.mrb[0].mxu0 %v9264
    %v9303 = vpop.f32.mrb[0].mxu0
    %v9304 = vadd.f32 0.0, %v9303
    %v9305 = vpop.f32.mrb[0].mxu0
    %v9306 = vpop.f32.mrb[0].mxu0
    %v9307 = vpop.f32.mrb[0].mxu0
    %9308 = vdwg.mxu0
    %v9310 = vsel %vm1985, %v9211, 0
    %v9313 = vsel %vm2917, %v9215, 0
    %9315 = vmatprep.subr.bf16.mxu0 0
    %9316 = vmatpush1.bf16.msra.mxu0 %v9313
    %9317 = vmatprep.subr.bf16.mxu0 0
    %9318 = vmatpush1.bf16.msra.mxu0 0
    %9319 = vmatprep.subr.bf16.mxu0 0
    %9320 = vmatpush1.bf16.msra.mxu0 0
    %9321 = vmatprep.subr.bf16.mxu0 0
    %9322 = vmatpush1.bf16.msra.mxu0 0
    %9323 = vmatprep.subr.bf16.mxu0 0
    %9324 = vmatpush1.bf16.msra.mxu0 0
    %9325 = vmatprep.subr.bf16.mxu0 0
    %9326 = vmatpush1.bf16.msra.mxu0 0
    %9327 = vmatprep.subr.bf16.mxu0 0
    %9328 = vmatpush1.bf16.msra.mxu0 0
    %9329 = vmatprep.subr.bf16.mxu0 0
    %9330 = vmatpush1.bf16.msra.mxu0 0
    %9331 = vmatprep.subr.bf16.mxu0 0
    %9332 = vmatpush1.bf16.msra.mxu0 0
    %9333 = vmatprep.subr.bf16.mxu0 0
    %9334 = vmatpush1.bf16.msra.mxu0 0
    %9335 = vmatprep.subr.bf16.mxu0 0
    %9336 = vmatpush1.bf16.msra.mxu0 0
    %9337 = vmatprep.subr.bf16.mxu0 0
    %9338 = vmatpush1.bf16.msra.mxu0 0
    %9339 = vmatprep.subr.bf16.mxu0 0
    %9340 = vmatpush1.bf16.msra.mxu0 0
    %9341 = vmatprep.subr.bf16.mxu0 0
    %9342 = vmatpush1.bf16.msra.mxu0 0
    %9343 = vmatprep.subr.bf16.mxu0 0
    %9344 = vmatpush1.bf16.msra.mxu0 0
    %9345 = vmatprep.subr.bf16.mxu0 0
    %9346 = vmatpush1.bf16.msra.mxu0 0
    %9347 = vmatprep.mubr.bf16.mxu0 0
    %9348 = vmatmul.mubr.bf16.gmra.mrb[0].mxu0 %v9310
    %v9349 = vpop.f32.mrb[0].mxu0
    %v9350 = vadd.f32 0.0, %v9349
    %v9351 = vpop.f32.mrb[0].mxu0
    %v9352 = vpop.f32.mrb[0].mxu0
    %v9353 = vpop.f32.mrb[0].mxu0
    %9354 = vdwg.mxu0
    %v9356 = vsel %vm1985, %v9212, 0
    %v9359 = vsel %vm2917, %v9216, 0
    %9361 = vmatprep.subr.bf16.mxu0 0
    %9362 = vmatpush1.bf16.msra.mxu0 %v9359
    %9363 = vmatprep.subr.bf16.mxu0 0
    %9364 = vmatpush1.bf16.msra.mxu0 0
    %9365 = vmatprep.subr.bf16.mxu0 0
    %9366 = vmatpush1.bf16.msra.mxu0 0
    %9367 = vmatprep.subr.bf16.mxu0 0
    %9368 = vmatpush1.bf16.msra.mxu0 0
    %9369 = vmatprep.subr.bf16.mxu0 0
    %9370 = vmatpush1.bf16.msra.mxu0 0
    %9371 = vmatprep.subr.bf16.mxu0 0
    %9372 = vmatpush1.bf16.msra.mxu0 0
    %9373 = vmatprep.subr.bf16.mxu0 0
    %9374 = vmatpush1.bf16.msra.mxu0 0
    %9375 = vmatprep.subr.bf16.mxu0 0
    %9376 = vmatpush1.bf16.msra.mxu0 0
    %9377 = vmatprep.subr.bf16.mxu0 0
    %9378 = vmatpush1.bf16.msra.mxu0 0
    %9379 = vmatprep.subr.bf16.mxu0 0
    %9380 = vmatpush1.bf16.msra.mxu0 0
    %9381 = vmatprep.subr.bf16.mxu0 0
    %9382 = vmatpush1.bf16.msra.mxu0 0
    %9383 = vmatprep.subr.bf16.mxu0 0
    %9384 = vmatpush1.bf16.msra.mxu0 0
    %9385 = vmatprep.subr.bf16.mxu0 0
    %9386 = vmatpush1.bf16.msra.mxu0 0
    %9387 = vmatprep.subr.bf16.mxu0 0
    %9388 = vmatpush1.bf16.msra.mxu0 0
    %9389 = vmatprep.subr.bf16.mxu0 0
    %9390 = vmatpush1.bf16.msra.mxu0 0
    %9391 = vmatprep.subr.bf16.mxu0 0
    %9392 = vmatpush1.bf16.msra.mxu0 0
    %9393 = vmatprep.mubr.bf16.mxu0 0
    %9394 = vmatmul.mubr.bf16.gmra.mrb[0].mxu0 %v9356
    %v9395 = vpop.f32.mrb[0].mxu0
    %v9396 = vadd.f32 0.0, %v9395
    %v9397 = vpop.f32.mrb[0].mxu0
    %v9398 = vpop.f32.mrb[0].mxu0
    %v9399 = vpop.f32.mrb[0].mxu0
    %9400 = vdwg.mxu0
    %vm9401 = vcmask 60416
    %v9402 = vsel %vm9401, %v119, 0.0
    %9403 = vadd.xlane.f32.xlu0 %v9402
    %v9404 = vpop.xlane.xlu0 %9403
    %v9405 = vmax.f32 %v9404, 1.0
    %v9407 = vrot.slane %v9405, 1
    %v9408 = vrot.slane %v9405, 2
    %v9409 = vrot.slane %v9405, 3
    %v9414 = vrcp.pop %v9405
    %v9415 = vmul.f32 %v9258, %v9414
    %v9416 = vrcp.pop %v9407
    %v9417 = vmul.f32 %v9304, %v9416
    %v9418 = vrcp.pop %v9408
    %v9419 = vmul.f32 %v9350, %v9418
    %v9420 = vrcp.pop %v9409
    %v9421 = vmul.f32 %v9396, %v9420
    %v9426 = vrot.slane %v9417, 7
    %vm9427 = vcmask 1041409
    %v9428 = vsel %vm9427, %v9426, %v9415
    %v9429 = vrot.slane %v9419, 6
    %vm9430 = vcmask 1042434
    %v9431 = vsel %vm9430, %v9429, %v9428
    %v9432 = vrot.slane %v9421, 5
    %vm9433 = vcmask 1043459
    %v9434 = vsel %vm9433, %v9432, %v9431
    %vm9436 = vcmask 257024
    %9437 = vst.msk [vmem:[#allocation11] sm:$0xf] %vm9436, %v9434
    // Predicated region
    $region78: #{tpu_custom_call.1} parent=1 // pred_check
      _
    $region79: #{tpu_custom_call.1} parent=1 // pred_check_branch
      %9439 = sbr.rel (0) target = $region81
    $region80: #{tpu_custom_call.1} parent=1 // pred_region
      %s9441 = ssub.s32 64, 64
      %9442 = vsyncadd [#allocation4], %s9441
      %s9444 = sshll.u32 [#allocation11], 4
      %s9445 = int_to_ptr.vmem [resolvable:$true] %s9444
      %9447 = dma.vmem_to_hbm [thread:$0]  %s9445, 64, %s14, [#allocation4]
    $region81: #{tpu_custom_call.1} parent=1 // pred_fallthru
      _
    // Predicated region
    $region82: #{tpu_custom_call.1} parent=1 // pred_check
      _
    $region83: #{tpu_custom_call.1} parent=1 // pred_check_branch
      %9449 = sbr.rel (0) target = $region85
    $region84: #{tpu_custom_call.1} parent=1 // pred_region
      %9450 = dma.done [#allocation4], 64
    $region85: #{tpu_custom_call.1} parent=1 // pred_fallthru
      _
    %9451 = vsyncpa [#allocation3], 1
    %9452 = vsyncpa [#allocation6], 1
    %9453 = vsyncpa [#allocation9], 1
    %9454 = vsyncpa [#allocation4], 1

</llo_original>
